<compile_context>
chip_gen: v7x
topology: tpu7x:2x2x1
jax: 0.10.0
libtpu: 0.0.40
codegen_flags: <defaults>
</compile_context>

<pallas_src>
import functools

import jax
import jax.numpy as jnp
from jax import lax
from jax.experimental import pallas as pl
from jax.experimental.pallas import tpu as pltpu


def _make_bottleneck_kernel(H, W, Cin, D, has_conv_shortcut):
    """Builds the fused bottleneck_IR kernel for one batch element."""
    HW = H * W

    def kernel(*refs):
        if has_conv_shortcut:
            (x_ref, w1_ref, prelu_ref, w2_ref,
             bn1s_ref, bn1b_ref, bn2s_ref, bn2b_ref,
             ws_ref, bnss_ref, bnsb_ref,
             o_ref, pad1_ref, pad2_ref) = refs
        else:
            (x_ref, w1_ref, prelu_ref, w2_ref,
             bn1s_ref, bn1b_ref, bn2s_ref, bn2b_ref,
             o_ref, pad1_ref, pad2_ref) = refs

        x = x_ref[0]                                         # (H, W, Cin)

        # ---- residual branch -------------------------------------------------
        # BatchNorm2d(Cin), folded inference form: y = x*scale + bias
        xn = x * bn1s_ref[...] + bn1b_ref[...]               # (H, W, Cin)

        # Zero-padded copy for 3x3 conv (pad=1). Interior placed at sublane-aligned
        # column offset 8; columns 7 and W+8 / rows 0 and H+1 stay zero (the padding).
        pad1_ref[...] = jnp.zeros_like(pad1_ref)
        pad1_ref[1:H + 1, 8:8 + W, :] = xn

        # Conv2d(Cin, D, 3x3, stride=1, pad=1) as 9 shifted MXU matmuls.
        acc = jnp.zeros((HW, D), jnp.float32)
        for ky in range(3):
            for kx in range(3):
                patch = pad1_ref[ky:ky + H, kx + 7:kx + 7 + W, :].reshape(HW, Cin)
                acc = acc + jnp.dot(patch, w1_ref[ky * 3 + kx],
                                    preferred_element_type=jnp.float32)

        # PReLU(D): per-channel negative slope.
        acc = jnp.where(acc > 0, acc, acc * prelu_ref[...])

        # Second 3x3 conv (computed at stride 1; stride folded into wrapper subsample).
        pad2_ref[...] = jnp.zeros_like(pad2_ref)
        pad2_ref[1:H + 1, 8:8 + W, :] = acc.reshape(H, W, D)

        acc2 = jnp.zeros((HW, D), jnp.float32)
        for ky in range(3):
            for kx in range(3):
                patch = pad2_ref[ky:ky + H, kx + 7:kx + 7 + W, :].reshape(HW, D)
                acc2 = acc2 + jnp.dot(patch, w2_ref[ky * 3 + kx],
                                      preferred_element_type=jnp.float32)

        res = acc2 * bn2s_ref[...] + bn2b_ref[...]           # BatchNorm2d(D)

        # ---- shortcut branch ---------------------------------------------------
        x2d = x.reshape(HW, Cin)
        if has_conv_shortcut:
            sc = jnp.dot(x2d, ws_ref[...], preferred_element_type=jnp.float32)
            sc = sc * bnss_ref[...] + bnsb_ref[...]          # Conv1x1 + BN
        else:
            sc = x2d                                         # MaxPool2d(1, s) == subsample(x)

        o_ref[0] = (res + sc).reshape(H, W, D).astype(o_ref.dtype)

    return kernel


@functools.partial(jax.jit, static_argnums=(2,))
def bottleneck_ir_forward(x, params, stride, eps=1e-5):
    """x: (B, Cin, H, W) f32 NCHW; params: dict of PyTorch-layout weights / BN stats."""
    B, Cin, H, W = x.shape
    w1 = params["res_conv1_w"]                   # (D, Cin, 3, 3) OIHW
    D = w1.shape[0]
    has_conv_shortcut = (Cin != D)
    assert W % 8 == 0, "kernel assumes W maps cleanly onto sublanes"
    # TODO(synk): support W not a multiple of 8 (needs width-padded blocking).

    def fold_bn(prefix):
        s = params[prefix + "_gamma"] / jnp.sqrt(params[prefix + "_var"] + eps)
        return s, params[prefix + "_beta"] - params[prefix + "_mean"] * s

    bn1_s, bn1_b = fold_bn("bn1")
    bn2_s, bn2_b = fold_bn("bn2")

    # Conv weights -> (tap, Cin, Cout) for channels-on-lanes matmuls.
    w1_k = jnp.transpose(w1, (2, 3, 1, 0)).reshape(9, Cin, D)
    w2_k = jnp.transpose(params["res_conv2_w"], (2, 3, 1, 0)).reshape(9, D, D)
    prelu = params["prelu_a"].reshape(1, D)

    x_l = jnp.transpose(x, (0, 2, 3, 1))         # NCHW -> NHWC (channels on lanes)

    operands = [x_l, w1_k, prelu, w2_k,
                bn1_s.reshape(1, Cin), bn1_b.reshape(1, Cin),
                bn2_s.reshape(1, D), bn2_b.reshape(1, D)]
    in_specs = [
        pl.BlockSpec((1, H, W, Cin), lambda b: (b, 0, 0, 0)),
        pl.BlockSpec((9, Cin, D), lambda b: (0, 0, 0)),
        pl.BlockSpec((1, D), lambda b: (0, 0)),
        pl.BlockSpec((9, D, D), lambda b: (0, 0, 0)),
        pl.BlockSpec((1, Cin), lambda b: (0, 0)),
        pl.BlockSpec((1, Cin), lambda b: (0, 0)),
        pl.BlockSpec((1, D), lambda b: (0, 0)),
        pl.BlockSpec((1, D), lambda b: (0, 0)),
    ]
    if has_conv_shortcut:
        ws = jnp.transpose(params["short_conv_w"][:, :, 0, 0], (1, 0))   # (Cin, D)
        bns_s, bns_b = fold_bn("short_bn")
        operands += [ws, bns_s.reshape(1, D), bns_b.reshape(1, D)]
        in_specs += [
            pl.BlockSpec((Cin, D), lambda b: (0, 0)),
            pl.BlockSpec((1, D), lambda b: (0, 0)),
            pl.BlockSpec((1, D), lambda b: (0, 0)),
        ]

    kernel = _make_bottleneck_kernel(H, W, Cin, D, has_conv_shortcut)

    out_full = pl.pallas_call(
        kernel,
        out_shape=jax.ShapeDtypeStruct((B, H, W, D), x.dtype),
        grid_spec=pltpu.PrefetchScalarGridSpec(
            num_scalar_prefetch=0,
            grid=(B,),
            in_specs=in_specs,
            out_specs=pl.BlockSpec((1, H, W, D), lambda b: (b, 0, 0, 0)),
            scratch_shapes=[
                pltpu.VMEM((H + 2, W + 16, Cin), jnp.float32),
                pltpu.VMEM((H + 2, W + 16, D), jnp.float32),
            ]),
        compiler_params=pltpu.CompilerParams(
            dimension_semantics=("parallel",)),
    )(*operands)

    if stride > 1:
        # Strided conv / MaxPool2d(1, s) == stride-1 result subsampled at (::s, ::s).
        out_full = out_full[:, ::stride, ::stride, :]
    return jnp.transpose(out_full, (0, 3, 1, 2))             # NHWC -> NCHW


def bottleneck_ir_reference(x, params, stride, eps=1e-5):
    """Plain-JAX reference matching the PyTorch forward (eval-mode BN)."""
    def bn(y, prefix):
        s = params[prefix + "_gamma"] / jnp.sqrt(params[prefix + "_var"] + eps)
        b = params[prefix + "_beta"] - params[prefix + "_mean"] * s
        return y * s[None, :, None, None] + b[None, :, None, None]

    dn = ("NCHW", "OIHW", "NCHW")
    Cin = x.shape[1]
    D = params["res_conv1_w"].shape[0]

    h = bn(x, "bn1")
    h = lax.conv_general_dilated(h, params["res_conv1_w"], (1, 1), ((1, 1), (1, 1)),
                                 dimension_numbers=dn, precision=lax.Precision.HIGHEST)
    a = params["prelu_a"][None, :, None, None]
    h = jnp.where(h > 0, h, a * h)
    h = lax.conv_general_dilated(h, params["res_conv2_w"], (stride, stride), ((1, 1), (1, 1)),
                                 dimension_numbers=dn, precision=lax.Precision.HIGHEST)
    res = bn(h, "bn2")

    if Cin == D:
        shortcut = x[:, :, ::stride, ::stride]               # MaxPool2d(1, stride)
    else:
        sc = lax.conv_general_dilated(x, params["short_conv_w"], (stride, stride),
                                      ((0, 0), (0, 0)), dimension_numbers=dn,
                                      precision=lax.Precision.HIGHEST)
        shortcut = bn(sc, "short_bn")
    return res + shortcut


def _make_params(key, Cin, D):
    ks = jax.random.split(key, 16)
    u = lambda k, shape, lo, hi: jax.random.uniform(k, shape, jnp.float32, lo, hi)
    n = lambda k, shape, s: s * jax.random.normal(k, shape, jnp.float32)
    return {
        "bn1_gamma": u(ks[0], (Cin,), 0.5, 1.5),
        "bn1_beta": n(ks[1], (Cin,), 0.1),
        "bn1_mean": n(ks[2], (Cin,), 0.1),
        "bn1_var": u(ks[3], (Cin,), 0.5, 1.5),
        "res_conv1_w": n(ks[4], (D, Cin, 3, 3), 0.2),
        "prelu_a": u(ks[5], (D,), 0.1, 0.4),
        "res_conv2_w": n(ks[6], (D, D, 3, 3), 0.2),
        "bn2_gamma": u(ks[7], (D,), 0.5, 1.5),
        "bn2_beta": n(ks[8], (D,), 0.1),
        "bn2_mean": n(ks[9], (D,), 0.1),
        "bn2_var": u(ks[10], (D,), 0.5, 1.5),
        "short_conv_w": n(ks[11], (D, Cin, 1, 1), 0.3),
        "short_bn_gamma": u(ks[12], (D,), 0.5, 1.5),
        "short_bn_beta": n(ks[13], (D,), 0.1),
        "short_bn_mean": n(ks[14], (D,), 0.1),
        "short_bn_var": u(ks[15], (D,), 0.5, 1.5),
    }


if __name__ == "__main__":
    key = jax.random.PRNGKey(0)

    configs = [
        # (B, Cin, depth, H, W, stride)
        (2, 4, 8, 16, 16, 2),   # Cin != depth -> 1x1 conv + BN shortcut, strided block
        (2, 4, 4, 16, 16, 1),   # Cin == depth -> MaxPool2d(1, 1) (identity) shortcut
    ]
    for (B, Cin, D, H, W, stride) in configs:
        key, kx, kp = jax.random.split(key, 3)
        x = jax.random.normal(kx, (B, Cin, H, W), dtype=jnp.float32)
        params = _make_params(kp, Cin, D)

        out = bottleneck_ir_forward(x, params, stride)
        out = jax.block_until_ready(out)

        ref = bottleneck_ir_reference(x, params, stride)
        h_out = (H - 1) // stride + 1
        w_out = (W - 1) // stride + 1
        assert out.shape == (B, D, h_out, w_out), out.shape
        assert jnp.allclose(out, ref, atol=5e-4, rtol=5e-4), \
            f"mismatch vs reference: max abs err {jnp.max(jnp.abs(out - ref))}"

    print("KERNEL_OK")
</pallas_src>

<mosaic_0001>
module attributes {stable_mosaic.version = 11 : i64} {
  func.func @kernel(%arg0: i32, %arg1: memref<1x16x16x4xf32, #tpu.memory_space<vmem>>, %arg2: memref<9x4x8xf32, #tpu.memory_space<vmem>>, %arg3: memref<1x8xf32, #tpu.memory_space<vmem>>, %arg4: memref<9x8x8xf32, #tpu.memory_space<vmem>>, %arg5: memref<1x4xf32, #tpu.memory_space<vmem>>, %arg6: memref<1x4xf32, #tpu.memory_space<vmem>>, %arg7: memref<1x8xf32, #tpu.memory_space<vmem>>, %arg8: memref<1x8xf32, #tpu.memory_space<vmem>>, %arg9: memref<4x8xf32, #tpu.memory_space<vmem>>, %arg10: memref<1x8xf32, #tpu.memory_space<vmem>>, %arg11: memref<1x8xf32, #tpu.memory_space<vmem>>, %arg12: memref<1x16x16x8xf32, #tpu.memory_space<vmem>>, %arg13: memref<18x32x4xf32, #tpu.memory_space<vmem>>, %arg14: memref<18x32x8xf32, #tpu.memory_space<vmem>>) attributes {dimension_semantics = [#tpu.dimension_semantics<parallel>], iteration_bounds = array<i64: 2>, scalar_prefetch = 0 : i64, scratch_operands = 2 : i64, tpu.core_type = #tpu.core_type<tc>, window_params = [{transform_indices = @transform_0, window_bounds = array<i64: 1, 16, 16, 4>}, {pipeline_mode = #tpu.pipeline_mode<synchronous>, transform_indices = @transform_1, window_bounds = array<i64: 9, 4, 8>}, {pipeline_mode = #tpu.pipeline_mode<synchronous>, transform_indices = @transform_2, window_bounds = array<i64: 1, 8>}, {pipeline_mode = #tpu.pipeline_mode<synchronous>, transform_indices = @transform_3, window_bounds = array<i64: 9, 8, 8>}, {pipeline_mode = #tpu.pipeline_mode<synchronous>, transform_indices = @transform_4, window_bounds = array<i64: 1, 4>}, {pipeline_mode = #tpu.pipeline_mode<synchronous>, transform_indices = @transform_5, window_bounds = array<i64: 1, 4>}, {pipeline_mode = #tpu.pipeline_mode<synchronous>, transform_indices = @transform_6, window_bounds = array<i64: 1, 8>}, {pipeline_mode = #tpu.pipeline_mode<synchronous>, transform_indices = @transform_7, window_bounds = array<i64: 1, 8>}, {pipeline_mode = #tpu.pipeline_mode<synchronous>, transform_indices = @transform_8, window_bounds = array<i64: 4, 8>}, {pipeline_mode = #tpu.pipeline_mode<synchronous>, transform_indices = @transform_9, window_bounds = array<i64: 1, 8>}, {pipeline_mode = #tpu.pipeline_mode<synchronous>, transform_indices = @transform_10, window_bounds = array<i64: 1, 8>}, {transform_indices = @transform_11, window_bounds = array<i64: 1, 16, 16, 8>}]} {
    %c0 = arith.constant 0 : index
    %c0_0 = arith.constant 0 : index
    %c0_1 = arith.constant 0 : index
    %c0_2 = arith.constant 0 : index
    %0 = vector.load %arg1[%c0, %c0_0, %c0_1, %c0_2] : memref<1x16x16x4xf32, #tpu.memory_space<vmem>>, vector<1x16x16x4xf32>
    %1 = vector.shape_cast %0 : vector<1x16x16x4xf32> to vector<16x16x4xf32>
    %c0_3 = arith.constant 0 : index
    %c0_4 = arith.constant 0 : index
    %2 = vector.load %arg5[%c0_3, %c0_4] : memref<1x4xf32, #tpu.memory_space<vmem>>, vector<1x4xf32>
    %3 = vector.shape_cast %2 : vector<1x4xf32> to vector<1x1x4xf32>
    %4 = vector.broadcast %3 : vector<1x1x4xf32> to vector<16x16x4xf32>
    %5 = arith.mulf %1, %4 : vector<16x16x4xf32>
    %c0_5 = arith.constant 0 : index
    %c0_6 = arith.constant 0 : index
    %6 = vector.load %arg6[%c0_5, %c0_6] : memref<1x4xf32, #tpu.memory_space<vmem>>, vector<1x4xf32>
    %7 = vector.shape_cast %6 : vector<1x4xf32> to vector<1x1x4xf32>
    %8 = vector.broadcast %7 : vector<1x1x4xf32> to vector<16x16x4xf32>
    %9 = arith.addf %5, %8 : vector<16x16x4xf32>
    %cst = arith.constant 0.000000e+00 : f32
    %10 = vector.broadcast %cst : f32 to vector<18x32x4xf32>
    %c0_7 = arith.constant 0 : index
    %c0_8 = arith.constant 0 : index
    %c0_9 = arith.constant 0 : index
    %11 = vector.load %arg13[%c0_7, %c0_8, %c0_9] : memref<18x32x4xf32, #tpu.memory_space<vmem>>, vector<18x32x4xf32>
    tpu.vector_store %arg13[%c0_7, %c0_8, %c0_9], %10 {strides = array<i32>} : memref<18x32x4xf32, #tpu.memory_space<vmem>>, vector<18x32x4xf32>,
    %c1 = arith.constant 1 : index
    %c8 = arith.constant 8 : index
    %c0_10 = arith.constant 0 : index
    %12 = vector.load %arg13[%c1, %c8, %c0_10] : memref<18x32x4xf32, #tpu.memory_space<vmem>>, vector<16x16x4xf32>
    tpu.vector_store %arg13[%c1, %c8, %c0_10], %9 {strides = array<i32>} : memref<18x32x4xf32, #tpu.memory_space<vmem>>, vector<16x16x4xf32>,
    %cst_11 = arith.constant 0.000000e+00 : f32
    %13 = vector.broadcast %cst_11 : f32 to vector<256x8xf32>
    %c0_12 = arith.constant 0 : index
    %c7 = arith.constant 7 : index
    %c0_13 = arith.constant 0 : index
    %14 = vector.load %arg13[%c0_12, %c7, %c0_13] : memref<18x32x4xf32, #tpu.memory_space<vmem>>, vector<16x16x4xf32>
    %15 = vector.shape_cast %14 : vector<16x16x4xf32> to vector<256x4xf32>
    %c0_14 = arith.constant 0 : index
    %c0_15 = arith.constant 0 : index
    %c0_16 = arith.constant 0 : index
    %16 = vector.load %arg2[%c0_14, %c0_15, %c0_16] : memref<9x4x8xf32, #tpu.memory_space<vmem>>, vector<1x4x8xf32>
    %17 = vector.shape_cast %16 : vector<1x4x8xf32> to vector<4x8xf32>
    %cst_17 = arith.constant dense<0.000000e+00> : vector<256x8xf32>
    %18 = tpu.matmul %15, %17, %cst_17 {dimension_numbers = #tpu.dot_dimension_numbers<[1], [0], [0], [1], [0, 0, 1, 1], [], []>} : vector<256x4xf32>, vector<4x8xf32>, vector<256x8xf32> -> vector<256x8xf32>
    %19 = arith.addf %13, %18 : vector<256x8xf32>
    %c0_18 = arith.constant 0 : index
    %c8_19 = arith.constant 8 : index
    %c0_20 = arith.constant 0 : index
    %20 = vector.load %arg13[%c0_18, %c8_19, %c0_20] : memref<18x32x4xf32, #tpu.memory_space<vmem>>, vector<16x16x4xf32>
    %21 = vector.shape_cast %20 : vector<16x16x4xf32> to vector<256x4xf32>
    %c1_21 = arith.constant 1 : index
    %c0_22 = arith.constant 0 : index
    %c0_23 = arith.constant 0 : index
    %22 = vector.load %arg2[%c1_21, %c0_22, %c0_23] : memref<9x4x8xf32, #tpu.memory_space<vmem>>, vector<1x4x8xf32>
    %23 = vector.shape_cast %22 : vector<1x4x8xf32> to vector<4x8xf32>
    %cst_24 = arith.constant dense<0.000000e+00> : vector<256x8xf32>
    %24 = tpu.matmul %21, %23, %cst_24 {dimension_numbers = #tpu.dot_dimension_numbers<[1], [0], [0], [1], [0, 0, 1, 1], [], []>} : vector<256x4xf32>, vector<4x8xf32>, vector<256x8xf32> -> vector<256x8xf32>
    %25 = arith.addf %19, %24 : vector<256x8xf32>
    %c0_25 = arith.constant 0 : index
    %c9 = arith.constant 9 : index
    %c0_26 = arith.constant 0 : index
    %26 = vector.load %arg13[%c0_25, %c9, %c0_26] : memref<18x32x4xf32, #tpu.memory_space<vmem>>, vector<16x16x4xf32>
    %27 = vector.shape_cast %26 : vector<16x16x4xf32> to vector<256x4xf32>
    %c2 = arith.constant 2 : index
    %c0_27 = arith.constant 0 : index
    %c0_28 = arith.constant 0 : index
    %28 = vector.load %arg2[%c2, %c0_27, %c0_28] : memref<9x4x8xf32, #tpu.memory_space<vmem>>, vector<1x4x8xf32>
    %29 = vector.shape_cast %28 : vector<1x4x8xf32> to vector<4x8xf32>
    %cst_29 = arith.constant dense<0.000000e+00> : vector<256x8xf32>
    %30 = tpu.matmul %27, %29, %cst_29 {dimension_numbers = #tpu.dot_dimension_numbers<[1], [0], [0], [1], [0, 0, 1, 1], [], []>} : vector<256x4xf32>, vector<4x8xf32>, vector<256x8xf32> -> vector<256x8xf32>
    %31 = arith.addf %25, %30 : vector<256x8xf32>
    %c1_30 = arith.constant 1 : index
    %c7_31 = arith.constant 7 : index
    %c0_32 = arith.constant 0 : index
    %32 = vector.load %arg13[%c1_30, %c7_31, %c0_32] : memref<18x32x4xf32, #tpu.memory_space<vmem>>, vector<16x16x4xf32>
    %33 = vector.shape_cast %32 : vector<16x16x4xf32> to vector<256x4xf32>
    %c3 = arith.constant 3 : index
    %c0_33 = arith.constant 0 : index
    %c0_34 = arith.constant 0 : index
    %34 = vector.load %arg2[%c3, %c0_33, %c0_34] : memref<9x4x8xf32, #tpu.memory_space<vmem>>, vector<1x4x8xf32>
    %35 = vector.shape_cast %34 : vector<1x4x8xf32> to vector<4x8xf32>
    %cst_35 = arith.constant dense<0.000000e+00> : vector<256x8xf32>
    %36 = tpu.matmul %33, %35, %cst_35 {dimension_numbers = #tpu.dot_dimension_numbers<[1], [0], [0], [1], [0, 0, 1, 1], [], []>} : vector<256x4xf32>, vector<4x8xf32>, vector<256x8xf32> -> vector<256x8xf32>
    %37 = arith.addf %31, %36 : vector<256x8xf32>
    %c1_36 = arith.constant 1 : index
    %c8_37 = arith.constant 8 : index
    %c0_38 = arith.constant 0 : index
    %38 = vector.load %arg13[%c1_36, %c8_37, %c0_38] : memref<18x32x4xf32, #tpu.memory_space<vmem>>, vector<16x16x4xf32>
    %39 = vector.shape_cast %38 : vector<16x16x4xf32> to vector<256x4xf32>
    %c4 = arith.constant 4 : index
    %c0_39 = arith.constant 0 : index
    %c0_40 = arith.constant 0 : index
    %40 = vector.load %arg2[%c4, %c0_39, %c0_40] : memref<9x4x8xf32, #tpu.memory_space<vmem>>, vector<1x4x8xf32>
    %41 = vector.shape_cast %40 : vector<1x4x8xf32> to vector<4x8xf32>
    %cst_41 = arith.constant dense<0.000000e+00> : vector<256x8xf32>
    %42 = tpu.matmul %39, %41, %cst_41 {dimension_numbers = #tpu.dot_dimension_numbers<[1], [0], [0], [1], [0, 0, 1, 1], [], []>} : vector<256x4xf32>, vector<4x8xf32>, vector<256x8xf32> -> vector<256x8xf32>
    %43 = arith.addf %37, %42 : vector<256x8xf32>
    %c1_42 = arith.constant 1 : index
    %c9_43 = arith.constant 9 : index
    %c0_44 = arith.constant 0 : index
    %44 = vector.load %arg13[%c1_42, %c9_43, %c0_44] : memref<18x32x4xf32, #tpu.memory_space<vmem>>, vector<16x16x4xf32>
    %45 = vector.shape_cast %44 : vector<16x16x4xf32> to vector<256x4xf32>
    %c5 = arith.constant 5 : index
    %c0_45 = arith.constant 0 : index
    %c0_46 = arith.constant 0 : index
    %46 = vector.load %arg2[%c5, %c0_45, %c0_46] : memref<9x4x8xf32, #tpu.memory_space<vmem>>, vector<1x4x8xf32>
    %47 = vector.shape_cast %46 : vector<1x4x8xf32> to vector<4x8xf32>
    %cst_47 = arith.constant dense<0.000000e+00> : vector<256x8xf32>
    %48 = tpu.matmul %45, %47, %cst_47 {dimension_numbers = #tpu.dot_dimension_numbers<[1], [0], [0], [1], [0, 0, 1, 1], [], []>} : vector<256x4xf32>, vector<4x8xf32>, vector<256x8xf32> -> vector<256x8xf32>
    %49 = arith.addf %43, %48 : vector<256x8xf32>
    %c2_48 = arith.constant 2 : index
    %c7_49 = arith.constant 7 : index
    %c0_50 = arith.constant 0 : index
    %50 = vector.load %arg13[%c2_48, %c7_49, %c0_50] : memref<18x32x4xf32, #tpu.memory_space<vmem>>, vector<16x16x4xf32>
    %51 = vector.shape_cast %50 : vector<16x16x4xf32> to vector<256x4xf32>
    %c6 = arith.constant 6 : index
    %c0_51 = arith.constant 0 : index
    %c0_52 = arith.constant 0 : index
    %52 = vector.load %arg2[%c6, %c0_51, %c0_52] : memref<9x4x8xf32, #tpu.memory_space<vmem>>, vector<1x4x8xf32>
    %53 = vector.shape_cast %52 : vector<1x4x8xf32> to vector<4x8xf32>
    %cst_53 = arith.constant dense<0.000000e+00> : vector<256x8xf32>
    %54 = tpu.matmul %51, %53, %cst_53 {dimension_numbers = #tpu.dot_dimension_numbers<[1], [0], [0], [1], [0, 0, 1, 1], [], []>} : vector<256x4xf32>, vector<4x8xf32>, vector<256x8xf32> -> vector<256x8xf32>
    %55 = arith.addf %49, %54 : vector<256x8xf32>
    %c2_54 = arith.constant 2 : index
    %c8_55 = arith.constant 8 : index
    %c0_56 = arith.constant 0 : index
    %56 = vector.load %arg13[%c2_54, %c8_55, %c0_56] : memref<18x32x4xf32, #tpu.memory_space<vmem>>, vector<16x16x4xf32>
    %57 = vector.shape_cast %56 : vector<16x16x4xf32> to vector<256x4xf32>
    %c7_57 = arith.constant 7 : index
    %c0_58 = arith.constant 0 : index
    %c0_59 = arith.constant 0 : index
    %58 = vector.load %arg2[%c7_57, %c0_58, %c0_59] : memref<9x4x8xf32, #tpu.memory_space<vmem>>, vector<1x4x8xf32>
    %59 = vector.shape_cast %58 : vector<1x4x8xf32> to vector<4x8xf32>
    %cst_60 = arith.constant dense<0.000000e+00> : vector<256x8xf32>
    %60 = tpu.matmul %57, %59, %cst_60 {dimension_numbers = #tpu.dot_dimension_numbers<[1], [0], [0], [1], [0, 0, 1, 1], [], []>} : vector<256x4xf32>, vector<4x8xf32>, vector<256x8xf32> -> vector<256x8xf32>
    %61 = arith.addf %55, %60 : vector<256x8xf32>
    %c2_61 = arith.constant 2 : index
    %c9_62 = arith.constant 9 : index
    %c0_63 = arith.constant 0 : index
    %62 = vector.load %arg13[%c2_61, %c9_62, %c0_63] : memref<18x32x4xf32, #tpu.memory_space<vmem>>, vector<16x16x4xf32>
    %63 = vector.shape_cast %62 : vector<16x16x4xf32> to vector<256x4xf32>
    %c8_64 = arith.constant 8 : index
    %c0_65 = arith.constant 0 : index
    %c0_66 = arith.constant 0 : index
    %64 = vector.load %arg2[%c8_64, %c0_65, %c0_66] : memref<9x4x8xf32, #tpu.memory_space<vmem>>, vector<1x4x8xf32>
    %65 = vector.shape_cast %64 : vector<1x4x8xf32> to vector<4x8xf32>
    %cst_67 = arith.constant dense<0.000000e+00> : vector<256x8xf32>
    %66 = tpu.matmul %63, %65, %cst_67 {dimension_numbers = #tpu.dot_dimension_numbers<[1], [0], [0], [1], [0, 0, 1, 1], [], []>} : vector<256x4xf32>, vector<4x8xf32>, vector<256x8xf32> -> vector<256x8xf32>
    %67 = arith.addf %61, %66 : vector<256x8xf32>
    %cst_68 = arith.constant 0.000000e+00 : f32
    %68 = vector.broadcast %cst_68 : f32 to vector<256x8xf32>
    %69 = arith.cmpf ogt, %67, %68 : vector<256x8xf32>
    %c0_69 = arith.constant 0 : index
    %c0_70 = arith.constant 0 : index
    %70 = vector.load %arg3[%c0_69, %c0_70] : memref<1x8xf32, #tpu.memory_space<vmem>>, vector<1x8xf32>
    %71 = vector.broadcast %70 : vector<1x8xf32> to vector<256x8xf32>
    %72 = arith.mulf %67, %71 : vector<256x8xf32>
    %73 = arith.select %69, %67, %72 : vector<256x8xi1>, vector<256x8xf32>
    %cst_71 = arith.constant 0.000000e+00 : f32
    %74 = vector.broadcast %cst_71 : f32 to vector<18x32x8xf32>
    %c0_72 = arith.constant 0 : index
    %c0_73 = arith.constant 0 : index
    %c0_74 = arith.constant 0 : index
    %75 = vector.load %arg14[%c0_72, %c0_73, %c0_74] : memref<18x32x8xf32, #tpu.memory_space<vmem>>, vector<18x32x8xf32>
    tpu.vector_store %arg14[%c0_72, %c0_73, %c0_74], %74 {strides = array<i32>} : memref<18x32x8xf32, #tpu.memory_space<vmem>>, vector<18x32x8xf32>,
    %76 = vector.shape_cast %73 : vector<256x8xf32> to vector<16x16x8xf32>
    %c1_75 = arith.constant 1 : index
    %c8_76 = arith.constant 8 : index
    %c0_77 = arith.constant 0 : index
    %77 = vector.load %arg14[%c1_75, %c8_76, %c0_77] : memref<18x32x8xf32, #tpu.memory_space<vmem>>, vector<16x16x8xf32>
    tpu.vector_store %arg14[%c1_75, %c8_76, %c0_77], %76 {strides = array<i32>} : memref<18x32x8xf32, #tpu.memory_space<vmem>>, vector<16x16x8xf32>,
    %cst_78 = arith.constant 0.000000e+00 : f32
    %78 = vector.broadcast %cst_78 : f32 to vector<256x8xf32>
    %c0_79 = arith.constant 0 : index
    %c7_80 = arith.constant 7 : index
    %c0_81 = arith.constant 0 : index
    %79 = vector.load %arg14[%c0_79, %c7_80, %c0_81] : memref<18x32x8xf32, #tpu.memory_space<vmem>>, vector<16x16x8xf32>
    %80 = vector.shape_cast %79 : vector<16x16x8xf32> to vector<256x8xf32>
    %c0_82 = arith.constant 0 : index
    %c0_83 = arith.constant 0 : index
    %c0_84 = arith.constant 0 : index
    %81 = vector.load %arg4[%c0_82, %c0_83, %c0_84] : memref<9x8x8xf32, #tpu.memory_space<vmem>>, vector<1x8x8xf32>
    %82 = vector.shape_cast %81 : vector<1x8x8xf32> to vector<8x8xf32>
    %cst_85 = arith.constant dense<0.000000e+00> : vector<256x8xf32>
    %83 = tpu.matmul %80, %82, %cst_85 {dimension_numbers = #tpu.dot_dimension_numbers<[1], [0], [0], [1], [0, 0, 1, 1], [], []>} : vector<256x8xf32>, vector<8x8xf32>, vector<256x8xf32> -> vector<256x8xf32>
    %84 = arith.addf %78, %83 : vector<256x8xf32>
    %c0_86 = arith.constant 0 : index
    %c8_87 = arith.constant 8 : index
    %c0_88 = arith.constant 0 : index
    %85 = vector.load %arg14[%c0_86, %c8_87, %c0_88] : memref<18x32x8xf32, #tpu.memory_space<vmem>>, vector<16x16x8xf32>
    %86 = vector.shape_cast %85 : vector<16x16x8xf32> to vector<256x8xf32>
    %c1_89 = arith.constant 1 : index
    %c0_90 = arith.constant 0 : index
    %c0_91 = arith.constant 0 : index
    %87 = vector.load %arg4[%c1_89, %c0_90, %c0_91] : memref<9x8x8xf32, #tpu.memory_space<vmem>>, vector<1x8x8xf32>
    %88 = vector.shape_cast %87 : vector<1x8x8xf32> to vector<8x8xf32>
    %cst_92 = arith.constant dense<0.000000e+00> : vector<256x8xf32>
    %89 = tpu.matmul %86, %88, %cst_92 {dimension_numbers = #tpu.dot_dimension_numbers<[1], [0], [0], [1], [0, 0, 1, 1], [], []>} : vector<256x8xf32>, vector<8x8xf32>, vector<256x8xf32> -> vector<256x8xf32>
    %90 = arith.addf %84, %89 : vector<256x8xf32>
    %c0_93 = arith.constant 0 : index
    %c9_94 = arith.constant 9 : index
    %c0_95 = arith.constant 0 : index
    %91 = vector.load %arg14[%c0_93, %c9_94, %c0_95] : memref<18x32x8xf32, #tpu.memory_space<vmem>>, vector<16x16x8xf32>
    %92 = vector.shape_cast %91 : vector<16x16x8xf32> to vector<256x8xf32>
    %c2_96 = arith.constant 2 : index
    %c0_97 = arith.constant 0 : index
    %c0_98 = arith.constant 0 : index
    %93 = vector.load %arg4[%c2_96, %c0_97, %c0_98] : memref<9x8x8xf32, #tpu.memory_space<vmem>>, vector<1x8x8xf32>
    %94 = vector.shape_cast %93 : vector<1x8x8xf32> to vector<8x8xf32>
    %cst_99 = arith.constant dense<0.000000e+00> : vector<256x8xf32>
    %95 = tpu.matmul %92, %94, %cst_99 {dimension_numbers = #tpu.dot_dimension_numbers<[1], [0], [0], [1], [0, 0, 1, 1], [], []>} : vector<256x8xf32>, vector<8x8xf32>, vector<256x8xf32> -> vector<256x8xf32>
    %96 = arith.addf %90, %95 : vector<256x8xf32>
    %c1_100 = arith.constant 1 : index
    %c7_101 = arith.constant 7 : index
    %c0_102 = arith.constant 0 : index
    %97 = vector.load %arg14[%c1_100, %c7_101, %c0_102] : memref<18x32x8xf32, #tpu.memory_space<vmem>>, vector<16x16x8xf32>
    %98 = vector.shape_cast %97 : vector<16x16x8xf32> to vector<256x8xf32>
    %c3_103 = arith.constant 3 : index
    %c0_104 = arith.constant 0 : index
    %c0_105 = arith.constant 0 : index
    %99 = vector.load %arg4[%c3_103, %c0_104, %c0_105] : memref<9x8x8xf32, #tpu.memory_space<vmem>>, vector<1x8x8xf32>
    %100 = vector.shape_cast %99 : vector<1x8x8xf32> to vector<8x8xf32>
    %cst_106 = arith.constant dense<0.000000e+00> : vector<256x8xf32>
    %101 = tpu.matmul %98, %100, %cst_106 {dimension_numbers = #tpu.dot_dimension_numbers<[1], [0], [0], [1], [0, 0, 1, 1], [], []>} : vector<256x8xf32>, vector<8x8xf32>, vector<256x8xf32> -> vector<256x8xf32>
    %102 = arith.addf %96, %101 : vector<256x8xf32>
    %c1_107 = arith.constant 1 : index
    %c8_108 = arith.constant 8 : index
    %c0_109 = arith.constant 0 : index
    %103 = vector.load %arg14[%c1_107, %c8_108, %c0_109] : memref<18x32x8xf32, #tpu.memory_space<vmem>>, vector<16x16x8xf32>
    %104 = vector.shape_cast %103 : vector<16x16x8xf32> to vector<256x8xf32>
    %c4_110 = arith.constant 4 : index
    %c0_111 = arith.constant 0 : index
    %c0_112 = arith.constant 0 : index
    %105 = vector.load %arg4[%c4_110, %c0_111, %c0_112] : memref<9x8x8xf32, #tpu.memory_space<vmem>>, vector<1x8x8xf32>
    %106 = vector.shape_cast %105 : vector<1x8x8xf32> to vector<8x8xf32>
    %cst_113 = arith.constant dense<0.000000e+00> : vector<256x8xf32>
    %107 = tpu.matmul %104, %106, %cst_113 {dimension_numbers = #tpu.dot_dimension_numbers<[1], [0], [0], [1], [0, 0, 1, 1], [], []>} : vector<256x8xf32>, vector<8x8xf32>, vector<256x8xf32> -> vector<256x8xf32>
    %108 = arith.addf %102, %107 : vector<256x8xf32>
    %c1_114 = arith.constant 1 : index
    %c9_115 = arith.constant 9 : index
    %c0_116 = arith.constant 0 : index
    %109 = vector.load %arg14[%c1_114, %c9_115, %c0_116] : memref<18x32x8xf32, #tpu.memory_space<vmem>>, vector<16x16x8xf32>
    %110 = vector.shape_cast %109 : vector<16x16x8xf32> to vector<256x8xf32>
    %c5_117 = arith.constant 5 : index
    %c0_118 = arith.constant 0 : index
    %c0_119 = arith.constant 0 : index
    %111 = vector.load %arg4[%c5_117, %c0_118, %c0_119] : memref<9x8x8xf32, #tpu.memory_space<vmem>>, vector<1x8x8xf32>
    %112 = vector.shape_cast %111 : vector<1x8x8xf32> to vector<8x8xf32>
    %cst_120 = arith.constant dense<0.000000e+00> : vector<256x8xf32>
    %113 = tpu.matmul %110, %112, %cst_120 {dimension_numbers = #tpu.dot_dimension_numbers<[1], [0], [0], [1], [0, 0, 1, 1], [], []>} : vector<256x8xf32>, vector<8x8xf32>, vector<256x8xf32> -> vector<256x8xf32>
    %114 = arith.addf %108, %113 : vector<256x8xf32>
    %c2_121 = arith.constant 2 : index
    %c7_122 = arith.constant 7 : index
    %c0_123 = arith.constant 0 : index
    %115 = vector.load %arg14[%c2_121, %c7_122, %c0_123] : memref<18x32x8xf32, #tpu.memory_space<vmem>>, vector<16x16x8xf32>
    %116 = vector.shape_cast %115 : vector<16x16x8xf32> to vector<256x8xf32>
    %c6_124 = arith.constant 6 : index
    %c0_125 = arith.constant 0 : index
    %c0_126 = arith.constant 0 : index
    %117 = vector.load %arg4[%c6_124, %c0_125, %c0_126] : memref<9x8x8xf32, #tpu.memory_space<vmem>>, vector<1x8x8xf32>
    %118 = vector.shape_cast %117 : vector<1x8x8xf32> to vector<8x8xf32>
    %cst_127 = arith.constant dense<0.000000e+00> : vector<256x8xf32>
    %119 = tpu.matmul %116, %118, %cst_127 {dimension_numbers = #tpu.dot_dimension_numbers<[1], [0], [0], [1], [0, 0, 1, 1], [], []>} : vector<256x8xf32>, vector<8x8xf32>, vector<256x8xf32> -> vector<256x8xf32>
    %120 = arith.addf %114, %119 : vector<256x8xf32>
    %c2_128 = arith.constant 2 : index
    %c8_129 = arith.constant 8 : index
    %c0_130 = arith.constant 0 : index
    %121 = vector.load %arg14[%c2_128, %c8_129, %c0_130] : memref<18x32x8xf32, #tpu.memory_space<vmem>>, vector<16x16x8xf32>
    %122 = vector.shape_cast %121 : vector<16x16x8xf32> to vector<256x8xf32>
    %c7_131 = arith.constant 7 : index
    %c0_132 = arith.constant 0 : index
    %c0_133 = arith.constant 0 : index
    %123 = vector.load %arg4[%c7_131, %c0_132, %c0_133] : memref<9x8x8xf32, #tpu.memory_space<vmem>>, vector<1x8x8xf32>
    %124 = vector.shape_cast %123 : vector<1x8x8xf32> to vector<8x8xf32>
    %cst_134 = arith.constant dense<0.000000e+00> : vector<256x8xf32>
    %125 = tpu.matmul %122, %124, %cst_134 {dimension_numbers = #tpu.dot_dimension_numbers<[1], [0], [0], [1], [0, 0, 1, 1], [], []>} : vector<256x8xf32>, vector<8x8xf32>, vector<256x8xf32> -> vector<256x8xf32>
    %126 = arith.addf %120, %125 : vector<256x8xf32>
    %c2_135 = arith.constant 2 : index
    %c9_136 = arith.constant 9 : index
    %c0_137 = arith.constant 0 : index
    %127 = vector.load %arg14[%c2_135, %c9_136, %c0_137] : memref<18x32x8xf32, #tpu.memory_space<vmem>>, vector<16x16x8xf32>
    %128 = vector.shape_cast %127 : vector<16x16x8xf32> to vector<256x8xf32>
    %c8_138 = arith.constant 8 : index
    %c0_139 = arith.constant 0 : index
    %c0_140 = arith.constant 0 : index
    %129 = vector.load %arg4[%c8_138, %c0_139, %c0_140] : memref<9x8x8xf32, #tpu.memory_space<vmem>>, vector<1x8x8xf32>
    %130 = vector.shape_cast %129 : vector<1x8x8xf32> to vector<8x8xf32>
    %cst_141 = arith.constant dense<0.000000e+00> : vector<256x8xf32>
    %131 = tpu.matmul %128, %130, %cst_141 {dimension_numbers = #tpu.dot_dimension_numbers<[1], [0], [0], [1], [0, 0, 1, 1], [], []>} : vector<256x8xf32>, vector<8x8xf32>, vector<256x8xf32> -> vector<256x8xf32>
    %132 = arith.addf %126, %131 : vector<256x8xf32>
    %c0_142 = arith.constant 0 : index
    %c0_143 = arith.constant 0 : index
    %133 = vector.load %arg7[%c0_142, %c0_143] : memref<1x8xf32, #tpu.memory_space<vmem>>, vector<1x8xf32>
    %134 = vector.broadcast %133 : vector<1x8xf32> to vector<256x8xf32>
    %135 = arith.mulf %132, %134 : vector<256x8xf32>
    %c0_144 = arith.constant 0 : index
    %c0_145 = arith.constant 0 : index
    %136 = vector.load %arg8[%c0_144, %c0_145] : memref<1x8xf32, #tpu.memory_space<vmem>>, vector<1x8xf32>
    %137 = vector.broadcast %136 : vector<1x8xf32> to vector<256x8xf32>
    %138 = arith.addf %135, %137 : vector<256x8xf32>
    %139 = vector.shape_cast %1 : vector<16x16x4xf32> to vector<256x4xf32>
    %c0_146 = arith.constant 0 : index
    %c0_147 = arith.constant 0 : index
    %140 = vector.load %arg9[%c0_146, %c0_147] : memref<4x8xf32, #tpu.memory_space<vmem>>, vector<4x8xf32>
    %cst_148 = arith.constant dense<0.000000e+00> : vector<256x8xf32>
    %141 = tpu.matmul %139, %140, %cst_148 {dimension_numbers = #tpu.dot_dimension_numbers<[1], [0], [0], [1], [0, 0, 1, 1], [], []>} : vector<256x4xf32>, vector<4x8xf32>, vector<256x8xf32> -> vector<256x8xf32>
    %c0_149 = arith.constant 0 : index
    %c0_150 = arith.constant 0 : index
    %142 = vector.load %arg10[%c0_149, %c0_150] : memref<1x8xf32, #tpu.memory_space<vmem>>, vector<1x8xf32>
    %143 = vector.broadcast %142 : vector<1x8xf32> to vector<256x8xf32>
    %144 = arith.mulf %141, %143 : vector<256x8xf32>
    %c0_151 = arith.constant 0 : index
    %c0_152 = arith.constant 0 : index
    %145 = vector.load %arg11[%c0_151, %c0_152] : memref<1x8xf32, #tpu.memory_space<vmem>>, vector<1x8xf32>
    %146 = vector.broadcast %145 : vector<1x8xf32> to vector<256x8xf32>
    %147 = arith.addf %144, %146 : vector<256x8xf32>
    %148 = arith.addf %138, %147 : vector<256x8xf32>
    %149 = vector.shape_cast %148 : vector<256x8xf32> to vector<16x16x8xf32>
    %c0_153 = arith.constant 0 : index
    %c0_154 = arith.constant 0 : index
    %c0_155 = arith.constant 0 : index
    %c0_156 = arith.constant 0 : index
    %150 = vector.load %arg12[%c0_153, %c0_154, %c0_155, %c0_156] : memref<1x16x16x8xf32, #tpu.memory_space<vmem>>, vector<1x16x16x8xf32>
    %151 = vector.shape_cast %150 : vector<1x16x16x8xf32> to vector<16x16x8xf32>
    %152 = vector.shape_cast %149 : vector<16x16x8xf32> to vector<1x16x16x8xf32>
    tpu.vector_store %arg12[%c0_153, %c0_154, %c0_155, %c0_156], %152 {strides = array<i32>} : memref<1x16x16x8xf32, #tpu.memory_space<vmem>>, vector<1x16x16x8xf32>,
    return
  }
  func.func @transform_0(%arg0: i32) -> (i32, i32, i32, i32) {
    %c0_i32 = arith.constant 0 : i32
    %c0_i32_0 = arith.constant 0 : i32
    %c0_i32_1 = arith.constant 0 : i32
    %c0_i32_2 = arith.constant 0 : i32
    return %arg0, %c0_i32, %c0_i32_0, %c0_i32_1 : i32, i32, i32, i32
  }
  func.func @transform_1(%arg0: i32) -> (i32, i32, i32) {
    %c0_i32 = arith.constant 0 : i32
    %c0_i32_0 = arith.constant 0 : i32
    %c0_i32_1 = arith.constant 0 : i32
    %c0_i32_2 = arith.constant 0 : i32
    return %c0_i32, %c0_i32_0, %c0_i32_1 : i32, i32, i32
  }
  func.func @transform_2(%arg0: i32) -> (i32, i32) {
    %c0_i32 = arith.constant 0 : i32
    %c0_i32_0 = arith.constant 0 : i32
    %c0_i32_1 = arith.constant 0 : i32
    return %c0_i32, %c0_i32_0 : i32, i32
  }
  func.func @transform_3(%arg0: i32) -> (i32, i32, i32) {
    %c0_i32 = arith.constant 0 : i32
    %c0_i32_0 = arith.constant 0 : i32
    %c0_i32_1 = arith.constant 0 : i32
    %c0_i32_2 = arith.constant 0 : i32
    return %c0_i32, %c0_i32_0, %c0_i32_1 : i32, i32, i32
  }
  func.func @transform_4(%arg0: i32) -> (i32, i32) {
    %c0_i32 = arith.constant 0 : i32
    %c0_i32_0 = arith.constant 0 : i32
    %c0_i32_1 = arith.constant 0 : i32
    return %c0_i32, %c0_i32_0 : i32, i32
  }
  func.func @transform_5(%arg0: i32) -> (i32, i32) {
    %c0_i32 = arith.constant 0 : i32
    %c0_i32_0 = arith.constant 0 : i32
    %c0_i32_1 = arith.constant 0 : i32
    return %c0_i32, %c0_i32_0 : i32, i32
  }
  func.func @transform_6(%arg0: i32) -> (i32, i32) {
    %c0_i32 = arith.constant 0 : i32
    %c0_i32_0 = arith.constant 0 : i32
    %c0_i32_1 = arith.constant 0 : i32
    return %c0_i32, %c0_i32_0 : i32, i32
  }
  func.func @transform_7(%arg0: i32) -> (i32, i32) {
    %c0_i32 = arith.constant 0 : i32
    %c0_i32_0 = arith.constant 0 : i32
    %c0_i32_1 = arith.constant 0 : i32
    return %c0_i32, %c0_i32_0 : i32, i32
  }
  func.func @transform_8(%arg0: i32) -> (i32, i32) {
    %c0_i32 = arith.constant 0 : i32
    %c0_i32_0 = arith.constant 0 : i32
    %c0_i32_1 = arith.constant 0 : i32
    return %c0_i32, %c0_i32_0 : i32, i32
  }
  func.func @transform_9(%arg0: i32) -> (i32, i32) {
    %c0_i32 = arith.constant 0 : i32
    %c0_i32_0 = arith.constant 0 : i32
    %c0_i32_1 = arith.constant 0 : i32
    return %c0_i32, %c0_i32_0 : i32, i32
  }
  func.func @transform_10(%arg0: i32) -> (i32, i32) {
    %c0_i32 = arith.constant 0 : i32
    %c0_i32_0 = arith.constant 0 : i32
    %c0_i32_1 = arith.constant 0 : i32
    return %c0_i32, %c0_i32_0 : i32, i32
  }
  func.func @transform_11(%arg0: i32) -> (i32, i32, i32, i32) {
    %c0_i32 = arith.constant 0 : i32
    %c0_i32_0 = arith.constant 0 : i32
    %c0_i32_1 = arith.constant 0 : i32
    %c0_i32_2 = arith.constant 0 : i32
    return %arg0, %c0_i32, %c0_i32_0, %c0_i32_1 : i32, i32, i32, i32
  }
}

</mosaic_0001>

<llo_original>
// kernel: bottleneck_ir_forward.1
$region0: #{bottleneck_ir_forward.1}
  #allocation0 [shape = 'u32[]', space=smem, size = 0x4, offset = 0x4, fixed_abs, tag = 'smem constant byte address 0x4 - core index']
  #allocation1 [shape = 'u32[144,128]{1,0:T(1,128)}', space=vmem, size = 0x12000, scoped, tag = 'internal scratch']
  #allocation2 [shape = 'f32[18,32,4]{2,1,0:T(8,128)}', space=vmem, size = 0x48000, scoped, tag = 'scratch operand']
  #allocation3 [shape = 'f32[18,32,8]{2,1,0:T(8,128)}', space=vmem, size = 0x48000, scoped, tag = 'scratch operand']
  %s0 = inlined_call_operand.vmem [shape: f32[2,16,16,4], index: 0, kind: input, shape index: {}]
  %s1 = inlined_call_operand.vmem [shape: f32[9,4,8], index: 1, kind: input, shape index: {}]
  %s2 = inlined_call_operand.vmem [shape: f32[1,8], index: 2, kind: input, shape index: {}]
  %s3 = inlined_call_operand.vmem [shape: f32[9,8,8], index: 3, kind: input, shape index: {}]
  %s4 = inlined_call_operand.vmem [shape: f32[1,4], index: 4, kind: input, shape index: {}]
  %s5 = inlined_call_operand.vmem [shape: f32[1,4], index: 5, kind: input, shape index: {}]
  %s6 = inlined_call_operand.vmem [shape: f32[1,8], index: 6, kind: input, shape index: {}]
  %s7 = inlined_call_operand.vmem [shape: f32[1,8], index: 7, kind: input, shape index: {}]
  %s8 = inlined_call_operand.vmem [shape: f32[4,8], index: 8, kind: input, shape index: {}]
  %s9 = inlined_call_operand.vmem [shape: f32[1,8], index: 9, kind: input, shape index: {}]
  %s10 = inlined_call_operand.vmem [shape: f32[1,8], index: 10, kind: input, shape index: {}]
  %s11 = inlined_call_operand.vmem [shape: f32[2,16,16,8], index: 11, kind: output, shape index: {}]
  %s12 = sld [smem:[#allocation0]]
  $region77: #{bottleneck_ir_forward.1} parent=0
    _
  %s14 = ssub.s32 1, %s12
  %s15 = scalar_select 0, %s14, %s12
  loop: start=0, step=1, limit=4
  $region2: #{bottleneck_ir_forward.1} parent=0 // loop_pre_header
    _
  $region3: #{bottleneck_ir_forward.1} parent=0 // loop_header
    %s17 = sphi 0, %s21
    %p18 = scmp.ge.s32.totalorder %s17, 4
    %s27 = sphi 0, %s29
    %s30 = sphi 0, %s27
    %s31 = sphi 0, %s30
    %s47 = sphi 0, %s31
    %s51 = sphi 0, %s51
    %s53 = sphi 0, %s51
    %s54 = sphi 0, %s53
    %s68 = sphi 0, %s54
    %s72 = sphi 0, %s72
    %s74 = sphi 0, %s72
    %s75 = sphi 0, %s74
    %s89 = sphi 0, %s75
    %s93 = sphi 0, %s93
    %s95 = sphi 0, %s93
    %s96 = sphi 0, %s95
    %s110 = sphi 0, %s96
    %s114 = sphi 0, %s114
    %s116 = sphi 0, %s114
    %s117 = sphi 0, %s116
    %s131 = sphi 0, %s117
    %s135 = sphi 0, %s135
    %s137 = sphi 0, %s135
    %s138 = sphi 0, %s137
    %s152 = sphi 0, %s138
    %s156 = sphi 0, %s156
    %s158 = sphi 0, %s156
    %s159 = sphi 0, %s158
    %s173 = sphi 0, %s159
    %s177 = sphi 0, %s177
    %s179 = sphi 0, %s177
    %s180 = sphi 0, %s179
    %s194 = sphi 0, %s180
    %s198 = sphi 0, %s198
    %s200 = sphi 0, %s198
    %s201 = sphi 0, %s200
    %s215 = sphi 0, %s201
    %s219 = sphi 0, %s219
    %s221 = sphi 0, %s219
    %s222 = sphi 0, %s221
    %s236 = sphi 0, %s222
    %s240 = sphi 0, %s240
    %s242 = sphi 0, %s240
    %s243 = sphi 0, %s242
    %s257 = sphi 0, %s243
    %s263 = sphi 0, %s265
    %s266 = sphi 0, %s263
    %s267 = sphi 0, %s266
    %s283 = sphi 0, %s267
  $region4: #{bottleneck_ir_forward.1} parent=0 // loop_header_branch
    %20 = sbr.rel (%p18) target = $region8
  $region5: #{bottleneck_ir_forward.1} parent=0 // loop_body
    %s22 = ssub.s32 %s17, 1
    %s23 = ssub.s32 %s17, 2
    %s24 = sadd.s32 %s17, 1
    %s25 = ssub.s32 %s17, %s24
    %p26 = scmp.eq.s32.totalorder %s25, 0
    %s28 = sadd.s32 %s27, 1
    %s29 = scalar_select %p26, %s27, %s28
    %p32 = pneg %p26
    %p33 = scmp.eq.s32.totalorder %s17, 1
    %p34 = por %p32, %p33
    %p35 = scmp.ne.s32.totalorder %s27, %s30
    %p36 = scmp.eq.s32.totalorder %s17, 0
    %p37 = por %p35, %p36
    %p38 = scmp.ne.s32.totalorder %s27, %s30
    %p39 = scmp.eq.s32.totalorder %s22, 1
    %p40 = por %p38, %p39
    %p41 = scmp.ne.s32.totalorder %s30, %s31
    %p42 = scmp.eq.s32.totalorder %s22, 0
    %p43 = por %p41, %p42
    %p44 = scmp.ne.s32.totalorder %s30, %s31
    %p45 = scmp.eq.s32.totalorder %s23, 1
    %p46 = por %p44, %p45
    %p48 = scmp.ne.s32.totalorder %s31, %s47
    %p49 = scmp.eq.s32.totalorder %s23, 0
    %p50 = por %p48, %p49
    %s52 = sadd.s32 %s51, 1
    %p55 = scmp.eq.s32.totalorder %s17, 1
    %p56 = scmp.ne.s32.totalorder %s51, %s53
    %p57 = scmp.eq.s32.totalorder %s17, 0
    %p58 = por %p56, %p57
    %p59 = scmp.ne.s32.totalorder %s51, %s53
    %p60 = scmp.eq.s32.totalorder %s22, 1
    %p61 = por %p59, %p60
    %p62 = scmp.ne.s32.totalorder %s53, %s54
    %p63 = scmp.eq.s32.totalorder %s22, 0
    %p64 = por %p62, %p63
    %p65 = scmp.ne.s32.totalorder %s53, %s54
    %p66 = scmp.eq.s32.totalorder %s23, 1
    %p67 = por %p65, %p66
    %p69 = scmp.ne.s32.totalorder %s54, %s68
    %p70 = scmp.eq.s32.totalorder %s23, 0
    %p71 = por %p69, %p70
    %s73 = sadd.s32 %s72, 1
    %p76 = scmp.eq.s32.totalorder %s17, 1
    %p77 = scmp.ne.s32.totalorder %s72, %s74
    %p78 = scmp.eq.s32.totalorder %s17, 0
    %p79 = por %p77, %p78
    %p80 = scmp.ne.s32.totalorder %s72, %s74
    %p81 = scmp.eq.s32.totalorder %s22, 1
    %p82 = por %p80, %p81
    %p83 = scmp.ne.s32.totalorder %s74, %s75
    %p84 = scmp.eq.s32.totalorder %s22, 0
    %p85 = por %p83, %p84
    %p86 = scmp.ne.s32.totalorder %s74, %s75
    %p87 = scmp.eq.s32.totalorder %s23, 1
    %p88 = por %p86, %p87
    %p90 = scmp.ne.s32.totalorder %s75, %s89
    %p91 = scmp.eq.s32.totalorder %s23, 0
    %p92 = por %p90, %p91
    %s94 = sadd.s32 %s93, 1
    %p97 = scmp.eq.s32.totalorder %s17, 1
    %p98 = scmp.ne.s32.totalorder %s93, %s95
    %p99 = scmp.eq.s32.totalorder %s17, 0
    %p100 = por %p98, %p99
    %p101 = scmp.ne.s32.totalorder %s93, %s95
    %p102 = scmp.eq.s32.totalorder %s22, 1
    %p103 = por %p101, %p102
    %p104 = scmp.ne.s32.totalorder %s95, %s96
    %p105 = scmp.eq.s32.totalorder %s22, 0
    %p106 = por %p104, %p105
    %p107 = scmp.ne.s32.totalorder %s95, %s96
    %p108 = scmp.eq.s32.totalorder %s23, 1
    %p109 = por %p107, %p108
    %p111 = scmp.ne.s32.totalorder %s96, %s110
    %p112 = scmp.eq.s32.totalorder %s23, 0
    %p113 = por %p111, %p112
    %s115 = sadd.s32 %s114, 1
    %p118 = scmp.eq.s32.totalorder %s17, 1
    %p119 = scmp.ne.s32.totalorder %s114, %s116
    %p120 = scmp.eq.s32.totalorder %s17, 0
    %p121 = por %p119, %p120
    %p122 = scmp.ne.s32.totalorder %s114, %s116
    %p123 = scmp.eq.s32.totalorder %s22, 1
    %p124 = por %p122, %p123
    %p125 = scmp.ne.s32.totalorder %s116, %s117
    %p126 = scmp.eq.s32.totalorder %s22, 0
    %p127 = por %p125, %p126
    %p128 = scmp.ne.s32.totalorder %s116, %s117
    %p129 = scmp.eq.s32.totalorder %s23, 1
    %p130 = por %p128, %p129
    %p132 = scmp.ne.s32.totalorder %s117, %s131
    %p133 = scmp.eq.s32.totalorder %s23, 0
    %p134 = por %p132, %p133
    %s136 = sadd.s32 %s135, 1
    %p139 = scmp.eq.s32.totalorder %s17, 1
    %p140 = scmp.ne.s32.totalorder %s135, %s137
    %p141 = scmp.eq.s32.totalorder %s17, 0
    %p142 = por %p140, %p141
    %p143 = scmp.ne.s32.totalorder %s135, %s137
    %p144 = scmp.eq.s32.totalorder %s22, 1
    %p145 = por %p143, %p144
    %p146 = scmp.ne.s32.totalorder %s137, %s138
    %p147 = scmp.eq.s32.totalorder %s22, 0
    %p148 = por %p146, %p147
    %p149 = scmp.ne.s32.totalorder %s137, %s138
    %p150 = scmp.eq.s32.totalorder %s23, 1
    %p151 = por %p149, %p150
    %p153 = scmp.ne.s32.totalorder %s138, %s152
    %p154 = scmp.eq.s32.totalorder %s23, 0
    %p155 = por %p153, %p154
    %s157 = sadd.s32 %s156, 1
    %p160 = scmp.eq.s32.totalorder %s17, 1
    %p161 = scmp.ne.s32.totalorder %s156, %s158
    %p162 = scmp.eq.s32.totalorder %s17, 0
    %p163 = por %p161, %p162
    %p164 = scmp.ne.s32.totalorder %s156, %s158
    %p165 = scmp.eq.s32.totalorder %s22, 1
    %p166 = por %p164, %p165
    %p167 = scmp.ne.s32.totalorder %s158, %s159
    %p168 = scmp.eq.s32.totalorder %s22, 0
    %p169 = por %p167, %p168
    %p170 = scmp.ne.s32.totalorder %s158, %s159
    %p171 = scmp.eq.s32.totalorder %s23, 1
    %p172 = por %p170, %p171
    %p174 = scmp.ne.s32.totalorder %s159, %s173
    %p175 = scmp.eq.s32.totalorder %s23, 0
    %p176 = por %p174, %p175
    %s178 = sadd.s32 %s177, 1
    %p181 = scmp.eq.s32.totalorder %s17, 1
    %p182 = scmp.ne.s32.totalorder %s177, %s179
    %p183 = scmp.eq.s32.totalorder %s17, 0
    %p184 = por %p182, %p183
    %p185 = scmp.ne.s32.totalorder %s177, %s179
    %p186 = scmp.eq.s32.totalorder %s22, 1
    %p187 = por %p185, %p186
    %p188 = scmp.ne.s32.totalorder %s179, %s180
    %p189 = scmp.eq.s32.totalorder %s22, 0
    %p190 = por %p188, %p189
    %p191 = scmp.ne.s32.totalorder %s179, %s180
    %p192 = scmp.eq.s32.totalorder %s23, 1
    %p193 = por %p191, %p192
    %p195 = scmp.ne.s32.totalorder %s180, %s194
    %p196 = scmp.eq.s32.totalorder %s23, 0
    %p197 = por %p195, %p196
    %s199 = sadd.s32 %s198, 1
    %p202 = scmp.eq.s32.totalorder %s17, 1
    %p203 = scmp.ne.s32.totalorder %s198, %s200
    %p204 = scmp.eq.s32.totalorder %s17, 0
    %p205 = por %p203, %p204
    %p206 = scmp.ne.s32.totalorder %s198, %s200
    %p207 = scmp.eq.s32.totalorder %s22, 1
    %p208 = por %p206, %p207
    %p209 = scmp.ne.s32.totalorder %s200, %s201
    %p210 = scmp.eq.s32.totalorder %s22, 0
    %p211 = por %p209, %p210
    %p212 = scmp.ne.s32.totalorder %s200, %s201
    %p213 = scmp.eq.s32.totalorder %s23, 1
    %p214 = por %p212, %p213
    %p216 = scmp.ne.s32.totalorder %s201, %s215
    %p217 = scmp.eq.s32.totalorder %s23, 0
    %p218 = por %p216, %p217
    %s220 = sadd.s32 %s219, 1
    %p223 = scmp.eq.s32.totalorder %s17, 1
    %p224 = scmp.ne.s32.totalorder %s219, %s221
    %p225 = scmp.eq.s32.totalorder %s17, 0
    %p226 = por %p224, %p225
    %p227 = scmp.ne.s32.totalorder %s219, %s221
    %p228 = scmp.eq.s32.totalorder %s22, 1
    %p229 = por %p227, %p228
    %p230 = scmp.ne.s32.totalorder %s221, %s222
    %p231 = scmp.eq.s32.totalorder %s22, 0
    %p232 = por %p230, %p231
    %p233 = scmp.ne.s32.totalorder %s221, %s222
    %p234 = scmp.eq.s32.totalorder %s23, 1
    %p235 = por %p233, %p234
    %p237 = scmp.ne.s32.totalorder %s222, %s236
    %p238 = scmp.eq.s32.totalorder %s23, 0
    %p239 = por %p237, %p238
    %s241 = sadd.s32 %s240, 1
    %p244 = scmp.eq.s32.totalorder %s17, 1
    %p245 = scmp.ne.s32.totalorder %s240, %s242
    %p246 = scmp.eq.s32.totalorder %s17, 0
    %p247 = por %p245, %p246
    %p248 = scmp.ne.s32.totalorder %s240, %s242
    %p249 = scmp.eq.s32.totalorder %s22, 1
    %p250 = por %p248, %p249
    %p251 = scmp.ne.s32.totalorder %s242, %s243
    %p252 = scmp.eq.s32.totalorder %s22, 0
    %p253 = por %p251, %p252
    %p254 = scmp.ne.s32.totalorder %s242, %s243
    %p255 = scmp.eq.s32.totalorder %s23, 1
    %p256 = por %p254, %p255
    %p258 = scmp.ne.s32.totalorder %s243, %s257
    %p259 = scmp.eq.s32.totalorder %s23, 0
    %p260 = por %p258, %p259
    %s261 = ssub.s32 %s17, %s24
    %p262 = scmp.eq.s32.totalorder %s261, 0
    %s264 = sadd.s32 %s263, 1
    %s265 = scalar_select %p262, %s263, %s264
    %p268 = pneg %p262
    %p269 = scmp.eq.s32.totalorder %s17, 1
    %p270 = por %p268, %p269
    %p271 = scmp.ne.s32.totalorder %s263, %s266
    %p272 = scmp.eq.s32.totalorder %s17, 0
    %p273 = por %p271, %p272
    %p274 = scmp.ne.s32.totalorder %s263, %s266
    %p275 = scmp.eq.s32.totalorder %s22, 1
    %p276 = por %p274, %p275
    %p277 = scmp.ne.s32.totalorder %s266, %s267
    %p278 = scmp.eq.s32.totalorder %s22, 0
    %p279 = por %p277, %p278
    %p280 = scmp.ne.s32.totalorder %s266, %s267
    %p281 = scmp.eq.s32.totalorder %s23, 1
    %p282 = por %p280, %p281
    %p284 = scmp.ne.s32.totalorder %s267, %s283
    %p285 = scmp.eq.s32.totalorder %s23, 0
    %p286 = por %p284, %p285
    %p287 = scmp.le.s32.totalorder 1, %s17
    %p288 = scmp.lt.s32.totalorder %s17, 3
    %p289 = pnand %p287, %p288
    %p290 = pneg %p289
    // Predicated region
    $region9: #{bottleneck_ir_forward.1} parent=5 // pred_check
      _
    $region10: #{bottleneck_ir_forward.1} parent=5 // pred_check_branch
      %292 = sbr.rel (%p289) target = $region12
    $region11: #{bottleneck_ir_forward.1} parent=5 // pred_region
      %s293 = ssub.s32 %s17, 1
      // Predicated region
      $region13: #{bottleneck_ir_forward.1} parent=11 // pred_check
        %p294 = pneg %p64
      $region14: #{bottleneck_ir_forward.1} parent=11 // pred_check_branch
        %296 = sbr.rel (%p294) target = $region16
      $region15: #{bottleneck_ir_forward.1} parent=11 // pred_region
        _
      $region16: #{bottleneck_ir_forward.1} parent=11 // pred_fallthru
        _
      // Predicated region
      $region17: #{bottleneck_ir_forward.1} parent=11 // pred_check
        %p297 = pneg %p85
      $region18: #{bottleneck_ir_forward.1} parent=11 // pred_check_branch
        %299 = sbr.rel (%p297) target = $region20
      $region19: #{bottleneck_ir_forward.1} parent=11 // pred_region
        _
      $region20: #{bottleneck_ir_forward.1} parent=11 // pred_fallthru
        _
      // Predicated region
      $region21: #{bottleneck_ir_forward.1} parent=11 // pred_check
        %p300 = pneg %p106
      $region22: #{bottleneck_ir_forward.1} parent=11 // pred_check_branch
        %302 = sbr.rel (%p300) target = $region24
      $region23: #{bottleneck_ir_forward.1} parent=11 // pred_region
        _
      $region24: #{bottleneck_ir_forward.1} parent=11 // pred_fallthru
        _
      // Predicated region
      $region25: #{bottleneck_ir_forward.1} parent=11 // pred_check
        %p303 = pneg %p127
      $region26: #{bottleneck_ir_forward.1} parent=11 // pred_check_branch
        %305 = sbr.rel (%p303) target = $region28
      $region27: #{bottleneck_ir_forward.1} parent=11 // pred_region
        _
      $region28: #{bottleneck_ir_forward.1} parent=11 // pred_fallthru
        _
      // Predicated region
      $region29: #{bottleneck_ir_forward.1} parent=11 // pred_check
        %p306 = pneg %p148
      $region30: #{bottleneck_ir_forward.1} parent=11 // pred_check_branch
        %308 = sbr.rel (%p306) target = $region32
      $region31: #{bottleneck_ir_forward.1} parent=11 // pred_region
        _
      $region32: #{bottleneck_ir_forward.1} parent=11 // pred_fallthru
        _
      // Predicated region
      $region33: #{bottleneck_ir_forward.1} parent=11 // pred_check
        %p309 = pneg %p169
      $region34: #{bottleneck_ir_forward.1} parent=11 // pred_check_branch
        %311 = sbr.rel (%p309) target = $region36
      $region35: #{bottleneck_ir_forward.1} parent=11 // pred_region
        _
      $region36: #{bottleneck_ir_forward.1} parent=11 // pred_fallthru
        _
      // Predicated region
      $region37: #{bottleneck_ir_forward.1} parent=11 // pred_check
        %p312 = pneg %p190
      $region38: #{bottleneck_ir_forward.1} parent=11 // pred_check_branch
        %314 = sbr.rel (%p312) target = $region40
      $region39: #{bottleneck_ir_forward.1} parent=11 // pred_region
        _
      $region40: #{bottleneck_ir_forward.1} parent=11 // pred_fallthru
        _
      // Predicated region
      $region41: #{bottleneck_ir_forward.1} parent=11 // pred_check
        %p315 = pneg %p211
      $region42: #{bottleneck_ir_forward.1} parent=11 // pred_check_branch
        %317 = sbr.rel (%p315) target = $region44
      $region43: #{bottleneck_ir_forward.1} parent=11 // pred_region
        _
      $region44: #{bottleneck_ir_forward.1} parent=11 // pred_fallthru
        _
      // Predicated region
      $region45: #{bottleneck_ir_forward.1} parent=11 // pred_check
        %p318 = pneg %p232
      $region46: #{bottleneck_ir_forward.1} parent=11 // pred_check_branch
        %320 = sbr.rel (%p318) target = $region48
      $region47: #{bottleneck_ir_forward.1} parent=11 // pred_region
        _
      $region48: #{bottleneck_ir_forward.1} parent=11 // pred_fallthru
        _
      // Predicated region
      $region49: #{bottleneck_ir_forward.1} parent=11 // pred_check
        %p321 = pneg %p253
      $region50: #{bottleneck_ir_forward.1} parent=11 // pred_check_branch
        %323 = sbr.rel (%p321) target = $region52
      $region51: #{bottleneck_ir_forward.1} parent=11 // pred_region
        _
      $region52: #{bottleneck_ir_forward.1} parent=11 // pred_fallthru
        _
    $region12: #{bottleneck_ir_forward.1} parent=5 // pred_fallthru
      _
    %p324 = scmp.lt.s32.totalorder %s17, 2
    // Predicated region
    $region53: #{bottleneck_ir_forward.1} parent=5 // pred_check
      %p325 = pneg %p324
    $region54: #{bottleneck_ir_forward.1} parent=5 // pred_check_branch
      %327 = sbr.rel (%p325) target = $region56
    $region55: #{bottleneck_ir_forward.1} parent=5 // pred_region
      // Predicated region
      $region57: #{bottleneck_ir_forward.1} parent=55 // pred_check
        %p328 = pneg %p37
      $region58: #{bottleneck_ir_forward.1} parent=55 // pred_check_branch
        %330 = sbr.rel (%p328) target = $region60
      $region59: #{bottleneck_ir_forward.1} parent=55 // pred_region
        %p331 = scmp.lt.s32.totalorder %s17, 1
        %s332 = scalar_select %p331, %s17, 1
        %s333 = smul.addr %s332, 32
        %s334 = smul.addr %s333, 8
        %s335 = scalar_lea.vmem %s0, %s334
      $region60: #{bottleneck_ir_forward.1} parent=55 // pred_fallthru
        _
    $region56: #{bottleneck_ir_forward.1} parent=5 // pred_fallthru
      _
    %p336 = scmp.le.s32.totalorder 1, %s17
    %p337 = scmp.lt.s32.totalorder %s17, 3
    %p338 = pnand %p336, %p337
    %p339 = pneg %p338
    // Predicated region
    $region61: #{bottleneck_ir_forward.1} parent=5 // pred_check
      _
    $region62: #{bottleneck_ir_forward.1} parent=5 // pred_check_branch
      %341 = sbr.rel (%p338) target = $region64
    $region63: #{bottleneck_ir_forward.1} parent=5 // pred_region
      %s342 = ssub.s32 %s17, 1
      %p343 = scmp.lt.s32.totalorder %s22, 1
      %s344 = scalar_select %p343, %s22, 1
      %s345 = smul.addr %s344, 32
      %s346 = smul.addr %s345, 8
      %s347 = scalar_lea.vmem %s0, %s346
      %p348 = pneg %p43
      %p349 = pneg %p40
      %p350 = pneg %p64
      %p351 = pneg %p61
      %p352 = pneg %p85
      %p353 = pneg %p82
      %p354 = pneg %p106
      %p355 = pneg %p103
      %p356 = pneg %p127
      %p357 = pneg %p124
      %p358 = pneg %p148
      %p359 = pneg %p145
      %p360 = pneg %p169
      %p361 = pneg %p166
      %p362 = pneg %p190
      %p363 = pneg %p187
      %p364 = pneg %p211
      %p365 = pneg %p208
      %p366 = pneg %p232
      %p367 = pneg %p229
      %p368 = pneg %p253
      %p369 = pneg %p250
      %p370 = pneg %p279
      %p371 = pneg %p276
      %p372 = scmp.lt.s32.totalorder %s22, 1
      %s373 = scalar_select %p372, %s22, 1
      %s374 = smul.addr %s373, 32
      %s375 = smul.addr %s374, 8
      %s376 = scalar_lea.vmem %s11, %s375
      %p377 = scmp.lt.s32.totalorder %s22, 1
      %s378 = scalar_select %p377, %s22, 1
      %s379 = smul.addr %s378, 32
      %s380 = smul.addr %s379, 8
      %s381 = scalar_lea.vmem %s0, %s380
      %p382 = scmp.lt.s32.totalorder %s22, 1
      %s383 = scalar_select %p382, %s22, 1
      %s384 = smul.addr %s383, 32
      %s385 = smul.addr %s384, 8
      %s386 = scalar_lea.vmem %s11, %s385
      %v387 = vld [vmem:[%s381] sm:$0xff]
      %v388 = vld [vmem:[%s381 + $0x8] sm:$0xff]
      %v389 = vld [vmem:[%s381 + $0x10] sm:$0xff]
      %v390 = vld [vmem:[%s381 + $0x18] sm:$0xff]
      %v391 = vld [vmem:[%s381 + $0x20] sm:$0xff]
      %v392 = vld [vmem:[%s381 + $0x28] sm:$0xff]
      %v393 = vld [vmem:[%s381 + $0x30] sm:$0xff]
      %v394 = vld [vmem:[%s381 + $0x38] sm:$0xff]
      %v395 = vld [vmem:[%s381 + $0x40] sm:$0xff]
      %v396 = vld [vmem:[%s381 + $0x48] sm:$0xff]
      %v397 = vld [vmem:[%s381 + $0x50] sm:$0xff]
      %v398 = vld [vmem:[%s381 + $0x58] sm:$0xff]
      %v399 = vld [vmem:[%s381 + $0x60] sm:$0xff]
      %v400 = vld [vmem:[%s381 + $0x68] sm:$0xff]
      %v401 = vld [vmem:[%s381 + $0x70] sm:$0xff]
      %v402 = vld [vmem:[%s381 + $0x78] sm:$0xff]
      %v403 = vld [vmem:[%s381 + $0x80] sm:$0xff]
      %v404 = vld [vmem:[%s381 + $0x88] sm:$0xff]
      %v405 = vld [vmem:[%s381 + $0x90] sm:$0xff]
      %v406 = vld [vmem:[%s381 + $0x98] sm:$0xff]
      %v407 = vld [vmem:[%s381 + $0xa0] sm:$0xff]
      %v408 = vld [vmem:[%s381 + $0xa8] sm:$0xff]
      %v409 = vld [vmem:[%s381 + $0xb0] sm:$0xff]
      %v410 = vld [vmem:[%s381 + $0xb8] sm:$0xff]
      %v411 = vld [vmem:[%s381 + $0xc0] sm:$0xff]
      %v412 = vld [vmem:[%s381 + $0xc8] sm:$0xff]
      %v413 = vld [vmem:[%s381 + $0xd0] sm:$0xff]
      %v414 = vld [vmem:[%s381 + $0xd8] sm:$0xff]
      %v415 = vld [vmem:[%s381 + $0xe0] sm:$0xff]
      %v416 = vld [vmem:[%s381 + $0xe8] sm:$0xff]
      %v417 = vld [vmem:[%s381 + $0xf0] sm:$0xff]
      %v418 = vld [vmem:[%s381 + $0xf8] sm:$0xff]
      %v419 = vld [vmem:[%s4] sm:$0x1]
      %v421 = vlaneseq
      %v422 = vshrl.u32 %v421, 7
      %v423 = vsub.s32 0, %v422
      %v424 = vrot.slane %v419, %v423
      %v426 = vmul.f32 %v387, %v424
      %v427 = vmul.f32 %v388, %v424
      %v428 = vmul.f32 %v389, %v424
      %v429 = vmul.f32 %v390, %v424
      %v430 = vmul.f32 %v391, %v424
      %v431 = vmul.f32 %v392, %v424
      %v432 = vmul.f32 %v393, %v424
      %v433 = vmul.f32 %v394, %v424
      %v434 = vmul.f32 %v395, %v424
      %v435 = vmul.f32 %v396, %v424
      %v436 = vmul.f32 %v397, %v424
      %v437 = vmul.f32 %v398, %v424
      %v438 = vmul.f32 %v399, %v424
      %v439 = vmul.f32 %v400, %v424
      %v440 = vmul.f32 %v401, %v424
      %v441 = vmul.f32 %v402, %v424
      %v442 = vmul.f32 %v403, %v424
      %v443 = vmul.f32 %v404, %v424
      %v444 = vmul.f32 %v405, %v424
      %v445 = vmul.f32 %v406, %v424
      %v446 = vmul.f32 %v407, %v424
      %v447 = vmul.f32 %v408, %v424
      %v448 = vmul.f32 %v409, %v424
      %v449 = vmul.f32 %v410, %v424
      %v450 = vmul.f32 %v411, %v424
      %v451 = vmul.f32 %v412, %v424
      %v452 = vmul.f32 %v413, %v424
      %v453 = vmul.f32 %v414, %v424
      %v454 = vmul.f32 %v415, %v424
      %v455 = vmul.f32 %v416, %v424
      %v456 = vmul.f32 %v417, %v424
      %v457 = vmul.f32 %v418, %v424
      %v458 = vld [vmem:[%s5] sm:$0x1]
      %v460 = vlaneseq
      %v461 = vshrl.u32 %v460, 7
      %v462 = vsub.s32 0, %v461
      %v463 = vrot.slane %v458, %v462
      %v465 = vadd.f32 %v426, %v463
      %v466 = vadd.f32 %v427, %v463
      %v467 = vadd.f32 %v428, %v463
      %v468 = vadd.f32 %v429, %v463
      %v469 = vadd.f32 %v430, %v463
      %v470 = vadd.f32 %v431, %v463
      %v471 = vadd.f32 %v432, %v463
      %v472 = vadd.f32 %v433, %v463
      %v473 = vadd.f32 %v434, %v463
      %v474 = vadd.f32 %v435, %v463
      %v475 = vadd.f32 %v436, %v463
      %v476 = vadd.f32 %v437, %v463
      %v477 = vadd.f32 %v438, %v463
      %v478 = vadd.f32 %v439, %v463
      %v479 = vadd.f32 %v440, %v463
      %v480 = vadd.f32 %v441, %v463
      %v481 = vadd.f32 %v442, %v463
      %v482 = vadd.f32 %v443, %v463
      %v483 = vadd.f32 %v444, %v463
      %v484 = vadd.f32 %v445, %v463
      %v485 = vadd.f32 %v446, %v463
      %v486 = vadd.f32 %v447, %v463
      %v487 = vadd.f32 %v448, %v463
      %v488 = vadd.f32 %v449, %v463
      %v489 = vadd.f32 %v450, %v463
      %v490 = vadd.f32 %v451, %v463
      %v491 = vadd.f32 %v452, %v463
      %v492 = vadd.f32 %v453, %v463
      %v493 = vadd.f32 %v454, %v463
      %v494 = vadd.f32 %v455, %v463
      %v495 = vadd.f32 %v456, %v463
      %v496 = vadd.f32 %v457, %v463
      %vm497 = vcmask 31744
      %498 = vst.msk [vmem:[#allocation2] sm:$0xff] %vm497, 0.0
      %499 = vst.msk [vmem:[#allocation2 + $0x8] sm:$0xff] %vm497, 0.0
      %500 = vst.msk [vmem:[#allocation2 + $0x10] sm:$0xff] %vm497, 0.0
      %501 = vst.msk [vmem:[#allocation2 + $0x18] sm:$0xff] %vm497, 0.0
      %502 = vst.msk [vmem:[#allocation2 + $0x20] sm:$0xff] %vm497, 0.0
      %503 = vst.msk [vmem:[#allocation2 + $0x28] sm:$0xff] %vm497, 0.0
      %504 = vst.msk [vmem:[#allocation2 + $0x30] sm:$0xff] %vm497, 0.0
      %505 = vst.msk [vmem:[#allocation2 + $0x38] sm:$0xff] %vm497, 0.0
      %506 = vst.msk [vmem:[#allocation2 + $0x40] sm:$0xff] %vm497, 0.0
      %507 = vst.msk [vmem:[#allocation2 + $0x48] sm:$0xff] %vm497, 0.0
      %508 = vst.msk [vmem:[#allocation2 + $0x50] sm:$0xff] %vm497, 0.0
      %509 = vst.msk [vmem:[#allocation2 + $0x58] sm:$0xff] %vm497, 0.0
      %510 = vst.msk [vmem:[#allocation2 + $0x60] sm:$0xff] %vm497, 0.0
      %511 = vst.msk [vmem:[#allocation2 + $0x68] sm:$0xff] %vm497, 0.0
      %512 = vst.msk [vmem:[#allocation2 + $0x70] sm:$0xff] %vm497, 0.0
      %513 = vst.msk [vmem:[#allocation2 + $0x78] sm:$0xff] %vm497, 0.0
      %514 = vst.msk [vmem:[#allocation2 + $0x80] sm:$0xff] %vm497, 0.0
      %515 = vst.msk [vmem:[#allocation2 + $0x88] sm:$0xff] %vm497, 0.0
      %516 = vst.msk [vmem:[#allocation2 + $0x90] sm:$0xff] %vm497, 0.0
      %517 = vst.msk [vmem:[#allocation2 + $0x98] sm:$0xff] %vm497, 0.0
      %518 = vst.msk [vmem:[#allocation2 + $0xa0] sm:$0xff] %vm497, 0.0
      %519 = vst.msk [vmem:[#allocation2 + $0xa8] sm:$0xff] %vm497, 0.0
      %520 = vst.msk [vmem:[#allocation2 + $0xb0] sm:$0xff] %vm497, 0.0
      %521 = vst.msk [vmem:[#allocation2 + $0xb8] sm:$0xff] %vm497, 0.0
      %522 = vst.msk [vmem:[#allocation2 + $0xc0] sm:$0xff] %vm497, 0.0
      %523 = vst.msk [vmem:[#allocation2 + $0xc8] sm:$0xff] %vm497, 0.0
      %524 = vst.msk [vmem:[#allocation2 + $0xd0] sm:$0xff] %vm497, 0.0
      %525 = vst.msk [vmem:[#allocation2 + $0xd8] sm:$0xff] %vm497, 0.0
      %526 = vst.msk [vmem:[#allocation2 + $0xe0] sm:$0xff] %vm497, 0.0
      %527 = vst.msk [vmem:[#allocation2 + $0xe8] sm:$0xff] %vm497, 0.0
      %528 = vst.msk [vmem:[#allocation2 + $0xf0] sm:$0xff] %vm497, 0.0
      %529 = vst.msk [vmem:[#allocation2 + $0xf8] sm:$0xff] %vm497, 0.0
      %530 = vst.msk [vmem:[#allocation2 + $0x100] sm:$0xff] %vm497, 0.0
      %531 = vst.msk [vmem:[#allocation2 + $0x108] sm:$0xff] %vm497, 0.0
      %532 = vst.msk [vmem:[#allocation2 + $0x110] sm:$0xff] %vm497, 0.0
      %533 = vst.msk [vmem:[#allocation2 + $0x118] sm:$0xff] %vm497, 0.0
      %534 = vst.msk [vmem:[#allocation2 + $0x120] sm:$0xff] %vm497, 0.0
      %535 = vst.msk [vmem:[#allocation2 + $0x128] sm:$0xff] %vm497, 0.0
      %536 = vst.msk [vmem:[#allocation2 + $0x130] sm:$0xff] %vm497, 0.0
      %537 = vst.msk [vmem:[#allocation2 + $0x138] sm:$0xff] %vm497, 0.0
      %538 = vst.msk [vmem:[#allocation2 + $0x140] sm:$0xff] %vm497, 0.0
      %539 = vst.msk [vmem:[#allocation2 + $0x148] sm:$0xff] %vm497, 0.0
      %540 = vst.msk [vmem:[#allocation2 + $0x150] sm:$0xff] %vm497, 0.0
      %541 = vst.msk [vmem:[#allocation2 + $0x158] sm:$0xff] %vm497, 0.0
      %542 = vst.msk [vmem:[#allocation2 + $0x160] sm:$0xff] %vm497, 0.0
      %543 = vst.msk [vmem:[#allocation2 + $0x168] sm:$0xff] %vm497, 0.0
      %544 = vst.msk [vmem:[#allocation2 + $0x170] sm:$0xff] %vm497, 0.0
      %545 = vst.msk [vmem:[#allocation2 + $0x178] sm:$0xff] %vm497, 0.0
      %546 = vst.msk [vmem:[#allocation2 + $0x180] sm:$0xff] %vm497, 0.0
      %547 = vst.msk [vmem:[#allocation2 + $0x188] sm:$0xff] %vm497, 0.0
      %548 = vst.msk [vmem:[#allocation2 + $0x190] sm:$0xff] %vm497, 0.0
      %549 = vst.msk [vmem:[#allocation2 + $0x198] sm:$0xff] %vm497, 0.0
      %550 = vst.msk [vmem:[#allocation2 + $0x1a0] sm:$0xff] %vm497, 0.0
      %551 = vst.msk [vmem:[#allocation2 + $0x1a8] sm:$0xff] %vm497, 0.0
      %552 = vst.msk [vmem:[#allocation2 + $0x1b0] sm:$0xff] %vm497, 0.0
      %553 = vst.msk [vmem:[#allocation2 + $0x1b8] sm:$0xff] %vm497, 0.0
      %554 = vst.msk [vmem:[#allocation2 + $0x1c0] sm:$0xff] %vm497, 0.0
      %555 = vst.msk [vmem:[#allocation2 + $0x1c8] sm:$0xff] %vm497, 0.0
      %556 = vst.msk [vmem:[#allocation2 + $0x1d0] sm:$0xff] %vm497, 0.0
      %557 = vst.msk [vmem:[#allocation2 + $0x1d8] sm:$0xff] %vm497, 0.0
      %558 = vst.msk [vmem:[#allocation2 + $0x1e0] sm:$0xff] %vm497, 0.0
      %559 = vst.msk [vmem:[#allocation2 + $0x1e8] sm:$0xff] %vm497, 0.0
      %560 = vst.msk [vmem:[#allocation2 + $0x1f0] sm:$0xff] %vm497, 0.0
      %561 = vst.msk [vmem:[#allocation2 + $0x1f8] sm:$0xff] %vm497, 0.0
      %562 = vst.msk [vmem:[#allocation2 + $0x200] sm:$0xff] %vm497, 0.0
      %563 = vst.msk [vmem:[#allocation2 + $0x208] sm:$0xff] %vm497, 0.0
      %564 = vst.msk [vmem:[#allocation2 + $0x210] sm:$0xff] %vm497, 0.0
      %565 = vst.msk [vmem:[#allocation2 + $0x218] sm:$0xff] %vm497, 0.0
      %566 = vst.msk [vmem:[#allocation2 + $0x220] sm:$0xff] %vm497, 0.0
      %567 = vst.msk [vmem:[#allocation2 + $0x228] sm:$0xff] %vm497, 0.0
      %568 = vst.msk [vmem:[#allocation2 + $0x230] sm:$0xff] %vm497, 0.0
      %569 = vst.msk [vmem:[#allocation2 + $0x238] sm:$0xff] %vm497, 0.0
      %s570 = scalar_lea.vmem [#allocation2], 32
      %571 = vst.msk [vmem:[%s570 + $0x8] sm:$0xff] %vm497, %v465
      %572 = vst.msk [vmem:[%s570 + $0x10] sm:$0xff] %vm497, %v466
      %573 = vst.msk [vmem:[%s570 + $0x28] sm:$0xff] %vm497, %v467
      %574 = vst.msk [vmem:[%s570 + $0x30] sm:$0xff] %vm497, %v468
      %575 = vst.msk [vmem:[%s570 + $0x48] sm:$0xff] %vm497, %v469
      %576 = vst.msk [vmem:[%s570 + $0x50] sm:$0xff] %vm497, %v470
      %577 = vst.msk [vmem:[%s570 + $0x68] sm:$0xff] %vm497, %v471
      %578 = vst.msk [vmem:[%s570 + $0x70] sm:$0xff] %vm497, %v472
      %579 = vst.msk [vmem:[%s570 + $0x88] sm:$0xff] %vm497, %v473
      %580 = vst.msk [vmem:[%s570 + $0x90] sm:$0xff] %vm497, %v474
      %581 = vst.msk [vmem:[%s570 + $0xa8] sm:$0xff] %vm497, %v475
      %582 = vst.msk [vmem:[%s570 + $0xb0] sm:$0xff] %vm497, %v476
      %583 = vst.msk [vmem:[%s570 + $0xc8] sm:$0xff] %vm497, %v477
      %584 = vst.msk [vmem:[%s570 + $0xd0] sm:$0xff] %vm497, %v478
      %585 = vst.msk [vmem:[%s570 + $0xe8] sm:$0xff] %vm497, %v479
      %586 = vst.msk [vmem:[%s570 + $0xf0] sm:$0xff] %vm497, %v480
      %587 = vst.msk [vmem:[%s570 + $0x108] sm:$0xff] %vm497, %v481
      %588 = vst.msk [vmem:[%s570 + $0x110] sm:$0xff] %vm497, %v482
      %589 = vst.msk [vmem:[%s570 + $0x128] sm:$0xff] %vm497, %v483
      %590 = vst.msk [vmem:[%s570 + $0x130] sm:$0xff] %vm497, %v484
      %591 = vst.msk [vmem:[%s570 + $0x148] sm:$0xff] %vm497, %v485
      %592 = vst.msk [vmem:[%s570 + $0x150] sm:$0xff] %vm497, %v486
      %593 = vst.msk [vmem:[%s570 + $0x168] sm:$0xff] %vm497, %v487
      %594 = vst.msk [vmem:[%s570 + $0x170] sm:$0xff] %vm497, %v488
      %595 = vst.msk [vmem:[%s570 + $0x188] sm:$0xff] %vm497, %v489
      %596 = vst.msk [vmem:[%s570 + $0x190] sm:$0xff] %vm497, %v490
      %597 = vst.msk [vmem:[%s570 + $0x1a8] sm:$0xff] %vm497, %v491
      %598 = vst.msk [vmem:[%s570 + $0x1b0] sm:$0xff] %vm497, %v492
      %599 = vst.msk [vmem:[%s570 + $0x1c8] sm:$0xff] %vm497, %v493
      %600 = vst.msk [vmem:[%s570 + $0x1d0] sm:$0xff] %vm497, %v494
      %601 = vst.msk [vmem:[%s570 + $0x1e8] sm:$0xff] %vm497, %v495
      %602 = vst.msk [vmem:[%s570 + $0x1f0] sm:$0xff] %vm497, %v496
      %v603 = vld [vmem:[#allocation2 + $0x7] sm:$0xff]
      %v604 = vld [vmem:[#allocation2 + $0xf] sm:$0xff]
      %v605 = vld [vmem:[#allocation2 + $0x27] sm:$0xff]
      %v606 = vld [vmem:[#allocation2 + $0x2f] sm:$0xff]
      %v607 = vld [vmem:[#allocation2 + $0x47] sm:$0xff]
      %v608 = vld [vmem:[#allocation2 + $0x4f] sm:$0xff]
      %v609 = vld [vmem:[#allocation2 + $0x67] sm:$0xff]
      %v610 = vld [vmem:[#allocation2 + $0x6f] sm:$0xff]
      %v611 = vld [vmem:[#allocation2 + $0x87] sm:$0xff]
      %v612 = vld [vmem:[#allocation2 + $0x8f] sm:$0xff]
      %v613 = vld [vmem:[#allocation2 + $0xa7] sm:$0xff]
      %v614 = vld [vmem:[#allocation2 + $0xaf] sm:$0xff]
      %v615 = vld [vmem:[#allocation2 + $0xc7] sm:$0xff]
      %v616 = vld [vmem:[#allocation2 + $0xcf] sm:$0xff]
      %v617 = vld [vmem:[#allocation2 + $0xe7] sm:$0xff]
      %v618 = vld [vmem:[#allocation2 + $0xef] sm:$0xff]
      %v619 = vld [vmem:[#allocation2 + $0x107] sm:$0xff]
      %v620 = vld [vmem:[#allocation2 + $0x10f] sm:$0xff]
      %v621 = vld [vmem:[#allocation2 + $0x127] sm:$0xff]
      %v622 = vld [vmem:[#allocation2 + $0x12f] sm:$0xff]
      %v623 = vld [vmem:[#allocation2 + $0x147] sm:$0xff]
      %v624 = vld [vmem:[#allocation2 + $0x14f] sm:$0xff]
      %v625 = vld [vmem:[#allocation2 + $0x167] sm:$0xff]
      %v626 = vld [vmem:[#allocation2 + $0x16f] sm:$0xff]
      %v627 = vld [vmem:[#allocation2 + $0x187] sm:$0xff]
      %v628 = vld [vmem:[#allocation2 + $0x18f] sm:$0xff]
      %v629 = vld [vmem:[#allocation2 + $0x1a7] sm:$0xff]
      %v630 = vld [vmem:[#allocation2 + $0x1af] sm:$0xff]
      %v631 = vld [vmem:[#allocation2 + $0x1c7] sm:$0xff]
      %v632 = vld [vmem:[#allocation2 + $0x1cf] sm:$0xff]
      %v633 = vld [vmem:[#allocation2 + $0x1e7] sm:$0xff]
      %v634 = vld [vmem:[#allocation2 + $0x1ef] sm:$0xff]
      %v635 = vld [vmem:[%s1] sm:$0xf]
      %v636 = vld [vmem:[#allocation2 + $0x8] sm:$0xff]
      %v637 = vld [vmem:[#allocation2 + $0x10] sm:$0xff]
      %v638 = vld [vmem:[#allocation2 + $0x28] sm:$0xff]
      %v639 = vld [vmem:[#allocation2 + $0x30] sm:$0xff]
      %v640 = vld [vmem:[#allocation2 + $0x48] sm:$0xff]
      %v641 = vld [vmem:[#allocation2 + $0x50] sm:$0xff]
      %v642 = vld [vmem:[#allocation2 + $0x68] sm:$0xff]
      %v643 = vld [vmem:[#allocation2 + $0x70] sm:$0xff]
      %v644 = vld [vmem:[#allocation2 + $0x88] sm:$0xff]
      %v645 = vld [vmem:[#allocation2 + $0x90] sm:$0xff]
      %v646 = vld [vmem:[#allocation2 + $0xa8] sm:$0xff]
      %v647 = vld [vmem:[#allocation2 + $0xb0] sm:$0xff]
      %v648 = vld [vmem:[#allocation2 + $0xc8] sm:$0xff]
      %v649 = vld [vmem:[#allocation2 + $0xd0] sm:$0xff]
      %v650 = vld [vmem:[#allocation2 + $0xe8] sm:$0xff]
      %v651 = vld [vmem:[#allocation2 + $0xf0] sm:$0xff]
      %v652 = vld [vmem:[#allocation2 + $0x108] sm:$0xff]
      %v653 = vld [vmem:[#allocation2 + $0x110] sm:$0xff]
      %v654 = vld [vmem:[#allocation2 + $0x128] sm:$0xff]
      %v655 = vld [vmem:[#allocation2 + $0x130] sm:$0xff]
      %v656 = vld [vmem:[#allocation2 + $0x148] sm:$0xff]
      %v657 = vld [vmem:[#allocation2 + $0x150] sm:$0xff]
      %v658 = vld [vmem:[#allocation2 + $0x168] sm:$0xff]
      %v659 = vld [vmem:[#allocation2 + $0x170] sm:$0xff]
      %v660 = vld [vmem:[#allocation2 + $0x188] sm:$0xff]
      %v661 = vld [vmem:[#allocation2 + $0x190] sm:$0xff]
      %v662 = vld [vmem:[#allocation2 + $0x1a8] sm:$0xff]
      %v663 = vld [vmem:[#allocation2 + $0x1b0] sm:$0xff]
      %v664 = vld [vmem:[#allocation2 + $0x1c8] sm:$0xff]
      %v665 = vld [vmem:[#allocation2 + $0x1d0] sm:$0xff]
      %v666 = vld [vmem:[#allocation2 + $0x1e8] sm:$0xff]
      %v667 = vld [vmem:[#allocation2 + $0x1f0] sm:$0xff]
      %s668 = scalar_lea.vmem %s1, 4
      %v669 = vld [vmem:[%s668] sm:$0xf]
      %v671 = vsel %vm497, %v636, 0
      %v674 = vsel %vm497, %v637, 0
      %v677 = vsel %vm497, %v638, 0
      %v680 = vsel %vm497, %v639, 0
      %v683 = vsel %vm497, %v640, 0
      %v686 = vsel %vm497, %v641, 0
      %v689 = vsel %vm497, %v642, 0
      %v692 = vsel %vm497, %v643, 0
      %v695 = vsel %vm497, %v644, 0
      %v698 = vsel %vm497, %v645, 0
      %v701 = vsel %vm497, %v646, 0
      %v704 = vsel %vm497, %v647, 0
      %v707 = vsel %vm497, %v648, 0
      %v710 = vsel %vm497, %v649, 0
      %v713 = vsel %vm497, %v650, 0
      %v716 = vsel %vm497, %v651, 0
      %v719 = vsel %vm497, %v652, 0
      %v722 = vsel %vm497, %v653, 0
      %v725 = vsel %vm497, %v654, 0
      %v728 = vsel %vm497, %v655, 0
      %v731 = vsel %vm497, %v656, 0
      %v734 = vsel %vm497, %v657, 0
      %v737 = vsel %vm497, %v658, 0
      %v740 = vsel %vm497, %v659, 0
      %v743 = vsel %vm497, %v660, 0
      %v746 = vsel %vm497, %v661, 0
      %v749 = vsel %vm497, %v662, 0
      %v752 = vsel %vm497, %v663, 0
      %v755 = vsel %vm497, %v664, 0
      %v758 = vsel %vm497, %v665, 0
      %v761 = vsel %vm497, %v666, 0
      %v764 = vsel %vm497, %v667, 0
      %vm766 = vcmask 1043456
      %v768 = vsel %vm766, %v669, 0
      %770 = vmatprep.subr.mxu0 0.0
      %771 = vmatpush1.msra.mxu0 %v768
      %772 = vmatprep.subr.mxu0 0.0
      %773 = vmatpush1.msra.mxu0 0.0
      %774 = vmatprep.subr.mxu0 0.0
      %775 = vmatpush1.msra.mxu0 0.0
      %776 = vmatprep.subr.mxu0 0.0
      %777 = vmatpush1.msra.mxu0 0.0
      %778 = vmatprep.subr.mxu0 0.0
      %779 = vmatpush1.msra.mxu0 0.0
      %780 = vmatprep.subr.mxu0 0.0
      %781 = vmatpush1.msra.mxu0 0.0
      %782 = vmatprep.subr.mxu0 0.0
      %783 = vmatpush1.msra.mxu0 0.0
      %784 = vmatprep.subr.mxu0 0.0
      %785 = vmatpush1.msra.mxu0 0.0
      %786 = vmatprep.subr.mxu0 0.0
      %787 = vmatpush1.msra.mxu0 0.0
      %788 = vmatprep.subr.mxu0 0.0
      %789 = vmatpush1.msra.mxu0 0.0
      %790 = vmatprep.subr.mxu0 0.0
      %791 = vmatpush1.msra.mxu0 0.0
      %792 = vmatprep.subr.mxu0 0.0
      %793 = vmatpush1.msra.mxu0 0.0
      %794 = vmatprep.subr.mxu0 0.0
      %795 = vmatpush1.msra.mxu0 0.0
      %796 = vmatprep.subr.mxu0 0.0
      %797 = vmatpush1.msra.mxu0 0.0
      %798 = vmatprep.subr.mxu0 0.0
      %799 = vmatpush1.msra.mxu0 0.0
      %800 = vmatprep.subr.mxu0 0.0
      %801 = vmatpush1.msra.mxu0 0.0
      %802 = vmatprep.subr.mxu0 0.0
      %803 = vmatpush1.msra.mxu0 0.0
      %804 = vmatprep.subr.mxu0 0.0
      %805 = vmatpush1.msra.mxu0 0.0
      %806 = vmatprep.subr.mxu0 0.0
      %807 = vmatpush1.msra.mxu0 0.0
      %808 = vmatprep.subr.mxu0 0.0
      %809 = vmatpush1.msra.mxu0 0.0
      %810 = vmatprep.subr.mxu0 0.0
      %811 = vmatpush1.msra.mxu0 0.0
      %812 = vmatprep.subr.mxu0 0.0
      %813 = vmatpush1.msra.mxu0 0.0
      %814 = vmatprep.subr.mxu0 0.0
      %815 = vmatpush1.msra.mxu0 0.0
      %816 = vmatprep.subr.mxu0 0.0
      %817 = vmatpush1.msra.mxu0 0.0
      %818 = vmatprep.subr.mxu0 0.0
      %819 = vmatpush1.msra.mxu0 0.0
      %820 = vmatprep.subr.mxu0 0.0
      %821 = vmatpush1.msra.mxu0 0.0
      %822 = vmatprep.subr.mxu0 0.0
      %823 = vmatpush1.msra.mxu0 0.0
      %824 = vmatprep.subr.mxu0 0.0
      %825 = vmatpush1.msra.mxu0 0.0
      %826 = vmatprep.subr.mxu0 0.0
      %827 = vmatpush1.msra.mxu0 0.0
      %828 = vmatprep.subr.mxu0 0.0
      %829 = vmatpush1.msra.mxu0 0.0
      %830 = vmatprep.subr.mxu0 0.0
      %831 = vmatpush1.msra.mxu0 0.0
      %832 = vmatprep.subr.mxu0 0.0
      %833 = vmatpush1.msra.mxu0 0.0
      %834 = vmatprep.mubr.f32.mxu0 0.0
      %835 = vmatmul.mubr.f32.gmra.mrb[0].mxu0 %v671
      %v836 = vpop.f32.mrb[0].mxu0
      %v837 = vadd.f32 0.0, %v836
      %v838 = vpop.f32.mrb[0].mxu0
      %839 = vmatprep.mubr.f32.mxu0 0.0
      %840 = vmatmul.mubr.f32.gmra.mrb[0].mxu0 %v674
      %v841 = vpop.f32.mrb[0].mxu0
      %v842 = vadd.f32 0.0, %v841
      %v843 = vpop.f32.mrb[0].mxu0
      %844 = vmatprep.mubr.f32.mxu0 0.0
      %845 = vmatmul.mubr.f32.gmra.mrb[0].mxu0 %v677
      %v846 = vpop.f32.mrb[0].mxu0
      %v847 = vadd.f32 0.0, %v846
      %v848 = vpop.f32.mrb[0].mxu0
      %849 = vmatprep.mubr.f32.mxu0 0.0
      %850 = vmatmul.mubr.f32.gmra.mrb[0].mxu0 %v680
      %v851 = vpop.f32.mrb[0].mxu0
      %v852 = vadd.f32 0.0, %v851
      %v853 = vpop.f32.mrb[0].mxu0
      %854 = vmatprep.mubr.f32.mxu0 0.0
      %855 = vmatmul.mubr.f32.gmra.mrb[0].mxu0 %v683
      %v856 = vpop.f32.mrb[0].mxu0
      %v857 = vadd.f32 0.0, %v856
      %v858 = vpop.f32.mrb[0].mxu0
      %859 = vmatprep.mubr.f32.mxu0 0.0
      %860 = vmatmul.mubr.f32.gmra.mrb[0].mxu0 %v686
      %v861 = vpop.f32.mrb[0].mxu0
      %v862 = vadd.f32 0.0, %v861
      %v863 = vpop.f32.mrb[0].mxu0
      %864 = vmatprep.mubr.f32.mxu0 0.0
      %865 = vmatmul.mubr.f32.gmra.mrb[0].mxu0 %v689
      %v866 = vpop.f32.mrb[0].mxu0
      %v867 = vadd.f32 0.0, %v866
      %v868 = vpop.f32.mrb[0].mxu0
      %869 = vmatprep.mubr.f32.mxu0 0.0
      %870 = vmatmul.mubr.f32.gmra.mrb[0].mxu0 %v692
      %v871 = vpop.f32.mrb[0].mxu0
      %v872 = vadd.f32 0.0, %v871
      %v873 = vpop.f32.mrb[0].mxu0
      %874 = vmatprep.mubr.f32.mxu0 0.0
      %875 = vmatmul.mubr.f32.gmra.mrb[0].mxu0 %v695
      %v876 = vpop.f32.mrb[0].mxu0
      %v877 = vadd.f32 0.0, %v876
      %v878 = vpop.f32.mrb[0].mxu0
      %879 = vmatprep.mubr.f32.mxu0 0.0
      %880 = vmatmul.mubr.f32.gmra.mrb[0].mxu0 %v698
      %v881 = vpop.f32.mrb[0].mxu0
      %v882 = vadd.f32 0.0, %v881
      %v883 = vpop.f32.mrb[0].mxu0
      %884 = vmatprep.mubr.f32.mxu0 0.0
      %885 = vmatmul.mubr.f32.gmra.mrb[0].mxu0 %v701
      %v886 = vpop.f32.mrb[0].mxu0
      %v887 = vadd.f32 0.0, %v886
      %v888 = vpop.f32.mrb[0].mxu0
      %889 = vmatprep.mubr.f32.mxu0 0.0
      %890 = vmatmul.mubr.f32.gmra.mrb[0].mxu0 %v704
      %v891 = vpop.f32.mrb[0].mxu0
      %v892 = vadd.f32 0.0, %v891
      %v893 = vpop.f32.mrb[0].mxu0
      %894 = vmatprep.mubr.f32.mxu0 0.0
      %895 = vmatmul.mubr.f32.gmra.mrb[0].mxu0 %v707
      %v896 = vpop.f32.mrb[0].mxu0
      %v897 = vadd.f32 0.0, %v896
      %v898 = vpop.f32.mrb[0].mxu0
      %899 = vmatprep.mubr.f32.mxu0 0.0
      %900 = vmatmul.mubr.f32.gmra.mrb[0].mxu0 %v710
      %v901 = vpop.f32.mrb[0].mxu0
      %v902 = vadd.f32 0.0, %v901
      %v903 = vpop.f32.mrb[0].mxu0
      %904 = vmatprep.mubr.f32.mxu0 0.0
      %905 = vmatmul.mubr.f32.gmra.mrb[0].mxu0 %v713
      %v906 = vpop.f32.mrb[0].mxu0
      %v907 = vadd.f32 0.0, %v906
      %v908 = vpop.f32.mrb[0].mxu0
      %909 = vmatprep.mubr.f32.mxu0 0.0
      %910 = vmatmul.mubr.f32.gmra.mrb[0].mxu0 %v716
      %v911 = vpop.f32.mrb[0].mxu0
      %v912 = vadd.f32 0.0, %v911
      %v913 = vpop.f32.mrb[0].mxu0
      %914 = vmatprep.mubr.f32.mxu0 0.0
      %915 = vmatmul.mubr.f32.gmra.mrb[0].mxu0 %v719
      %v916 = vpop.f32.mrb[0].mxu0
      %v917 = vadd.f32 0.0, %v916
      %v918 = vpop.f32.mrb[0].mxu0
      %919 = vmatprep.mubr.f32.mxu0 0.0
      %920 = vmatmul.mubr.f32.gmra.mrb[0].mxu0 %v722
      %v921 = vpop.f32.mrb[0].mxu0
      %v922 = vadd.f32 0.0, %v921
      %v923 = vpop.f32.mrb[0].mxu0
      %924 = vmatprep.mubr.f32.mxu0 0.0
      %925 = vmatmul.mubr.f32.gmra.mrb[0].mxu0 %v725
      %v926 = vpop.f32.mrb[0].mxu0
      %v927 = vadd.f32 0.0, %v926
      %v928 = vpop.f32.mrb[0].mxu0
      %929 = vmatprep.mubr.f32.mxu0 0.0
      %930 = vmatmul.mubr.f32.gmra.mrb[0].mxu0 %v728
      %v931 = vpop.f32.mrb[0].mxu0
      %v932 = vadd.f32 0.0, %v931
      %v933 = vpop.f32.mrb[0].mxu0
      %934 = vmatprep.mubr.f32.mxu0 0.0
      %935 = vmatmul.mubr.f32.gmra.mrb[0].mxu0 %v731
      %v936 = vpop.f32.mrb[0].mxu0
      %v937 = vadd.f32 0.0, %v936
      %v938 = vpop.f32.mrb[0].mxu0
      %939 = vmatprep.mubr.f32.mxu0 0.0
      %940 = vmatmul.mubr.f32.gmra.mrb[0].mxu0 %v734
      %v941 = vpop.f32.mrb[0].mxu0
      %v942 = vadd.f32 0.0, %v941
      %v943 = vpop.f32.mrb[0].mxu0
      %944 = vmatprep.mubr.f32.mxu0 0.0
      %945 = vmatmul.mubr.f32.gmra.mrb[0].mxu0 %v737
      %v946 = vpop.f32.mrb[0].mxu0
      %v947 = vadd.f32 0.0, %v946
      %v948 = vpop.f32.mrb[0].mxu0
      %949 = vmatprep.mubr.f32.mxu0 0.0
      %950 = vmatmul.mubr.f32.gmra.mrb[0].mxu0 %v740
      %v951 = vpop.f32.mrb[0].mxu0
      %v952 = vadd.f32 0.0, %v951
      %v953 = vpop.f32.mrb[0].mxu0
      %954 = vmatprep.mubr.f32.mxu0 0.0
      %955 = vmatmul.mubr.f32.gmra.mrb[0].mxu0 %v743
      %v956 = vpop.f32.mrb[0].mxu0
      %v957 = vadd.f32 0.0, %v956
      %v958 = vpop.f32.mrb[0].mxu0
      %959 = vmatprep.mubr.f32.mxu0 0.0
      %960 = vmatmul.mubr.f32.gmra.mrb[0].mxu0 %v746
      %v961 = vpop.f32.mrb[0].mxu0
      %v962 = vadd.f32 0.0, %v961
      %v963 = vpop.f32.mrb[0].mxu0
      %964 = vmatprep.mubr.f32.mxu0 0.0
      %965 = vmatmul.mubr.f32.gmra.mrb[0].mxu0 %v749
      %v966 = vpop.f32.mrb[0].mxu0
      %v967 = vadd.f32 0.0, %v966
      %v968 = vpop.f32.mrb[0].mxu0
      %969 = vmatprep.mubr.f32.mxu0 0.0
      %970 = vmatmul.mubr.f32.gmra.mrb[0].mxu0 %v752
      %v971 = vpop.f32.mrb[0].mxu0
      %v972 = vadd.f32 0.0, %v971
      %v973 = vpop.f32.mrb[0].mxu0
      %974 = vmatprep.mubr.f32.mxu0 0.0
      %975 = vmatmul.mubr.f32.gmra.mrb[0].mxu0 %v755
      %v976 = vpop.f32.mrb[0].mxu0
      %v977 = vadd.f32 0.0, %v976
      %v978 = vpop.f32.mrb[0].mxu0
      %979 = vmatprep.mubr.f32.mxu0 0.0
      %980 = vmatmul.mubr.f32.gmra.mrb[0].mxu0 %v758
      %v981 = vpop.f32.mrb[0].mxu0
      %v982 = vadd.f32 0.0, %v981
      %v983 = vpop.f32.mrb[0].mxu0
      %984 = vmatprep.mubr.f32.mxu0 0.0
      %985 = vmatmul.mubr.f32.gmra.mrb[0].mxu0 %v761
      %v986 = vpop.f32.mrb[0].mxu0
      %v987 = vadd.f32 0.0, %v986
      %v988 = vpop.f32.mrb[0].mxu0
      %989 = vmatprep.mubr.f32.mxu0 0.0
      %990 = vmatmul.mubr.f32.gmra.mrb[0].mxu0 %v764
      %v991 = vpop.f32.mrb[0].mxu0
      %v992 = vadd.f32 0.0, %v991
      %v993 = vpop.f32.mrb[0].mxu0
      %994 = vdwg.mxu0
      %v996 = vsel %vm497, %v603, 0
      %v999 = vsel %vm497, %v604, 0
      %v1002 = vsel %vm497, %v605, 0
      %v1005 = vsel %vm497, %v606, 0
      %v1008 = vsel %vm497, %v607, 0
      %v1011 = vsel %vm497, %v608, 0
      %v1014 = vsel %vm497, %v609, 0
      %v1017 = vsel %vm497, %v610, 0
      %v1020 = vsel %vm497, %v611, 0
      %v1023 = vsel %vm497, %v612, 0
      %v1026 = vsel %vm497, %v613, 0
      %v1029 = vsel %vm497, %v614, 0
      %v1032 = vsel %vm497, %v615, 0
      %v1035 = vsel %vm497, %v616, 0
      %v1038 = vsel %vm497, %v617, 0
      %v1041 = vsel %vm497, %v618, 0
      %v1044 = vsel %vm497, %v619, 0
      %v1047 = vsel %vm497, %v620, 0
      %v1050 = vsel %vm497, %v621, 0
      %v1053 = vsel %vm497, %v622, 0
      %v1056 = vsel %vm497, %v623, 0
      %v1059 = vsel %vm497, %v624, 0
      %v1062 = vsel %vm497, %v625, 0
      %v1065 = vsel %vm497, %v626, 0
      %v1068 = vsel %vm497, %v627, 0
      %v1071 = vsel %vm497, %v628, 0
      %v1074 = vsel %vm497, %v629, 0
      %v1077 = vsel %vm497, %v630, 0
      %v1080 = vsel %vm497, %v631, 0
      %v1083 = vsel %vm497, %v632, 0
      %v1086 = vsel %vm497, %v633, 0
      %v1089 = vsel %vm497, %v634, 0
      %v1092 = vsel %vm766, %v635, 0
      %1094 = vmatprep.subr.mxu0 0.0
      %1095 = vmatpush1.msra.mxu0 %v1092
      %1096 = vmatprep.subr.mxu0 0.0
      %1097 = vmatpush1.msra.mxu0 0.0
      %1098 = vmatprep.subr.mxu0 0.0
      %1099 = vmatpush1.msra.mxu0 0.0
      %1100 = vmatprep.subr.mxu0 0.0
      %1101 = vmatpush1.msra.mxu0 0.0
      %1102 = vmatprep.subr.mxu0 0.0
      %1103 = vmatpush1.msra.mxu0 0.0
      %1104 = vmatprep.subr.mxu0 0.0
      %1105 = vmatpush1.msra.mxu0 0.0
      %1106 = vmatprep.subr.mxu0 0.0
      %1107 = vmatpush1.msra.mxu0 0.0
      %1108 = vmatprep.subr.mxu0 0.0
      %1109 = vmatpush1.msra.mxu0 0.0
      %1110 = vmatprep.subr.mxu0 0.0
      %1111 = vmatpush1.msra.mxu0 0.0
      %1112 = vmatprep.subr.mxu0 0.0
      %1113 = vmatpush1.msra.mxu0 0.0
      %1114 = vmatprep.subr.mxu0 0.0
      %1115 = vmatpush1.msra.mxu0 0.0
      %1116 = vmatprep.subr.mxu0 0.0
      %1117 = vmatpush1.msra.mxu0 0.0
      %1118 = vmatprep.subr.mxu0 0.0
      %1119 = vmatpush1.msra.mxu0 0.0
      %1120 = vmatprep.subr.mxu0 0.0
      %1121 = vmatpush1.msra.mxu0 0.0
      %1122 = vmatprep.subr.mxu0 0.0
      %1123 = vmatpush1.msra.mxu0 0.0
      %1124 = vmatprep.subr.mxu0 0.0
      %1125 = vmatpush1.msra.mxu0 0.0
      %1126 = vmatprep.subr.mxu0 0.0
      %1127 = vmatpush1.msra.mxu0 0.0
      %1128 = vmatprep.subr.mxu0 0.0
      %1129 = vmatpush1.msra.mxu0 0.0
      %1130 = vmatprep.subr.mxu0 0.0
      %1131 = vmatpush1.msra.mxu0 0.0
      %1132 = vmatprep.subr.mxu0 0.0
      %1133 = vmatpush1.msra.mxu0 0.0
      %1134 = vmatprep.subr.mxu0 0.0
      %1135 = vmatpush1.msra.mxu0 0.0
      %1136 = vmatprep.subr.mxu0 0.0
      %1137 = vmatpush1.msra.mxu0 0.0
      %1138 = vmatprep.subr.mxu0 0.0
      %1139 = vmatpush1.msra.mxu0 0.0
      %1140 = vmatprep.subr.mxu0 0.0
      %1141 = vmatpush1.msra.mxu0 0.0
      %1142 = vmatprep.subr.mxu0 0.0
      %1143 = vmatpush1.msra.mxu0 0.0
      %1144 = vmatprep.subr.mxu0 0.0
      %1145 = vmatpush1.msra.mxu0 0.0
      %1146 = vmatprep.subr.mxu0 0.0
      %1147 = vmatpush1.msra.mxu0 0.0
      %1148 = vmatprep.subr.mxu0 0.0
      %1149 = vmatpush1.msra.mxu0 0.0
      %1150 = vmatprep.subr.mxu0 0.0
      %1151 = vmatpush1.msra.mxu0 0.0
      %1152 = vmatprep.subr.mxu0 0.0
      %1153 = vmatpush1.msra.mxu0 0.0
      %1154 = vmatprep.subr.mxu0 0.0
      %1155 = vmatpush1.msra.mxu0 0.0
      %1156 = vmatprep.subr.mxu0 0.0
      %1157 = vmatpush1.msra.mxu0 0.0
      %1158 = vmatprep.mubr.f32.mxu0 0.0
      %1159 = vmatmul.mubr.f32.gmra.mrb[0].mxu0 %v996
      %v1160 = vpop.f32.mrb[0].mxu0
      %v1161 = vadd.f32 %v837, %v1160
      %v1162 = vpop.f32.mrb[0].mxu0
      %1163 = vmatprep.mubr.f32.mxu0 0.0
      %1164 = vmatmul.mubr.f32.gmra.mrb[0].mxu0 %v999
      %v1165 = vpop.f32.mrb[0].mxu0
      %v1166 = vadd.f32 %v842, %v1165
      %v1167 = vpop.f32.mrb[0].mxu0
      %1168 = vmatprep.mubr.f32.mxu0 0.0
      %1169 = vmatmul.mubr.f32.gmra.mrb[0].mxu0 %v1002
      %v1170 = vpop.f32.mrb[0].mxu0
      %v1171 = vadd.f32 %v847, %v1170
      %v1172 = vpop.f32.mrb[0].mxu0
      %1173 = vmatprep.mubr.f32.mxu0 0.0
      %1174 = vmatmul.mubr.f32.gmra.mrb[0].mxu0 %v1005
      %v1175 = vpop.f32.mrb[0].mxu0
      %v1176 = vadd.f32 %v852, %v1175
      %v1177 = vpop.f32.mrb[0].mxu0
      %1178 = vmatprep.mubr.f32.mxu0 0.0
      %1179 = vmatmul.mubr.f32.gmra.mrb[0].mxu0 %v1008
      %v1180 = vpop.f32.mrb[0].mxu0
      %v1181 = vadd.f32 %v857, %v1180
      %v1182 = vpop.f32.mrb[0].mxu0
      %1183 = vmatprep.mubr.f32.mxu0 0.0
      %1184 = vmatmul.mubr.f32.gmra.mrb[0].mxu0 %v1011
      %v1185 = vpop.f32.mrb[0].mxu0
      %v1186 = vadd.f32 %v862, %v1185
      %v1187 = vpop.f32.mrb[0].mxu0
      %1188 = vmatprep.mubr.f32.mxu0 0.0
      %1189 = vmatmul.mubr.f32.gmra.mrb[0].mxu0 %v1014
      %v1190 = vpop.f32.mrb[0].mxu0
      %v1191 = vadd.f32 %v867, %v1190
      %v1192 = vpop.f32.mrb[0].mxu0
      %1193 = vmatprep.mubr.f32.mxu0 0.0
      %1194 = vmatmul.mubr.f32.gmra.mrb[0].mxu0 %v1017
      %v1195 = vpop.f32.mrb[0].mxu0
      %v1196 = vadd.f32 %v872, %v1195
      %v1197 = vpop.f32.mrb[0].mxu0
      %1198 = vmatprep.mubr.f32.mxu0 0.0
      %1199 = vmatmul.mubr.f32.gmra.mrb[0].mxu0 %v1020
      %v1200 = vpop.f32.mrb[0].mxu0
      %v1201 = vadd.f32 %v877, %v1200
      %v1202 = vpop.f32.mrb[0].mxu0
      %1203 = vmatprep.mubr.f32.mxu0 0.0
      %1204 = vmatmul.mubr.f32.gmra.mrb[0].mxu0 %v1023
      %v1205 = vpop.f32.mrb[0].mxu0
      %v1206 = vadd.f32 %v882, %v1205
      %v1207 = vpop.f32.mrb[0].mxu0
      %1208 = vmatprep.mubr.f32.mxu0 0.0
      %1209 = vmatmul.mubr.f32.gmra.mrb[0].mxu0 %v1026
      %v1210 = vpop.f32.mrb[0].mxu0
      %v1211 = vadd.f32 %v887, %v1210
      %v1212 = vpop.f32.mrb[0].mxu0
      %1213 = vmatprep.mubr.f32.mxu0 0.0
      %1214 = vmatmul.mubr.f32.gmra.mrb[0].mxu0 %v1029
      %v1215 = vpop.f32.mrb[0].mxu0
      %v1216 = vadd.f32 %v892, %v1215
      %v1217 = vpop.f32.mrb[0].mxu0
      %1218 = vmatprep.mubr.f32.mxu0 0.0
      %1219 = vmatmul.mubr.f32.gmra.mrb[0].mxu0 %v1032
      %v1220 = vpop.f32.mrb[0].mxu0
      %v1221 = vadd.f32 %v897, %v1220
      %v1222 = vpop.f32.mrb[0].mxu0
      %1223 = vmatprep.mubr.f32.mxu0 0.0
      %1224 = vmatmul.mubr.f32.gmra.mrb[0].mxu0 %v1035
      %v1225 = vpop.f32.mrb[0].mxu0
      %v1226 = vadd.f32 %v902, %v1225
      %v1227 = vpop.f32.mrb[0].mxu0
      %1228 = vmatprep.mubr.f32.mxu0 0.0
      %1229 = vmatmul.mubr.f32.gmra.mrb[0].mxu0 %v1038
      %v1230 = vpop.f32.mrb[0].mxu0
      %v1231 = vadd.f32 %v907, %v1230
      %v1232 = vpop.f32.mrb[0].mxu0
      %1233 = vmatprep.mubr.f32.mxu0 0.0
      %1234 = vmatmul.mubr.f32.gmra.mrb[0].mxu0 %v1041
      %v1235 = vpop.f32.mrb[0].mxu0
      %v1236 = vadd.f32 %v912, %v1235
      %v1237 = vpop.f32.mrb[0].mxu0
      %1238 = vmatprep.mubr.f32.mxu0 0.0
      %1239 = vmatmul.mubr.f32.gmra.mrb[0].mxu0 %v1044
      %v1240 = vpop.f32.mrb[0].mxu0
      %v1241 = vadd.f32 %v917, %v1240
      %v1242 = vpop.f32.mrb[0].mxu0
      %1243 = vmatprep.mubr.f32.mxu0 0.0
      %1244 = vmatmul.mubr.f32.gmra.mrb[0].mxu0 %v1047
      %v1245 = vpop.f32.mrb[0].mxu0
      %v1246 = vadd.f32 %v922, %v1245
      %v1247 = vpop.f32.mrb[0].mxu0
      %1248 = vmatprep.mubr.f32.mxu0 0.0
      %1249 = vmatmul.mubr.f32.gmra.mrb[0].mxu0 %v1050
      %v1250 = vpop.f32.mrb[0].mxu0
      %v1251 = vadd.f32 %v927, %v1250
      %v1252 = vpop.f32.mrb[0].mxu0
      %1253 = vmatprep.mubr.f32.mxu0 0.0
      %1254 = vmatmul.mubr.f32.gmra.mrb[0].mxu0 %v1053
      %v1255 = vpop.f32.mrb[0].mxu0
      %v1256 = vadd.f32 %v932, %v1255
      %v1257 = vpop.f32.mrb[0].mxu0
      %1258 = vmatprep.mubr.f32.mxu0 0.0
      %1259 = vmatmul.mubr.f32.gmra.mrb[0].mxu0 %v1056
      %v1260 = vpop.f32.mrb[0].mxu0
      %v1261 = vadd.f32 %v937, %v1260
      %v1262 = vpop.f32.mrb[0].mxu0
      %1263 = vmatprep.mubr.f32.mxu0 0.0
      %1264 = vmatmul.mubr.f32.gmra.mrb[0].mxu0 %v1059
      %v1265 = vpop.f32.mrb[0].mxu0
      %v1266 = vadd.f32 %v942, %v1265
      %v1267 = vpop.f32.mrb[0].mxu0
      %1268 = vmatprep.mubr.f32.mxu0 0.0
      %1269 = vmatmul.mubr.f32.gmra.mrb[0].mxu0 %v1062
      %v1270 = vpop.f32.mrb[0].mxu0
      %v1271 = vadd.f32 %v947, %v1270
      %v1272 = vpop.f32.mrb[0].mxu0
      %1273 = vmatprep.mubr.f32.mxu0 0.0
      %1274 = vmatmul.mubr.f32.gmra.mrb[0].mxu0 %v1065
      %v1275 = vpop.f32.mrb[0].mxu0
      %v1276 = vadd.f32 %v952, %v1275
      %v1277 = vpop.f32.mrb[0].mxu0
      %1278 = vmatprep.mubr.f32.mxu0 0.0
      %1279 = vmatmul.mubr.f32.gmra.mrb[0].mxu0 %v1068
      %v1280 = vpop.f32.mrb[0].mxu0
      %v1281 = vadd.f32 %v957, %v1280
      %v1282 = vpop.f32.mrb[0].mxu0
      %1283 = vmatprep.mubr.f32.mxu0 0.0
      %1284 = vmatmul.mubr.f32.gmra.mrb[0].mxu0 %v1071
      %v1285 = vpop.f32.mrb[0].mxu0
      %v1286 = vadd.f32 %v962, %v1285
      %v1287 = vpop.f32.mrb[0].mxu0
      %1288 = vmatprep.mubr.f32.mxu0 0.0
      %1289 = vmatmul.mubr.f32.gmra.mrb[0].mxu0 %v1074
      %v1290 = vpop.f32.mrb[0].mxu0
      %v1291 = vadd.f32 %v967, %v1290
      %v1292 = vpop.f32.mrb[0].mxu0
      %1293 = vmatprep.mubr.f32.mxu0 0.0
      %1294 = vmatmul.mubr.f32.gmra.mrb[0].mxu0 %v1077
      %v1295 = vpop.f32.mrb[0].mxu0
      %v1296 = vadd.f32 %v972, %v1295
      %v1297 = vpop.f32.mrb[0].mxu0
      %1298 = vmatprep.mubr.f32.mxu0 0.0
      %1299 = vmatmul.mubr.f32.gmra.mrb[0].mxu0 %v1080
      %v1300 = vpop.f32.mrb[0].mxu0
      %v1301 = vadd.f32 %v977, %v1300
      %v1302 = vpop.f32.mrb[0].mxu0
      %1303 = vmatprep.mubr.f32.mxu0 0.0
      %1304 = vmatmul.mubr.f32.gmra.mrb[0].mxu0 %v1083
      %v1305 = vpop.f32.mrb[0].mxu0
      %v1306 = vadd.f32 %v982, %v1305
      %v1307 = vpop.f32.mrb[0].mxu0
      %1308 = vmatprep.mubr.f32.mxu0 0.0
      %1309 = vmatmul.mubr.f32.gmra.mrb[0].mxu0 %v1086
      %v1310 = vpop.f32.mrb[0].mxu0
      %v1311 = vadd.f32 %v987, %v1310
      %v1312 = vpop.f32.mrb[0].mxu0
      %1313 = vmatprep.mubr.f32.mxu0 0.0
      %1314 = vmatmul.mubr.f32.gmra.mrb[0].mxu0 %v1089
      %v1315 = vpop.f32.mrb[0].mxu0
      %v1316 = vadd.f32 %v992, %v1315
      %v1317 = vpop.f32.mrb[0].mxu0
      %1318 = vdwg.mxu0
      %v1319 = vld [vmem:[#allocation2 + $0x9] sm:$0xff]
      %v1320 = vld [vmem:[#allocation2 + $0x11] sm:$0xff]
      %v1321 = vld [vmem:[#allocation2 + $0x29] sm:$0xff]
      %v1322 = vld [vmem:[#allocation2 + $0x31] sm:$0xff]
      %v1323 = vld [vmem:[#allocation2 + $0x49] sm:$0xff]
      %v1324 = vld [vmem:[#allocation2 + $0x51] sm:$0xff]
      %v1325 = vld [vmem:[#allocation2 + $0x69] sm:$0xff]
      %v1326 = vld [vmem:[#allocation2 + $0x71] sm:$0xff]
      %v1327 = vld [vmem:[#allocation2 + $0x89] sm:$0xff]
      %v1328 = vld [vmem:[#allocation2 + $0x91] sm:$0xff]
      %v1329 = vld [vmem:[#allocation2 + $0xa9] sm:$0xff]
      %v1330 = vld [vmem:[#allocation2 + $0xb1] sm:$0xff]
      %v1331 = vld [vmem:[#allocation2 + $0xc9] sm:$0xff]
      %v1332 = vld [vmem:[#allocation2 + $0xd1] sm:$0xff]
      %v1333 = vld [vmem:[#allocation2 + $0xe9] sm:$0xff]
      %v1334 = vld [vmem:[#allocation2 + $0xf1] sm:$0xff]
      %v1335 = vld [vmem:[#allocation2 + $0x109] sm:$0xff]
      %v1336 = vld [vmem:[#allocation2 + $0x111] sm:$0xff]
      %v1337 = vld [vmem:[#allocation2 + $0x129] sm:$0xff]
      %v1338 = vld [vmem:[#allocation2 + $0x131] sm:$0xff]
      %v1339 = vld [vmem:[#allocation2 + $0x149] sm:$0xff]
      %v1340 = vld [vmem:[#allocation2 + $0x151] sm:$0xff]
      %v1341 = vld [vmem:[#allocation2 + $0x169] sm:$0xff]
      %v1342 = vld [vmem:[#allocation2 + $0x171] sm:$0xff]
      %v1343 = vld [vmem:[#allocation2 + $0x189] sm:$0xff]
      %v1344 = vld [vmem:[#allocation2 + $0x191] sm:$0xff]
      %v1345 = vld [vmem:[#allocation2 + $0x1a9] sm:$0xff]
      %v1346 = vld [vmem:[#allocation2 + $0x1b1] sm:$0xff]
      %v1347 = vld [vmem:[#allocation2 + $0x1c9] sm:$0xff]
      %v1348 = vld [vmem:[#allocation2 + $0x1d1] sm:$0xff]
      %v1349 = vld [vmem:[#allocation2 + $0x1e9] sm:$0xff]
      %v1350 = vld [vmem:[#allocation2 + $0x1f1] sm:$0xff]
      %s1351 = scalar_lea.vmem %s1, 8
      %v1352 = vld [vmem:[%s1351] sm:$0xf]
      %v1354 = vsel %vm497, %v1319, 0
      %v1357 = vsel %vm497, %v1320, 0
      %v1360 = vsel %vm497, %v1321, 0
      %v1363 = vsel %vm497, %v1322, 0
      %v1366 = vsel %vm497, %v1323, 0
      %v1369 = vsel %vm497, %v1324, 0
      %v1372 = vsel %vm497, %v1325, 0
      %v1375 = vsel %vm497, %v1326, 0
      %v1378 = vsel %vm497, %v1327, 0
      %v1381 = vsel %vm497, %v1328, 0
      %v1384 = vsel %vm497, %v1329, 0
      %v1387 = vsel %vm497, %v1330, 0
      %v1390 = vsel %vm497, %v1331, 0
      %v1393 = vsel %vm497, %v1332, 0
      %v1396 = vsel %vm497, %v1333, 0
      %v1399 = vsel %vm497, %v1334, 0
      %v1402 = vsel %vm497, %v1335, 0
      %v1405 = vsel %vm497, %v1336, 0
      %v1408 = vsel %vm497, %v1337, 0
      %v1411 = vsel %vm497, %v1338, 0
      %v1414 = vsel %vm497, %v1339, 0
      %v1417 = vsel %vm497, %v1340, 0
      %v1420 = vsel %vm497, %v1341, 0
      %v1423 = vsel %vm497, %v1342, 0
      %v1426 = vsel %vm497, %v1343, 0
      %v1429 = vsel %vm497, %v1344, 0
      %v1432 = vsel %vm497, %v1345, 0
      %v1435 = vsel %vm497, %v1346, 0
      %v1438 = vsel %vm497, %v1347, 0
      %v1441 = vsel %vm497, %v1348, 0
      %v1444 = vsel %vm497, %v1349, 0
      %v1447 = vsel %vm497, %v1350, 0
      %v1450 = vsel %vm766, %v1352, 0
      %1452 = vmatprep.subr.mxu0 0.0
      %1453 = vmatpush1.msra.mxu0 %v1450
      %1454 = vmatprep.subr.mxu0 0.0
      %1455 = vmatpush1.msra.mxu0 0.0
      %1456 = vmatprep.subr.mxu0 0.0
      %1457 = vmatpush1.msra.mxu0 0.0
      %1458 = vmatprep.subr.mxu0 0.0
      %1459 = vmatpush1.msra.mxu0 0.0
      %1460 = vmatprep.subr.mxu0 0.0
      %1461 = vmatpush1.msra.mxu0 0.0
      %1462 = vmatprep.subr.mxu0 0.0
      %1463 = vmatpush1.msra.mxu0 0.0
      %1464 = vmatprep.subr.mxu0 0.0
      %1465 = vmatpush1.msra.mxu0 0.0
      %1466 = vmatprep.subr.mxu0 0.0
      %1467 = vmatpush1.msra.mxu0 0.0
      %1468 = vmatprep.subr.mxu0 0.0
      %1469 = vmatpush1.msra.mxu0 0.0
      %1470 = vmatprep.subr.mxu0 0.0
      %1471 = vmatpush1.msra.mxu0 0.0
      %1472 = vmatprep.subr.mxu0 0.0
      %1473 = vmatpush1.msra.mxu0 0.0
      %1474 = vmatprep.subr.mxu0 0.0
      %1475 = vmatpush1.msra.mxu0 0.0
      %1476 = vmatprep.subr.mxu0 0.0
      %1477 = vmatpush1.msra.mxu0 0.0
      %1478 = vmatprep.subr.mxu0 0.0
      %1479 = vmatpush1.msra.mxu0 0.0
      %1480 = vmatprep.subr.mxu0 0.0
      %1481 = vmatpush1.msra.mxu0 0.0
      %1482 = vmatprep.subr.mxu0 0.0
      %1483 = vmatpush1.msra.mxu0 0.0
      %1484 = vmatprep.subr.mxu0 0.0
      %1485 = vmatpush1.msra.mxu0 0.0
      %1486 = vmatprep.subr.mxu0 0.0
      %1487 = vmatpush1.msra.mxu0 0.0
      %1488 = vmatprep.subr.mxu0 0.0
      %1489 = vmatpush1.msra.mxu0 0.0
      %1490 = vmatprep.subr.mxu0 0.0
      %1491 = vmatpush1.msra.mxu0 0.0
      %1492 = vmatprep.subr.mxu0 0.0
      %1493 = vmatpush1.msra.mxu0 0.0
      %1494 = vmatprep.subr.mxu0 0.0
      %1495 = vmatpush1.msra.mxu0 0.0
      %1496 = vmatprep.subr.mxu0 0.0
      %1497 = vmatpush1.msra.mxu0 0.0
      %1498 = vmatprep.subr.mxu0 0.0
      %1499 = vmatpush1.msra.mxu0 0.0
      %1500 = vmatprep.subr.mxu0 0.0
      %1501 = vmatpush1.msra.mxu0 0.0
      %1502 = vmatprep.subr.mxu0 0.0
      %1503 = vmatpush1.msra.mxu0 0.0
      %1504 = vmatprep.subr.mxu0 0.0
      %1505 = vmatpush1.msra.mxu0 0.0
      %1506 = vmatprep.subr.mxu0 0.0
      %1507 = vmatpush1.msra.mxu0 0.0
      %1508 = vmatprep.subr.mxu0 0.0
      %1509 = vmatpush1.msra.mxu0 0.0
      %1510 = vmatprep.subr.mxu0 0.0
      %1511 = vmatpush1.msra.mxu0 0.0
      %1512 = vmatprep.subr.mxu0 0.0
      %1513 = vmatpush1.msra.mxu0 0.0
      %1514 = vmatprep.subr.mxu0 0.0
      %1515 = vmatpush1.msra.mxu0 0.0
      %1516 = vmatprep.mubr.f32.mxu0 0.0
      %1517 = vmatmul.mubr.f32.gmra.mrb[0].mxu0 %v1354
      %v1518 = vpop.f32.mrb[0].mxu0
      %v1519 = vadd.f32 0.0, %v1518
      %v1520 = vpop.f32.mrb[0].mxu0
      %1521 = vmatprep.mubr.f32.mxu0 0.0
      %1522 = vmatmul.mubr.f32.gmra.mrb[0].mxu0 %v1357
      %v1523 = vpop.f32.mrb[0].mxu0
      %v1524 = vadd.f32 0.0, %v1523
      %v1525 = vpop.f32.mrb[0].mxu0
      %1526 = vmatprep.mubr.f32.mxu0 0.0
      %1527 = vmatmul.mubr.f32.gmra.mrb[0].mxu0 %v1360
      %v1528 = vpop.f32.mrb[0].mxu0
      %v1529 = vadd.f32 0.0, %v1528
      %v1530 = vpop.f32.mrb[0].mxu0
      %1531 = vmatprep.mubr.f32.mxu0 0.0
      %1532 = vmatmul.mubr.f32.gmra.mrb[0].mxu0 %v1363
      %v1533 = vpop.f32.mrb[0].mxu0
      %v1534 = vadd.f32 0.0, %v1533
      %v1535 = vpop.f32.mrb[0].mxu0
      %1536 = vmatprep.mubr.f32.mxu0 0.0
      %1537 = vmatmul.mubr.f32.gmra.mrb[0].mxu0 %v1366
      %v1538 = vpop.f32.mrb[0].mxu0
      %v1539 = vadd.f32 0.0, %v1538
      %v1540 = vpop.f32.mrb[0].mxu0
      %1541 = vmatprep.mubr.f32.mxu0 0.0
      %1542 = vmatmul.mubr.f32.gmra.mrb[0].mxu0 %v1369
      %v1543 = vpop.f32.mrb[0].mxu0
      %v1544 = vadd.f32 0.0, %v1543
      %v1545 = vpop.f32.mrb[0].mxu0
      %1546 = vmatprep.mubr.f32.mxu0 0.0
      %1547 = vmatmul.mubr.f32.gmra.mrb[0].mxu0 %v1372
      %v1548 = vpop.f32.mrb[0].mxu0
      %v1549 = vadd.f32 0.0, %v1548
      %v1550 = vpop.f32.mrb[0].mxu0
      %1551 = vmatprep.mubr.f32.mxu0 0.0
      %1552 = vmatmul.mubr.f32.gmra.mrb[0].mxu0 %v1375
      %v1553 = vpop.f32.mrb[0].mxu0
      %v1554 = vadd.f32 0.0, %v1553
      %v1555 = vpop.f32.mrb[0].mxu0
      %1556 = vmatprep.mubr.f32.mxu0 0.0
      %1557 = vmatmul.mubr.f32.gmra.mrb[0].mxu0 %v1378
      %v1558 = vpop.f32.mrb[0].mxu0
      %v1559 = vadd.f32 0.0, %v1558
      %v1560 = vpop.f32.mrb[0].mxu0
      %1561 = vmatprep.mubr.f32.mxu0 0.0
      %1562 = vmatmul.mubr.f32.gmra.mrb[0].mxu0 %v1381
      %v1563 = vpop.f32.mrb[0].mxu0
      %v1564 = vadd.f32 0.0, %v1563
      %v1565 = vpop.f32.mrb[0].mxu0
      %1566 = vmatprep.mubr.f32.mxu0 0.0
      %1567 = vmatmul.mubr.f32.gmra.mrb[0].mxu0 %v1384
      %v1568 = vpop.f32.mrb[0].mxu0
      %v1569 = vadd.f32 0.0, %v1568
      %v1570 = vpop.f32.mrb[0].mxu0
      %1571 = vmatprep.mubr.f32.mxu0 0.0
      %1572 = vmatmul.mubr.f32.gmra.mrb[0].mxu0 %v1387
      %v1573 = vpop.f32.mrb[0].mxu0
      %v1574 = vadd.f32 0.0, %v1573
      %v1575 = vpop.f32.mrb[0].mxu0
      %1576 = vmatprep.mubr.f32.mxu0 0.0
      %1577 = vmatmul.mubr.f32.gmra.mrb[0].mxu0 %v1390
      %v1578 = vpop.f32.mrb[0].mxu0
      %v1579 = vadd.f32 0.0, %v1578
      %v1580 = vpop.f32.mrb[0].mxu0
      %1581 = vmatprep.mubr.f32.mxu0 0.0
      %1582 = vmatmul.mubr.f32.gmra.mrb[0].mxu0 %v1393
      %v1583 = vpop.f32.mrb[0].mxu0
      %v1584 = vadd.f32 0.0, %v1583
      %v1585 = vpop.f32.mrb[0].mxu0
      %1586 = vmatprep.mubr.f32.mxu0 0.0
      %1587 = vmatmul.mubr.f32.gmra.mrb[0].mxu0 %v1396
      %v1588 = vpop.f32.mrb[0].mxu0
      %v1589 = vadd.f32 0.0, %v1588
      %v1590 = vpop.f32.mrb[0].mxu0
      %1591 = vmatprep.mubr.f32.mxu0 0.0
      %1592 = vmatmul.mubr.f32.gmra.mrb[0].mxu0 %v1399
      %v1593 = vpop.f32.mrb[0].mxu0
      %v1594 = vadd.f32 0.0, %v1593
      %v1595 = vpop.f32.mrb[0].mxu0
      %1596 = vmatprep.mubr.f32.mxu0 0.0
      %1597 = vmatmul.mubr.f32.gmra.mrb[0].mxu0 %v1402
      %v1598 = vpop.f32.mrb[0].mxu0
      %v1599 = vadd.f32 0.0, %v1598
      %v1600 = vpop.f32.mrb[0].mxu0
      %1601 = vmatprep.mubr.f32.mxu0 0.0
      %1602 = vmatmul.mubr.f32.gmra.mrb[0].mxu0 %v1405
      %v1603 = vpop.f32.mrb[0].mxu0
      %v1604 = vadd.f32 0.0, %v1603
      %v1605 = vpop.f32.mrb[0].mxu0
      %1606 = vmatprep.mubr.f32.mxu0 0.0
      %1607 = vmatmul.mubr.f32.gmra.mrb[0].mxu0 %v1408
      %v1608 = vpop.f32.mrb[0].mxu0
      %v1609 = vadd.f32 0.0, %v1608
      %v1610 = vpop.f32.mrb[0].mxu0
      %1611 = vmatprep.mubr.f32.mxu0 0.0
      %1612 = vmatmul.mubr.f32.gmra.mrb[0].mxu0 %v1411
      %v1613 = vpop.f32.mrb[0].mxu0
      %v1614 = vadd.f32 0.0, %v1613
      %v1615 = vpop.f32.mrb[0].mxu0
      %1616 = vmatprep.mubr.f32.mxu0 0.0
      %1617 = vmatmul.mubr.f32.gmra.mrb[0].mxu0 %v1414
      %v1618 = vpop.f32.mrb[0].mxu0
      %v1619 = vadd.f32 0.0, %v1618
      %v1620 = vpop.f32.mrb[0].mxu0
      %1621 = vmatprep.mubr.f32.mxu0 0.0
      %1622 = vmatmul.mubr.f32.gmra.mrb[0].mxu0 %v1417
      %v1623 = vpop.f32.mrb[0].mxu0
      %v1624 = vadd.f32 0.0, %v1623
      %v1625 = vpop.f32.mrb[0].mxu0
      %1626 = vmatprep.mubr.f32.mxu0 0.0
      %1627 = vmatmul.mubr.f32.gmra.mrb[0].mxu0 %v1420
      %v1628 = vpop.f32.mrb[0].mxu0
      %v1629 = vadd.f32 0.0, %v1628
      %v1630 = vpop.f32.mrb[0].mxu0
      %1631 = vmatprep.mubr.f32.mxu0 0.0
      %1632 = vmatmul.mubr.f32.gmra.mrb[0].mxu0 %v1423
      %v1633 = vpop.f32.mrb[0].mxu0
      %v1634 = vadd.f32 0.0, %v1633
      %v1635 = vpop.f32.mrb[0].mxu0
      %1636 = vmatprep.mubr.f32.mxu0 0.0
      %1637 = vmatmul.mubr.f32.gmra.mrb[0].mxu0 %v1426
      %v1638 = vpop.f32.mrb[0].mxu0
      %v1639 = vadd.f32 0.0, %v1638
      %v1640 = vpop.f32.mrb[0].mxu0
      %1641 = vmatprep.mubr.f32.mxu0 0.0
      %1642 = vmatmul.mubr.f32.gmra.mrb[0].mxu0 %v1429
      %v1643 = vpop.f32.mrb[0].mxu0
      %v1644 = vadd.f32 0.0, %v1643
      %v1645 = vpop.f32.mrb[0].mxu0
      %1646 = vmatprep.mubr.f32.mxu0 0.0
      %1647 = vmatmul.mubr.f32.gmra.mrb[0].mxu0 %v1432
      %v1648 = vpop.f32.mrb[0].mxu0
      %v1649 = vadd.f32 0.0, %v1648
      %v1650 = vpop.f32.mrb[0].mxu0
      %1651 = vmatprep.mubr.f32.mxu0 0.0
      %1652 = vmatmul.mubr.f32.gmra.mrb[0].mxu0 %v1435
      %v1653 = vpop.f32.mrb[0].mxu0
      %v1654 = vadd.f32 0.0, %v1653
      %v1655 = vpop.f32.mrb[0].mxu0
      %1656 = vmatprep.mubr.f32.mxu0 0.0
      %1657 = vmatmul.mubr.f32.gmra.mrb[0].mxu0 %v1438
      %v1658 = vpop.f32.mrb[0].mxu0
      %v1659 = vadd.f32 0.0, %v1658
      %v1660 = vpop.f32.mrb[0].mxu0
      %1661 = vmatprep.mubr.f32.mxu0 0.0
      %1662 = vmatmul.mubr.f32.gmra.mrb[0].mxu0 %v1441
      %v1663 = vpop.f32.mrb[0].mxu0
      %v1664 = vadd.f32 0.0, %v1663
      %v1665 = vpop.f32.mrb[0].mxu0
      %1666 = vmatprep.mubr.f32.mxu0 0.0
      %1667 = vmatmul.mubr.f32.gmra.mrb[0].mxu0 %v1444
      %v1668 = vpop.f32.mrb[0].mxu0
      %v1669 = vadd.f32 0.0, %v1668
      %v1670 = vpop.f32.mrb[0].mxu0
      %1671 = vmatprep.mubr.f32.mxu0 0.0
      %1672 = vmatmul.mubr.f32.gmra.mrb[0].mxu0 %v1447
      %v1673 = vpop.f32.mrb[0].mxu0
      %v1674 = vadd.f32 0.0, %v1673
      %v1675 = vpop.f32.mrb[0].mxu0
      %1676 = vdwg.mxu0
      %v1677 = vadd.f32 %v1161, %v1519
      %v1678 = vadd.f32 %v1166, %v1524
      %v1679 = vadd.f32 %v1171, %v1529
      %v1680 = vadd.f32 %v1176, %v1534
      %v1681 = vadd.f32 %v1181, %v1539
      %v1682 = vadd.f32 %v1186, %v1544
      %v1683 = vadd.f32 %v1191, %v1549
      %v1684 = vadd.f32 %v1196, %v1554
      %v1685 = vadd.f32 %v1201, %v1559
      %v1686 = vadd.f32 %v1206, %v1564
      %v1687 = vadd.f32 %v1211, %v1569
      %v1688 = vadd.f32 %v1216, %v1574
      %v1689 = vadd.f32 %v1221, %v1579
      %v1690 = vadd.f32 %v1226, %v1584
      %v1691 = vadd.f32 %v1231, %v1589
      %v1692 = vadd.f32 %v1236, %v1594
      %v1693 = vadd.f32 %v1241, %v1599
      %v1694 = vadd.f32 %v1246, %v1604
      %v1695 = vadd.f32 %v1251, %v1609
      %v1696 = vadd.f32 %v1256, %v1614
      %v1697 = vadd.f32 %v1261, %v1619
      %v1698 = vadd.f32 %v1266, %v1624
      %v1699 = vadd.f32 %v1271, %v1629
      %v1700 = vadd.f32 %v1276, %v1634
      %v1701 = vadd.f32 %v1281, %v1639
      %v1702 = vadd.f32 %v1286, %v1644
      %v1703 = vadd.f32 %v1291, %v1649
      %v1704 = vadd.f32 %v1296, %v1654
      %v1705 = vadd.f32 %v1301, %v1659
      %v1706 = vadd.f32 %v1306, %v1664
      %v1707 = vadd.f32 %v1311, %v1669
      %v1708 = vadd.f32 %v1316, %v1674
      %v1709 = vld [vmem:[%s570 + $0x7] sm:$0xff]
      %v1710 = vld [vmem:[%s570 + $0xf] sm:$0xff]
      %v1711 = vld [vmem:[%s570 + $0x27] sm:$0xff]
      %v1712 = vld [vmem:[%s570 + $0x2f] sm:$0xff]
      %v1713 = vld [vmem:[%s570 + $0x47] sm:$0xff]
      %v1714 = vld [vmem:[%s570 + $0x4f] sm:$0xff]
      %v1715 = vld [vmem:[%s570 + $0x67] sm:$0xff]
      %v1716 = vld [vmem:[%s570 + $0x6f] sm:$0xff]
      %v1717 = vld [vmem:[%s570 + $0x87] sm:$0xff]
      %v1718 = vld [vmem:[%s570 + $0x8f] sm:$0xff]
      %v1719 = vld [vmem:[%s570 + $0xa7] sm:$0xff]
      %v1720 = vld [vmem:[%s570 + $0xaf] sm:$0xff]
      %v1721 = vld [vmem:[%s570 + $0xc7] sm:$0xff]
      %v1722 = vld [vmem:[%s570 + $0xcf] sm:$0xff]
      %v1723 = vld [vmem:[%s570 + $0xe7] sm:$0xff]
      %v1724 = vld [vmem:[%s570 + $0xef] sm:$0xff]
      %v1725 = vld [vmem:[%s570 + $0x107] sm:$0xff]
      %v1726 = vld [vmem:[%s570 + $0x10f] sm:$0xff]
      %v1727 = vld [vmem:[%s570 + $0x127] sm:$0xff]
      %v1728 = vld [vmem:[%s570 + $0x12f] sm:$0xff]
      %v1729 = vld [vmem:[%s570 + $0x147] sm:$0xff]
      %v1730 = vld [vmem:[%s570 + $0x14f] sm:$0xff]
      %v1731 = vld [vmem:[%s570 + $0x167] sm:$0xff]
      %v1732 = vld [vmem:[%s570 + $0x16f] sm:$0xff]
      %v1733 = vld [vmem:[%s570 + $0x187] sm:$0xff]
      %v1734 = vld [vmem:[%s570 + $0x18f] sm:$0xff]
      %v1735 = vld [vmem:[%s570 + $0x1a7] sm:$0xff]
      %v1736 = vld [vmem:[%s570 + $0x1af] sm:$0xff]
      %v1737 = vld [vmem:[%s570 + $0x1c7] sm:$0xff]
      %v1738 = vld [vmem:[%s570 + $0x1cf] sm:$0xff]
      %v1739 = vld [vmem:[%s570 + $0x1e7] sm:$0xff]
      %v1740 = vld [vmem:[%s570 + $0x1ef] sm:$0xff]
      %s1741 = scalar_lea.vmem %s1, 12
      %v1742 = vld [vmem:[%s1741] sm:$0xf]
      %v1744 = vsel %vm497, %v1709, 0
      %v1747 = vsel %vm497, %v1710, 0
      %v1750 = vsel %vm497, %v1711, 0
      %v1753 = vsel %vm497, %v1712, 0
      %v1756 = vsel %vm497, %v1713, 0
      %v1759 = vsel %vm497, %v1714, 0
      %v1762 = vsel %vm497, %v1715, 0
      %v1765 = vsel %vm497, %v1716, 0
      %v1768 = vsel %vm497, %v1717, 0
      %v1771 = vsel %vm497, %v1718, 0
      %v1774 = vsel %vm497, %v1719, 0
      %v1777 = vsel %vm497, %v1720, 0
      %v1780 = vsel %vm497, %v1721, 0
      %v1783 = vsel %vm497, %v1722, 0
      %v1786 = vsel %vm497, %v1723, 0
      %v1789 = vsel %vm497, %v1724, 0
      %v1792 = vsel %vm497, %v1725, 0
      %v1795 = vsel %vm497, %v1726, 0
      %v1798 = vsel %vm497, %v1727, 0
      %v1801 = vsel %vm497, %v1728, 0
      %v1804 = vsel %vm497, %v1729, 0
      %v1807 = vsel %vm497, %v1730, 0
      %v1810 = vsel %vm497, %v1731, 0
      %v1813 = vsel %vm497, %v1732, 0
      %v1816 = vsel %vm497, %v1733, 0
      %v1819 = vsel %vm497, %v1734, 0
      %v1822 = vsel %vm497, %v1735, 0
      %v1825 = vsel %vm497, %v1736, 0
      %v1828 = vsel %vm497, %v1737, 0
      %v1831 = vsel %vm497, %v1738, 0
      %v1834 = vsel %vm497, %v1739, 0
      %v1837 = vsel %vm497, %v1740, 0
      %v1840 = vsel %vm766, %v1742, 0
      %1842 = vmatprep.subr.mxu0 0.0
      %1843 = vmatpush1.msra.mxu0 %v1840
      %1844 = vmatprep.subr.mxu0 0.0
      %1845 = vmatpush1.msra.mxu0 0.0
      %1846 = vmatprep.subr.mxu0 0.0
      %1847 = vmatpush1.msra.mxu0 0.0
      %1848 = vmatprep.subr.mxu0 0.0
      %1849 = vmatpush1.msra.mxu0 0.0
      %1850 = vmatprep.subr.mxu0 0.0
      %1851 = vmatpush1.msra.mxu0 0.0
      %1852 = vmatprep.subr.mxu0 0.0
      %1853 = vmatpush1.msra.mxu0 0.0
      %1854 = vmatprep.subr.mxu0 0.0
      %1855 = vmatpush1.msra.mxu0 0.0
      %1856 = vmatprep.subr.mxu0 0.0
      %1857 = vmatpush1.msra.mxu0 0.0
      %1858 = vmatprep.subr.mxu0 0.0
      %1859 = vmatpush1.msra.mxu0 0.0
      %1860 = vmatprep.subr.mxu0 0.0
      %1861 = vmatpush1.msra.mxu0 0.0
      %1862 = vmatprep.subr.mxu0 0.0
      %1863 = vmatpush1.msra.mxu0 0.0
      %1864 = vmatprep.subr.mxu0 0.0
      %1865 = vmatpush1.msra.mxu0 0.0
      %1866 = vmatprep.subr.mxu0 0.0
      %1867 = vmatpush1.msra.mxu0 0.0
      %1868 = vmatprep.subr.mxu0 0.0
      %1869 = vmatpush1.msra.mxu0 0.0
      %1870 = vmatprep.subr.mxu0 0.0
      %1871 = vmatpush1.msra.mxu0 0.0
      %1872 = vmatprep.subr.mxu0 0.0
      %1873 = vmatpush1.msra.mxu0 0.0
      %1874 = vmatprep.subr.mxu0 0.0
      %1875 = vmatpush1.msra.mxu0 0.0
      %1876 = vmatprep.subr.mxu0 0.0
      %1877 = vmatpush1.msra.mxu0 0.0
      %1878 = vmatprep.subr.mxu0 0.0
      %1879 = vmatpush1.msra.mxu0 0.0
      %1880 = vmatprep.subr.mxu0 0.0
      %1881 = vmatpush1.msra.mxu0 0.0
      %1882 = vmatprep.subr.mxu0 0.0
      %1883 = vmatpush1.msra.mxu0 0.0
      %1884 = vmatprep.subr.mxu0 0.0
      %1885 = vmatpush1.msra.mxu0 0.0
      %1886 = vmatprep.subr.mxu0 0.0
      %1887 = vmatpush1.msra.mxu0 0.0
      %1888 = vmatprep.subr.mxu0 0.0
      %1889 = vmatpush1.msra.mxu0 0.0
      %1890 = vmatprep.subr.mxu0 0.0
      %1891 = vmatpush1.msra.mxu0 0.0
      %1892 = vmatprep.subr.mxu0 0.0
      %1893 = vmatpush1.msra.mxu0 0.0
      %1894 = vmatprep.subr.mxu0 0.0
      %1895 = vmatpush1.msra.mxu0 0.0
      %1896 = vmatprep.subr.mxu0 0.0
      %1897 = vmatpush1.msra.mxu0 0.0
      %1898 = vmatprep.subr.mxu0 0.0
      %1899 = vmatpush1.msra.mxu0 0.0
      %1900 = vmatprep.subr.mxu0 0.0
      %1901 = vmatpush1.msra.mxu0 0.0
      %1902 = vmatprep.subr.mxu0 0.0
      %1903 = vmatpush1.msra.mxu0 0.0
      %1904 = vmatprep.subr.mxu0 0.0
      %1905 = vmatpush1.msra.mxu0 0.0
      %1906 = vmatprep.mubr.f32.mxu0 0.0
      %1907 = vmatmul.mubr.f32.gmra.mrb[0].mxu0 %v1744
      %v1908 = vpop.f32.mrb[0].mxu0
      %v1909 = vadd.f32 0.0, %v1908
      %v1910 = vpop.f32.mrb[0].mxu0
      %1911 = vmatprep.mubr.f32.mxu0 0.0
      %1912 = vmatmul.mubr.f32.gmra.mrb[0].mxu0 %v1747
      %v1913 = vpop.f32.mrb[0].mxu0
      %v1914 = vadd.f32 0.0, %v1913
      %v1915 = vpop.f32.mrb[0].mxu0
      %1916 = vmatprep.mubr.f32.mxu0 0.0
      %1917 = vmatmul.mubr.f32.gmra.mrb[0].mxu0 %v1750
      %v1918 = vpop.f32.mrb[0].mxu0
      %v1919 = vadd.f32 0.0, %v1918
      %v1920 = vpop.f32.mrb[0].mxu0
      %1921 = vmatprep.mubr.f32.mxu0 0.0
      %1922 = vmatmul.mubr.f32.gmra.mrb[0].mxu0 %v1753
      %v1923 = vpop.f32.mrb[0].mxu0
      %v1924 = vadd.f32 0.0, %v1923
      %v1925 = vpop.f32.mrb[0].mxu0
      %1926 = vmatprep.mubr.f32.mxu0 0.0
      %1927 = vmatmul.mubr.f32.gmra.mrb[0].mxu0 %v1756
      %v1928 = vpop.f32.mrb[0].mxu0
      %v1929 = vadd.f32 0.0, %v1928
      %v1930 = vpop.f32.mrb[0].mxu0
      %1931 = vmatprep.mubr.f32.mxu0 0.0
      %1932 = vmatmul.mubr.f32.gmra.mrb[0].mxu0 %v1759
      %v1933 = vpop.f32.mrb[0].mxu0
      %v1934 = vadd.f32 0.0, %v1933
      %v1935 = vpop.f32.mrb[0].mxu0
      %1936 = vmatprep.mubr.f32.mxu0 0.0
      %1937 = vmatmul.mubr.f32.gmra.mrb[0].mxu0 %v1762
      %v1938 = vpop.f32.mrb[0].mxu0
      %v1939 = vadd.f32 0.0, %v1938
      %v1940 = vpop.f32.mrb[0].mxu0
      %1941 = vmatprep.mubr.f32.mxu0 0.0
      %1942 = vmatmul.mubr.f32.gmra.mrb[0].mxu0 %v1765
      %v1943 = vpop.f32.mrb[0].mxu0
      %v1944 = vadd.f32 0.0, %v1943
      %v1945 = vpop.f32.mrb[0].mxu0
      %1946 = vmatprep.mubr.f32.mxu0 0.0
      %1947 = vmatmul.mubr.f32.gmra.mrb[0].mxu0 %v1768
      %v1948 = vpop.f32.mrb[0].mxu0
      %v1949 = vadd.f32 0.0, %v1948
      %v1950 = vpop.f32.mrb[0].mxu0
      %1951 = vmatprep.mubr.f32.mxu0 0.0
      %1952 = vmatmul.mubr.f32.gmra.mrb[0].mxu0 %v1771
      %v1953 = vpop.f32.mrb[0].mxu0
      %v1954 = vadd.f32 0.0, %v1953
      %v1955 = vpop.f32.mrb[0].mxu0
      %1956 = vmatprep.mubr.f32.mxu0 0.0
      %1957 = vmatmul.mubr.f32.gmra.mrb[0].mxu0 %v1774
      %v1958 = vpop.f32.mrb[0].mxu0
      %v1959 = vadd.f32 0.0, %v1958
      %v1960 = vpop.f32.mrb[0].mxu0
      %1961 = vmatprep.mubr.f32.mxu0 0.0
      %1962 = vmatmul.mubr.f32.gmra.mrb[0].mxu0 %v1777
      %v1963 = vpop.f32.mrb[0].mxu0
      %v1964 = vadd.f32 0.0, %v1963
      %v1965 = vpop.f32.mrb[0].mxu0
      %1966 = vmatprep.mubr.f32.mxu0 0.0
      %1967 = vmatmul.mubr.f32.gmra.mrb[0].mxu0 %v1780
      %v1968 = vpop.f32.mrb[0].mxu0
      %v1969 = vadd.f32 0.0, %v1968
      %v1970 = vpop.f32.mrb[0].mxu0
      %1971 = vmatprep.mubr.f32.mxu0 0.0
      %1972 = vmatmul.mubr.f32.gmra.mrb[0].mxu0 %v1783
      %v1973 = vpop.f32.mrb[0].mxu0
      %v1974 = vadd.f32 0.0, %v1973
      %v1975 = vpop.f32.mrb[0].mxu0
      %1976 = vmatprep.mubr.f32.mxu0 0.0
      %1977 = vmatmul.mubr.f32.gmra.mrb[0].mxu0 %v1786
      %v1978 = vpop.f32.mrb[0].mxu0
      %v1979 = vadd.f32 0.0, %v1978
      %v1980 = vpop.f32.mrb[0].mxu0
      %1981 = vmatprep.mubr.f32.mxu0 0.0
      %1982 = vmatmul.mubr.f32.gmra.mrb[0].mxu0 %v1789
      %v1983 = vpop.f32.mrb[0].mxu0
      %v1984 = vadd.f32 0.0, %v1983
      %v1985 = vpop.f32.mrb[0].mxu0
      %1986 = vmatprep.mubr.f32.mxu0 0.0
      %1987 = vmatmul.mubr.f32.gmra.mrb[0].mxu0 %v1792
      %v1988 = vpop.f32.mrb[0].mxu0
      %v1989 = vadd.f32 0.0, %v1988
      %v1990 = vpop.f32.mrb[0].mxu0
      %1991 = vmatprep.mubr.f32.mxu0 0.0
      %1992 = vmatmul.mubr.f32.gmra.mrb[0].mxu0 %v1795
      %v1993 = vpop.f32.mrb[0].mxu0
      %v1994 = vadd.f32 0.0, %v1993
      %v1995 = vpop.f32.mrb[0].mxu0
      %1996 = vmatprep.mubr.f32.mxu0 0.0
      %1997 = vmatmul.mubr.f32.gmra.mrb[0].mxu0 %v1798
      %v1998 = vpop.f32.mrb[0].mxu0
      %v1999 = vadd.f32 0.0, %v1998
      %v2000 = vpop.f32.mrb[0].mxu0
      %2001 = vmatprep.mubr.f32.mxu0 0.0
      %2002 = vmatmul.mubr.f32.gmra.mrb[0].mxu0 %v1801
      %v2003 = vpop.f32.mrb[0].mxu0
      %v2004 = vadd.f32 0.0, %v2003
      %v2005 = vpop.f32.mrb[0].mxu0
      %2006 = vmatprep.mubr.f32.mxu0 0.0
      %2007 = vmatmul.mubr.f32.gmra.mrb[0].mxu0 %v1804
      %v2008 = vpop.f32.mrb[0].mxu0
      %v2009 = vadd.f32 0.0, %v2008
      %v2010 = vpop.f32.mrb[0].mxu0
      %2011 = vmatprep.mubr.f32.mxu0 0.0
      %2012 = vmatmul.mubr.f32.gmra.mrb[0].mxu0 %v1807
      %v2013 = vpop.f32.mrb[0].mxu0
      %v2014 = vadd.f32 0.0, %v2013
      %v2015 = vpop.f32.mrb[0].mxu0
      %2016 = vmatprep.mubr.f32.mxu0 0.0
      %2017 = vmatmul.mubr.f32.gmra.mrb[0].mxu0 %v1810
      %v2018 = vpop.f32.mrb[0].mxu0
      %v2019 = vadd.f32 0.0, %v2018
      %v2020 = vpop.f32.mrb[0].mxu0
      %2021 = vmatprep.mubr.f32.mxu0 0.0
      %2022 = vmatmul.mubr.f32.gmra.mrb[0].mxu0 %v1813
      %v2023 = vpop.f32.mrb[0].mxu0
      %v2024 = vadd.f32 0.0, %v2023
      %v2025 = vpop.f32.mrb[0].mxu0
      %2026 = vmatprep.mubr.f32.mxu0 0.0
      %2027 = vmatmul.mubr.f32.gmra.mrb[0].mxu0 %v1816
      %v2028 = vpop.f32.mrb[0].mxu0
      %v2029 = vadd.f32 0.0, %v2028
      %v2030 = vpop.f32.mrb[0].mxu0
      %2031 = vmatprep.mubr.f32.mxu0 0.0
      %2032 = vmatmul.mubr.f32.gmra.mrb[0].mxu0 %v1819
      %v2033 = vpop.f32.mrb[0].mxu0
      %v2034 = vadd.f32 0.0, %v2033
      %v2035 = vpop.f32.mrb[0].mxu0
      %2036 = vmatprep.mubr.f32.mxu0 0.0
      %2037 = vmatmul.mubr.f32.gmra.mrb[0].mxu0 %v1822
      %v2038 = vpop.f32.mrb[0].mxu0
      %v2039 = vadd.f32 0.0, %v2038
      %v2040 = vpop.f32.mrb[0].mxu0
      %2041 = vmatprep.mubr.f32.mxu0 0.0
      %2042 = vmatmul.mubr.f32.gmra.mrb[0].mxu0 %v1825
      %v2043 = vpop.f32.mrb[0].mxu0
      %v2044 = vadd.f32 0.0, %v2043
      %v2045 = vpop.f32.mrb[0].mxu0
      %2046 = vmatprep.mubr.f32.mxu0 0.0
      %2047 = vmatmul.mubr.f32.gmra.mrb[0].mxu0 %v1828
      %v2048 = vpop.f32.mrb[0].mxu0
      %v2049 = vadd.f32 0.0, %v2048
      %v2050 = vpop.f32.mrb[0].mxu0
      %2051 = vmatprep.mubr.f32.mxu0 0.0
      %2052 = vmatmul.mubr.f32.gmra.mrb[0].mxu0 %v1831
      %v2053 = vpop.f32.mrb[0].mxu0
      %v2054 = vadd.f32 0.0, %v2053
      %v2055 = vpop.f32.mrb[0].mxu0
      %2056 = vmatprep.mubr.f32.mxu0 0.0
      %2057 = vmatmul.mubr.f32.gmra.mrb[0].mxu0 %v1834
      %v2058 = vpop.f32.mrb[0].mxu0
      %v2059 = vadd.f32 0.0, %v2058
      %v2060 = vpop.f32.mrb[0].mxu0
      %2061 = vmatprep.mubr.f32.mxu0 0.0
      %2062 = vmatmul.mubr.f32.gmra.mrb[0].mxu0 %v1837
      %v2063 = vpop.f32.mrb[0].mxu0
      %v2064 = vadd.f32 0.0, %v2063
      %v2065 = vpop.f32.mrb[0].mxu0
      %2066 = vdwg.mxu0
      %v2067 = vadd.f32 %v1677, %v1909
      %v2068 = vadd.f32 %v1678, %v1914
      %v2069 = vadd.f32 %v1679, %v1919
      %v2070 = vadd.f32 %v1680, %v1924
      %v2071 = vadd.f32 %v1681, %v1929
      %v2072 = vadd.f32 %v1682, %v1934
      %v2073 = vadd.f32 %v1683, %v1939
      %v2074 = vadd.f32 %v1684, %v1944
      %v2075 = vadd.f32 %v1685, %v1949
      %v2076 = vadd.f32 %v1686, %v1954
      %v2077 = vadd.f32 %v1687, %v1959
      %v2078 = vadd.f32 %v1688, %v1964
      %v2079 = vadd.f32 %v1689, %v1969
      %v2080 = vadd.f32 %v1690, %v1974
      %v2081 = vadd.f32 %v1691, %v1979
      %v2082 = vadd.f32 %v1692, %v1984
      %v2083 = vadd.f32 %v1693, %v1989
      %v2084 = vadd.f32 %v1694, %v1994
      %v2085 = vadd.f32 %v1695, %v1999
      %v2086 = vadd.f32 %v1696, %v2004
      %v2087 = vadd.f32 %v1697, %v2009
      %v2088 = vadd.f32 %v1698, %v2014
      %v2089 = vadd.f32 %v1699, %v2019
      %v2090 = vadd.f32 %v1700, %v2024
      %v2091 = vadd.f32 %v1701, %v2029
      %v2092 = vadd.f32 %v1702, %v2034
      %v2093 = vadd.f32 %v1703, %v2039
      %v2094 = vadd.f32 %v1704, %v2044
      %v2095 = vadd.f32 %v1705, %v2049
      %v2096 = vadd.f32 %v1706, %v2054
      %v2097 = vadd.f32 %v1707, %v2059
      %v2098 = vadd.f32 %v1708, %v2064
      %v2099 = vld [vmem:[%s570 + $0x8] sm:$0xff]
      %v2100 = vld [vmem:[%s570 + $0x10] sm:$0xff]
      %v2101 = vld [vmem:[%s570 + $0x28] sm:$0xff]
      %v2102 = vld [vmem:[%s570 + $0x30] sm:$0xff]
      %v2103 = vld [vmem:[%s570 + $0x48] sm:$0xff]
      %v2104 = vld [vmem:[%s570 + $0x50] sm:$0xff]
      %v2105 = vld [vmem:[%s570 + $0x68] sm:$0xff]
      %v2106 = vld [vmem:[%s570 + $0x70] sm:$0xff]
      %v2107 = vld [vmem:[%s570 + $0x88] sm:$0xff]
      %v2108 = vld [vmem:[%s570 + $0x90] sm:$0xff]
      %v2109 = vld [vmem:[%s570 + $0xa8] sm:$0xff]
      %v2110 = vld [vmem:[%s570 + $0xb0] sm:$0xff]
      %v2111 = vld [vmem:[%s570 + $0xc8] sm:$0xff]
      %v2112 = vld [vmem:[%s570 + $0xd0] sm:$0xff]
      %v2113 = vld [vmem:[%s570 + $0xe8] sm:$0xff]
      %v2114 = vld [vmem:[%s570 + $0xf0] sm:$0xff]
      %v2115 = vld [vmem:[%s570 + $0x108] sm:$0xff]
      %v2116 = vld [vmem:[%s570 + $0x110] sm:$0xff]
      %v2117 = vld [vmem:[%s570 + $0x128] sm:$0xff]
      %v2118 = vld [vmem:[%s570 + $0x130] sm:$0xff]
      %v2119 = vld [vmem:[%s570 + $0x148] sm:$0xff]
      %v2120 = vld [vmem:[%s570 + $0x150] sm:$0xff]
      %v2121 = vld [vmem:[%s570 + $0x168] sm:$0xff]
      %v2122 = vld [vmem:[%s570 + $0x170] sm:$0xff]
      %v2123 = vld [vmem:[%s570 + $0x188] sm:$0xff]
      %v2124 = vld [vmem:[%s570 + $0x190] sm:$0xff]
      %v2125 = vld [vmem:[%s570 + $0x1a8] sm:$0xff]
      %v2126 = vld [vmem:[%s570 + $0x1b0] sm:$0xff]
      %v2127 = vld [vmem:[%s570 + $0x1c8] sm:$0xff]
      %v2128 = vld [vmem:[%s570 + $0x1d0] sm:$0xff]
      %v2129 = vld [vmem:[%s570 + $0x1e8] sm:$0xff]
      %v2130 = vld [vmem:[%s570 + $0x1f0] sm:$0xff]
      %s2131 = scalar_lea.vmem %s1, 16
      %v2132 = vld [vmem:[%s2131] sm:$0xf]
      %v2134 = vsel %vm497, %v2099, 0
      %v2137 = vsel %vm497, %v2100, 0
      %v2140 = vsel %vm497, %v2101, 0
      %v2143 = vsel %vm497, %v2102, 0
      %v2146 = vsel %vm497, %v2103, 0
      %v2149 = vsel %vm497, %v2104, 0
      %v2152 = vsel %vm497, %v2105, 0
      %v2155 = vsel %vm497, %v2106, 0
      %v2158 = vsel %vm497, %v2107, 0
      %v2161 = vsel %vm497, %v2108, 0
      %v2164 = vsel %vm497, %v2109, 0
      %v2167 = vsel %vm497, %v2110, 0
      %v2170 = vsel %vm497, %v2111, 0
      %v2173 = vsel %vm497, %v2112, 0
      %v2176 = vsel %vm497, %v2113, 0
      %v2179 = vsel %vm497, %v2114, 0
      %v2182 = vsel %vm497, %v2115, 0
      %v2185 = vsel %vm497, %v2116, 0
      %v2188 = vsel %vm497, %v2117, 0
      %v2191 = vsel %vm497, %v2118, 0
      %v2194 = vsel %vm497, %v2119, 0
      %v2197 = vsel %vm497, %v2120, 0
      %v2200 = vsel %vm497, %v2121, 0
      %v2203 = vsel %vm497, %v2122, 0
      %v2206 = vsel %vm497, %v2123, 0
      %v2209 = vsel %vm497, %v2124, 0
      %v2212 = vsel %vm497, %v2125, 0
      %v2215 = vsel %vm497, %v2126, 0
      %v2218 = vsel %vm497, %v2127, 0
      %v2221 = vsel %vm497, %v2128, 0
      %v2224 = vsel %vm497, %v2129, 0
      %v2227 = vsel %vm497, %v2130, 0
      %v2230 = vsel %vm766, %v2132, 0
      %2232 = vmatprep.subr.mxu0 0.0
      %2233 = vmatpush1.msra.mxu0 %v2230
      %2234 = vmatprep.subr.mxu0 0.0
      %2235 = vmatpush1.msra.mxu0 0.0
      %2236 = vmatprep.subr.mxu0 0.0
      %2237 = vmatpush1.msra.mxu0 0.0
      %2238 = vmatprep.subr.mxu0 0.0
      %2239 = vmatpush1.msra.mxu0 0.0
      %2240 = vmatprep.subr.mxu0 0.0
      %2241 = vmatpush1.msra.mxu0 0.0
      %2242 = vmatprep.subr.mxu0 0.0
      %2243 = vmatpush1.msra.mxu0 0.0
      %2244 = vmatprep.subr.mxu0 0.0
      %2245 = vmatpush1.msra.mxu0 0.0
      %2246 = vmatprep.subr.mxu0 0.0
      %2247 = vmatpush1.msra.mxu0 0.0
      %2248 = vmatprep.subr.mxu0 0.0
      %2249 = vmatpush1.msra.mxu0 0.0
      %2250 = vmatprep.subr.mxu0 0.0
      %2251 = vmatpush1.msra.mxu0 0.0
      %2252 = vmatprep.subr.mxu0 0.0
      %2253 = vmatpush1.msra.mxu0 0.0
      %2254 = vmatprep.subr.mxu0 0.0
      %2255 = vmatpush1.msra.mxu0 0.0
      %2256 = vmatprep.subr.mxu0 0.0
      %2257 = vmatpush1.msra.mxu0 0.0
      %2258 = vmatprep.subr.mxu0 0.0
      %2259 = vmatpush1.msra.mxu0 0.0
      %2260 = vmatprep.subr.mxu0 0.0
      %2261 = vmatpush1.msra.mxu0 0.0
      %2262 = vmatprep.subr.mxu0 0.0
      %2263 = vmatpush1.msra.mxu0 0.0
      %2264 = vmatprep.subr.mxu0 0.0
      %2265 = vmatpush1.msra.mxu0 0.0
      %2266 = vmatprep.subr.mxu0 0.0
      %2267 = vmatpush1.msra.mxu0 0.0
      %2268 = vmatprep.subr.mxu0 0.0
      %2269 = vmatpush1.msra.mxu0 0.0
      %2270 = vmatprep.subr.mxu0 0.0
      %2271 = vmatpush1.msra.mxu0 0.0
      %2272 = vmatprep.subr.mxu0 0.0
      %2273 = vmatpush1.msra.mxu0 0.0
      %2274 = vmatprep.subr.mxu0 0.0
      %2275 = vmatpush1.msra.mxu0 0.0
      %2276 = vmatprep.subr.mxu0 0.0
      %2277 = vmatpush1.msra.mxu0 0.0
      %2278 = vmatprep.subr.mxu0 0.0
      %2279 = vmatpush1.msra.mxu0 0.0
      %2280 = vmatprep.subr.mxu0 0.0
      %2281 = vmatpush1.msra.mxu0 0.0
      %2282 = vmatprep.subr.mxu0 0.0
      %2283 = vmatpush1.msra.mxu0 0.0
      %2284 = vmatprep.subr.mxu0 0.0
      %2285 = vmatpush1.msra.mxu0 0.0
      %2286 = vmatprep.subr.mxu0 0.0
      %2287 = vmatpush1.msra.mxu0 0.0
      %2288 = vmatprep.subr.mxu0 0.0
      %2289 = vmatpush1.msra.mxu0 0.0
      %2290 = vmatprep.subr.mxu0 0.0
      %2291 = vmatpush1.msra.mxu0 0.0
      %2292 = vmatprep.subr.mxu0 0.0
      %2293 = vmatpush1.msra.mxu0 0.0
      %2294 = vmatprep.subr.mxu0 0.0
      %2295 = vmatpush1.msra.mxu0 0.0
      %2296 = vmatprep.mubr.f32.mxu0 0.0
      %2297 = vmatmul.mubr.f32.gmra.mrb[0].mxu0 %v2134
      %v2298 = vpop.f32.mrb[0].mxu0
      %v2299 = vadd.f32 0.0, %v2298
      %v2300 = vpop.f32.mrb[0].mxu0
      %2301 = vmatprep.mubr.f32.mxu0 0.0
      %2302 = vmatmul.mubr.f32.gmra.mrb[0].mxu0 %v2137
      %v2303 = vpop.f32.mrb[0].mxu0
      %v2304 = vadd.f32 0.0, %v2303
      %v2305 = vpop.f32.mrb[0].mxu0
      %2306 = vmatprep.mubr.f32.mxu0 0.0
      %2307 = vmatmul.mubr.f32.gmra.mrb[0].mxu0 %v2140
      %v2308 = vpop.f32.mrb[0].mxu0
      %v2309 = vadd.f32 0.0, %v2308
      %v2310 = vpop.f32.mrb[0].mxu0
      %2311 = vmatprep.mubr.f32.mxu0 0.0
      %2312 = vmatmul.mubr.f32.gmra.mrb[0].mxu0 %v2143
      %v2313 = vpop.f32.mrb[0].mxu0
      %v2314 = vadd.f32 0.0, %v2313
      %v2315 = vpop.f32.mrb[0].mxu0
      %2316 = vmatprep.mubr.f32.mxu0 0.0
      %2317 = vmatmul.mubr.f32.gmra.mrb[0].mxu0 %v2146
      %v2318 = vpop.f32.mrb[0].mxu0
      %v2319 = vadd.f32 0.0, %v2318
      %v2320 = vpop.f32.mrb[0].mxu0
      %2321 = vmatprep.mubr.f32.mxu0 0.0
      %2322 = vmatmul.mubr.f32.gmra.mrb[0].mxu0 %v2149
      %v2323 = vpop.f32.mrb[0].mxu0
      %v2324 = vadd.f32 0.0, %v2323
      %v2325 = vpop.f32.mrb[0].mxu0
      %2326 = vmatprep.mubr.f32.mxu0 0.0
      %2327 = vmatmul.mubr.f32.gmra.mrb[0].mxu0 %v2152
      %v2328 = vpop.f32.mrb[0].mxu0
      %v2329 = vadd.f32 0.0, %v2328
      %v2330 = vpop.f32.mrb[0].mxu0
      %2331 = vmatprep.mubr.f32.mxu0 0.0
      %2332 = vmatmul.mubr.f32.gmra.mrb[0].mxu0 %v2155
      %v2333 = vpop.f32.mrb[0].mxu0
      %v2334 = vadd.f32 0.0, %v2333
      %v2335 = vpop.f32.mrb[0].mxu0
      %2336 = vmatprep.mubr.f32.mxu0 0.0
      %2337 = vmatmul.mubr.f32.gmra.mrb[0].mxu0 %v2158
      %v2338 = vpop.f32.mrb[0].mxu0
      %v2339 = vadd.f32 0.0, %v2338
      %v2340 = vpop.f32.mrb[0].mxu0
      %2341 = vmatprep.mubr.f32.mxu0 0.0
      %2342 = vmatmul.mubr.f32.gmra.mrb[0].mxu0 %v2161
      %v2343 = vpop.f32.mrb[0].mxu0
      %v2344 = vadd.f32 0.0, %v2343
      %v2345 = vpop.f32.mrb[0].mxu0
      %2346 = vmatprep.mubr.f32.mxu0 0.0
      %2347 = vmatmul.mubr.f32.gmra.mrb[0].mxu0 %v2164
      %v2348 = vpop.f32.mrb[0].mxu0
      %v2349 = vadd.f32 0.0, %v2348
      %v2350 = vpop.f32.mrb[0].mxu0
      %2351 = vmatprep.mubr.f32.mxu0 0.0
      %2352 = vmatmul.mubr.f32.gmra.mrb[0].mxu0 %v2167
      %v2353 = vpop.f32.mrb[0].mxu0
      %v2354 = vadd.f32 0.0, %v2353
      %v2355 = vpop.f32.mrb[0].mxu0
      %2356 = vmatprep.mubr.f32.mxu0 0.0
      %2357 = vmatmul.mubr.f32.gmra.mrb[0].mxu0 %v2170
      %v2358 = vpop.f32.mrb[0].mxu0
      %v2359 = vadd.f32 0.0, %v2358
      %v2360 = vpop.f32.mrb[0].mxu0
      %2361 = vmatprep.mubr.f32.mxu0 0.0
      %2362 = vmatmul.mubr.f32.gmra.mrb[0].mxu0 %v2173
      %v2363 = vpop.f32.mrb[0].mxu0
      %v2364 = vadd.f32 0.0, %v2363
      %v2365 = vpop.f32.mrb[0].mxu0
      %2366 = vmatprep.mubr.f32.mxu0 0.0
      %2367 = vmatmul.mubr.f32.gmra.mrb[0].mxu0 %v2176
      %v2368 = vpop.f32.mrb[0].mxu0
      %v2369 = vadd.f32 0.0, %v2368
      %v2370 = vpop.f32.mrb[0].mxu0
      %2371 = vmatprep.mubr.f32.mxu0 0.0
      %2372 = vmatmul.mubr.f32.gmra.mrb[0].mxu0 %v2179
      %v2373 = vpop.f32.mrb[0].mxu0
      %v2374 = vadd.f32 0.0, %v2373
      %v2375 = vpop.f32.mrb[0].mxu0
      %2376 = vmatprep.mubr.f32.mxu0 0.0
      %2377 = vmatmul.mubr.f32.gmra.mrb[0].mxu0 %v2182
      %v2378 = vpop.f32.mrb[0].mxu0
      %v2379 = vadd.f32 0.0, %v2378
      %v2380 = vpop.f32.mrb[0].mxu0
      %2381 = vmatprep.mubr.f32.mxu0 0.0
      %2382 = vmatmul.mubr.f32.gmra.mrb[0].mxu0 %v2185
      %v2383 = vpop.f32.mrb[0].mxu0
      %v2384 = vadd.f32 0.0, %v2383
      %v2385 = vpop.f32.mrb[0].mxu0
      %2386 = vmatprep.mubr.f32.mxu0 0.0
      %2387 = vmatmul.mubr.f32.gmra.mrb[0].mxu0 %v2188
      %v2388 = vpop.f32.mrb[0].mxu0
      %v2389 = vadd.f32 0.0, %v2388
      %v2390 = vpop.f32.mrb[0].mxu0
      %2391 = vmatprep.mubr.f32.mxu0 0.0
      %2392 = vmatmul.mubr.f32.gmra.mrb[0].mxu0 %v2191
      %v2393 = vpop.f32.mrb[0].mxu0
      %v2394 = vadd.f32 0.0, %v2393
      %v2395 = vpop.f32.mrb[0].mxu0
      %2396 = vmatprep.mubr.f32.mxu0 0.0
      %2397 = vmatmul.mubr.f32.gmra.mrb[0].mxu0 %v2194
      %v2398 = vpop.f32.mrb[0].mxu0
      %v2399 = vadd.f32 0.0, %v2398
      %v2400 = vpop.f32.mrb[0].mxu0
      %2401 = vmatprep.mubr.f32.mxu0 0.0
      %2402 = vmatmul.mubr.f32.gmra.mrb[0].mxu0 %v2197
      %v2403 = vpop.f32.mrb[0].mxu0
      %v2404 = vadd.f32 0.0, %v2403
      %v2405 = vpop.f32.mrb[0].mxu0
      %2406 = vmatprep.mubr.f32.mxu0 0.0
      %2407 = vmatmul.mubr.f32.gmra.mrb[0].mxu0 %v2200
      %v2408 = vpop.f32.mrb[0].mxu0
      %v2409 = vadd.f32 0.0, %v2408
      %v2410 = vpop.f32.mrb[0].mxu0
      %2411 = vmatprep.mubr.f32.mxu0 0.0
      %2412 = vmatmul.mubr.f32.gmra.mrb[0].mxu0 %v2203
      %v2413 = vpop.f32.mrb[0].mxu0
      %v2414 = vadd.f32 0.0, %v2413
      %v2415 = vpop.f32.mrb[0].mxu0
      %2416 = vmatprep.mubr.f32.mxu0 0.0
      %2417 = vmatmul.mubr.f32.gmra.mrb[0].mxu0 %v2206
      %v2418 = vpop.f32.mrb[0].mxu0
      %v2419 = vadd.f32 0.0, %v2418
      %v2420 = vpop.f32.mrb[0].mxu0
      %2421 = vmatprep.mubr.f32.mxu0 0.0
      %2422 = vmatmul.mubr.f32.gmra.mrb[0].mxu0 %v2209
      %v2423 = vpop.f32.mrb[0].mxu0
      %v2424 = vadd.f32 0.0, %v2423
      %v2425 = vpop.f32.mrb[0].mxu0
      %2426 = vmatprep.mubr.f32.mxu0 0.0
      %2427 = vmatmul.mubr.f32.gmra.mrb[0].mxu0 %v2212
      %v2428 = vpop.f32.mrb[0].mxu0
      %v2429 = vadd.f32 0.0, %v2428
      %v2430 = vpop.f32.mrb[0].mxu0
      %2431 = vmatprep.mubr.f32.mxu0 0.0
      %2432 = vmatmul.mubr.f32.gmra.mrb[0].mxu0 %v2215
      %v2433 = vpop.f32.mrb[0].mxu0
      %v2434 = vadd.f32 0.0, %v2433
      %v2435 = vpop.f32.mrb[0].mxu0
      %2436 = vmatprep.mubr.f32.mxu0 0.0
      %2437 = vmatmul.mubr.f32.gmra.mrb[0].mxu0 %v2218
      %v2438 = vpop.f32.mrb[0].mxu0
      %v2439 = vadd.f32 0.0, %v2438
      %v2440 = vpop.f32.mrb[0].mxu0
      %2441 = vmatprep.mubr.f32.mxu0 0.0
      %2442 = vmatmul.mubr.f32.gmra.mrb[0].mxu0 %v2221
      %v2443 = vpop.f32.mrb[0].mxu0
      %v2444 = vadd.f32 0.0, %v2443
      %v2445 = vpop.f32.mrb[0].mxu0
      %2446 = vmatprep.mubr.f32.mxu0 0.0
      %2447 = vmatmul.mubr.f32.gmra.mrb[0].mxu0 %v2224
      %v2448 = vpop.f32.mrb[0].mxu0
      %v2449 = vadd.f32 0.0, %v2448
      %v2450 = vpop.f32.mrb[0].mxu0
      %2451 = vmatprep.mubr.f32.mxu0 0.0
      %2452 = vmatmul.mubr.f32.gmra.mrb[0].mxu0 %v2227
      %v2453 = vpop.f32.mrb[0].mxu0
      %v2454 = vadd.f32 0.0, %v2453
      %v2455 = vpop.f32.mrb[0].mxu0
      %2456 = vdwg.mxu0
      %v2457 = vadd.f32 %v2067, %v2299
      %v2458 = vadd.f32 %v2068, %v2304
      %v2459 = vadd.f32 %v2069, %v2309
      %v2460 = vadd.f32 %v2070, %v2314
      %v2461 = vadd.f32 %v2071, %v2319
      %v2462 = vadd.f32 %v2072, %v2324
      %v2463 = vadd.f32 %v2073, %v2329
      %v2464 = vadd.f32 %v2074, %v2334
      %v2465 = vadd.f32 %v2075, %v2339
      %v2466 = vadd.f32 %v2076, %v2344
      %v2467 = vadd.f32 %v2077, %v2349
      %v2468 = vadd.f32 %v2078, %v2354
      %v2469 = vadd.f32 %v2079, %v2359
      %v2470 = vadd.f32 %v2080, %v2364
      %v2471 = vadd.f32 %v2081, %v2369
      %v2472 = vadd.f32 %v2082, %v2374
      %v2473 = vadd.f32 %v2083, %v2379
      %v2474 = vadd.f32 %v2084, %v2384
      %v2475 = vadd.f32 %v2085, %v2389
      %v2476 = vadd.f32 %v2086, %v2394
      %v2477 = vadd.f32 %v2087, %v2399
      %v2478 = vadd.f32 %v2088, %v2404
      %v2479 = vadd.f32 %v2089, %v2409
      %v2480 = vadd.f32 %v2090, %v2414
      %v2481 = vadd.f32 %v2091, %v2419
      %v2482 = vadd.f32 %v2092, %v2424
      %v2483 = vadd.f32 %v2093, %v2429
      %v2484 = vadd.f32 %v2094, %v2434
      %v2485 = vadd.f32 %v2095, %v2439
      %v2486 = vadd.f32 %v2096, %v2444
      %v2487 = vadd.f32 %v2097, %v2449
      %v2488 = vadd.f32 %v2098, %v2454
      %v2489 = vld [vmem:[%s570 + $0x9] sm:$0xff]
      %v2490 = vld [vmem:[%s570 + $0x11] sm:$0xff]
      %v2491 = vld [vmem:[%s570 + $0x29] sm:$0xff]
      %v2492 = vld [vmem:[%s570 + $0x31] sm:$0xff]
      %v2493 = vld [vmem:[%s570 + $0x49] sm:$0xff]
      %v2494 = vld [vmem:[%s570 + $0x51] sm:$0xff]
      %v2495 = vld [vmem:[%s570 + $0x69] sm:$0xff]
      %v2496 = vld [vmem:[%s570 + $0x71] sm:$0xff]
      %v2497 = vld [vmem:[%s570 + $0x89] sm:$0xff]
      %v2498 = vld [vmem:[%s570 + $0x91] sm:$0xff]
      %v2499 = vld [vmem:[%s570 + $0xa9] sm:$0xff]
      %v2500 = vld [vmem:[%s570 + $0xb1] sm:$0xff]
      %v2501 = vld [vmem:[%s570 + $0xc9] sm:$0xff]
      %v2502 = vld [vmem:[%s570 + $0xd1] sm:$0xff]
      %v2503 = vld [vmem:[%s570 + $0xe9] sm:$0xff]
      %v2504 = vld [vmem:[%s570 + $0xf1] sm:$0xff]
      %v2505 = vld [vmem:[%s570 + $0x109] sm:$0xff]
      %v2506 = vld [vmem:[%s570 + $0x111] sm:$0xff]
      %v2507 = vld [vmem:[%s570 + $0x129] sm:$0xff]
      %v2508 = vld [vmem:[%s570 + $0x131] sm:$0xff]
      %v2509 = vld [vmem:[%s570 + $0x149] sm:$0xff]
      %v2510 = vld [vmem:[%s570 + $0x151] sm:$0xff]
      %v2511 = vld [vmem:[%s570 + $0x169] sm:$0xff]
      %v2512 = vld [vmem:[%s570 + $0x171] sm:$0xff]
      %v2513 = vld [vmem:[%s570 + $0x189] sm:$0xff]
      %v2514 = vld [vmem:[%s570 + $0x191] sm:$0xff]
      %v2515 = vld [vmem:[%s570 + $0x1a9] sm:$0xff]
      %v2516 = vld [vmem:[%s570 + $0x1b1] sm:$0xff]
      %v2517 = vld [vmem:[%s570 + $0x1c9] sm:$0xff]
      %v2518 = vld [vmem:[%s570 + $0x1d1] sm:$0xff]
      %v2519 = vld [vmem:[%s570 + $0x1e9] sm:$0xff]
      %v2520 = vld [vmem:[%s570 + $0x1f1] sm:$0xff]
      %s2521 = scalar_lea.vmem %s1, 20
      %v2522 = vld [vmem:[%s2521] sm:$0xf]
      %v2524 = vsel %vm497, %v2489, 0
      %v2527 = vsel %vm497, %v2490, 0
      %v2530 = vsel %vm497, %v2491, 0
      %v2533 = vsel %vm497, %v2492, 0
      %v2536 = vsel %vm497, %v2493, 0
      %v2539 = vsel %vm497, %v2494, 0
      %v2542 = vsel %vm497, %v2495, 0
      %v2545 = vsel %vm497, %v2496, 0
      %v2548 = vsel %vm497, %v2497, 0
      %v2551 = vsel %vm497, %v2498, 0
      %v2554 = vsel %vm497, %v2499, 0
      %v2557 = vsel %vm497, %v2500, 0
      %v2560 = vsel %vm497, %v2501, 0
      %v2563 = vsel %vm497, %v2502, 0
      %v2566 = vsel %vm497, %v2503, 0
      %v2569 = vsel %vm497, %v2504, 0
      %v2572 = vsel %vm497, %v2505, 0
      %v2575 = vsel %vm497, %v2506, 0
      %v2578 = vsel %vm497, %v2507, 0
      %v2581 = vsel %vm497, %v2508, 0
      %v2584 = vsel %vm497, %v2509, 0
      %v2587 = vsel %vm497, %v2510, 0
      %v2590 = vsel %vm497, %v2511, 0
      %v2593 = vsel %vm497, %v2512, 0
      %v2596 = vsel %vm497, %v2513, 0
      %v2599 = vsel %vm497, %v2514, 0
      %v2602 = vsel %vm497, %v2515, 0
      %v2605 = vsel %vm497, %v2516, 0
      %v2608 = vsel %vm497, %v2517, 0
      %v2611 = vsel %vm497, %v2518, 0
      %v2614 = vsel %vm497, %v2519, 0
      %v2617 = vsel %vm497, %v2520, 0
      %v2620 = vsel %vm766, %v2522, 0
      %2622 = vmatprep.subr.mxu0 0.0
      %2623 = vmatpush1.msra.mxu0 %v2620
      %2624 = vmatprep.subr.mxu0 0.0
      %2625 = vmatpush1.msra.mxu0 0.0
      %2626 = vmatprep.subr.mxu0 0.0
      %2627 = vmatpush1.msra.mxu0 0.0
      %2628 = vmatprep.subr.mxu0 0.0
      %2629 = vmatpush1.msra.mxu0 0.0
      %2630 = vmatprep.subr.mxu0 0.0
      %2631 = vmatpush1.msra.mxu0 0.0
      %2632 = vmatprep.subr.mxu0 0.0
      %2633 = vmatpush1.msra.mxu0 0.0
      %2634 = vmatprep.subr.mxu0 0.0
      %2635 = vmatpush1.msra.mxu0 0.0
      %2636 = vmatprep.subr.mxu0 0.0
      %2637 = vmatpush1.msra.mxu0 0.0
      %2638 = vmatprep.subr.mxu0 0.0
      %2639 = vmatpush1.msra.mxu0 0.0
      %2640 = vmatprep.subr.mxu0 0.0
      %2641 = vmatpush1.msra.mxu0 0.0
      %2642 = vmatprep.subr.mxu0 0.0
      %2643 = vmatpush1.msra.mxu0 0.0
      %2644 = vmatprep.subr.mxu0 0.0
      %2645 = vmatpush1.msra.mxu0 0.0
      %2646 = vmatprep.subr.mxu0 0.0
      %2647 = vmatpush1.msra.mxu0 0.0
      %2648 = vmatprep.subr.mxu0 0.0
      %2649 = vmatpush1.msra.mxu0 0.0
      %2650 = vmatprep.subr.mxu0 0.0
      %2651 = vmatpush1.msra.mxu0 0.0
      %2652 = vmatprep.subr.mxu0 0.0
      %2653 = vmatpush1.msra.mxu0 0.0
      %2654 = vmatprep.subr.mxu0 0.0
      %2655 = vmatpush1.msra.mxu0 0.0
      %2656 = vmatprep.subr.mxu0 0.0
      %2657 = vmatpush1.msra.mxu0 0.0
      %2658 = vmatprep.subr.mxu0 0.0
      %2659 = vmatpush1.msra.mxu0 0.0
      %2660 = vmatprep.subr.mxu0 0.0
      %2661 = vmatpush1.msra.mxu0 0.0
      %2662 = vmatprep.subr.mxu0 0.0
      %2663 = vmatpush1.msra.mxu0 0.0
      %2664 = vmatprep.subr.mxu0 0.0
      %2665 = vmatpush1.msra.mxu0 0.0
      %2666 = vmatprep.subr.mxu0 0.0
      %2667 = vmatpush1.msra.mxu0 0.0
      %2668 = vmatprep.subr.mxu0 0.0
      %2669 = vmatpush1.msra.mxu0 0.0
      %2670 = vmatprep.subr.mxu0 0.0
      %2671 = vmatpush1.msra.mxu0 0.0
      %2672 = vmatprep.subr.mxu0 0.0
      %2673 = vmatpush1.msra.mxu0 0.0
      %2674 = vmatprep.subr.mxu0 0.0
      %2675 = vmatpush1.msra.mxu0 0.0
      %2676 = vmatprep.subr.mxu0 0.0
      %2677 = vmatpush1.msra.mxu0 0.0
      %2678 = vmatprep.subr.mxu0 0.0
      %2679 = vmatpush1.msra.mxu0 0.0
      %2680 = vmatprep.subr.mxu0 0.0
      %2681 = vmatpush1.msra.mxu0 0.0
      %2682 = vmatprep.subr.mxu0 0.0
      %2683 = vmatpush1.msra.mxu0 0.0
      %2684 = vmatprep.subr.mxu0 0.0
      %2685 = vmatpush1.msra.mxu0 0.0
      %2686 = vmatprep.mubr.f32.mxu0 0.0
      %2687 = vmatmul.mubr.f32.gmra.mrb[0].mxu0 %v2524
      %v2688 = vpop.f32.mrb[0].mxu0
      %v2689 = vadd.f32 0.0, %v2688
      %v2690 = vpop.f32.mrb[0].mxu0
      %2691 = vmatprep.mubr.f32.mxu0 0.0
      %2692 = vmatmul.mubr.f32.gmra.mrb[0].mxu0 %v2527
      %v2693 = vpop.f32.mrb[0].mxu0
      %v2694 = vadd.f32 0.0, %v2693
      %v2695 = vpop.f32.mrb[0].mxu0
      %2696 = vmatprep.mubr.f32.mxu0 0.0
      %2697 = vmatmul.mubr.f32.gmra.mrb[0].mxu0 %v2530
      %v2698 = vpop.f32.mrb[0].mxu0
      %v2699 = vadd.f32 0.0, %v2698
      %v2700 = vpop.f32.mrb[0].mxu0
      %2701 = vmatprep.mubr.f32.mxu0 0.0
      %2702 = vmatmul.mubr.f32.gmra.mrb[0].mxu0 %v2533
      %v2703 = vpop.f32.mrb[0].mxu0
      %v2704 = vadd.f32 0.0, %v2703
      %v2705 = vpop.f32.mrb[0].mxu0
      %2706 = vmatprep.mubr.f32.mxu0 0.0
      %2707 = vmatmul.mubr.f32.gmra.mrb[0].mxu0 %v2536
      %v2708 = vpop.f32.mrb[0].mxu0
      %v2709 = vadd.f32 0.0, %v2708
      %v2710 = vpop.f32.mrb[0].mxu0
      %2711 = vmatprep.mubr.f32.mxu0 0.0
      %2712 = vmatmul.mubr.f32.gmra.mrb[0].mxu0 %v2539
      %v2713 = vpop.f32.mrb[0].mxu0
      %v2714 = vadd.f32 0.0, %v2713
      %v2715 = vpop.f32.mrb[0].mxu0
      %2716 = vmatprep.mubr.f32.mxu0 0.0
      %2717 = vmatmul.mubr.f32.gmra.mrb[0].mxu0 %v2542
      %v2718 = vpop.f32.mrb[0].mxu0
      %v2719 = vadd.f32 0.0, %v2718
      %v2720 = vpop.f32.mrb[0].mxu0
      %2721 = vmatprep.mubr.f32.mxu0 0.0
      %2722 = vmatmul.mubr.f32.gmra.mrb[0].mxu0 %v2545
      %v2723 = vpop.f32.mrb[0].mxu0
      %v2724 = vadd.f32 0.0, %v2723
      %v2725 = vpop.f32.mrb[0].mxu0
      %2726 = vmatprep.mubr.f32.mxu0 0.0
      %2727 = vmatmul.mubr.f32.gmra.mrb[0].mxu0 %v2548
      %v2728 = vpop.f32.mrb[0].mxu0
      %v2729 = vadd.f32 0.0, %v2728
      %v2730 = vpop.f32.mrb[0].mxu0
      %2731 = vmatprep.mubr.f32.mxu0 0.0
      %2732 = vmatmul.mubr.f32.gmra.mrb[0].mxu0 %v2551
      %v2733 = vpop.f32.mrb[0].mxu0
      %v2734 = vadd.f32 0.0, %v2733
      %v2735 = vpop.f32.mrb[0].mxu0
      %2736 = vmatprep.mubr.f32.mxu0 0.0
      %2737 = vmatmul.mubr.f32.gmra.mrb[0].mxu0 %v2554
      %v2738 = vpop.f32.mrb[0].mxu0
      %v2739 = vadd.f32 0.0, %v2738
      %v2740 = vpop.f32.mrb[0].mxu0
      %2741 = vmatprep.mubr.f32.mxu0 0.0
      %2742 = vmatmul.mubr.f32.gmra.mrb[0].mxu0 %v2557
      %v2743 = vpop.f32.mrb[0].mxu0
      %v2744 = vadd.f32 0.0, %v2743
      %v2745 = vpop.f32.mrb[0].mxu0
      %2746 = vmatprep.mubr.f32.mxu0 0.0
      %2747 = vmatmul.mubr.f32.gmra.mrb[0].mxu0 %v2560
      %v2748 = vpop.f32.mrb[0].mxu0
      %v2749 = vadd.f32 0.0, %v2748
      %v2750 = vpop.f32.mrb[0].mxu0
      %2751 = vmatprep.mubr.f32.mxu0 0.0
      %2752 = vmatmul.mubr.f32.gmra.mrb[0].mxu0 %v2563
      %v2753 = vpop.f32.mrb[0].mxu0
      %v2754 = vadd.f32 0.0, %v2753
      %v2755 = vpop.f32.mrb[0].mxu0
      %2756 = vmatprep.mubr.f32.mxu0 0.0
      %2757 = vmatmul.mubr.f32.gmra.mrb[0].mxu0 %v2566
      %v2758 = vpop.f32.mrb[0].mxu0
      %v2759 = vadd.f32 0.0, %v2758
      %v2760 = vpop.f32.mrb[0].mxu0
      %2761 = vmatprep.mubr.f32.mxu0 0.0
      %2762 = vmatmul.mubr.f32.gmra.mrb[0].mxu0 %v2569
      %v2763 = vpop.f32.mrb[0].mxu0
      %v2764 = vadd.f32 0.0, %v2763
      %v2765 = vpop.f32.mrb[0].mxu0
      %2766 = vmatprep.mubr.f32.mxu0 0.0
      %2767 = vmatmul.mubr.f32.gmra.mrb[0].mxu0 %v2572
      %v2768 = vpop.f32.mrb[0].mxu0
      %v2769 = vadd.f32 0.0, %v2768
      %v2770 = vpop.f32.mrb[0].mxu0
      %2771 = vmatprep.mubr.f32.mxu0 0.0
      %2772 = vmatmul.mubr.f32.gmra.mrb[0].mxu0 %v2575
      %v2773 = vpop.f32.mrb[0].mxu0
      %v2774 = vadd.f32 0.0, %v2773
      %v2775 = vpop.f32.mrb[0].mxu0
      %2776 = vmatprep.mubr.f32.mxu0 0.0
      %2777 = vmatmul.mubr.f32.gmra.mrb[0].mxu0 %v2578
      %v2778 = vpop.f32.mrb[0].mxu0
      %v2779 = vadd.f32 0.0, %v2778
      %v2780 = vpop.f32.mrb[0].mxu0
      %2781 = vmatprep.mubr.f32.mxu0 0.0
      %2782 = vmatmul.mubr.f32.gmra.mrb[0].mxu0 %v2581
      %v2783 = vpop.f32.mrb[0].mxu0
      %v2784 = vadd.f32 0.0, %v2783
      %v2785 = vpop.f32.mrb[0].mxu0
      %2786 = vmatprep.mubr.f32.mxu0 0.0
      %2787 = vmatmul.mubr.f32.gmra.mrb[0].mxu0 %v2584
      %v2788 = vpop.f32.mrb[0].mxu0
      %v2789 = vadd.f32 0.0, %v2788
      %v2790 = vpop.f32.mrb[0].mxu0
      %2791 = vmatprep.mubr.f32.mxu0 0.0
      %2792 = vmatmul.mubr.f32.gmra.mrb[0].mxu0 %v2587
      %v2793 = vpop.f32.mrb[0].mxu0
      %v2794 = vadd.f32 0.0, %v2793
      %v2795 = vpop.f32.mrb[0].mxu0
      %2796 = vmatprep.mubr.f32.mxu0 0.0
      %2797 = vmatmul.mubr.f32.gmra.mrb[0].mxu0 %v2590
      %v2798 = vpop.f32.mrb[0].mxu0
      %v2799 = vadd.f32 0.0, %v2798
      %v2800 = vpop.f32.mrb[0].mxu0
      %2801 = vmatprep.mubr.f32.mxu0 0.0
      %2802 = vmatmul.mubr.f32.gmra.mrb[0].mxu0 %v2593
      %v2803 = vpop.f32.mrb[0].mxu0
      %v2804 = vadd.f32 0.0, %v2803
      %v2805 = vpop.f32.mrb[0].mxu0
      %2806 = vmatprep.mubr.f32.mxu0 0.0
      %2807 = vmatmul.mubr.f32.gmra.mrb[0].mxu0 %v2596
      %v2808 = vpop.f32.mrb[0].mxu0
      %v2809 = vadd.f32 0.0, %v2808
      %v2810 = vpop.f32.mrb[0].mxu0
      %2811 = vmatprep.mubr.f32.mxu0 0.0
      %2812 = vmatmul.mubr.f32.gmra.mrb[0].mxu0 %v2599
      %v2813 = vpop.f32.mrb[0].mxu0
      %v2814 = vadd.f32 0.0, %v2813
      %v2815 = vpop.f32.mrb[0].mxu0
      %2816 = vmatprep.mubr.f32.mxu0 0.0
      %2817 = vmatmul.mubr.f32.gmra.mrb[0].mxu0 %v2602
      %v2818 = vpop.f32.mrb[0].mxu0
      %v2819 = vadd.f32 0.0, %v2818
      %v2820 = vpop.f32.mrb[0].mxu0
      %2821 = vmatprep.mubr.f32.mxu0 0.0
      %2822 = vmatmul.mubr.f32.gmra.mrb[0].mxu0 %v2605
      %v2823 = vpop.f32.mrb[0].mxu0
      %v2824 = vadd.f32 0.0, %v2823
      %v2825 = vpop.f32.mrb[0].mxu0
      %2826 = vmatprep.mubr.f32.mxu0 0.0
      %2827 = vmatmul.mubr.f32.gmra.mrb[0].mxu0 %v2608
      %v2828 = vpop.f32.mrb[0].mxu0
      %v2829 = vadd.f32 0.0, %v2828
      %v2830 = vpop.f32.mrb[0].mxu0
      %2831 = vmatprep.mubr.f32.mxu0 0.0
      %2832 = vmatmul.mubr.f32.gmra.mrb[0].mxu0 %v2611
      %v2833 = vpop.f32.mrb[0].mxu0
      %v2834 = vadd.f32 0.0, %v2833
      %v2835 = vpop.f32.mrb[0].mxu0
      %2836 = vmatprep.mubr.f32.mxu0 0.0
      %2837 = vmatmul.mubr.f32.gmra.mrb[0].mxu0 %v2614
      %v2838 = vpop.f32.mrb[0].mxu0
      %v2839 = vadd.f32 0.0, %v2838
      %v2840 = vpop.f32.mrb[0].mxu0
      %2841 = vmatprep.mubr.f32.mxu0 0.0
      %2842 = vmatmul.mubr.f32.gmra.mrb[0].mxu0 %v2617
      %v2843 = vpop.f32.mrb[0].mxu0
      %v2844 = vadd.f32 0.0, %v2843
      %v2845 = vpop.f32.mrb[0].mxu0
      %2846 = vdwg.mxu0
      %v2847 = vadd.f32 %v2457, %v2689
      %v2848 = vadd.f32 %v2458, %v2694
      %v2849 = vadd.f32 %v2459, %v2699
      %v2850 = vadd.f32 %v2460, %v2704
      %v2851 = vadd.f32 %v2461, %v2709
      %v2852 = vadd.f32 %v2462, %v2714
      %v2853 = vadd.f32 %v2463, %v2719
      %v2854 = vadd.f32 %v2464, %v2724
      %v2855 = vadd.f32 %v2465, %v2729
      %v2856 = vadd.f32 %v2466, %v2734
      %v2857 = vadd.f32 %v2467, %v2739
      %v2858 = vadd.f32 %v2468, %v2744
      %v2859 = vadd.f32 %v2469, %v2749
      %v2860 = vadd.f32 %v2470, %v2754
      %v2861 = vadd.f32 %v2471, %v2759
      %v2862 = vadd.f32 %v2472, %v2764
      %v2863 = vadd.f32 %v2473, %v2769
      %v2864 = vadd.f32 %v2474, %v2774
      %v2865 = vadd.f32 %v2475, %v2779
      %v2866 = vadd.f32 %v2476, %v2784
      %v2867 = vadd.f32 %v2477, %v2789
      %v2868 = vadd.f32 %v2478, %v2794
      %v2869 = vadd.f32 %v2479, %v2799
      %v2870 = vadd.f32 %v2480, %v2804
      %v2871 = vadd.f32 %v2481, %v2809
      %v2872 = vadd.f32 %v2482, %v2814
      %v2873 = vadd.f32 %v2483, %v2819
      %v2874 = vadd.f32 %v2484, %v2824
      %v2875 = vadd.f32 %v2485, %v2829
      %v2876 = vadd.f32 %v2486, %v2834
      %v2877 = vadd.f32 %v2487, %v2839
      %v2878 = vadd.f32 %v2488, %v2844
      %s2879 = scalar_lea.vmem [#allocation2], 64
      %v2880 = vld [vmem:[%s2879 + $0x7] sm:$0xff]
      %v2881 = vld [vmem:[%s2879 + $0xf] sm:$0xff]
      %v2882 = vld [vmem:[%s2879 + $0x27] sm:$0xff]
      %v2883 = vld [vmem:[%s2879 + $0x2f] sm:$0xff]
      %v2884 = vld [vmem:[%s2879 + $0x47] sm:$0xff]
      %v2885 = vld [vmem:[%s2879 + $0x4f] sm:$0xff]
      %v2886 = vld [vmem:[%s2879 + $0x67] sm:$0xff]
      %v2887 = vld [vmem:[%s2879 + $0x6f] sm:$0xff]
      %v2888 = vld [vmem:[%s2879 + $0x87] sm:$0xff]
      %v2889 = vld [vmem:[%s2879 + $0x8f] sm:$0xff]
      %v2890 = vld [vmem:[%s2879 + $0xa7] sm:$0xff]
      %v2891 = vld [vmem:[%s2879 + $0xaf] sm:$0xff]
      %v2892 = vld [vmem:[%s2879 + $0xc7] sm:$0xff]
      %v2893 = vld [vmem:[%s2879 + $0xcf] sm:$0xff]
      %v2894 = vld [vmem:[%s2879 + $0xe7] sm:$0xff]
      %v2895 = vld [vmem:[%s2879 + $0xef] sm:$0xff]
      %v2896 = vld [vmem:[%s2879 + $0x107] sm:$0xff]
      %v2897 = vld [vmem:[%s2879 + $0x10f] sm:$0xff]
      %v2898 = vld [vmem:[%s2879 + $0x127] sm:$0xff]
      %v2899 = vld [vmem:[%s2879 + $0x12f] sm:$0xff]
      %v2900 = vld [vmem:[%s2879 + $0x147] sm:$0xff]
      %v2901 = vld [vmem:[%s2879 + $0x14f] sm:$0xff]
      %v2902 = vld [vmem:[%s2879 + $0x167] sm:$0xff]
      %v2903 = vld [vmem:[%s2879 + $0x16f] sm:$0xff]
      %v2904 = vld [vmem:[%s2879 + $0x187] sm:$0xff]
      %v2905 = vld [vmem:[%s2879 + $0x18f] sm:$0xff]
      %v2906 = vld [vmem:[%s2879 + $0x1a7] sm:$0xff]
      %v2907 = vld [vmem:[%s2879 + $0x1af] sm:$0xff]
      %v2908 = vld [vmem:[%s2879 + $0x1c7] sm:$0xff]
      %v2909 = vld [vmem:[%s2879 + $0x1cf] sm:$0xff]
      %v2910 = vld [vmem:[%s2879 + $0x1e7] sm:$0xff]
      %v2911 = vld [vmem:[%s2879 + $0x1ef] sm:$0xff]
      %s2912 = scalar_lea.vmem %s1, 24
      %v2913 = vld [vmem:[%s2912] sm:$0xf]
      %v2915 = vsel %vm497, %v2880, 0
      %v2918 = vsel %vm497, %v2881, 0
      %v2921 = vsel %vm497, %v2882, 0
      %v2924 = vsel %vm497, %v2883, 0
      %v2927 = vsel %vm497, %v2884, 0
      %v2930 = vsel %vm497, %v2885, 0
      %v2933 = vsel %vm497, %v2886, 0
      %v2936 = vsel %vm497, %v2887, 0
      %v2939 = vsel %vm497, %v2888, 0
      %v2942 = vsel %vm497, %v2889, 0
      %v2945 = vsel %vm497, %v2890, 0
      %v2948 = vsel %vm497, %v2891, 0
      %v2951 = vsel %vm497, %v2892, 0
      %v2954 = vsel %vm497, %v2893, 0
      %v2957 = vsel %vm497, %v2894, 0
      %v2960 = vsel %vm497, %v2895, 0
      %v2963 = vsel %vm497, %v2896, 0
      %v2966 = vsel %vm497, %v2897, 0
      %v2969 = vsel %vm497, %v2898, 0
      %v2972 = vsel %vm497, %v2899, 0
      %v2975 = vsel %vm497, %v2900, 0
      %v2978 = vsel %vm497, %v2901, 0
      %v2981 = vsel %vm497, %v2902, 0
      %v2984 = vsel %vm497, %v2903, 0
      %v2987 = vsel %vm497, %v2904, 0
      %v2990 = vsel %vm497, %v2905, 0
      %v2993 = vsel %vm497, %v2906, 0
      %v2996 = vsel %vm497, %v2907, 0
      %v2999 = vsel %vm497, %v2908, 0
      %v3002 = vsel %vm497, %v2909, 0
      %v3005 = vsel %vm497, %v2910, 0
      %v3008 = vsel %vm497, %v2911, 0
      %v3011 = vsel %vm766, %v2913, 0
      %3013 = vmatprep.subr.mxu0 0.0
      %3014 = vmatpush1.msra.mxu0 %v3011
      %3015 = vmatprep.subr.mxu0 0.0
      %3016 = vmatpush1.msra.mxu0 0.0
      %3017 = vmatprep.subr.mxu0 0.0
      %3018 = vmatpush1.msra.mxu0 0.0
      %3019 = vmatprep.subr.mxu0 0.0
      %3020 = vmatpush1.msra.mxu0 0.0
      %3021 = vmatprep.subr.mxu0 0.0
      %3022 = vmatpush1.msra.mxu0 0.0
      %3023 = vmatprep.subr.mxu0 0.0
      %3024 = vmatpush1.msra.mxu0 0.0
      %3025 = vmatprep.subr.mxu0 0.0
      %3026 = vmatpush1.msra.mxu0 0.0
      %3027 = vmatprep.subr.mxu0 0.0
      %3028 = vmatpush1.msra.mxu0 0.0
      %3029 = vmatprep.subr.mxu0 0.0
      %3030 = vmatpush1.msra.mxu0 0.0
      %3031 = vmatprep.subr.mxu0 0.0
      %3032 = vmatpush1.msra.mxu0 0.0
      %3033 = vmatprep.subr.mxu0 0.0
      %3034 = vmatpush1.msra.mxu0 0.0
      %3035 = vmatprep.subr.mxu0 0.0
      %3036 = vmatpush1.msra.mxu0 0.0
      %3037 = vmatprep.subr.mxu0 0.0
      %3038 = vmatpush1.msra.mxu0 0.0
      %3039 = vmatprep.subr.mxu0 0.0
      %3040 = vmatpush1.msra.mxu0 0.0
      %3041 = vmatprep.subr.mxu0 0.0
      %3042 = vmatpush1.msra.mxu0 0.0
      %3043 = vmatprep.subr.mxu0 0.0
      %3044 = vmatpush1.msra.mxu0 0.0
      %3045 = vmatprep.subr.mxu0 0.0
      %3046 = vmatpush1.msra.mxu0 0.0
      %3047 = vmatprep.subr.mxu0 0.0
      %3048 = vmatpush1.msra.mxu0 0.0
      %3049 = vmatprep.subr.mxu0 0.0
      %3050 = vmatpush1.msra.mxu0 0.0
      %3051 = vmatprep.subr.mxu0 0.0
      %3052 = vmatpush1.msra.mxu0 0.0
      %3053 = vmatprep.subr.mxu0 0.0
      %3054 = vmatpush1.msra.mxu0 0.0
      %3055 = vmatprep.subr.mxu0 0.0
      %3056 = vmatpush1.msra.mxu0 0.0
      %3057 = vmatprep.subr.mxu0 0.0
      %3058 = vmatpush1.msra.mxu0 0.0
      %3059 = vmatprep.subr.mxu0 0.0
      %3060 = vmatpush1.msra.mxu0 0.0
      %3061 = vmatprep.subr.mxu0 0.0
      %3062 = vmatpush1.msra.mxu0 0.0
      %3063 = vmatprep.subr.mxu0 0.0
      %3064 = vmatpush1.msra.mxu0 0.0
      %3065 = vmatprep.subr.mxu0 0.0
      %3066 = vmatpush1.msra.mxu0 0.0
      %3067 = vmatprep.subr.mxu0 0.0
      %3068 = vmatpush1.msra.mxu0 0.0
      %3069 = vmatprep.subr.mxu0 0.0
      %3070 = vmatpush1.msra.mxu0 0.0
      %3071 = vmatprep.subr.mxu0 0.0
      %3072 = vmatpush1.msra.mxu0 0.0
      %3073 = vmatprep.subr.mxu0 0.0
      %3074 = vmatpush1.msra.mxu0 0.0
      %3075 = vmatprep.subr.mxu0 0.0
      %3076 = vmatpush1.msra.mxu0 0.0
      %3077 = vmatprep.mubr.f32.mxu0 0.0
      %3078 = vmatmul.mubr.f32.gmra.mrb[0].mxu0 %v2915
      %v3079 = vpop.f32.mrb[0].mxu0
      %v3080 = vadd.f32 0.0, %v3079
      %v3081 = vpop.f32.mrb[0].mxu0
      %3082 = vmatprep.mubr.f32.mxu0 0.0
      %3083 = vmatmul.mubr.f32.gmra.mrb[0].mxu0 %v2918
      %v3084 = vpop.f32.mrb[0].mxu0
      %v3085 = vadd.f32 0.0, %v3084
      %v3086 = vpop.f32.mrb[0].mxu0
      %3087 = vmatprep.mubr.f32.mxu0 0.0
      %3088 = vmatmul.mubr.f32.gmra.mrb[0].mxu0 %v2921
      %v3089 = vpop.f32.mrb[0].mxu0
      %v3090 = vadd.f32 0.0, %v3089
      %v3091 = vpop.f32.mrb[0].mxu0
      %3092 = vmatprep.mubr.f32.mxu0 0.0
      %3093 = vmatmul.mubr.f32.gmra.mrb[0].mxu0 %v2924
      %v3094 = vpop.f32.mrb[0].mxu0
      %v3095 = vadd.f32 0.0, %v3094
      %v3096 = vpop.f32.mrb[0].mxu0
      %3097 = vmatprep.mubr.f32.mxu0 0.0
      %3098 = vmatmul.mubr.f32.gmra.mrb[0].mxu0 %v2927
      %v3099 = vpop.f32.mrb[0].mxu0
      %v3100 = vadd.f32 0.0, %v3099
      %v3101 = vpop.f32.mrb[0].mxu0
      %3102 = vmatprep.mubr.f32.mxu0 0.0
      %3103 = vmatmul.mubr.f32.gmra.mrb[0].mxu0 %v2930
      %v3104 = vpop.f32.mrb[0].mxu0
      %v3105 = vadd.f32 0.0, %v3104
      %v3106 = vpop.f32.mrb[0].mxu0
      %3107 = vmatprep.mubr.f32.mxu0 0.0
      %3108 = vmatmul.mubr.f32.gmra.mrb[0].mxu0 %v2933
      %v3109 = vpop.f32.mrb[0].mxu0
      %v3110 = vadd.f32 0.0, %v3109
      %v3111 = vpop.f32.mrb[0].mxu0
      %3112 = vmatprep.mubr.f32.mxu0 0.0
      %3113 = vmatmul.mubr.f32.gmra.mrb[0].mxu0 %v2936
      %v3114 = vpop.f32.mrb[0].mxu0
      %v3115 = vadd.f32 0.0, %v3114
      %v3116 = vpop.f32.mrb[0].mxu0
      %3117 = vmatprep.mubr.f32.mxu0 0.0
      %3118 = vmatmul.mubr.f32.gmra.mrb[0].mxu0 %v2939
      %v3119 = vpop.f32.mrb[0].mxu0
      %v3120 = vadd.f32 0.0, %v3119
      %v3121 = vpop.f32.mrb[0].mxu0
      %3122 = vmatprep.mubr.f32.mxu0 0.0
      %3123 = vmatmul.mubr.f32.gmra.mrb[0].mxu0 %v2942
      %v3124 = vpop.f32.mrb[0].mxu0
      %v3125 = vadd.f32 0.0, %v3124
      %v3126 = vpop.f32.mrb[0].mxu0
      %3127 = vmatprep.mubr.f32.mxu0 0.0
      %3128 = vmatmul.mubr.f32.gmra.mrb[0].mxu0 %v2945
      %v3129 = vpop.f32.mrb[0].mxu0
      %v3130 = vadd.f32 0.0, %v3129
      %v3131 = vpop.f32.mrb[0].mxu0
      %3132 = vmatprep.mubr.f32.mxu0 0.0
      %3133 = vmatmul.mubr.f32.gmra.mrb[0].mxu0 %v2948
      %v3134 = vpop.f32.mrb[0].mxu0
      %v3135 = vadd.f32 0.0, %v3134
      %v3136 = vpop.f32.mrb[0].mxu0
      %3137 = vmatprep.mubr.f32.mxu0 0.0
      %3138 = vmatmul.mubr.f32.gmra.mrb[0].mxu0 %v2951
      %v3139 = vpop.f32.mrb[0].mxu0
      %v3140 = vadd.f32 0.0, %v3139
      %v3141 = vpop.f32.mrb[0].mxu0
      %3142 = vmatprep.mubr.f32.mxu0 0.0
      %3143 = vmatmul.mubr.f32.gmra.mrb[0].mxu0 %v2954
      %v3144 = vpop.f32.mrb[0].mxu0
      %v3145 = vadd.f32 0.0, %v3144
      %v3146 = vpop.f32.mrb[0].mxu0
      %3147 = vmatprep.mubr.f32.mxu0 0.0
      %3148 = vmatmul.mubr.f32.gmra.mrb[0].mxu0 %v2957
      %v3149 = vpop.f32.mrb[0].mxu0
      %v3150 = vadd.f32 0.0, %v3149
      %v3151 = vpop.f32.mrb[0].mxu0
      %3152 = vmatprep.mubr.f32.mxu0 0.0
      %3153 = vmatmul.mubr.f32.gmra.mrb[0].mxu0 %v2960
      %v3154 = vpop.f32.mrb[0].mxu0
      %v3155 = vadd.f32 0.0, %v3154
      %v3156 = vpop.f32.mrb[0].mxu0
      %3157 = vmatprep.mubr.f32.mxu0 0.0
      %3158 = vmatmul.mubr.f32.gmra.mrb[0].mxu0 %v2963
      %v3159 = vpop.f32.mrb[0].mxu0
      %v3160 = vadd.f32 0.0, %v3159
      %v3161 = vpop.f32.mrb[0].mxu0
      %3162 = vmatprep.mubr.f32.mxu0 0.0
      %3163 = vmatmul.mubr.f32.gmra.mrb[0].mxu0 %v2966
      %v3164 = vpop.f32.mrb[0].mxu0
      %v3165 = vadd.f32 0.0, %v3164
      %v3166 = vpop.f32.mrb[0].mxu0
      %3167 = vmatprep.mubr.f32.mxu0 0.0
      %3168 = vmatmul.mubr.f32.gmra.mrb[0].mxu0 %v2969
      %v3169 = vpop.f32.mrb[0].mxu0
      %v3170 = vadd.f32 0.0, %v3169
      %v3171 = vpop.f32.mrb[0].mxu0
      %3172 = vmatprep.mubr.f32.mxu0 0.0
      %3173 = vmatmul.mubr.f32.gmra.mrb[0].mxu0 %v2972
      %v3174 = vpop.f32.mrb[0].mxu0
      %v3175 = vadd.f32 0.0, %v3174
      %v3176 = vpop.f32.mrb[0].mxu0
      %3177 = vmatprep.mubr.f32.mxu0 0.0
      %3178 = vmatmul.mubr.f32.gmra.mrb[0].mxu0 %v2975
      %v3179 = vpop.f32.mrb[0].mxu0
      %v3180 = vadd.f32 0.0, %v3179
      %v3181 = vpop.f32.mrb[0].mxu0
      %3182 = vmatprep.mubr.f32.mxu0 0.0
      %3183 = vmatmul.mubr.f32.gmra.mrb[0].mxu0 %v2978
      %v3184 = vpop.f32.mrb[0].mxu0
      %v3185 = vadd.f32 0.0, %v3184
      %v3186 = vpop.f32.mrb[0].mxu0
      %3187 = vmatprep.mubr.f32.mxu0 0.0
      %3188 = vmatmul.mubr.f32.gmra.mrb[0].mxu0 %v2981
      %v3189 = vpop.f32.mrb[0].mxu0
      %v3190 = vadd.f32 0.0, %v3189
      %v3191 = vpop.f32.mrb[0].mxu0
      %3192 = vmatprep.mubr.f32.mxu0 0.0
      %3193 = vmatmul.mubr.f32.gmra.mrb[0].mxu0 %v2984
      %v3194 = vpop.f32.mrb[0].mxu0
      %v3195 = vadd.f32 0.0, %v3194
      %v3196 = vpop.f32.mrb[0].mxu0
      %3197 = vmatprep.mubr.f32.mxu0 0.0
      %3198 = vmatmul.mubr.f32.gmra.mrb[0].mxu0 %v2987
      %v3199 = vpop.f32.mrb[0].mxu0
      %v3200 = vadd.f32 0.0, %v3199
      %v3201 = vpop.f32.mrb[0].mxu0
      %3202 = vmatprep.mubr.f32.mxu0 0.0
      %3203 = vmatmul.mubr.f32.gmra.mrb[0].mxu0 %v2990
      %v3204 = vpop.f32.mrb[0].mxu0
      %v3205 = vadd.f32 0.0, %v3204
      %v3206 = vpop.f32.mrb[0].mxu0
      %3207 = vmatprep.mubr.f32.mxu0 0.0
      %3208 = vmatmul.mubr.f32.gmra.mrb[0].mxu0 %v2993
      %v3209 = vpop.f32.mrb[0].mxu0
      %v3210 = vadd.f32 0.0, %v3209
      %v3211 = vpop.f32.mrb[0].mxu0
      %3212 = vmatprep.mubr.f32.mxu0 0.0
      %3213 = vmatmul.mubr.f32.gmra.mrb[0].mxu0 %v2996
      %v3214 = vpop.f32.mrb[0].mxu0
      %v3215 = vadd.f32 0.0, %v3214
      %v3216 = vpop.f32.mrb[0].mxu0
      %3217 = vmatprep.mubr.f32.mxu0 0.0
      %3218 = vmatmul.mubr.f32.gmra.mrb[0].mxu0 %v2999
      %v3219 = vpop.f32.mrb[0].mxu0
      %v3220 = vadd.f32 0.0, %v3219
      %v3221 = vpop.f32.mrb[0].mxu0
      %3222 = vmatprep.mubr.f32.mxu0 0.0
      %3223 = vmatmul.mubr.f32.gmra.mrb[0].mxu0 %v3002
      %v3224 = vpop.f32.mrb[0].mxu0
      %v3225 = vadd.f32 0.0, %v3224
      %v3226 = vpop.f32.mrb[0].mxu0
      %3227 = vmatprep.mubr.f32.mxu0 0.0
      %3228 = vmatmul.mubr.f32.gmra.mrb[0].mxu0 %v3005
      %v3229 = vpop.f32.mrb[0].mxu0
      %v3230 = vadd.f32 0.0, %v3229
      %v3231 = vpop.f32.mrb[0].mxu0
      %3232 = vmatprep.mubr.f32.mxu0 0.0
      %3233 = vmatmul.mubr.f32.gmra.mrb[0].mxu0 %v3008
      %v3234 = vpop.f32.mrb[0].mxu0
      %v3235 = vadd.f32 0.0, %v3234
      %v3236 = vpop.f32.mrb[0].mxu0
      %3237 = vdwg.mxu0
      %v3238 = vadd.f32 %v2847, %v3080
      %v3239 = vadd.f32 %v2848, %v3085
      %v3240 = vadd.f32 %v2849, %v3090
      %v3241 = vadd.f32 %v2850, %v3095
      %v3242 = vadd.f32 %v2851, %v3100
      %v3243 = vadd.f32 %v2852, %v3105
      %v3244 = vadd.f32 %v2853, %v3110
      %v3245 = vadd.f32 %v2854, %v3115
      %v3246 = vadd.f32 %v2855, %v3120
      %v3247 = vadd.f32 %v2856, %v3125
      %v3248 = vadd.f32 %v2857, %v3130
      %v3249 = vadd.f32 %v2858, %v3135
      %v3250 = vadd.f32 %v2859, %v3140
      %v3251 = vadd.f32 %v2860, %v3145
      %v3252 = vadd.f32 %v2861, %v3150
      %v3253 = vadd.f32 %v2862, %v3155
      %v3254 = vadd.f32 %v2863, %v3160
      %v3255 = vadd.f32 %v2864, %v3165
      %v3256 = vadd.f32 %v2865, %v3170
      %v3257 = vadd.f32 %v2866, %v3175
      %v3258 = vadd.f32 %v2867, %v3180
      %v3259 = vadd.f32 %v2868, %v3185
      %v3260 = vadd.f32 %v2869, %v3190
      %v3261 = vadd.f32 %v2870, %v3195
      %v3262 = vadd.f32 %v2871, %v3200
      %v3263 = vadd.f32 %v2872, %v3205
      %v3264 = vadd.f32 %v2873, %v3210
      %v3265 = vadd.f32 %v2874, %v3215
      %v3266 = vadd.f32 %v2875, %v3220
      %v3267 = vadd.f32 %v2876, %v3225
      %v3268 = vadd.f32 %v2877, %v3230
      %v3269 = vadd.f32 %v2878, %v3235
      %v3270 = vld [vmem:[%s2879 + $0x8] sm:$0xff]
      %v3271 = vld [vmem:[%s2879 + $0x10] sm:$0xff]
      %v3272 = vld [vmem:[%s2879 + $0x28] sm:$0xff]
      %v3273 = vld [vmem:[%s2879 + $0x30] sm:$0xff]
      %v3274 = vld [vmem:[%s2879 + $0x48] sm:$0xff]
      %v3275 = vld [vmem:[%s2879 + $0x50] sm:$0xff]
      %v3276 = vld [vmem:[%s2879 + $0x68] sm:$0xff]
      %v3277 = vld [vmem:[%s2879 + $0x70] sm:$0xff]
      %v3278 = vld [vmem:[%s2879 + $0x88] sm:$0xff]
      %v3279 = vld [vmem:[%s2879 + $0x90] sm:$0xff]
      %v3280 = vld [vmem:[%s2879 + $0xa8] sm:$0xff]
      %v3281 = vld [vmem:[%s2879 + $0xb0] sm:$0xff]
      %v3282 = vld [vmem:[%s2879 + $0xc8] sm:$0xff]
      %v3283 = vld [vmem:[%s2879 + $0xd0] sm:$0xff]
      %v3284 = vld [vmem:[%s2879 + $0xe8] sm:$0xff]
      %v3285 = vld [vmem:[%s2879 + $0xf0] sm:$0xff]
      %v3286 = vld [vmem:[%s2879 + $0x108] sm:$0xff]
      %v3287 = vld [vmem:[%s2879 + $0x110] sm:$0xff]
      %v3288 = vld [vmem:[%s2879 + $0x128] sm:$0xff]
      %v3289 = vld [vmem:[%s2879 + $0x130] sm:$0xff]
      %v3290 = vld [vmem:[%s2879 + $0x148] sm:$0xff]
      %v3291 = vld [vmem:[%s2879 + $0x150] sm:$0xff]
      %v3292 = vld [vmem:[%s2879 + $0x168] sm:$0xff]
      %v3293 = vld [vmem:[%s2879 + $0x170] sm:$0xff]
      %v3294 = vld [vmem:[%s2879 + $0x188] sm:$0xff]
      %v3295 = vld [vmem:[%s2879 + $0x190] sm:$0xff]
      %v3296 = vld [vmem:[%s2879 + $0x1a8] sm:$0xff]
      %v3297 = vld [vmem:[%s2879 + $0x1b0] sm:$0xff]
      %v3298 = vld [vmem:[%s2879 + $0x1c8] sm:$0xff]
      %v3299 = vld [vmem:[%s2879 + $0x1d0] sm:$0xff]
      %v3300 = vld [vmem:[%s2879 + $0x1e8] sm:$0xff]
      %v3301 = vld [vmem:[%s2879 + $0x1f0] sm:$0xff]
      %s3302 = scalar_lea.vmem %s1, 28
      %v3303 = vld [vmem:[%s3302] sm:$0xf]
      %v3305 = vsel %vm497, %v3270, 0
      %v3308 = vsel %vm497, %v3271, 0
      %v3311 = vsel %vm497, %v3272, 0
      %v3314 = vsel %vm497, %v3273, 0
      %v3317 = vsel %vm497, %v3274, 0
      %v3320 = vsel %vm497, %v3275, 0
      %v3323 = vsel %vm497, %v3276, 0
      %v3326 = vsel %vm497, %v3277, 0
      %v3329 = vsel %vm497, %v3278, 0
      %v3332 = vsel %vm497, %v3279, 0
      %v3335 = vsel %vm497, %v3280, 0
      %v3338 = vsel %vm497, %v3281, 0
      %v3341 = vsel %vm497, %v3282, 0
      %v3344 = vsel %vm497, %v3283, 0
      %v3347 = vsel %vm497, %v3284, 0
      %v3350 = vsel %vm497, %v3285, 0
      %v3353 = vsel %vm497, %v3286, 0
      %v3356 = vsel %vm497, %v3287, 0
      %v3359 = vsel %vm497, %v3288, 0
      %v3362 = vsel %vm497, %v3289, 0
      %v3365 = vsel %vm497, %v3290, 0
      %v3368 = vsel %vm497, %v3291, 0
      %v3371 = vsel %vm497, %v3292, 0
      %v3374 = vsel %vm497, %v3293, 0
      %v3377 = vsel %vm497, %v3294, 0
      %v3380 = vsel %vm497, %v3295, 0
      %v3383 = vsel %vm497, %v3296, 0
      %v3386 = vsel %vm497, %v3297, 0
      %v3389 = vsel %vm497, %v3298, 0
      %v3392 = vsel %vm497, %v3299, 0
      %v3395 = vsel %vm497, %v3300, 0
      %v3398 = vsel %vm497, %v3301, 0
      %v3401 = vsel %vm766, %v3303, 0
      %3403 = vmatprep.subr.mxu0 0.0
      %3404 = vmatpush1.msra.mxu0 %v3401
      %3405 = vmatprep.subr.mxu0 0.0
      %3406 = vmatpush1.msra.mxu0 0.0
      %3407 = vmatprep.subr.mxu0 0.0
      %3408 = vmatpush1.msra.mxu0 0.0
      %3409 = vmatprep.subr.mxu0 0.0
      %3410 = vmatpush1.msra.mxu0 0.0
      %3411 = vmatprep.subr.mxu0 0.0
      %3412 = vmatpush1.msra.mxu0 0.0
      %3413 = vmatprep.subr.mxu0 0.0
      %3414 = vmatpush1.msra.mxu0 0.0
      %3415 = vmatprep.subr.mxu0 0.0
      %3416 = vmatpush1.msra.mxu0 0.0
      %3417 = vmatprep.subr.mxu0 0.0
      %3418 = vmatpush1.msra.mxu0 0.0
      %3419 = vmatprep.subr.mxu0 0.0
      %3420 = vmatpush1.msra.mxu0 0.0
      %3421 = vmatprep.subr.mxu0 0.0
      %3422 = vmatpush1.msra.mxu0 0.0
      %3423 = vmatprep.subr.mxu0 0.0
      %3424 = vmatpush1.msra.mxu0 0.0
      %3425 = vmatprep.subr.mxu0 0.0
      %3426 = vmatpush1.msra.mxu0 0.0
      %3427 = vmatprep.subr.mxu0 0.0
      %3428 = vmatpush1.msra.mxu0 0.0
      %3429 = vmatprep.subr.mxu0 0.0
      %3430 = vmatpush1.msra.mxu0 0.0
      %3431 = vmatprep.subr.mxu0 0.0
      %3432 = vmatpush1.msra.mxu0 0.0
      %3433 = vmatprep.subr.mxu0 0.0
      %3434 = vmatpush1.msra.mxu0 0.0
      %3435 = vmatprep.subr.mxu0 0.0
      %3436 = vmatpush1.msra.mxu0 0.0
      %3437 = vmatprep.subr.mxu0 0.0
      %3438 = vmatpush1.msra.mxu0 0.0
      %3439 = vmatprep.subr.mxu0 0.0
      %3440 = vmatpush1.msra.mxu0 0.0
      %3441 = vmatprep.subr.mxu0 0.0
      %3442 = vmatpush1.msra.mxu0 0.0
      %3443 = vmatprep.subr.mxu0 0.0
      %3444 = vmatpush1.msra.mxu0 0.0
      %3445 = vmatprep.subr.mxu0 0.0
      %3446 = vmatpush1.msra.mxu0 0.0
      %3447 = vmatprep.subr.mxu0 0.0
      %3448 = vmatpush1.msra.mxu0 0.0
      %3449 = vmatprep.subr.mxu0 0.0
      %3450 = vmatpush1.msra.mxu0 0.0
      %3451 = vmatprep.subr.mxu0 0.0
      %3452 = vmatpush1.msra.mxu0 0.0
      %3453 = vmatprep.subr.mxu0 0.0
      %3454 = vmatpush1.msra.mxu0 0.0
      %3455 = vmatprep.subr.mxu0 0.0
      %3456 = vmatpush1.msra.mxu0 0.0
      %3457 = vmatprep.subr.mxu0 0.0
      %3458 = vmatpush1.msra.mxu0 0.0
      %3459 = vmatprep.subr.mxu0 0.0
      %3460 = vmatpush1.msra.mxu0 0.0
      %3461 = vmatprep.subr.mxu0 0.0
      %3462 = vmatpush1.msra.mxu0 0.0
      %3463 = vmatprep.subr.mxu0 0.0
      %3464 = vmatpush1.msra.mxu0 0.0
      %3465 = vmatprep.subr.mxu0 0.0
      %3466 = vmatpush1.msra.mxu0 0.0
      %3467 = vmatprep.mubr.f32.mxu0 0.0
      %3468 = vmatmul.mubr.f32.gmra.mrb[0].mxu0 %v3305
      %v3469 = vpop.f32.mrb[0].mxu0
      %v3470 = vadd.f32 0.0, %v3469
      %v3471 = vpop.f32.mrb[0].mxu0
      %3472 = vmatprep.mubr.f32.mxu0 0.0
      %3473 = vmatmul.mubr.f32.gmra.mrb[0].mxu0 %v3308
      %v3474 = vpop.f32.mrb[0].mxu0
      %v3475 = vadd.f32 0.0, %v3474
      %v3476 = vpop.f32.mrb[0].mxu0
      %3477 = vmatprep.mubr.f32.mxu0 0.0
      %3478 = vmatmul.mubr.f32.gmra.mrb[0].mxu0 %v3311
      %v3479 = vpop.f32.mrb[0].mxu0
      %v3480 = vadd.f32 0.0, %v3479
      %v3481 = vpop.f32.mrb[0].mxu0
      %3482 = vmatprep.mubr.f32.mxu0 0.0
      %3483 = vmatmul.mubr.f32.gmra.mrb[0].mxu0 %v3314
      %v3484 = vpop.f32.mrb[0].mxu0
      %v3485 = vadd.f32 0.0, %v3484
      %v3486 = vpop.f32.mrb[0].mxu0
      %3487 = vmatprep.mubr.f32.mxu0 0.0
      %3488 = vmatmul.mubr.f32.gmra.mrb[0].mxu0 %v3317
      %v3489 = vpop.f32.mrb[0].mxu0
      %v3490 = vadd.f32 0.0, %v3489
      %v3491 = vpop.f32.mrb[0].mxu0
      %3492 = vmatprep.mubr.f32.mxu0 0.0
      %3493 = vmatmul.mubr.f32.gmra.mrb[0].mxu0 %v3320
      %v3494 = vpop.f32.mrb[0].mxu0
      %v3495 = vadd.f32 0.0, %v3494
      %v3496 = vpop.f32.mrb[0].mxu0
      %3497 = vmatprep.mubr.f32.mxu0 0.0
      %3498 = vmatmul.mubr.f32.gmra.mrb[0].mxu0 %v3323
      %v3499 = vpop.f32.mrb[0].mxu0
      %v3500 = vadd.f32 0.0, %v3499
      %v3501 = vpop.f32.mrb[0].mxu0
      %3502 = vmatprep.mubr.f32.mxu0 0.0
      %3503 = vmatmul.mubr.f32.gmra.mrb[0].mxu0 %v3326
      %v3504 = vpop.f32.mrb[0].mxu0
      %v3505 = vadd.f32 0.0, %v3504
      %v3506 = vpop.f32.mrb[0].mxu0
      %3507 = vmatprep.mubr.f32.mxu0 0.0
      %3508 = vmatmul.mubr.f32.gmra.mrb[0].mxu0 %v3329
      %v3509 = vpop.f32.mrb[0].mxu0
      %v3510 = vadd.f32 0.0, %v3509
      %v3511 = vpop.f32.mrb[0].mxu0
      %3512 = vmatprep.mubr.f32.mxu0 0.0
      %3513 = vmatmul.mubr.f32.gmra.mrb[0].mxu0 %v3332
      %v3514 = vpop.f32.mrb[0].mxu0
      %v3515 = vadd.f32 0.0, %v3514
      %v3516 = vpop.f32.mrb[0].mxu0
      %3517 = vmatprep.mubr.f32.mxu0 0.0
      %3518 = vmatmul.mubr.f32.gmra.mrb[0].mxu0 %v3335
      %v3519 = vpop.f32.mrb[0].mxu0
      %v3520 = vadd.f32 0.0, %v3519
      %v3521 = vpop.f32.mrb[0].mxu0
      %3522 = vmatprep.mubr.f32.mxu0 0.0
      %3523 = vmatmul.mubr.f32.gmra.mrb[0].mxu0 %v3338
      %v3524 = vpop.f32.mrb[0].mxu0
      %v3525 = vadd.f32 0.0, %v3524
      %v3526 = vpop.f32.mrb[0].mxu0
      %3527 = vmatprep.mubr.f32.mxu0 0.0
      %3528 = vmatmul.mubr.f32.gmra.mrb[0].mxu0 %v3341
      %v3529 = vpop.f32.mrb[0].mxu0
      %v3530 = vadd.f32 0.0, %v3529
      %v3531 = vpop.f32.mrb[0].mxu0
      %3532 = vmatprep.mubr.f32.mxu0 0.0
      %3533 = vmatmul.mubr.f32.gmra.mrb[0].mxu0 %v3344
      %v3534 = vpop.f32.mrb[0].mxu0
      %v3535 = vadd.f32 0.0, %v3534
      %v3536 = vpop.f32.mrb[0].mxu0
      %3537 = vmatprep.mubr.f32.mxu0 0.0
      %3538 = vmatmul.mubr.f32.gmra.mrb[0].mxu0 %v3347
      %v3539 = vpop.f32.mrb[0].mxu0
      %v3540 = vadd.f32 0.0, %v3539
      %v3541 = vpop.f32.mrb[0].mxu0
      %3542 = vmatprep.mubr.f32.mxu0 0.0
      %3543 = vmatmul.mubr.f32.gmra.mrb[0].mxu0 %v3350
      %v3544 = vpop.f32.mrb[0].mxu0
      %v3545 = vadd.f32 0.0, %v3544
      %v3546 = vpop.f32.mrb[0].mxu0
      %3547 = vmatprep.mubr.f32.mxu0 0.0
      %3548 = vmatmul.mubr.f32.gmra.mrb[0].mxu0 %v3353
      %v3549 = vpop.f32.mrb[0].mxu0
      %v3550 = vadd.f32 0.0, %v3549
      %v3551 = vpop.f32.mrb[0].mxu0
      %3552 = vmatprep.mubr.f32.mxu0 0.0
      %3553 = vmatmul.mubr.f32.gmra.mrb[0].mxu0 %v3356
      %v3554 = vpop.f32.mrb[0].mxu0
      %v3555 = vadd.f32 0.0, %v3554
      %v3556 = vpop.f32.mrb[0].mxu0
      %3557 = vmatprep.mubr.f32.mxu0 0.0
      %3558 = vmatmul.mubr.f32.gmra.mrb[0].mxu0 %v3359
      %v3559 = vpop.f32.mrb[0].mxu0
      %v3560 = vadd.f32 0.0, %v3559
      %v3561 = vpop.f32.mrb[0].mxu0
      %3562 = vmatprep.mubr.f32.mxu0 0.0
      %3563 = vmatmul.mubr.f32.gmra.mrb[0].mxu0 %v3362
      %v3564 = vpop.f32.mrb[0].mxu0
      %v3565 = vadd.f32 0.0, %v3564
      %v3566 = vpop.f32.mrb[0].mxu0
      %3567 = vmatprep.mubr.f32.mxu0 0.0
      %3568 = vmatmul.mubr.f32.gmra.mrb[0].mxu0 %v3365
      %v3569 = vpop.f32.mrb[0].mxu0
      %v3570 = vadd.f32 0.0, %v3569
      %v3571 = vpop.f32.mrb[0].mxu0
      %3572 = vmatprep.mubr.f32.mxu0 0.0
      %3573 = vmatmul.mubr.f32.gmra.mrb[0].mxu0 %v3368
      %v3574 = vpop.f32.mrb[0].mxu0
      %v3575 = vadd.f32 0.0, %v3574
      %v3576 = vpop.f32.mrb[0].mxu0
      %3577 = vmatprep.mubr.f32.mxu0 0.0
      %3578 = vmatmul.mubr.f32.gmra.mrb[0].mxu0 %v3371
      %v3579 = vpop.f32.mrb[0].mxu0
      %v3580 = vadd.f32 0.0, %v3579
      %v3581 = vpop.f32.mrb[0].mxu0
      %3582 = vmatprep.mubr.f32.mxu0 0.0
      %3583 = vmatmul.mubr.f32.gmra.mrb[0].mxu0 %v3374
      %v3584 = vpop.f32.mrb[0].mxu0
      %v3585 = vadd.f32 0.0, %v3584
      %v3586 = vpop.f32.mrb[0].mxu0
      %3587 = vmatprep.mubr.f32.mxu0 0.0
      %3588 = vmatmul.mubr.f32.gmra.mrb[0].mxu0 %v3377
      %v3589 = vpop.f32.mrb[0].mxu0
      %v3590 = vadd.f32 0.0, %v3589
      %v3591 = vpop.f32.mrb[0].mxu0
      %3592 = vmatprep.mubr.f32.mxu0 0.0
      %3593 = vmatmul.mubr.f32.gmra.mrb[0].mxu0 %v3380
      %v3594 = vpop.f32.mrb[0].mxu0
      %v3595 = vadd.f32 0.0, %v3594
      %v3596 = vpop.f32.mrb[0].mxu0
      %3597 = vmatprep.mubr.f32.mxu0 0.0
      %3598 = vmatmul.mubr.f32.gmra.mrb[0].mxu0 %v3383
      %v3599 = vpop.f32.mrb[0].mxu0
      %v3600 = vadd.f32 0.0, %v3599
      %v3601 = vpop.f32.mrb[0].mxu0
      %3602 = vmatprep.mubr.f32.mxu0 0.0
      %3603 = vmatmul.mubr.f32.gmra.mrb[0].mxu0 %v3386
      %v3604 = vpop.f32.mrb[0].mxu0
      %v3605 = vadd.f32 0.0, %v3604
      %v3606 = vpop.f32.mrb[0].mxu0
      %3607 = vmatprep.mubr.f32.mxu0 0.0
      %3608 = vmatmul.mubr.f32.gmra.mrb[0].mxu0 %v3389
      %v3609 = vpop.f32.mrb[0].mxu0
      %v3610 = vadd.f32 0.0, %v3609
      %v3611 = vpop.f32.mrb[0].mxu0
      %3612 = vmatprep.mubr.f32.mxu0 0.0
      %3613 = vmatmul.mubr.f32.gmra.mrb[0].mxu0 %v3392
      %v3614 = vpop.f32.mrb[0].mxu0
      %v3615 = vadd.f32 0.0, %v3614
      %v3616 = vpop.f32.mrb[0].mxu0
      %3617 = vmatprep.mubr.f32.mxu0 0.0
      %3618 = vmatmul.mubr.f32.gmra.mrb[0].mxu0 %v3395
      %v3619 = vpop.f32.mrb[0].mxu0
      %v3620 = vadd.f32 0.0, %v3619
      %v3621 = vpop.f32.mrb[0].mxu0
      %3622 = vmatprep.mubr.f32.mxu0 0.0
      %3623 = vmatmul.mubr.f32.gmra.mrb[0].mxu0 %v3398
      %v3624 = vpop.f32.mrb[0].mxu0
      %v3625 = vadd.f32 0.0, %v3624
      %v3626 = vpop.f32.mrb[0].mxu0
      %3627 = vdwg.mxu0
      %v3628 = vadd.f32 %v3238, %v3470
      %v3629 = vadd.f32 %v3239, %v3475
      %v3630 = vadd.f32 %v3240, %v3480
      %v3631 = vadd.f32 %v3241, %v3485
      %v3632 = vadd.f32 %v3242, %v3490
      %v3633 = vadd.f32 %v3243, %v3495
      %v3634 = vadd.f32 %v3244, %v3500
      %v3635 = vadd.f32 %v3245, %v3505
      %v3636 = vadd.f32 %v3246, %v3510
      %v3637 = vadd.f32 %v3247, %v3515
      %v3638 = vadd.f32 %v3248, %v3520
      %v3639 = vadd.f32 %v3249, %v3525
      %v3640 = vadd.f32 %v3250, %v3530
      %v3641 = vadd.f32 %v3251, %v3535
      %v3642 = vadd.f32 %v3252, %v3540
      %v3643 = vadd.f32 %v3253, %v3545
      %v3644 = vadd.f32 %v3254, %v3550
      %v3645 = vadd.f32 %v3255, %v3555
      %v3646 = vadd.f32 %v3256, %v3560
      %v3647 = vadd.f32 %v3257, %v3565
      %v3648 = vadd.f32 %v3258, %v3570
      %v3649 = vadd.f32 %v3259, %v3575
      %v3650 = vadd.f32 %v3260, %v3580
      %v3651 = vadd.f32 %v3261, %v3585
      %v3652 = vadd.f32 %v3262, %v3590
      %v3653 = vadd.f32 %v3263, %v3595
      %v3654 = vadd.f32 %v3264, %v3600
      %v3655 = vadd.f32 %v3265, %v3605
      %v3656 = vadd.f32 %v3266, %v3610
      %v3657 = vadd.f32 %v3267, %v3615
      %v3658 = vadd.f32 %v3268, %v3620
      %v3659 = vadd.f32 %v3269, %v3625
      %v3660 = vld [vmem:[%s2879 + $0x9] sm:$0xff]
      %v3661 = vld [vmem:[%s2879 + $0x11] sm:$0xff]
      %v3662 = vld [vmem:[%s2879 + $0x29] sm:$0xff]
      %v3663 = vld [vmem:[%s2879 + $0x31] sm:$0xff]
      %v3664 = vld [vmem:[%s2879 + $0x49] sm:$0xff]
      %v3665 = vld [vmem:[%s2879 + $0x51] sm:$0xff]
      %v3666 = vld [vmem:[%s2879 + $0x69] sm:$0xff]
      %v3667 = vld [vmem:[%s2879 + $0x71] sm:$0xff]
      %v3668 = vld [vmem:[%s2879 + $0x89] sm:$0xff]
      %v3669 = vld [vmem:[%s2879 + $0x91] sm:$0xff]
      %v3670 = vld [vmem:[%s2879 + $0xa9] sm:$0xff]
      %v3671 = vld [vmem:[%s2879 + $0xb1] sm:$0xff]
      %v3672 = vld [vmem:[%s2879 + $0xc9] sm:$0xff]
      %v3673 = vld [vmem:[%s2879 + $0xd1] sm:$0xff]
      %v3674 = vld [vmem:[%s2879 + $0xe9] sm:$0xff]
      %v3675 = vld [vmem:[%s2879 + $0xf1] sm:$0xff]
      %v3676 = vld [vmem:[%s2879 + $0x109] sm:$0xff]
      %v3677 = vld [vmem:[%s2879 + $0x111] sm:$0xff]
      %v3678 = vld [vmem:[%s2879 + $0x129] sm:$0xff]
      %v3679 = vld [vmem:[%s2879 + $0x131] sm:$0xff]
      %v3680 = vld [vmem:[%s2879 + $0x149] sm:$0xff]
      %v3681 = vld [vmem:[%s2879 + $0x151] sm:$0xff]
      %v3682 = vld [vmem:[%s2879 + $0x169] sm:$0xff]
      %v3683 = vld [vmem:[%s2879 + $0x171] sm:$0xff]
      %v3684 = vld [vmem:[%s2879 + $0x189] sm:$0xff]
      %v3685 = vld [vmem:[%s2879 + $0x191] sm:$0xff]
      %v3686 = vld [vmem:[%s2879 + $0x1a9] sm:$0xff]
      %v3687 = vld [vmem:[%s2879 + $0x1b1] sm:$0xff]
      %v3688 = vld [vmem:[%s2879 + $0x1c9] sm:$0xff]
      %v3689 = vld [vmem:[%s2879 + $0x1d1] sm:$0xff]
      %v3690 = vld [vmem:[%s2879 + $0x1e9] sm:$0xff]
      %v3691 = vld [vmem:[%s2879 + $0x1f1] sm:$0xff]
      %s3692 = scalar_lea.vmem %s1, 32
      %v3693 = vld [vmem:[%s3692] sm:$0xf]
      %v3695 = vsel %vm497, %v3660, 0
      %v3698 = vsel %vm497, %v3661, 0
      %v3701 = vsel %vm497, %v3662, 0
      %v3704 = vsel %vm497, %v3663, 0
      %v3707 = vsel %vm497, %v3664, 0
      %v3710 = vsel %vm497, %v3665, 0
      %v3713 = vsel %vm497, %v3666, 0
      %v3716 = vsel %vm497, %v3667, 0
      %v3719 = vsel %vm497, %v3668, 0
      %v3722 = vsel %vm497, %v3669, 0
      %v3725 = vsel %vm497, %v3670, 0
      %v3728 = vsel %vm497, %v3671, 0
      %v3731 = vsel %vm497, %v3672, 0
      %v3734 = vsel %vm497, %v3673, 0
      %v3737 = vsel %vm497, %v3674, 0
      %v3740 = vsel %vm497, %v3675, 0
      %v3743 = vsel %vm497, %v3676, 0
      %v3746 = vsel %vm497, %v3677, 0
      %v3749 = vsel %vm497, %v3678, 0
      %v3752 = vsel %vm497, %v3679, 0
      %v3755 = vsel %vm497, %v3680, 0
      %v3758 = vsel %vm497, %v3681, 0
      %v3761 = vsel %vm497, %v3682, 0
      %v3764 = vsel %vm497, %v3683, 0
      %v3767 = vsel %vm497, %v3684, 0
      %v3770 = vsel %vm497, %v3685, 0
      %v3773 = vsel %vm497, %v3686, 0
      %v3776 = vsel %vm497, %v3687, 0
      %v3779 = vsel %vm497, %v3688, 0
      %v3782 = vsel %vm497, %v3689, 0
      %v3785 = vsel %vm497, %v3690, 0
      %v3788 = vsel %vm497, %v3691, 0
      %v3791 = vsel %vm766, %v3693, 0
      %3793 = vmatprep.subr.mxu0 0.0
      %3794 = vmatpush1.msra.mxu0 %v3791
      %3795 = vmatprep.subr.mxu0 0.0
      %3796 = vmatpush1.msra.mxu0 0.0
      %3797 = vmatprep.subr.mxu0 0.0
      %3798 = vmatpush1.msra.mxu0 0.0
      %3799 = vmatprep.subr.mxu0 0.0
      %3800 = vmatpush1.msra.mxu0 0.0
      %3801 = vmatprep.subr.mxu0 0.0
      %3802 = vmatpush1.msra.mxu0 0.0
      %3803 = vmatprep.subr.mxu0 0.0
      %3804 = vmatpush1.msra.mxu0 0.0
      %3805 = vmatprep.subr.mxu0 0.0
      %3806 = vmatpush1.msra.mxu0 0.0
      %3807 = vmatprep.subr.mxu0 0.0
      %3808 = vmatpush1.msra.mxu0 0.0
      %3809 = vmatprep.subr.mxu0 0.0
      %3810 = vmatpush1.msra.mxu0 0.0
      %3811 = vmatprep.subr.mxu0 0.0
      %3812 = vmatpush1.msra.mxu0 0.0
      %3813 = vmatprep.subr.mxu0 0.0
      %3814 = vmatpush1.msra.mxu0 0.0
      %3815 = vmatprep.subr.mxu0 0.0
      %3816 = vmatpush1.msra.mxu0 0.0
      %3817 = vmatprep.subr.mxu0 0.0
      %3818 = vmatpush1.msra.mxu0 0.0
      %3819 = vmatprep.subr.mxu0 0.0
      %3820 = vmatpush1.msra.mxu0 0.0
      %3821 = vmatprep.subr.mxu0 0.0
      %3822 = vmatpush1.msra.mxu0 0.0
      %3823 = vmatprep.subr.mxu0 0.0
      %3824 = vmatpush1.msra.mxu0 0.0
      %3825 = vmatprep.subr.mxu0 0.0
      %3826 = vmatpush1.msra.mxu0 0.0
      %3827 = vmatprep.subr.mxu0 0.0
      %3828 = vmatpush1.msra.mxu0 0.0
      %3829 = vmatprep.subr.mxu0 0.0
      %3830 = vmatpush1.msra.mxu0 0.0
      %3831 = vmatprep.subr.mxu0 0.0
      %3832 = vmatpush1.msra.mxu0 0.0
      %3833 = vmatprep.subr.mxu0 0.0
      %3834 = vmatpush1.msra.mxu0 0.0
      %3835 = vmatprep.subr.mxu0 0.0
      %3836 = vmatpush1.msra.mxu0 0.0
      %3837 = vmatprep.subr.mxu0 0.0
      %3838 = vmatpush1.msra.mxu0 0.0
      %3839 = vmatprep.subr.mxu0 0.0
      %3840 = vmatpush1.msra.mxu0 0.0
      %3841 = vmatprep.subr.mxu0 0.0
      %3842 = vmatpush1.msra.mxu0 0.0
      %3843 = vmatprep.subr.mxu0 0.0
      %3844 = vmatpush1.msra.mxu0 0.0
      %3845 = vmatprep.subr.mxu0 0.0
      %3846 = vmatpush1.msra.mxu0 0.0
      %3847 = vmatprep.subr.mxu0 0.0
      %3848 = vmatpush1.msra.mxu0 0.0
      %3849 = vmatprep.subr.mxu0 0.0
      %3850 = vmatpush1.msra.mxu0 0.0
      %3851 = vmatprep.subr.mxu0 0.0
      %3852 = vmatpush1.msra.mxu0 0.0
      %3853 = vmatprep.subr.mxu0 0.0
      %3854 = vmatpush1.msra.mxu0 0.0
      %3855 = vmatprep.subr.mxu0 0.0
      %3856 = vmatpush1.msra.mxu0 0.0
      %3857 = vmatprep.mubr.f32.mxu0 0.0
      %3858 = vmatmul.mubr.f32.gmra.mrb[0].mxu0 %v3695
      %v3859 = vpop.f32.mrb[0].mxu0
      %v3860 = vadd.f32 0.0, %v3859
      %v3861 = vpop.f32.mrb[0].mxu0
      %3862 = vmatprep.mubr.f32.mxu0 0.0
      %3863 = vmatmul.mubr.f32.gmra.mrb[0].mxu0 %v3698
      %v3864 = vpop.f32.mrb[0].mxu0
      %v3865 = vadd.f32 0.0, %v3864
      %v3866 = vpop.f32.mrb[0].mxu0
      %3867 = vmatprep.mubr.f32.mxu0 0.0
      %3868 = vmatmul.mubr.f32.gmra.mrb[0].mxu0 %v3701
      %v3869 = vpop.f32.mrb[0].mxu0
      %v3870 = vadd.f32 0.0, %v3869
      %v3871 = vpop.f32.mrb[0].mxu0
      %3872 = vmatprep.mubr.f32.mxu0 0.0
      %3873 = vmatmul.mubr.f32.gmra.mrb[0].mxu0 %v3704
      %v3874 = vpop.f32.mrb[0].mxu0
      %v3875 = vadd.f32 0.0, %v3874
      %v3876 = vpop.f32.mrb[0].mxu0
      %3877 = vmatprep.mubr.f32.mxu0 0.0
      %3878 = vmatmul.mubr.f32.gmra.mrb[0].mxu0 %v3707
      %v3879 = vpop.f32.mrb[0].mxu0
      %v3880 = vadd.f32 0.0, %v3879
      %v3881 = vpop.f32.mrb[0].mxu0
      %3882 = vmatprep.mubr.f32.mxu0 0.0
      %3883 = vmatmul.mubr.f32.gmra.mrb[0].mxu0 %v3710
      %v3884 = vpop.f32.mrb[0].mxu0
      %v3885 = vadd.f32 0.0, %v3884
      %v3886 = vpop.f32.mrb[0].mxu0
      %3887 = vmatprep.mubr.f32.mxu0 0.0
      %3888 = vmatmul.mubr.f32.gmra.mrb[0].mxu0 %v3713
      %v3889 = vpop.f32.mrb[0].mxu0
      %v3890 = vadd.f32 0.0, %v3889
      %v3891 = vpop.f32.mrb[0].mxu0
      %3892 = vmatprep.mubr.f32.mxu0 0.0
      %3893 = vmatmul.mubr.f32.gmra.mrb[0].mxu0 %v3716
      %v3894 = vpop.f32.mrb[0].mxu0
      %v3895 = vadd.f32 0.0, %v3894
      %v3896 = vpop.f32.mrb[0].mxu0
      %3897 = vmatprep.mubr.f32.mxu0 0.0
      %3898 = vmatmul.mubr.f32.gmra.mrb[0].mxu0 %v3719
      %v3899 = vpop.f32.mrb[0].mxu0
      %v3900 = vadd.f32 0.0, %v3899
      %v3901 = vpop.f32.mrb[0].mxu0
      %3902 = vmatprep.mubr.f32.mxu0 0.0
      %3903 = vmatmul.mubr.f32.gmra.mrb[0].mxu0 %v3722
      %v3904 = vpop.f32.mrb[0].mxu0
      %v3905 = vadd.f32 0.0, %v3904
      %v3906 = vpop.f32.mrb[0].mxu0
      %3907 = vmatprep.mubr.f32.mxu0 0.0
      %3908 = vmatmul.mubr.f32.gmra.mrb[0].mxu0 %v3725
      %v3909 = vpop.f32.mrb[0].mxu0
      %v3910 = vadd.f32 0.0, %v3909
      %v3911 = vpop.f32.mrb[0].mxu0
      %3912 = vmatprep.mubr.f32.mxu0 0.0
      %3913 = vmatmul.mubr.f32.gmra.mrb[0].mxu0 %v3728
      %v3914 = vpop.f32.mrb[0].mxu0
      %v3915 = vadd.f32 0.0, %v3914
      %v3916 = vpop.f32.mrb[0].mxu0
      %3917 = vmatprep.mubr.f32.mxu0 0.0
      %3918 = vmatmul.mubr.f32.gmra.mrb[0].mxu0 %v3731
      %v3919 = vpop.f32.mrb[0].mxu0
      %v3920 = vadd.f32 0.0, %v3919
      %v3921 = vpop.f32.mrb[0].mxu0
      %3922 = vmatprep.mubr.f32.mxu0 0.0
      %3923 = vmatmul.mubr.f32.gmra.mrb[0].mxu0 %v3734
      %v3924 = vpop.f32.mrb[0].mxu0
      %v3925 = vadd.f32 0.0, %v3924
      %v3926 = vpop.f32.mrb[0].mxu0
      %3927 = vmatprep.mubr.f32.mxu0 0.0
      %3928 = vmatmul.mubr.f32.gmra.mrb[0].mxu0 %v3737
      %v3929 = vpop.f32.mrb[0].mxu0
      %v3930 = vadd.f32 0.0, %v3929
      %v3931 = vpop.f32.mrb[0].mxu0
      %3932 = vmatprep.mubr.f32.mxu0 0.0
      %3933 = vmatmul.mubr.f32.gmra.mrb[0].mxu0 %v3740
      %v3934 = vpop.f32.mrb[0].mxu0
      %v3935 = vadd.f32 0.0, %v3934
      %v3936 = vpop.f32.mrb[0].mxu0
      %3937 = vmatprep.mubr.f32.mxu0 0.0
      %3938 = vmatmul.mubr.f32.gmra.mrb[0].mxu0 %v3743
      %v3939 = vpop.f32.mrb[0].mxu0
      %v3940 = vadd.f32 0.0, %v3939
      %v3941 = vpop.f32.mrb[0].mxu0
      %3942 = vmatprep.mubr.f32.mxu0 0.0
      %3943 = vmatmul.mubr.f32.gmra.mrb[0].mxu0 %v3746
      %v3944 = vpop.f32.mrb[0].mxu0
      %v3945 = vadd.f32 0.0, %v3944
      %v3946 = vpop.f32.mrb[0].mxu0
      %3947 = vmatprep.mubr.f32.mxu0 0.0
      %3948 = vmatmul.mubr.f32.gmra.mrb[0].mxu0 %v3749
      %v3949 = vpop.f32.mrb[0].mxu0
      %v3950 = vadd.f32 0.0, %v3949
      %v3951 = vpop.f32.mrb[0].mxu0
      %3952 = vmatprep.mubr.f32.mxu0 0.0
      %3953 = vmatmul.mubr.f32.gmra.mrb[0].mxu0 %v3752
      %v3954 = vpop.f32.mrb[0].mxu0
      %v3955 = vadd.f32 0.0, %v3954
      %v3956 = vpop.f32.mrb[0].mxu0
      %3957 = vmatprep.mubr.f32.mxu0 0.0
      %3958 = vmatmul.mubr.f32.gmra.mrb[0].mxu0 %v3755
      %v3959 = vpop.f32.mrb[0].mxu0
      %v3960 = vadd.f32 0.0, %v3959
      %v3961 = vpop.f32.mrb[0].mxu0
      %3962 = vmatprep.mubr.f32.mxu0 0.0
      %3963 = vmatmul.mubr.f32.gmra.mrb[0].mxu0 %v3758
      %v3964 = vpop.f32.mrb[0].mxu0
      %v3965 = vadd.f32 0.0, %v3964
      %v3966 = vpop.f32.mrb[0].mxu0
      %3967 = vmatprep.mubr.f32.mxu0 0.0
      %3968 = vmatmul.mubr.f32.gmra.mrb[0].mxu0 %v3761
      %v3969 = vpop.f32.mrb[0].mxu0
      %v3970 = vadd.f32 0.0, %v3969
      %v3971 = vpop.f32.mrb[0].mxu0
      %3972 = vmatprep.mubr.f32.mxu0 0.0
      %3973 = vmatmul.mubr.f32.gmra.mrb[0].mxu0 %v3764
      %v3974 = vpop.f32.mrb[0].mxu0
      %v3975 = vadd.f32 0.0, %v3974
      %v3976 = vpop.f32.mrb[0].mxu0
      %3977 = vmatprep.mubr.f32.mxu0 0.0
      %3978 = vmatmul.mubr.f32.gmra.mrb[0].mxu0 %v3767
      %v3979 = vpop.f32.mrb[0].mxu0
      %v3980 = vadd.f32 0.0, %v3979
      %v3981 = vpop.f32.mrb[0].mxu0
      %3982 = vmatprep.mubr.f32.mxu0 0.0
      %3983 = vmatmul.mubr.f32.gmra.mrb[0].mxu0 %v3770
      %v3984 = vpop.f32.mrb[0].mxu0
      %v3985 = vadd.f32 0.0, %v3984
      %v3986 = vpop.f32.mrb[0].mxu0
      %3987 = vmatprep.mubr.f32.mxu0 0.0
      %3988 = vmatmul.mubr.f32.gmra.mrb[0].mxu0 %v3773
      %v3989 = vpop.f32.mrb[0].mxu0
      %v3990 = vadd.f32 0.0, %v3989
      %v3991 = vpop.f32.mrb[0].mxu0
      %3992 = vmatprep.mubr.f32.mxu0 0.0
      %3993 = vmatmul.mubr.f32.gmra.mrb[0].mxu0 %v3776
      %v3994 = vpop.f32.mrb[0].mxu0
      %v3995 = vadd.f32 0.0, %v3994
      %v3996 = vpop.f32.mrb[0].mxu0
      %3997 = vmatprep.mubr.f32.mxu0 0.0
      %3998 = vmatmul.mubr.f32.gmra.mrb[0].mxu0 %v3779
      %v3999 = vpop.f32.mrb[0].mxu0
      %v4000 = vadd.f32 0.0, %v3999
      %v4001 = vpop.f32.mrb[0].mxu0
      %4002 = vmatprep.mubr.f32.mxu0 0.0
      %4003 = vmatmul.mubr.f32.gmra.mrb[0].mxu0 %v3782
      %v4004 = vpop.f32.mrb[0].mxu0
      %v4005 = vadd.f32 0.0, %v4004
      %v4006 = vpop.f32.mrb[0].mxu0
      %4007 = vmatprep.mubr.f32.mxu0 0.0
      %4008 = vmatmul.mubr.f32.gmra.mrb[0].mxu0 %v3785
      %v4009 = vpop.f32.mrb[0].mxu0
      %v4010 = vadd.f32 0.0, %v4009
      %v4011 = vpop.f32.mrb[0].mxu0
      %4012 = vmatprep.mubr.f32.mxu0 0.0
      %4013 = vmatmul.mubr.f32.gmra.mrb[0].mxu0 %v3788
      %v4014 = vpop.f32.mrb[0].mxu0
      %v4015 = vadd.f32 0.0, %v4014
      %v4016 = vpop.f32.mrb[0].mxu0
      %4017 = vdwg.mxu0
      %v4018 = vadd.f32 %v3628, %v3860
      %v4019 = vadd.f32 %v3629, %v3865
      %v4020 = vadd.f32 %v3630, %v3870
      %v4021 = vadd.f32 %v3631, %v3875
      %v4022 = vadd.f32 %v3632, %v3880
      %v4023 = vadd.f32 %v3633, %v3885
      %v4024 = vadd.f32 %v3634, %v3890
      %v4025 = vadd.f32 %v3635, %v3895
      %v4026 = vadd.f32 %v3636, %v3900
      %v4027 = vadd.f32 %v3637, %v3905
      %v4028 = vadd.f32 %v3638, %v3910
      %v4029 = vadd.f32 %v3639, %v3915
      %v4030 = vadd.f32 %v3640, %v3920
      %v4031 = vadd.f32 %v3641, %v3925
      %v4032 = vadd.f32 %v3642, %v3930
      %v4033 = vadd.f32 %v3643, %v3935
      %v4034 = vadd.f32 %v3644, %v3940
      %v4035 = vadd.f32 %v3645, %v3945
      %v4036 = vadd.f32 %v3646, %v3950
      %v4037 = vadd.f32 %v3647, %v3955
      %v4038 = vadd.f32 %v3648, %v3960
      %v4039 = vadd.f32 %v3649, %v3965
      %v4040 = vadd.f32 %v3650, %v3970
      %v4041 = vadd.f32 %v3651, %v3975
      %v4042 = vadd.f32 %v3652, %v3980
      %v4043 = vadd.f32 %v3653, %v3985
      %v4044 = vadd.f32 %v3654, %v3990
      %v4045 = vadd.f32 %v3655, %v3995
      %v4046 = vadd.f32 %v3656, %v4000
      %v4047 = vadd.f32 %v3657, %v4005
      %v4048 = vadd.f32 %v3658, %v4010
      %v4049 = vadd.f32 %v3659, %v4015
      %vm4050 = vcmp.gt.f32.partialorder %v4018, 0.0
      %vm4051 = vcmp.gt.f32.partialorder %v4019, 0.0
      %vm4052 = vcmp.gt.f32.partialorder %v4020, 0.0
      %vm4053 = vcmp.gt.f32.partialorder %v4021, 0.0
      %vm4054 = vcmp.gt.f32.partialorder %v4022, 0.0
      %vm4055 = vcmp.gt.f32.partialorder %v4023, 0.0
      %vm4056 = vcmp.gt.f32.partialorder %v4024, 0.0
      %vm4057 = vcmp.gt.f32.partialorder %v4025, 0.0
      %vm4058 = vcmp.gt.f32.partialorder %v4026, 0.0
      %vm4059 = vcmp.gt.f32.partialorder %v4027, 0.0
      %vm4060 = vcmp.gt.f32.partialorder %v4028, 0.0
      %vm4061 = vcmp.gt.f32.partialorder %v4029, 0.0
      %vm4062 = vcmp.gt.f32.partialorder %v4030, 0.0
      %vm4063 = vcmp.gt.f32.partialorder %v4031, 0.0
      %vm4064 = vcmp.gt.f32.partialorder %v4032, 0.0
      %vm4065 = vcmp.gt.f32.partialorder %v4033, 0.0
      %vm4066 = vcmp.gt.f32.partialorder %v4034, 0.0
      %vm4067 = vcmp.gt.f32.partialorder %v4035, 0.0
      %vm4068 = vcmp.gt.f32.partialorder %v4036, 0.0
      %vm4069 = vcmp.gt.f32.partialorder %v4037, 0.0
      %vm4070 = vcmp.gt.f32.partialorder %v4038, 0.0
      %vm4071 = vcmp.gt.f32.partialorder %v4039, 0.0
      %vm4072 = vcmp.gt.f32.partialorder %v4040, 0.0
      %vm4073 = vcmp.gt.f32.partialorder %v4041, 0.0
      %vm4074 = vcmp.gt.f32.partialorder %v4042, 0.0
      %vm4075 = vcmp.gt.f32.partialorder %v4043, 0.0
      %vm4076 = vcmp.gt.f32.partialorder %v4044, 0.0
      %vm4077 = vcmp.gt.f32.partialorder %v4045, 0.0
      %vm4078 = vcmp.gt.f32.partialorder %v4046, 0.0
      %vm4079 = vcmp.gt.f32.partialorder %v4047, 0.0
      %vm4080 = vcmp.gt.f32.partialorder %v4048, 0.0
      %vm4081 = vcmp.gt.f32.partialorder %v4049, 0.0
      %v4082 = vld [vmem:[%s2] sm:$0x1]
      %v4084 = vlaneseq
      %v4085 = vshrl.u32 %v4084, 7
      %v4086 = vsub.s32 0, %v4085
      %v4087 = vrot.slane %v4082, %v4086
      %v4089 = vmul.f32 %v4018, %v4087
      %v4090 = vmul.f32 %v4019, %v4087
      %v4091 = vmul.f32 %v4020, %v4087
      %v4092 = vmul.f32 %v4021, %v4087
      %v4093 = vmul.f32 %v4022, %v4087
      %v4094 = vmul.f32 %v4023, %v4087
      %v4095 = vmul.f32 %v4024, %v4087
      %v4096 = vmul.f32 %v4025, %v4087
      %v4097 = vmul.f32 %v4026, %v4087
      %v4098 = vmul.f32 %v4027, %v4087
      %v4099 = vmul.f32 %v4028, %v4087
      %v4100 = vmul.f32 %v4029, %v4087
      %v4101 = vmul.f32 %v4030, %v4087
      %v4102 = vmul.f32 %v4031, %v4087
      %v4103 = vmul.f32 %v4032, %v4087
      %v4104 = vmul.f32 %v4033, %v4087
      %v4105 = vmul.f32 %v4034, %v4087
      %v4106 = vmul.f32 %v4035, %v4087
      %v4107 = vmul.f32 %v4036, %v4087
      %v4108 = vmul.f32 %v4037, %v4087
      %v4109 = vmul.f32 %v4038, %v4087
      %v4110 = vmul.f32 %v4039, %v4087
      %v4111 = vmul.f32 %v4040, %v4087
      %v4112 = vmul.f32 %v4041, %v4087
      %v4113 = vmul.f32 %v4042, %v4087
      %v4114 = vmul.f32 %v4043, %v4087
      %v4115 = vmul.f32 %v4044, %v4087
      %v4116 = vmul.f32 %v4045, %v4087
      %v4117 = vmul.f32 %v4046, %v4087
      %v4118 = vmul.f32 %v4047, %v4087
      %v4119 = vmul.f32 %v4048, %v4087
      %v4120 = vmul.f32 %v4049, %v4087
      %v4121 = vsel %vm4050, %v4018, %v4089
      %v4122 = vsel %vm4051, %v4019, %v4090
      %v4123 = vsel %vm4052, %v4020, %v4091
      %v4124 = vsel %vm4053, %v4021, %v4092
      %v4125 = vsel %vm4054, %v4022, %v4093
      %v4126 = vsel %vm4055, %v4023, %v4094
      %v4127 = vsel %vm4056, %v4024, %v4095
      %v4128 = vsel %vm4057, %v4025, %v4096
      %v4129 = vsel %vm4058, %v4026, %v4097
      %v4130 = vsel %vm4059, %v4027, %v4098
      %v4131 = vsel %vm4060, %v4028, %v4099
      %v4132 = vsel %vm4061, %v4029, %v4100
      %v4133 = vsel %vm4062, %v4030, %v4101
      %v4134 = vsel %vm4063, %v4031, %v4102
      %v4135 = vsel %vm4064, %v4032, %v4103
      %v4136 = vsel %vm4065, %v4033, %v4104
      %v4137 = vsel %vm4066, %v4034, %v4105
      %v4138 = vsel %vm4067, %v4035, %v4106
      %v4139 = vsel %vm4068, %v4036, %v4107
      %v4140 = vsel %vm4069, %v4037, %v4108
      %v4141 = vsel %vm4070, %v4038, %v4109
      %v4142 = vsel %vm4071, %v4039, %v4110
      %v4143 = vsel %vm4072, %v4040, %v4111
      %v4144 = vsel %vm4073, %v4041, %v4112
      %v4145 = vsel %vm4074, %v4042, %v4113
      %v4146 = vsel %vm4075, %v4043, %v4114
      %v4147 = vsel %vm4076, %v4044, %v4115
      %v4148 = vsel %vm4077, %v4045, %v4116
      %v4149 = vsel %vm4078, %v4046, %v4117
      %v4150 = vsel %vm4079, %v4047, %v4118
      %v4151 = vsel %vm4080, %v4048, %v4119
      %v4152 = vsel %vm4081, %v4049, %v4120
      %vm4153 = vcmask 64512
      %4154 = vst.msk [vmem:[#allocation3] sm:$0xff] %vm4153, 0.0
      %4155 = vst.msk [vmem:[#allocation3 + $0x8] sm:$0xff] %vm4153, 0.0
      %4156 = vst.msk [vmem:[#allocation3 + $0x10] sm:$0xff] %vm4153, 0.0
      %4157 = vst.msk [vmem:[#allocation3 + $0x18] sm:$0xff] %vm4153, 0.0
      %4158 = vst.msk [vmem:[#allocation3 + $0x20] sm:$0xff] %vm4153, 0.0
      %4159 = vst.msk [vmem:[#allocation3 + $0x28] sm:$0xff] %vm4153, 0.0
      %4160 = vst.msk [vmem:[#allocation3 + $0x30] sm:$0xff] %vm4153, 0.0
      %4161 = vst.msk [vmem:[#allocation3 + $0x38] sm:$0xff] %vm4153, 0.0
      %4162 = vst.msk [vmem:[#allocation3 + $0x40] sm:$0xff] %vm4153, 0.0
      %4163 = vst.msk [vmem:[#allocation3 + $0x48] sm:$0xff] %vm4153, 0.0
      %4164 = vst.msk [vmem:[#allocation3 + $0x50] sm:$0xff] %vm4153, 0.0
      %4165 = vst.msk [vmem:[#allocation3 + $0x58] sm:$0xff] %vm4153, 0.0
      %4166 = vst.msk [vmem:[#allocation3 + $0x60] sm:$0xff] %vm4153, 0.0
      %4167 = vst.msk [vmem:[#allocation3 + $0x68] sm:$0xff] %vm4153, 0.0
      %4168 = vst.msk [vmem:[#allocation3 + $0x70] sm:$0xff] %vm4153, 0.0
      %4169 = vst.msk [vmem:[#allocation3 + $0x78] sm:$0xff] %vm4153, 0.0
      %4170 = vst.msk [vmem:[#allocation3 + $0x80] sm:$0xff] %vm4153, 0.0
      %4171 = vst.msk [vmem:[#allocation3 + $0x88] sm:$0xff] %vm4153, 0.0
      %4172 = vst.msk [vmem:[#allocation3 + $0x90] sm:$0xff] %vm4153, 0.0
      %4173 = vst.msk [vmem:[#allocation3 + $0x98] sm:$0xff] %vm4153, 0.0
      %4174 = vst.msk [vmem:[#allocation3 + $0xa0] sm:$0xff] %vm4153, 0.0
      %4175 = vst.msk [vmem:[#allocation3 + $0xa8] sm:$0xff] %vm4153, 0.0
      %4176 = vst.msk [vmem:[#allocation3 + $0xb0] sm:$0xff] %vm4153, 0.0
      %4177 = vst.msk [vmem:[#allocation3 + $0xb8] sm:$0xff] %vm4153, 0.0
      %4178 = vst.msk [vmem:[#allocation3 + $0xc0] sm:$0xff] %vm4153, 0.0
      %4179 = vst.msk [vmem:[#allocation3 + $0xc8] sm:$0xff] %vm4153, 0.0
      %4180 = vst.msk [vmem:[#allocation3 + $0xd0] sm:$0xff] %vm4153, 0.0
      %4181 = vst.msk [vmem:[#allocation3 + $0xd8] sm:$0xff] %vm4153, 0.0
      %4182 = vst.msk [vmem:[#allocation3 + $0xe0] sm:$0xff] %vm4153, 0.0
      %4183 = vst.msk [vmem:[#allocation3 + $0xe8] sm:$0xff] %vm4153, 0.0
      %4184 = vst.msk [vmem:[#allocation3 + $0xf0] sm:$0xff] %vm4153, 0.0
      %4185 = vst.msk [vmem:[#allocation3 + $0xf8] sm:$0xff] %vm4153, 0.0
      %4186 = vst.msk [vmem:[#allocation3 + $0x100] sm:$0xff] %vm4153, 0.0
      %4187 = vst.msk [vmem:[#allocation3 + $0x108] sm:$0xff] %vm4153, 0.0
      %4188 = vst.msk [vmem:[#allocation3 + $0x110] sm:$0xff] %vm4153, 0.0
      %4189 = vst.msk [vmem:[#allocation3 + $0x118] sm:$0xff] %vm4153, 0.0
      %4190 = vst.msk [vmem:[#allocation3 + $0x120] sm:$0xff] %vm4153, 0.0
      %4191 = vst.msk [vmem:[#allocation3 + $0x128] sm:$0xff] %vm4153, 0.0
      %4192 = vst.msk [vmem:[#allocation3 + $0x130] sm:$0xff] %vm4153, 0.0
      %4193 = vst.msk [vmem:[#allocation3 + $0x138] sm:$0xff] %vm4153, 0.0
      %4194 = vst.msk [vmem:[#allocation3 + $0x140] sm:$0xff] %vm4153, 0.0
      %4195 = vst.msk [vmem:[#allocation3 + $0x148] sm:$0xff] %vm4153, 0.0
      %4196 = vst.msk [vmem:[#allocation3 + $0x150] sm:$0xff] %vm4153, 0.0
      %4197 = vst.msk [vmem:[#allocation3 + $0x158] sm:$0xff] %vm4153, 0.0
      %4198 = vst.msk [vmem:[#allocation3 + $0x160] sm:$0xff] %vm4153, 0.0
      %4199 = vst.msk [vmem:[#allocation3 + $0x168] sm:$0xff] %vm4153, 0.0
      %4200 = vst.msk [vmem:[#allocation3 + $0x170] sm:$0xff] %vm4153, 0.0
      %4201 = vst.msk [vmem:[#allocation3 + $0x178] sm:$0xff] %vm4153, 0.0
      %4202 = vst.msk [vmem:[#allocation3 + $0x180] sm:$0xff] %vm4153, 0.0
      %4203 = vst.msk [vmem:[#allocation3 + $0x188] sm:$0xff] %vm4153, 0.0
      %4204 = vst.msk [vmem:[#allocation3 + $0x190] sm:$0xff] %vm4153, 0.0
      %4205 = vst.msk [vmem:[#allocation3 + $0x198] sm:$0xff] %vm4153, 0.0
      %4206 = vst.msk [vmem:[#allocation3 + $0x1a0] sm:$0xff] %vm4153, 0.0
      %4207 = vst.msk [vmem:[#allocation3 + $0x1a8] sm:$0xff] %vm4153, 0.0
      %4208 = vst.msk [vmem:[#allocation3 + $0x1b0] sm:$0xff] %vm4153, 0.0
      %4209 = vst.msk [vmem:[#allocation3 + $0x1b8] sm:$0xff] %vm4153, 0.0
      %4210 = vst.msk [vmem:[#allocation3 + $0x1c0] sm:$0xff] %vm4153, 0.0
      %4211 = vst.msk [vmem:[#allocation3 + $0x1c8] sm:$0xff] %vm4153, 0.0
      %4212 = vst.msk [vmem:[#allocation3 + $0x1d0] sm:$0xff] %vm4153, 0.0
      %4213 = vst.msk [vmem:[#allocation3 + $0x1d8] sm:$0xff] %vm4153, 0.0
      %4214 = vst.msk [vmem:[#allocation3 + $0x1e0] sm:$0xff] %vm4153, 0.0
      %4215 = vst.msk [vmem:[#allocation3 + $0x1e8] sm:$0xff] %vm4153, 0.0
      %4216 = vst.msk [vmem:[#allocation3 + $0x1f0] sm:$0xff] %vm4153, 0.0
      %4217 = vst.msk [vmem:[#allocation3 + $0x1f8] sm:$0xff] %vm4153, 0.0
      %4218 = vst.msk [vmem:[#allocation3 + $0x200] sm:$0xff] %vm4153, 0.0
      %4219 = vst.msk [vmem:[#allocation3 + $0x208] sm:$0xff] %vm4153, 0.0
      %4220 = vst.msk [vmem:[#allocation3 + $0x210] sm:$0xff] %vm4153, 0.0
      %4221 = vst.msk [vmem:[#allocation3 + $0x218] sm:$0xff] %vm4153, 0.0
      %4222 = vst.msk [vmem:[#allocation3 + $0x220] sm:$0xff] %vm4153, 0.0
      %4223 = vst.msk [vmem:[#allocation3 + $0x228] sm:$0xff] %vm4153, 0.0
      %4224 = vst.msk [vmem:[#allocation3 + $0x230] sm:$0xff] %vm4153, 0.0
      %4225 = vst.msk [vmem:[#allocation3 + $0x238] sm:$0xff] %vm4153, 0.0
      %s4226 = scalar_lea.vmem [#allocation3], 32
      %4227 = vst.msk [vmem:[%s4226 + $0x8] sm:$0xff] %vm4153, %v4121
      %4228 = vst.msk [vmem:[%s4226 + $0x10] sm:$0xff] %vm4153, %v4122
      %4229 = vst.msk [vmem:[%s4226 + $0x28] sm:$0xff] %vm4153, %v4123
      %4230 = vst.msk [vmem:[%s4226 + $0x30] sm:$0xff] %vm4153, %v4124
      %4231 = vst.msk [vmem:[%s4226 + $0x48] sm:$0xff] %vm4153, %v4125
      %4232 = vst.msk [vmem:[%s4226 + $0x50] sm:$0xff] %vm4153, %v4126
      %4233 = vst.msk [vmem:[%s4226 + $0x68] sm:$0xff] %vm4153, %v4127
      %4234 = vst.msk [vmem:[%s4226 + $0x70] sm:$0xff] %vm4153, %v4128
      %4235 = vst.msk [vmem:[%s4226 + $0x88] sm:$0xff] %vm4153, %v4129
      %4236 = vst.msk [vmem:[%s4226 + $0x90] sm:$0xff] %vm4153, %v4130
      %4237 = vst.msk [vmem:[%s4226 + $0xa8] sm:$0xff] %vm4153, %v4131
      %4238 = vst.msk [vmem:[%s4226 + $0xb0] sm:$0xff] %vm4153, %v4132
      %4239 = vst.msk [vmem:[%s4226 + $0xc8] sm:$0xff] %vm4153, %v4133
      %4240 = vst.msk [vmem:[%s4226 + $0xd0] sm:$0xff] %vm4153, %v4134
      %4241 = vst.msk [vmem:[%s4226 + $0xe8] sm:$0xff] %vm4153, %v4135
      %4242 = vst.msk [vmem:[%s4226 + $0xf0] sm:$0xff] %vm4153, %v4136
      %4243 = vst.msk [vmem:[%s4226 + $0x108] sm:$0xff] %vm4153, %v4137
      %4244 = vst.msk [vmem:[%s4226 + $0x110] sm:$0xff] %vm4153, %v4138
      %4245 = vst.msk [vmem:[%s4226 + $0x128] sm:$0xff] %vm4153, %v4139
      %4246 = vst.msk [vmem:[%s4226 + $0x130] sm:$0xff] %vm4153, %v4140
      %4247 = vst.msk [vmem:[%s4226 + $0x148] sm:$0xff] %vm4153, %v4141
      %4248 = vst.msk [vmem:[%s4226 + $0x150] sm:$0xff] %vm4153, %v4142
      %4249 = vst.msk [vmem:[%s4226 + $0x168] sm:$0xff] %vm4153, %v4143
      %4250 = vst.msk [vmem:[%s4226 + $0x170] sm:$0xff] %vm4153, %v4144
      %4251 = vst.msk [vmem:[%s4226 + $0x188] sm:$0xff] %vm4153, %v4145
      %4252 = vst.msk [vmem:[%s4226 + $0x190] sm:$0xff] %vm4153, %v4146
      %4253 = vst.msk [vmem:[%s4226 + $0x1a8] sm:$0xff] %vm4153, %v4147
      %4254 = vst.msk [vmem:[%s4226 + $0x1b0] sm:$0xff] %vm4153, %v4148
      %4255 = vst.msk [vmem:[%s4226 + $0x1c8] sm:$0xff] %vm4153, %v4149
      %4256 = vst.msk [vmem:[%s4226 + $0x1d0] sm:$0xff] %vm4153, %v4150
      %4257 = vst.msk [vmem:[%s4226 + $0x1e8] sm:$0xff] %vm4153, %v4151
      %4258 = vst.msk [vmem:[%s4226 + $0x1f0] sm:$0xff] %vm4153, %v4152
      %v4259 = vld [vmem:[#allocation3 + $0x7] sm:$0xff]
      %v4260 = vld [vmem:[#allocation3 + $0xf] sm:$0xff]
      %v4261 = vld [vmem:[#allocation3 + $0x27] sm:$0xff]
      %v4262 = vld [vmem:[#allocation3 + $0x2f] sm:$0xff]
      %v4263 = vld [vmem:[#allocation3 + $0x47] sm:$0xff]
      %v4264 = vld [vmem:[#allocation3 + $0x4f] sm:$0xff]
      %v4265 = vld [vmem:[#allocation3 + $0x67] sm:$0xff]
      %v4266 = vld [vmem:[#allocation3 + $0x6f] sm:$0xff]
      %v4267 = vld [vmem:[#allocation3 + $0x87] sm:$0xff]
      %v4268 = vld [vmem:[#allocation3 + $0x8f] sm:$0xff]
      %v4269 = vld [vmem:[#allocation3 + $0xa7] sm:$0xff]
      %v4270 = vld [vmem:[#allocation3 + $0xaf] sm:$0xff]
      %v4271 = vld [vmem:[#allocation3 + $0xc7] sm:$0xff]
      %v4272 = vld [vmem:[#allocation3 + $0xcf] sm:$0xff]
      %v4273 = vld [vmem:[#allocation3 + $0xe7] sm:$0xff]
      %v4274 = vld [vmem:[#allocation3 + $0xef] sm:$0xff]
      %v4275 = vld [vmem:[#allocation3 + $0x107] sm:$0xff]
      %v4276 = vld [vmem:[#allocation3 + $0x10f] sm:$0xff]
      %v4277 = vld [vmem:[#allocation3 + $0x127] sm:$0xff]
      %v4278 = vld [vmem:[#allocation3 + $0x12f] sm:$0xff]
      %v4279 = vld [vmem:[#allocation3 + $0x147] sm:$0xff]
      %v4280 = vld [vmem:[#allocation3 + $0x14f] sm:$0xff]
      %v4281 = vld [vmem:[#allocation3 + $0x167] sm:$0xff]
      %v4282 = vld [vmem:[#allocation3 + $0x16f] sm:$0xff]
      %v4283 = vld [vmem:[#allocation3 + $0x187] sm:$0xff]
      %v4284 = vld [vmem:[#allocation3 + $0x18f] sm:$0xff]
      %v4285 = vld [vmem:[#allocation3 + $0x1a7] sm:$0xff]
      %v4286 = vld [vmem:[#allocation3 + $0x1af] sm:$0xff]
      %v4287 = vld [vmem:[#allocation3 + $0x1c7] sm:$0xff]
      %v4288 = vld [vmem:[#allocation3 + $0x1cf] sm:$0xff]
      %v4289 = vld [vmem:[#allocation3 + $0x1e7] sm:$0xff]
      %v4290 = vld [vmem:[#allocation3 + $0x1ef] sm:$0xff]
      %v4291 = vld [vmem:[%s3] sm:$0xff]
      %v4292 = vld [vmem:[#allocation3 + $0x8] sm:$0xff]
      %v4293 = vld [vmem:[#allocation3 + $0x10] sm:$0xff]
      %v4294 = vld [vmem:[#allocation3 + $0x28] sm:$0xff]
      %v4295 = vld [vmem:[#allocation3 + $0x30] sm:$0xff]
      %v4296 = vld [vmem:[#allocation3 + $0x48] sm:$0xff]
      %v4297 = vld [vmem:[#allocation3 + $0x50] sm:$0xff]
      %v4298 = vld [vmem:[#allocation3 + $0x68] sm:$0xff]
      %v4299 = vld [vmem:[#allocation3 + $0x70] sm:$0xff]
      %v4300 = vld [vmem:[#allocation3 + $0x88] sm:$0xff]
      %v4301 = vld [vmem:[#allocation3 + $0x90] sm:$0xff]
      %v4302 = vld [vmem:[#allocation3 + $0xa8] sm:$0xff]
      %v4303 = vld [vmem:[#allocation3 + $0xb0] sm:$0xff]
      %v4304 = vld [vmem:[#allocation3 + $0xc8] sm:$0xff]
      %v4305 = vld [vmem:[#allocation3 + $0xd0] sm:$0xff]
      %v4306 = vld [vmem:[#allocation3 + $0xe8] sm:$0xff]
      %v4307 = vld [vmem:[#allocation3 + $0xf0] sm:$0xff]
      %v4308 = vld [vmem:[#allocation3 + $0x108] sm:$0xff]
      %v4309 = vld [vmem:[#allocation3 + $0x110] sm:$0xff]
      %v4310 = vld [vmem:[#allocation3 + $0x128] sm:$0xff]
      %v4311 = vld [vmem:[#allocation3 + $0x130] sm:$0xff]
      %v4312 = vld [vmem:[#allocation3 + $0x148] sm:$0xff]
      %v4313 = vld [vmem:[#allocation3 + $0x150] sm:$0xff]
      %v4314 = vld [vmem:[#allocation3 + $0x168] sm:$0xff]
      %v4315 = vld [vmem:[#allocation3 + $0x170] sm:$0xff]
      %v4316 = vld [vmem:[#allocation3 + $0x188] sm:$0xff]
      %v4317 = vld [vmem:[#allocation3 + $0x190] sm:$0xff]
      %v4318 = vld [vmem:[#allocation3 + $0x1a8] sm:$0xff]
      %v4319 = vld [vmem:[#allocation3 + $0x1b0] sm:$0xff]
      %v4320 = vld [vmem:[#allocation3 + $0x1c8] sm:$0xff]
      %v4321 = vld [vmem:[#allocation3 + $0x1d0] sm:$0xff]
      %v4322 = vld [vmem:[#allocation3 + $0x1e8] sm:$0xff]
      %v4323 = vld [vmem:[#allocation3 + $0x1f0] sm:$0xff]
      %s4324 = scalar_lea.vmem %s3, 8
      %v4325 = vld [vmem:[%s4324] sm:$0xff]
      %v4327 = vsel %vm4153, %v4292, 0
      %v4330 = vsel %vm4153, %v4293, 0
      %v4333 = vsel %vm4153, %v4294, 0
      %v4336 = vsel %vm4153, %v4295, 0
      %v4339 = vsel %vm4153, %v4296, 0
      %v4342 = vsel %vm4153, %v4297, 0
      %v4345 = vsel %vm4153, %v4298, 0
      %v4348 = vsel %vm4153, %v4299, 0
      %v4351 = vsel %vm4153, %v4300, 0
      %v4354 = vsel %vm4153, %v4301, 0
      %v4357 = vsel %vm4153, %v4302, 0
      %v4360 = vsel %vm4153, %v4303, 0
      %v4363 = vsel %vm4153, %v4304, 0
      %v4366 = vsel %vm4153, %v4305, 0
      %v4369 = vsel %vm4153, %v4306, 0
      %v4372 = vsel %vm4153, %v4307, 0
      %v4375 = vsel %vm4153, %v4308, 0
      %v4378 = vsel %vm4153, %v4309, 0
      %v4381 = vsel %vm4153, %v4310, 0
      %v4384 = vsel %vm4153, %v4311, 0
      %v4387 = vsel %vm4153, %v4312, 0
      %v4390 = vsel %vm4153, %v4313, 0
      %v4393 = vsel %vm4153, %v4314, 0
      %v4396 = vsel %vm4153, %v4315, 0
      %v4399 = vsel %vm4153, %v4316, 0
      %v4402 = vsel %vm4153, %v4317, 0
      %v4405 = vsel %vm4153, %v4318, 0
      %v4408 = vsel %vm4153, %v4319, 0
      %v4411 = vsel %vm4153, %v4320, 0
      %v4414 = vsel %vm4153, %v4321, 0
      %v4417 = vsel %vm4153, %v4322, 0
      %v4420 = vsel %vm4153, %v4323, 0
      %4422 = vmatprep.subr.mxu0 0.0
      %4423 = vmatpush1.msra.mxu0 %v4325
      %4424 = vmatprep.subr.mxu0 0.0
      %4425 = vmatpush1.msra.mxu0 0.0
      %4426 = vmatprep.subr.mxu0 0.0
      %4427 = vmatpush1.msra.mxu0 0.0
      %4428 = vmatprep.subr.mxu0 0.0
      %4429 = vmatpush1.msra.mxu0 0.0
      %4430 = vmatprep.subr.mxu0 0.0
      %4431 = vmatpush1.msra.mxu0 0.0
      %4432 = vmatprep.subr.mxu0 0.0
      %4433 = vmatpush1.msra.mxu0 0.0
      %4434 = vmatprep.subr.mxu0 0.0
      %4435 = vmatpush1.msra.mxu0 0.0
      %4436 = vmatprep.subr.mxu0 0.0
      %4437 = vmatpush1.msra.mxu0 0.0
      %4438 = vmatprep.subr.mxu0 0.0
      %4439 = vmatpush1.msra.mxu0 0.0
      %4440 = vmatprep.subr.mxu0 0.0
      %4441 = vmatpush1.msra.mxu0 0.0
      %4442 = vmatprep.subr.mxu0 0.0
      %4443 = vmatpush1.msra.mxu0 0.0
      %4444 = vmatprep.subr.mxu0 0.0
      %4445 = vmatpush1.msra.mxu0 0.0
      %4446 = vmatprep.subr.mxu0 0.0
      %4447 = vmatpush1.msra.mxu0 0.0
      %4448 = vmatprep.subr.mxu0 0.0
      %4449 = vmatpush1.msra.mxu0 0.0
      %4450 = vmatprep.subr.mxu0 0.0
      %4451 = vmatpush1.msra.mxu0 0.0
      %4452 = vmatprep.subr.mxu0 0.0
      %4453 = vmatpush1.msra.mxu0 0.0
      %4454 = vmatprep.subr.mxu0 0.0
      %4455 = vmatpush1.msra.mxu0 0.0
      %4456 = vmatprep.subr.mxu0 0.0
      %4457 = vmatpush1.msra.mxu0 0.0
      %4458 = vmatprep.subr.mxu0 0.0
      %4459 = vmatpush1.msra.mxu0 0.0
      %4460 = vmatprep.subr.mxu0 0.0
      %4461 = vmatpush1.msra.mxu0 0.0
      %4462 = vmatprep.subr.mxu0 0.0
      %4463 = vmatpush1.msra.mxu0 0.0
      %4464 = vmatprep.subr.mxu0 0.0
      %4465 = vmatpush1.msra.mxu0 0.0
      %4466 = vmatprep.subr.mxu0 0.0
      %4467 = vmatpush1.msra.mxu0 0.0
      %4468 = vmatprep.subr.mxu0 0.0
      %4469 = vmatpush1.msra.mxu0 0.0
      %4470 = vmatprep.subr.mxu0 0.0
      %4471 = vmatpush1.msra.mxu0 0.0
      %4472 = vmatprep.subr.mxu0 0.0
      %4473 = vmatpush1.msra.mxu0 0.0
      %4474 = vmatprep.subr.mxu0 0.0
      %4475 = vmatpush1.msra.mxu0 0.0
      %4476 = vmatprep.subr.mxu0 0.0
      %4477 = vmatpush1.msra.mxu0 0.0
      %4478 = vmatprep.subr.mxu0 0.0
      %4479 = vmatpush1.msra.mxu0 0.0
      %4480 = vmatprep.subr.mxu0 0.0
      %4481 = vmatpush1.msra.mxu0 0.0
      %4482 = vmatprep.subr.mxu0 0.0
      %4483 = vmatpush1.msra.mxu0 0.0
      %4484 = vmatprep.subr.mxu0 0.0
      %4485 = vmatpush1.msra.mxu0 0.0
      %4486 = vmatprep.mubr.f32.mxu0 0.0
      %4487 = vmatmul.mubr.f32.gmra.mrb[0].mxu0 %v4327
      %v4488 = vpop.f32.mrb[0].mxu0
      %v4489 = vadd.f32 0.0, %v4488
      %v4490 = vpop.f32.mrb[0].mxu0
      %4491 = vmatprep.mubr.f32.mxu0 0.0
      %4492 = vmatmul.mubr.f32.gmra.mrb[0].mxu0 %v4330
      %v4493 = vpop.f32.mrb[0].mxu0
      %v4494 = vadd.f32 0.0, %v4493
      %v4495 = vpop.f32.mrb[0].mxu0
      %4496 = vmatprep.mubr.f32.mxu0 0.0
      %4497 = vmatmul.mubr.f32.gmra.mrb[0].mxu0 %v4333
      %v4498 = vpop.f32.mrb[0].mxu0
      %v4499 = vadd.f32 0.0, %v4498
      %v4500 = vpop.f32.mrb[0].mxu0
      %4501 = vmatprep.mubr.f32.mxu0 0.0
      %4502 = vmatmul.mubr.f32.gmra.mrb[0].mxu0 %v4336
      %v4503 = vpop.f32.mrb[0].mxu0
      %v4504 = vadd.f32 0.0, %v4503
      %v4505 = vpop.f32.mrb[0].mxu0
      %4506 = vmatprep.mubr.f32.mxu0 0.0
      %4507 = vmatmul.mubr.f32.gmra.mrb[0].mxu0 %v4339
      %v4508 = vpop.f32.mrb[0].mxu0
      %v4509 = vadd.f32 0.0, %v4508
      %v4510 = vpop.f32.mrb[0].mxu0
      %4511 = vmatprep.mubr.f32.mxu0 0.0
      %4512 = vmatmul.mubr.f32.gmra.mrb[0].mxu0 %v4342
      %v4513 = vpop.f32.mrb[0].mxu0
      %v4514 = vadd.f32 0.0, %v4513
      %v4515 = vpop.f32.mrb[0].mxu0
      %4516 = vmatprep.mubr.f32.mxu0 0.0
      %4517 = vmatmul.mubr.f32.gmra.mrb[0].mxu0 %v4345
      %v4518 = vpop.f32.mrb[0].mxu0
      %v4519 = vadd.f32 0.0, %v4518
      %v4520 = vpop.f32.mrb[0].mxu0
      %4521 = vmatprep.mubr.f32.mxu0 0.0
      %4522 = vmatmul.mubr.f32.gmra.mrb[0].mxu0 %v4348
      %v4523 = vpop.f32.mrb[0].mxu0
      %v4524 = vadd.f32 0.0, %v4523
      %v4525 = vpop.f32.mrb[0].mxu0
      %4526 = vmatprep.mubr.f32.mxu0 0.0
      %4527 = vmatmul.mubr.f32.gmra.mrb[0].mxu0 %v4351
      %v4528 = vpop.f32.mrb[0].mxu0
      %v4529 = vadd.f32 0.0, %v4528
      %v4530 = vpop.f32.mrb[0].mxu0
      %4531 = vmatprep.mubr.f32.mxu0 0.0
      %4532 = vmatmul.mubr.f32.gmra.mrb[0].mxu0 %v4354
      %v4533 = vpop.f32.mrb[0].mxu0
      %v4534 = vadd.f32 0.0, %v4533
      %v4535 = vpop.f32.mrb[0].mxu0
      %4536 = vmatprep.mubr.f32.mxu0 0.0
      %4537 = vmatmul.mubr.f32.gmra.mrb[0].mxu0 %v4357
      %v4538 = vpop.f32.mrb[0].mxu0
      %v4539 = vadd.f32 0.0, %v4538
      %v4540 = vpop.f32.mrb[0].mxu0
      %4541 = vmatprep.mubr.f32.mxu0 0.0
      %4542 = vmatmul.mubr.f32.gmra.mrb[0].mxu0 %v4360
      %v4543 = vpop.f32.mrb[0].mxu0
      %v4544 = vadd.f32 0.0, %v4543
      %v4545 = vpop.f32.mrb[0].mxu0
      %4546 = vmatprep.mubr.f32.mxu0 0.0
      %4547 = vmatmul.mubr.f32.gmra.mrb[0].mxu0 %v4363
      %v4548 = vpop.f32.mrb[0].mxu0
      %v4549 = vadd.f32 0.0, %v4548
      %v4550 = vpop.f32.mrb[0].mxu0
      %4551 = vmatprep.mubr.f32.mxu0 0.0
      %4552 = vmatmul.mubr.f32.gmra.mrb[0].mxu0 %v4366
      %v4553 = vpop.f32.mrb[0].mxu0
      %v4554 = vadd.f32 0.0, %v4553
      %v4555 = vpop.f32.mrb[0].mxu0
      %4556 = vmatprep.mubr.f32.mxu0 0.0
      %4557 = vmatmul.mubr.f32.gmra.mrb[0].mxu0 %v4369
      %v4558 = vpop.f32.mrb[0].mxu0
      %v4559 = vadd.f32 0.0, %v4558
      %v4560 = vpop.f32.mrb[0].mxu0
      %4561 = vmatprep.mubr.f32.mxu0 0.0
      %4562 = vmatmul.mubr.f32.gmra.mrb[0].mxu0 %v4372
      %v4563 = vpop.f32.mrb[0].mxu0
      %v4564 = vadd.f32 0.0, %v4563
      %v4565 = vpop.f32.mrb[0].mxu0
      %4566 = vmatprep.mubr.f32.mxu0 0.0
      %4567 = vmatmul.mubr.f32.gmra.mrb[0].mxu0 %v4375
      %v4568 = vpop.f32.mrb[0].mxu0
      %v4569 = vadd.f32 0.0, %v4568
      %v4570 = vpop.f32.mrb[0].mxu0
      %4571 = vmatprep.mubr.f32.mxu0 0.0
      %4572 = vmatmul.mubr.f32.gmra.mrb[0].mxu0 %v4378
      %v4573 = vpop.f32.mrb[0].mxu0
      %v4574 = vadd.f32 0.0, %v4573
      %v4575 = vpop.f32.mrb[0].mxu0
      %4576 = vmatprep.mubr.f32.mxu0 0.0
      %4577 = vmatmul.mubr.f32.gmra.mrb[0].mxu0 %v4381
      %v4578 = vpop.f32.mrb[0].mxu0
      %v4579 = vadd.f32 0.0, %v4578
      %v4580 = vpop.f32.mrb[0].mxu0
      %4581 = vmatprep.mubr.f32.mxu0 0.0
      %4582 = vmatmul.mubr.f32.gmra.mrb[0].mxu0 %v4384
      %v4583 = vpop.f32.mrb[0].mxu0
      %v4584 = vadd.f32 0.0, %v4583
      %v4585 = vpop.f32.mrb[0].mxu0
      %4586 = vmatprep.mubr.f32.mxu0 0.0
      %4587 = vmatmul.mubr.f32.gmra.mrb[0].mxu0 %v4387
      %v4588 = vpop.f32.mrb[0].mxu0
      %v4589 = vadd.f32 0.0, %v4588
      %v4590 = vpop.f32.mrb[0].mxu0
      %4591 = vmatprep.mubr.f32.mxu0 0.0
      %4592 = vmatmul.mubr.f32.gmra.mrb[0].mxu0 %v4390
      %v4593 = vpop.f32.mrb[0].mxu0
      %v4594 = vadd.f32 0.0, %v4593
      %v4595 = vpop.f32.mrb[0].mxu0
      %4596 = vmatprep.mubr.f32.mxu0 0.0
      %4597 = vmatmul.mubr.f32.gmra.mrb[0].mxu0 %v4393
      %v4598 = vpop.f32.mrb[0].mxu0
      %v4599 = vadd.f32 0.0, %v4598
      %v4600 = vpop.f32.mrb[0].mxu0
      %4601 = vmatprep.mubr.f32.mxu0 0.0
      %4602 = vmatmul.mubr.f32.gmra.mrb[0].mxu0 %v4396
      %v4603 = vpop.f32.mrb[0].mxu0
      %v4604 = vadd.f32 0.0, %v4603
      %v4605 = vpop.f32.mrb[0].mxu0
      %4606 = vmatprep.mubr.f32.mxu0 0.0
      %4607 = vmatmul.mubr.f32.gmra.mrb[0].mxu0 %v4399
      %v4608 = vpop.f32.mrb[0].mxu0
      %v4609 = vadd.f32 0.0, %v4608
      %v4610 = vpop.f32.mrb[0].mxu0
      %4611 = vmatprep.mubr.f32.mxu0 0.0
      %4612 = vmatmul.mubr.f32.gmra.mrb[0].mxu0 %v4402
      %v4613 = vpop.f32.mrb[0].mxu0
      %v4614 = vadd.f32 0.0, %v4613
      %v4615 = vpop.f32.mrb[0].mxu0
      %4616 = vmatprep.mubr.f32.mxu0 0.0
      %4617 = vmatmul.mubr.f32.gmra.mrb[0].mxu0 %v4405
      %v4618 = vpop.f32.mrb[0].mxu0
      %v4619 = vadd.f32 0.0, %v4618
      %v4620 = vpop.f32.mrb[0].mxu0
      %4621 = vmatprep.mubr.f32.mxu0 0.0
      %4622 = vmatmul.mubr.f32.gmra.mrb[0].mxu0 %v4408
      %v4623 = vpop.f32.mrb[0].mxu0
      %v4624 = vadd.f32 0.0, %v4623
      %v4625 = vpop.f32.mrb[0].mxu0
      %4626 = vmatprep.mubr.f32.mxu0 0.0
      %4627 = vmatmul.mubr.f32.gmra.mrb[0].mxu0 %v4411
      %v4628 = vpop.f32.mrb[0].mxu0
      %v4629 = vadd.f32 0.0, %v4628
      %v4630 = vpop.f32.mrb[0].mxu0
      %4631 = vmatprep.mubr.f32.mxu0 0.0
      %4632 = vmatmul.mubr.f32.gmra.mrb[0].mxu0 %v4414
      %v4633 = vpop.f32.mrb[0].mxu0
      %v4634 = vadd.f32 0.0, %v4633
      %v4635 = vpop.f32.mrb[0].mxu0
      %4636 = vmatprep.mubr.f32.mxu0 0.0
      %4637 = vmatmul.mubr.f32.gmra.mrb[0].mxu0 %v4417
      %v4638 = vpop.f32.mrb[0].mxu0
      %v4639 = vadd.f32 0.0, %v4638
      %v4640 = vpop.f32.mrb[0].mxu0
      %4641 = vmatprep.mubr.f32.mxu0 0.0
      %4642 = vmatmul.mubr.f32.gmra.mrb[0].mxu0 %v4420
      %v4643 = vpop.f32.mrb[0].mxu0
      %v4644 = vadd.f32 0.0, %v4643
      %v4645 = vpop.f32.mrb[0].mxu0
      %4646 = vdwg.mxu0
      %v4648 = vsel %vm4153, %v4259, 0
      %v4651 = vsel %vm4153, %v4260, 0
      %v4654 = vsel %vm4153, %v4261, 0
      %v4657 = vsel %vm4153, %v4262, 0
      %v4660 = vsel %vm4153, %v4263, 0
      %v4663 = vsel %vm4153, %v4264, 0
      %v4666 = vsel %vm4153, %v4265, 0
      %v4669 = vsel %vm4153, %v4266, 0
      %v4672 = vsel %vm4153, %v4267, 0
      %v4675 = vsel %vm4153, %v4268, 0
      %v4678 = vsel %vm4153, %v4269, 0
      %v4681 = vsel %vm4153, %v4270, 0
      %v4684 = vsel %vm4153, %v4271, 0
      %v4687 = vsel %vm4153, %v4272, 0
      %v4690 = vsel %vm4153, %v4273, 0
      %v4693 = vsel %vm4153, %v4274, 0
      %v4696 = vsel %vm4153, %v4275, 0
      %v4699 = vsel %vm4153, %v4276, 0
      %v4702 = vsel %vm4153, %v4277, 0
      %v4705 = vsel %vm4153, %v4278, 0
      %v4708 = vsel %vm4153, %v4279, 0
      %v4711 = vsel %vm4153, %v4280, 0
      %v4714 = vsel %vm4153, %v4281, 0
      %v4717 = vsel %vm4153, %v4282, 0
      %v4720 = vsel %vm4153, %v4283, 0
      %v4723 = vsel %vm4153, %v4284, 0
      %v4726 = vsel %vm4153, %v4285, 0
      %v4729 = vsel %vm4153, %v4286, 0
      %v4732 = vsel %vm4153, %v4287, 0
      %v4735 = vsel %vm4153, %v4288, 0
      %v4738 = vsel %vm4153, %v4289, 0
      %v4741 = vsel %vm4153, %v4290, 0
      %4743 = vmatprep.subr.mxu0 0.0
      %4744 = vmatpush1.msra.mxu0 %v4291
      %4745 = vmatprep.subr.mxu0 0.0
      %4746 = vmatpush1.msra.mxu0 0.0
      %4747 = vmatprep.subr.mxu0 0.0
      %4748 = vmatpush1.msra.mxu0 0.0
      %4749 = vmatprep.subr.mxu0 0.0
      %4750 = vmatpush1.msra.mxu0 0.0
      %4751 = vmatprep.subr.mxu0 0.0
      %4752 = vmatpush1.msra.mxu0 0.0
      %4753 = vmatprep.subr.mxu0 0.0
      %4754 = vmatpush1.msra.mxu0 0.0
      %4755 = vmatprep.subr.mxu0 0.0
      %4756 = vmatpush1.msra.mxu0 0.0
      %4757 = vmatprep.subr.mxu0 0.0
      %4758 = vmatpush1.msra.mxu0 0.0
      %4759 = vmatprep.subr.mxu0 0.0
      %4760 = vmatpush1.msra.mxu0 0.0
      %4761 = vmatprep.subr.mxu0 0.0
      %4762 = vmatpush1.msra.mxu0 0.0
      %4763 = vmatprep.subr.mxu0 0.0
      %4764 = vmatpush1.msra.mxu0 0.0
      %4765 = vmatprep.subr.mxu0 0.0
      %4766 = vmatpush1.msra.mxu0 0.0
      %4767 = vmatprep.subr.mxu0 0.0
      %4768 = vmatpush1.msra.mxu0 0.0
      %4769 = vmatprep.subr.mxu0 0.0
      %4770 = vmatpush1.msra.mxu0 0.0
      %4771 = vmatprep.subr.mxu0 0.0
      %4772 = vmatpush1.msra.mxu0 0.0
      %4773 = vmatprep.subr.mxu0 0.0
      %4774 = vmatpush1.msra.mxu0 0.0
      %4775 = vmatprep.subr.mxu0 0.0
      %4776 = vmatpush1.msra.mxu0 0.0
      %4777 = vmatprep.subr.mxu0 0.0
      %4778 = vmatpush1.msra.mxu0 0.0
      %4779 = vmatprep.subr.mxu0 0.0
      %4780 = vmatpush1.msra.mxu0 0.0
      %4781 = vmatprep.subr.mxu0 0.0
      %4782 = vmatpush1.msra.mxu0 0.0
      %4783 = vmatprep.subr.mxu0 0.0
      %4784 = vmatpush1.msra.mxu0 0.0
      %4785 = vmatprep.subr.mxu0 0.0
      %4786 = vmatpush1.msra.mxu0 0.0
      %4787 = vmatprep.subr.mxu0 0.0
      %4788 = vmatpush1.msra.mxu0 0.0
      %4789 = vmatprep.subr.mxu0 0.0
      %4790 = vmatpush1.msra.mxu0 0.0
      %4791 = vmatprep.subr.mxu0 0.0
      %4792 = vmatpush1.msra.mxu0 0.0
      %4793 = vmatprep.subr.mxu0 0.0
      %4794 = vmatpush1.msra.mxu0 0.0
      %4795 = vmatprep.subr.mxu0 0.0
      %4796 = vmatpush1.msra.mxu0 0.0
      %4797 = vmatprep.subr.mxu0 0.0
      %4798 = vmatpush1.msra.mxu0 0.0
      %4799 = vmatprep.subr.mxu0 0.0
      %4800 = vmatpush1.msra.mxu0 0.0
      %4801 = vmatprep.subr.mxu0 0.0
      %4802 = vmatpush1.msra.mxu0 0.0
      %4803 = vmatprep.subr.mxu0 0.0
      %4804 = vmatpush1.msra.mxu0 0.0
      %4805 = vmatprep.subr.mxu0 0.0
      %4806 = vmatpush1.msra.mxu0 0.0
      %4807 = vmatprep.mubr.f32.mxu0 0.0
      %4808 = vmatmul.mubr.f32.gmra.mrb[0].mxu0 %v4648
      %v4809 = vpop.f32.mrb[0].mxu0
      %v4810 = vadd.f32 %v4489, %v4809
      %v4811 = vpop.f32.mrb[0].mxu0
      %4812 = vmatprep.mubr.f32.mxu0 0.0
      %4813 = vmatmul.mubr.f32.gmra.mrb[0].mxu0 %v4651
      %v4814 = vpop.f32.mrb[0].mxu0
      %v4815 = vadd.f32 %v4494, %v4814
      %v4816 = vpop.f32.mrb[0].mxu0
      %4817 = vmatprep.mubr.f32.mxu0 0.0
      %4818 = vmatmul.mubr.f32.gmra.mrb[0].mxu0 %v4654
      %v4819 = vpop.f32.mrb[0].mxu0
      %v4820 = vadd.f32 %v4499, %v4819
      %v4821 = vpop.f32.mrb[0].mxu0
      %4822 = vmatprep.mubr.f32.mxu0 0.0
      %4823 = vmatmul.mubr.f32.gmra.mrb[0].mxu0 %v4657
      %v4824 = vpop.f32.mrb[0].mxu0
      %v4825 = vadd.f32 %v4504, %v4824
      %v4826 = vpop.f32.mrb[0].mxu0
      %4827 = vmatprep.mubr.f32.mxu0 0.0
      %4828 = vmatmul.mubr.f32.gmra.mrb[0].mxu0 %v4660
      %v4829 = vpop.f32.mrb[0].mxu0
      %v4830 = vadd.f32 %v4509, %v4829
      %v4831 = vpop.f32.mrb[0].mxu0
      %4832 = vmatprep.mubr.f32.mxu0 0.0
      %4833 = vmatmul.mubr.f32.gmra.mrb[0].mxu0 %v4663
      %v4834 = vpop.f32.mrb[0].mxu0
      %v4835 = vadd.f32 %v4514, %v4834
      %v4836 = vpop.f32.mrb[0].mxu0
      %4837 = vmatprep.mubr.f32.mxu0 0.0
      %4838 = vmatmul.mubr.f32.gmra.mrb[0].mxu0 %v4666
      %v4839 = vpop.f32.mrb[0].mxu0
      %v4840 = vadd.f32 %v4519, %v4839
      %v4841 = vpop.f32.mrb[0].mxu0
      %4842 = vmatprep.mubr.f32.mxu0 0.0
      %4843 = vmatmul.mubr.f32.gmra.mrb[0].mxu0 %v4669
      %v4844 = vpop.f32.mrb[0].mxu0
      %v4845 = vadd.f32 %v4524, %v4844
      %v4846 = vpop.f32.mrb[0].mxu0
      %4847 = vmatprep.mubr.f32.mxu0 0.0
      %4848 = vmatmul.mubr.f32.gmra.mrb[0].mxu0 %v4672
      %v4849 = vpop.f32.mrb[0].mxu0
      %v4850 = vadd.f32 %v4529, %v4849
      %v4851 = vpop.f32.mrb[0].mxu0
      %4852 = vmatprep.mubr.f32.mxu0 0.0
      %4853 = vmatmul.mubr.f32.gmra.mrb[0].mxu0 %v4675
      %v4854 = vpop.f32.mrb[0].mxu0
      %v4855 = vadd.f32 %v4534, %v4854
      %v4856 = vpop.f32.mrb[0].mxu0
      %4857 = vmatprep.mubr.f32.mxu0 0.0
      %4858 = vmatmul.mubr.f32.gmra.mrb[0].mxu0 %v4678
      %v4859 = vpop.f32.mrb[0].mxu0
      %v4860 = vadd.f32 %v4539, %v4859
      %v4861 = vpop.f32.mrb[0].mxu0
      %4862 = vmatprep.mubr.f32.mxu0 0.0
      %4863 = vmatmul.mubr.f32.gmra.mrb[0].mxu0 %v4681
      %v4864 = vpop.f32.mrb[0].mxu0
      %v4865 = vadd.f32 %v4544, %v4864
      %v4866 = vpop.f32.mrb[0].mxu0
      %4867 = vmatprep.mubr.f32.mxu0 0.0
      %4868 = vmatmul.mubr.f32.gmra.mrb[0].mxu0 %v4684
      %v4869 = vpop.f32.mrb[0].mxu0
      %v4870 = vadd.f32 %v4549, %v4869
      %v4871 = vpop.f32.mrb[0].mxu0
      %4872 = vmatprep.mubr.f32.mxu0 0.0
      %4873 = vmatmul.mubr.f32.gmra.mrb[0].mxu0 %v4687
      %v4874 = vpop.f32.mrb[0].mxu0
      %v4875 = vadd.f32 %v4554, %v4874
      %v4876 = vpop.f32.mrb[0].mxu0
      %4877 = vmatprep.mubr.f32.mxu0 0.0
      %4878 = vmatmul.mubr.f32.gmra.mrb[0].mxu0 %v4690
      %v4879 = vpop.f32.mrb[0].mxu0
      %v4880 = vadd.f32 %v4559, %v4879
      %v4881 = vpop.f32.mrb[0].mxu0
      %4882 = vmatprep.mubr.f32.mxu0 0.0
      %4883 = vmatmul.mubr.f32.gmra.mrb[0].mxu0 %v4693
      %v4884 = vpop.f32.mrb[0].mxu0
      %v4885 = vadd.f32 %v4564, %v4884
      %v4886 = vpop.f32.mrb[0].mxu0
      %4887 = vmatprep.mubr.f32.mxu0 0.0
      %4888 = vmatmul.mubr.f32.gmra.mrb[0].mxu0 %v4696
      %v4889 = vpop.f32.mrb[0].mxu0
      %v4890 = vadd.f32 %v4569, %v4889
      %v4891 = vpop.f32.mrb[0].mxu0
      %4892 = vmatprep.mubr.f32.mxu0 0.0
      %4893 = vmatmul.mubr.f32.gmra.mrb[0].mxu0 %v4699
      %v4894 = vpop.f32.mrb[0].mxu0
      %v4895 = vadd.f32 %v4574, %v4894
      %v4896 = vpop.f32.mrb[0].mxu0
      %4897 = vmatprep.mubr.f32.mxu0 0.0
      %4898 = vmatmul.mubr.f32.gmra.mrb[0].mxu0 %v4702
      %v4899 = vpop.f32.mrb[0].mxu0
      %v4900 = vadd.f32 %v4579, %v4899
      %v4901 = vpop.f32.mrb[0].mxu0
      %4902 = vmatprep.mubr.f32.mxu0 0.0
      %4903 = vmatmul.mubr.f32.gmra.mrb[0].mxu0 %v4705
      %v4904 = vpop.f32.mrb[0].mxu0
      %v4905 = vadd.f32 %v4584, %v4904
      %v4906 = vpop.f32.mrb[0].mxu0
      %4907 = vmatprep.mubr.f32.mxu0 0.0
      %4908 = vmatmul.mubr.f32.gmra.mrb[0].mxu0 %v4708
      %v4909 = vpop.f32.mrb[0].mxu0
      %v4910 = vadd.f32 %v4589, %v4909
      %v4911 = vpop.f32.mrb[0].mxu0
      %4912 = vmatprep.mubr.f32.mxu0 0.0
      %4913 = vmatmul.mubr.f32.gmra.mrb[0].mxu0 %v4711
      %v4914 = vpop.f32.mrb[0].mxu0
      %v4915 = vadd.f32 %v4594, %v4914
      %v4916 = vpop.f32.mrb[0].mxu0
      %4917 = vmatprep.mubr.f32.mxu0 0.0
      %4918 = vmatmul.mubr.f32.gmra.mrb[0].mxu0 %v4714
      %v4919 = vpop.f32.mrb[0].mxu0
      %v4920 = vadd.f32 %v4599, %v4919
      %v4921 = vpop.f32.mrb[0].mxu0
      %4922 = vmatprep.mubr.f32.mxu0 0.0
      %4923 = vmatmul.mubr.f32.gmra.mrb[0].mxu0 %v4717
      %v4924 = vpop.f32.mrb[0].mxu0
      %v4925 = vadd.f32 %v4604, %v4924
      %v4926 = vpop.f32.mrb[0].mxu0
      %4927 = vmatprep.mubr.f32.mxu0 0.0
      %4928 = vmatmul.mubr.f32.gmra.mrb[0].mxu0 %v4720
      %v4929 = vpop.f32.mrb[0].mxu0
      %v4930 = vadd.f32 %v4609, %v4929
      %v4931 = vpop.f32.mrb[0].mxu0
      %4932 = vmatprep.mubr.f32.mxu0 0.0
      %4933 = vmatmul.mubr.f32.gmra.mrb[0].mxu0 %v4723
      %v4934 = vpop.f32.mrb[0].mxu0
      %v4935 = vadd.f32 %v4614, %v4934
      %v4936 = vpop.f32.mrb[0].mxu0
      %4937 = vmatprep.mubr.f32.mxu0 0.0
      %4938 = vmatmul.mubr.f32.gmra.mrb[0].mxu0 %v4726
      %v4939 = vpop.f32.mrb[0].mxu0
      %v4940 = vadd.f32 %v4619, %v4939
      %v4941 = vpop.f32.mrb[0].mxu0
      %4942 = vmatprep.mubr.f32.mxu0 0.0
      %4943 = vmatmul.mubr.f32.gmra.mrb[0].mxu0 %v4729
      %v4944 = vpop.f32.mrb[0].mxu0
      %v4945 = vadd.f32 %v4624, %v4944
      %v4946 = vpop.f32.mrb[0].mxu0
      %4947 = vmatprep.mubr.f32.mxu0 0.0
      %4948 = vmatmul.mubr.f32.gmra.mrb[0].mxu0 %v4732
      %v4949 = vpop.f32.mrb[0].mxu0
      %v4950 = vadd.f32 %v4629, %v4949
      %v4951 = vpop.f32.mrb[0].mxu0
      %4952 = vmatprep.mubr.f32.mxu0 0.0
      %4953 = vmatmul.mubr.f32.gmra.mrb[0].mxu0 %v4735
      %v4954 = vpop.f32.mrb[0].mxu0
      %v4955 = vadd.f32 %v4634, %v4954
      %v4956 = vpop.f32.mrb[0].mxu0
      %4957 = vmatprep.mubr.f32.mxu0 0.0
      %4958 = vmatmul.mubr.f32.gmra.mrb[0].mxu0 %v4738
      %v4959 = vpop.f32.mrb[0].mxu0
      %v4960 = vadd.f32 %v4639, %v4959
      %v4961 = vpop.f32.mrb[0].mxu0
      %4962 = vmatprep.mubr.f32.mxu0 0.0
      %4963 = vmatmul.mubr.f32.gmra.mrb[0].mxu0 %v4741
      %v4964 = vpop.f32.mrb[0].mxu0
      %v4965 = vadd.f32 %v4644, %v4964
      %v4966 = vpop.f32.mrb[0].mxu0
      %4967 = vdwg.mxu0
      %v4968 = vld [vmem:[#allocation3 + $0x9] sm:$0xff]
      %v4969 = vld [vmem:[#allocation3 + $0x11] sm:$0xff]
      %v4970 = vld [vmem:[#allocation3 + $0x29] sm:$0xff]
      %v4971 = vld [vmem:[#allocation3 + $0x31] sm:$0xff]
      %v4972 = vld [vmem:[#allocation3 + $0x49] sm:$0xff]
      %v4973 = vld [vmem:[#allocation3 + $0x51] sm:$0xff]
      %v4974 = vld [vmem:[#allocation3 + $0x69] sm:$0xff]
      %v4975 = vld [vmem:[#allocation3 + $0x71] sm:$0xff]
      %v4976 = vld [vmem:[#allocation3 + $0x89] sm:$0xff]
      %v4977 = vld [vmem:[#allocation3 + $0x91] sm:$0xff]
      %v4978 = vld [vmem:[#allocation3 + $0xa9] sm:$0xff]
      %v4979 = vld [vmem:[#allocation3 + $0xb1] sm:$0xff]
      %v4980 = vld [vmem:[#allocation3 + $0xc9] sm:$0xff]
      %v4981 = vld [vmem:[#allocation3 + $0xd1] sm:$0xff]
      %v4982 = vld [vmem:[#allocation3 + $0xe9] sm:$0xff]
      %v4983 = vld [vmem:[#allocation3 + $0xf1] sm:$0xff]
      %v4984 = vld [vmem:[#allocation3 + $0x109] sm:$0xff]
      %v4985 = vld [vmem:[#allocation3 + $0x111] sm:$0xff]
      %v4986 = vld [vmem:[#allocation3 + $0x129] sm:$0xff]
      %v4987 = vld [vmem:[#allocation3 + $0x131] sm:$0xff]
      %v4988 = vld [vmem:[#allocation3 + $0x149] sm:$0xff]
      %v4989 = vld [vmem:[#allocation3 + $0x151] sm:$0xff]
      %v4990 = vld [vmem:[#allocation3 + $0x169] sm:$0xff]
      %v4991 = vld [vmem:[#allocation3 + $0x171] sm:$0xff]
      %v4992 = vld [vmem:[#allocation3 + $0x189] sm:$0xff]
      %v4993 = vld [vmem:[#allocation3 + $0x191] sm:$0xff]
      %v4994 = vld [vmem:[#allocation3 + $0x1a9] sm:$0xff]
      %v4995 = vld [vmem:[#allocation3 + $0x1b1] sm:$0xff]
      %v4996 = vld [vmem:[#allocation3 + $0x1c9] sm:$0xff]
      %v4997 = vld [vmem:[#allocation3 + $0x1d1] sm:$0xff]
      %v4998 = vld [vmem:[#allocation3 + $0x1e9] sm:$0xff]
      %v4999 = vld [vmem:[#allocation3 + $0x1f1] sm:$0xff]
      %s5000 = scalar_lea.vmem %s3, 16
      %v5001 = vld [vmem:[%s5000] sm:$0xff]
      %v5003 = vsel %vm4153, %v4968, 0
      %v5006 = vsel %vm4153, %v4969, 0
      %v5009 = vsel %vm4153, %v4970, 0
      %v5012 = vsel %vm4153, %v4971, 0
      %v5015 = vsel %vm4153, %v4972, 0
      %v5018 = vsel %vm4153, %v4973, 0
      %v5021 = vsel %vm4153, %v4974, 0
      %v5024 = vsel %vm4153, %v4975, 0
      %v5027 = vsel %vm4153, %v4976, 0
      %v5030 = vsel %vm4153, %v4977, 0
      %v5033 = vsel %vm4153, %v4978, 0
      %v5036 = vsel %vm4153, %v4979, 0
      %v5039 = vsel %vm4153, %v4980, 0
      %v5042 = vsel %vm4153, %v4981, 0
      %v5045 = vsel %vm4153, %v4982, 0
      %v5048 = vsel %vm4153, %v4983, 0
      %v5051 = vsel %vm4153, %v4984, 0
      %v5054 = vsel %vm4153, %v4985, 0
      %v5057 = vsel %vm4153, %v4986, 0
      %v5060 = vsel %vm4153, %v4987, 0
      %v5063 = vsel %vm4153, %v4988, 0
      %v5066 = vsel %vm4153, %v4989, 0
      %v5069 = vsel %vm4153, %v4990, 0
      %v5072 = vsel %vm4153, %v4991, 0
      %v5075 = vsel %vm4153, %v4992, 0
      %v5078 = vsel %vm4153, %v4993, 0
      %v5081 = vsel %vm4153, %v4994, 0
      %v5084 = vsel %vm4153, %v4995, 0
      %v5087 = vsel %vm4153, %v4996, 0
      %v5090 = vsel %vm4153, %v4997, 0
      %v5093 = vsel %vm4153, %v4998, 0
      %v5096 = vsel %vm4153, %v4999, 0
      %5098 = vmatprep.subr.mxu0 0.0
      %5099 = vmatpush1.msra.mxu0 %v5001
      %5100 = vmatprep.subr.mxu0 0.0
      %5101 = vmatpush1.msra.mxu0 0.0
      %5102 = vmatprep.subr.mxu0 0.0
      %5103 = vmatpush1.msra.mxu0 0.0
      %5104 = vmatprep.subr.mxu0 0.0
      %5105 = vmatpush1.msra.mxu0 0.0
      %5106 = vmatprep.subr.mxu0 0.0
      %5107 = vmatpush1.msra.mxu0 0.0
      %5108 = vmatprep.subr.mxu0 0.0
      %5109 = vmatpush1.msra.mxu0 0.0
      %5110 = vmatprep.subr.mxu0 0.0
      %5111 = vmatpush1.msra.mxu0 0.0
      %5112 = vmatprep.subr.mxu0 0.0
      %5113 = vmatpush1.msra.mxu0 0.0
      %5114 = vmatprep.subr.mxu0 0.0
      %5115 = vmatpush1.msra.mxu0 0.0
      %5116 = vmatprep.subr.mxu0 0.0
      %5117 = vmatpush1.msra.mxu0 0.0
      %5118 = vmatprep.subr.mxu0 0.0
      %5119 = vmatpush1.msra.mxu0 0.0
      %5120 = vmatprep.subr.mxu0 0.0
      %5121 = vmatpush1.msra.mxu0 0.0
      %5122 = vmatprep.subr.mxu0 0.0
      %5123 = vmatpush1.msra.mxu0 0.0
      %5124 = vmatprep.subr.mxu0 0.0
      %5125 = vmatpush1.msra.mxu0 0.0
      %5126 = vmatprep.subr.mxu0 0.0
      %5127 = vmatpush1.msra.mxu0 0.0
      %5128 = vmatprep.subr.mxu0 0.0
      %5129 = vmatpush1.msra.mxu0 0.0
      %5130 = vmatprep.subr.mxu0 0.0
      %5131 = vmatpush1.msra.mxu0 0.0
      %5132 = vmatprep.subr.mxu0 0.0
      %5133 = vmatpush1.msra.mxu0 0.0
      %5134 = vmatprep.subr.mxu0 0.0
      %5135 = vmatpush1.msra.mxu0 0.0
      %5136 = vmatprep.subr.mxu0 0.0
      %5137 = vmatpush1.msra.mxu0 0.0
      %5138 = vmatprep.subr.mxu0 0.0
      %5139 = vmatpush1.msra.mxu0 0.0
      %5140 = vmatprep.subr.mxu0 0.0
      %5141 = vmatpush1.msra.mxu0 0.0
      %5142 = vmatprep.subr.mxu0 0.0
      %5143 = vmatpush1.msra.mxu0 0.0
      %5144 = vmatprep.subr.mxu0 0.0
      %5145 = vmatpush1.msra.mxu0 0.0
      %5146 = vmatprep.subr.mxu0 0.0
      %5147 = vmatpush1.msra.mxu0 0.0
      %5148 = vmatprep.subr.mxu0 0.0
      %5149 = vmatpush1.msra.mxu0 0.0
      %5150 = vmatprep.subr.mxu0 0.0
      %5151 = vmatpush1.msra.mxu0 0.0
      %5152 = vmatprep.subr.mxu0 0.0
      %5153 = vmatpush1.msra.mxu0 0.0
      %5154 = vmatprep.subr.mxu0 0.0
      %5155 = vmatpush1.msra.mxu0 0.0
      %5156 = vmatprep.subr.mxu0 0.0
      %5157 = vmatpush1.msra.mxu0 0.0
      %5158 = vmatprep.subr.mxu0 0.0
      %5159 = vmatpush1.msra.mxu0 0.0
      %5160 = vmatprep.subr.mxu0 0.0
      %5161 = vmatpush1.msra.mxu0 0.0
      %5162 = vmatprep.mubr.f32.mxu0 0.0
      %5163 = vmatmul.mubr.f32.gmra.mrb[0].mxu0 %v5003
      %v5164 = vpop.f32.mrb[0].mxu0
      %v5165 = vadd.f32 0.0, %v5164
      %v5166 = vpop.f32.mrb[0].mxu0
      %5167 = vmatprep.mubr.f32.mxu0 0.0
      %5168 = vmatmul.mubr.f32.gmra.mrb[0].mxu0 %v5006
      %v5169 = vpop.f32.mrb[0].mxu0
      %v5170 = vadd.f32 0.0, %v5169
      %v5171 = vpop.f32.mrb[0].mxu0
      %5172 = vmatprep.mubr.f32.mxu0 0.0
      %5173 = vmatmul.mubr.f32.gmra.mrb[0].mxu0 %v5009
      %v5174 = vpop.f32.mrb[0].mxu0
      %v5175 = vadd.f32 0.0, %v5174
      %v5176 = vpop.f32.mrb[0].mxu0
      %5177 = vmatprep.mubr.f32.mxu0 0.0
      %5178 = vmatmul.mubr.f32.gmra.mrb[0].mxu0 %v5012
      %v5179 = vpop.f32.mrb[0].mxu0
      %v5180 = vadd.f32 0.0, %v5179
      %v5181 = vpop.f32.mrb[0].mxu0
      %5182 = vmatprep.mubr.f32.mxu0 0.0
      %5183 = vmatmul.mubr.f32.gmra.mrb[0].mxu0 %v5015
      %v5184 = vpop.f32.mrb[0].mxu0
      %v5185 = vadd.f32 0.0, %v5184
      %v5186 = vpop.f32.mrb[0].mxu0
      %5187 = vmatprep.mubr.f32.mxu0 0.0
      %5188 = vmatmul.mubr.f32.gmra.mrb[0].mxu0 %v5018
      %v5189 = vpop.f32.mrb[0].mxu0
      %v5190 = vadd.f32 0.0, %v5189
      %v5191 = vpop.f32.mrb[0].mxu0
      %5192 = vmatprep.mubr.f32.mxu0 0.0
      %5193 = vmatmul.mubr.f32.gmra.mrb[0].mxu0 %v5021
      %v5194 = vpop.f32.mrb[0].mxu0
      %v5195 = vadd.f32 0.0, %v5194
      %v5196 = vpop.f32.mrb[0].mxu0
      %5197 = vmatprep.mubr.f32.mxu0 0.0
      %5198 = vmatmul.mubr.f32.gmra.mrb[0].mxu0 %v5024
      %v5199 = vpop.f32.mrb[0].mxu0
      %v5200 = vadd.f32 0.0, %v5199
      %v5201 = vpop.f32.mrb[0].mxu0
      %5202 = vmatprep.mubr.f32.mxu0 0.0
      %5203 = vmatmul.mubr.f32.gmra.mrb[0].mxu0 %v5027
      %v5204 = vpop.f32.mrb[0].mxu0
      %v5205 = vadd.f32 0.0, %v5204
      %v5206 = vpop.f32.mrb[0].mxu0
      %5207 = vmatprep.mubr.f32.mxu0 0.0
      %5208 = vmatmul.mubr.f32.gmra.mrb[0].mxu0 %v5030
      %v5209 = vpop.f32.mrb[0].mxu0
      %v5210 = vadd.f32 0.0, %v5209
      %v5211 = vpop.f32.mrb[0].mxu0
      %5212 = vmatprep.mubr.f32.mxu0 0.0
      %5213 = vmatmul.mubr.f32.gmra.mrb[0].mxu0 %v5033
      %v5214 = vpop.f32.mrb[0].mxu0
      %v5215 = vadd.f32 0.0, %v5214
      %v5216 = vpop.f32.mrb[0].mxu0
      %5217 = vmatprep.mubr.f32.mxu0 0.0
      %5218 = vmatmul.mubr.f32.gmra.mrb[0].mxu0 %v5036
      %v5219 = vpop.f32.mrb[0].mxu0
      %v5220 = vadd.f32 0.0, %v5219
      %v5221 = vpop.f32.mrb[0].mxu0
      %5222 = vmatprep.mubr.f32.mxu0 0.0
      %5223 = vmatmul.mubr.f32.gmra.mrb[0].mxu0 %v5039
      %v5224 = vpop.f32.mrb[0].mxu0
      %v5225 = vadd.f32 0.0, %v5224
      %v5226 = vpop.f32.mrb[0].mxu0
      %5227 = vmatprep.mubr.f32.mxu0 0.0
      %5228 = vmatmul.mubr.f32.gmra.mrb[0].mxu0 %v5042
      %v5229 = vpop.f32.mrb[0].mxu0
      %v5230 = vadd.f32 0.0, %v5229
      %v5231 = vpop.f32.mrb[0].mxu0
      %5232 = vmatprep.mubr.f32.mxu0 0.0
      %5233 = vmatmul.mubr.f32.gmra.mrb[0].mxu0 %v5045
      %v5234 = vpop.f32.mrb[0].mxu0
      %v5235 = vadd.f32 0.0, %v5234
      %v5236 = vpop.f32.mrb[0].mxu0
      %5237 = vmatprep.mubr.f32.mxu0 0.0
      %5238 = vmatmul.mubr.f32.gmra.mrb[0].mxu0 %v5048
      %v5239 = vpop.f32.mrb[0].mxu0
      %v5240 = vadd.f32 0.0, %v5239
      %v5241 = vpop.f32.mrb[0].mxu0
      %5242 = vmatprep.mubr.f32.mxu0 0.0
      %5243 = vmatmul.mubr.f32.gmra.mrb[0].mxu0 %v5051
      %v5244 = vpop.f32.mrb[0].mxu0
      %v5245 = vadd.f32 0.0, %v5244
      %v5246 = vpop.f32.mrb[0].mxu0
      %5247 = vmatprep.mubr.f32.mxu0 0.0
      %5248 = vmatmul.mubr.f32.gmra.mrb[0].mxu0 %v5054
      %v5249 = vpop.f32.mrb[0].mxu0
      %v5250 = vadd.f32 0.0, %v5249
      %v5251 = vpop.f32.mrb[0].mxu0
      %5252 = vmatprep.mubr.f32.mxu0 0.0
      %5253 = vmatmul.mubr.f32.gmra.mrb[0].mxu0 %v5057
      %v5254 = vpop.f32.mrb[0].mxu0
      %v5255 = vadd.f32 0.0, %v5254
      %v5256 = vpop.f32.mrb[0].mxu0
      %5257 = vmatprep.mubr.f32.mxu0 0.0
      %5258 = vmatmul.mubr.f32.gmra.mrb[0].mxu0 %v5060
      %v5259 = vpop.f32.mrb[0].mxu0
      %v5260 = vadd.f32 0.0, %v5259
      %v5261 = vpop.f32.mrb[0].mxu0
      %5262 = vmatprep.mubr.f32.mxu0 0.0
      %5263 = vmatmul.mubr.f32.gmra.mrb[0].mxu0 %v5063
      %v5264 = vpop.f32.mrb[0].mxu0
      %v5265 = vadd.f32 0.0, %v5264
      %v5266 = vpop.f32.mrb[0].mxu0
      %5267 = vmatprep.mubr.f32.mxu0 0.0
      %5268 = vmatmul.mubr.f32.gmra.mrb[0].mxu0 %v5066
      %v5269 = vpop.f32.mrb[0].mxu0
      %v5270 = vadd.f32 0.0, %v5269
      %v5271 = vpop.f32.mrb[0].mxu0
      %5272 = vmatprep.mubr.f32.mxu0 0.0
      %5273 = vmatmul.mubr.f32.gmra.mrb[0].mxu0 %v5069
      %v5274 = vpop.f32.mrb[0].mxu0
      %v5275 = vadd.f32 0.0, %v5274
      %v5276 = vpop.f32.mrb[0].mxu0
      %5277 = vmatprep.mubr.f32.mxu0 0.0
      %5278 = vmatmul.mubr.f32.gmra.mrb[0].mxu0 %v5072
      %v5279 = vpop.f32.mrb[0].mxu0
      %v5280 = vadd.f32 0.0, %v5279
      %v5281 = vpop.f32.mrb[0].mxu0
      %5282 = vmatprep.mubr.f32.mxu0 0.0
      %5283 = vmatmul.mubr.f32.gmra.mrb[0].mxu0 %v5075
      %v5284 = vpop.f32.mrb[0].mxu0
      %v5285 = vadd.f32 0.0, %v5284
      %v5286 = vpop.f32.mrb[0].mxu0
      %5287 = vmatprep.mubr.f32.mxu0 0.0
      %5288 = vmatmul.mubr.f32.gmra.mrb[0].mxu0 %v5078
      %v5289 = vpop.f32.mrb[0].mxu0
      %v5290 = vadd.f32 0.0, %v5289
      %v5291 = vpop.f32.mrb[0].mxu0
      %5292 = vmatprep.mubr.f32.mxu0 0.0
      %5293 = vmatmul.mubr.f32.gmra.mrb[0].mxu0 %v5081
      %v5294 = vpop.f32.mrb[0].mxu0
      %v5295 = vadd.f32 0.0, %v5294
      %v5296 = vpop.f32.mrb[0].mxu0
      %5297 = vmatprep.mubr.f32.mxu0 0.0
      %5298 = vmatmul.mubr.f32.gmra.mrb[0].mxu0 %v5084
      %v5299 = vpop.f32.mrb[0].mxu0
      %v5300 = vadd.f32 0.0, %v5299
      %v5301 = vpop.f32.mrb[0].mxu0
      %5302 = vmatprep.mubr.f32.mxu0 0.0
      %5303 = vmatmul.mubr.f32.gmra.mrb[0].mxu0 %v5087
      %v5304 = vpop.f32.mrb[0].mxu0
      %v5305 = vadd.f32 0.0, %v5304
      %v5306 = vpop.f32.mrb[0].mxu0
      %5307 = vmatprep.mubr.f32.mxu0 0.0
      %5308 = vmatmul.mubr.f32.gmra.mrb[0].mxu0 %v5090
      %v5309 = vpop.f32.mrb[0].mxu0
      %v5310 = vadd.f32 0.0, %v5309
      %v5311 = vpop.f32.mrb[0].mxu0
      %5312 = vmatprep.mubr.f32.mxu0 0.0
      %5313 = vmatmul.mubr.f32.gmra.mrb[0].mxu0 %v5093
      %v5314 = vpop.f32.mrb[0].mxu0
      %v5315 = vadd.f32 0.0, %v5314
      %v5316 = vpop.f32.mrb[0].mxu0
      %5317 = vmatprep.mubr.f32.mxu0 0.0
      %5318 = vmatmul.mubr.f32.gmra.mrb[0].mxu0 %v5096
      %v5319 = vpop.f32.mrb[0].mxu0
      %v5320 = vadd.f32 0.0, %v5319
      %v5321 = vpop.f32.mrb[0].mxu0
      %5322 = vdwg.mxu0
      %v5323 = vadd.f32 %v4810, %v5165
      %v5324 = vadd.f32 %v4815, %v5170
      %v5325 = vadd.f32 %v4820, %v5175
      %v5326 = vadd.f32 %v4825, %v5180
      %v5327 = vadd.f32 %v4830, %v5185
      %v5328 = vadd.f32 %v4835, %v5190
      %v5329 = vadd.f32 %v4840, %v5195
      %v5330 = vadd.f32 %v4845, %v5200
      %v5331 = vadd.f32 %v4850, %v5205
      %v5332 = vadd.f32 %v4855, %v5210
      %v5333 = vadd.f32 %v4860, %v5215
      %v5334 = vadd.f32 %v4865, %v5220
      %v5335 = vadd.f32 %v4870, %v5225
      %v5336 = vadd.f32 %v4875, %v5230
      %v5337 = vadd.f32 %v4880, %v5235
      %v5338 = vadd.f32 %v4885, %v5240
      %v5339 = vadd.f32 %v4890, %v5245
      %v5340 = vadd.f32 %v4895, %v5250
      %v5341 = vadd.f32 %v4900, %v5255
      %v5342 = vadd.f32 %v4905, %v5260
      %v5343 = vadd.f32 %v4910, %v5265
      %v5344 = vadd.f32 %v4915, %v5270
      %v5345 = vadd.f32 %v4920, %v5275
      %v5346 = vadd.f32 %v4925, %v5280
      %v5347 = vadd.f32 %v4930, %v5285
      %v5348 = vadd.f32 %v4935, %v5290
      %v5349 = vadd.f32 %v4940, %v5295
      %v5350 = vadd.f32 %v4945, %v5300
      %v5351 = vadd.f32 %v4950, %v5305
      %v5352 = vadd.f32 %v4955, %v5310
      %v5353 = vadd.f32 %v4960, %v5315
      %v5354 = vadd.f32 %v4965, %v5320
      %v5355 = vld [vmem:[%s4226 + $0x7] sm:$0xff]
      %v5356 = vld [vmem:[%s4226 + $0xf] sm:$0xff]
      %v5357 = vld [vmem:[%s4226 + $0x27] sm:$0xff]
      %v5358 = vld [vmem:[%s4226 + $0x2f] sm:$0xff]
      %v5359 = vld [vmem:[%s4226 + $0x47] sm:$0xff]
      %v5360 = vld [vmem:[%s4226 + $0x4f] sm:$0xff]
      %v5361 = vld [vmem:[%s4226 + $0x67] sm:$0xff]
      %v5362 = vld [vmem:[%s4226 + $0x6f] sm:$0xff]
      %v5363 = vld [vmem:[%s4226 + $0x87] sm:$0xff]
      %v5364 = vld [vmem:[%s4226 + $0x8f] sm:$0xff]
      %v5365 = vld [vmem:[%s4226 + $0xa7] sm:$0xff]
      %v5366 = vld [vmem:[%s4226 + $0xaf] sm:$0xff]
      %v5367 = vld [vmem:[%s4226 + $0xc7] sm:$0xff]
      %v5368 = vld [vmem:[%s4226 + $0xcf] sm:$0xff]
      %v5369 = vld [vmem:[%s4226 + $0xe7] sm:$0xff]
      %v5370 = vld [vmem:[%s4226 + $0xef] sm:$0xff]
      %v5371 = vld [vmem:[%s4226 + $0x107] sm:$0xff]
      %v5372 = vld [vmem:[%s4226 + $0x10f] sm:$0xff]
      %v5373 = vld [vmem:[%s4226 + $0x127] sm:$0xff]
      %v5374 = vld [vmem:[%s4226 + $0x12f] sm:$0xff]
      %v5375 = vld [vmem:[%s4226 + $0x147] sm:$0xff]
      %v5376 = vld [vmem:[%s4226 + $0x14f] sm:$0xff]
      %v5377 = vld [vmem:[%s4226 + $0x167] sm:$0xff]
      %v5378 = vld [vmem:[%s4226 + $0x16f] sm:$0xff]
      %v5379 = vld [vmem:[%s4226 + $0x187] sm:$0xff]
      %v5380 = vld [vmem:[%s4226 + $0x18f] sm:$0xff]
      %v5381 = vld [vmem:[%s4226 + $0x1a7] sm:$0xff]
      %v5382 = vld [vmem:[%s4226 + $0x1af] sm:$0xff]
      %v5383 = vld [vmem:[%s4226 + $0x1c7] sm:$0xff]
      %v5384 = vld [vmem:[%s4226 + $0x1cf] sm:$0xff]
      %v5385 = vld [vmem:[%s4226 + $0x1e7] sm:$0xff]
      %v5386 = vld [vmem:[%s4226 + $0x1ef] sm:$0xff]
      %s5387 = scalar_lea.vmem %s3, 24
      %v5388 = vld [vmem:[%s5387] sm:$0xff]
      %v5390 = vsel %vm4153, %v5355, 0
      %v5393 = vsel %vm4153, %v5356, 0
      %v5396 = vsel %vm4153, %v5357, 0
      %v5399 = vsel %vm4153, %v5358, 0
      %v5402 = vsel %vm4153, %v5359, 0
      %v5405 = vsel %vm4153, %v5360, 0
      %v5408 = vsel %vm4153, %v5361, 0
      %v5411 = vsel %vm4153, %v5362, 0
      %v5414 = vsel %vm4153, %v5363, 0
      %v5417 = vsel %vm4153, %v5364, 0
      %v5420 = vsel %vm4153, %v5365, 0
      %v5423 = vsel %vm4153, %v5366, 0
      %v5426 = vsel %vm4153, %v5367, 0
      %v5429 = vsel %vm4153, %v5368, 0
      %v5432 = vsel %vm4153, %v5369, 0
      %v5435 = vsel %vm4153, %v5370, 0
      %v5438 = vsel %vm4153, %v5371, 0
      %v5441 = vsel %vm4153, %v5372, 0
      %v5444 = vsel %vm4153, %v5373, 0
      %v5447 = vsel %vm4153, %v5374, 0
      %v5450 = vsel %vm4153, %v5375, 0
      %v5453 = vsel %vm4153, %v5376, 0
      %v5456 = vsel %vm4153, %v5377, 0
      %v5459 = vsel %vm4153, %v5378, 0
      %v5462 = vsel %vm4153, %v5379, 0
      %v5465 = vsel %vm4153, %v5380, 0
      %v5468 = vsel %vm4153, %v5381, 0
      %v5471 = vsel %vm4153, %v5382, 0
      %v5474 = vsel %vm4153, %v5383, 0
      %v5477 = vsel %vm4153, %v5384, 0
      %v5480 = vsel %vm4153, %v5385, 0
      %v5483 = vsel %vm4153, %v5386, 0
      %5485 = vmatprep.subr.mxu0 0.0
      %5486 = vmatpush1.msra.mxu0 %v5388
      %5487 = vmatprep.subr.mxu0 0.0
      %5488 = vmatpush1.msra.mxu0 0.0
      %5489 = vmatprep.subr.mxu0 0.0
      %5490 = vmatpush1.msra.mxu0 0.0
      %5491 = vmatprep.subr.mxu0 0.0
      %5492 = vmatpush1.msra.mxu0 0.0
      %5493 = vmatprep.subr.mxu0 0.0
      %5494 = vmatpush1.msra.mxu0 0.0
      %5495 = vmatprep.subr.mxu0 0.0
      %5496 = vmatpush1.msra.mxu0 0.0
      %5497 = vmatprep.subr.mxu0 0.0
      %5498 = vmatpush1.msra.mxu0 0.0
      %5499 = vmatprep.subr.mxu0 0.0
      %5500 = vmatpush1.msra.mxu0 0.0
      %5501 = vmatprep.subr.mxu0 0.0
      %5502 = vmatpush1.msra.mxu0 0.0
      %5503 = vmatprep.subr.mxu0 0.0
      %5504 = vmatpush1.msra.mxu0 0.0
      %5505 = vmatprep.subr.mxu0 0.0
      %5506 = vmatpush1.msra.mxu0 0.0
      %5507 = vmatprep.subr.mxu0 0.0
      %5508 = vmatpush1.msra.mxu0 0.0
      %5509 = vmatprep.subr.mxu0 0.0
      %5510 = vmatpush1.msra.mxu0 0.0
      %5511 = vmatprep.subr.mxu0 0.0
      %5512 = vmatpush1.msra.mxu0 0.0
      %5513 = vmatprep.subr.mxu0 0.0
      %5514 = vmatpush1.msra.mxu0 0.0
      %5515 = vmatprep.subr.mxu0 0.0
      %5516 = vmatpush1.msra.mxu0 0.0
      %5517 = vmatprep.subr.mxu0 0.0
      %5518 = vmatpush1.msra.mxu0 0.0
      %5519 = vmatprep.subr.mxu0 0.0
      %5520 = vmatpush1.msra.mxu0 0.0
      %5521 = vmatprep.subr.mxu0 0.0
      %5522 = vmatpush1.msra.mxu0 0.0
      %5523 = vmatprep.subr.mxu0 0.0
      %5524 = vmatpush1.msra.mxu0 0.0
      %5525 = vmatprep.subr.mxu0 0.0
      %5526 = vmatpush1.msra.mxu0 0.0
      %5527 = vmatprep.subr.mxu0 0.0
      %5528 = vmatpush1.msra.mxu0 0.0
      %5529 = vmatprep.subr.mxu0 0.0
      %5530 = vmatpush1.msra.mxu0 0.0
      %5531 = vmatprep.subr.mxu0 0.0
      %5532 = vmatpush1.msra.mxu0 0.0
      %5533 = vmatprep.subr.mxu0 0.0
      %5534 = vmatpush1.msra.mxu0 0.0
      %5535 = vmatprep.subr.mxu0 0.0
      %5536 = vmatpush1.msra.mxu0 0.0
      %5537 = vmatprep.subr.mxu0 0.0
      %5538 = vmatpush1.msra.mxu0 0.0
      %5539 = vmatprep.subr.mxu0 0.0
      %5540 = vmatpush1.msra.mxu0 0.0
      %5541 = vmatprep.subr.mxu0 0.0
      %5542 = vmatpush1.msra.mxu0 0.0
      %5543 = vmatprep.subr.mxu0 0.0
      %5544 = vmatpush1.msra.mxu0 0.0
      %5545 = vmatprep.subr.mxu0 0.0
      %5546 = vmatpush1.msra.mxu0 0.0
      %5547 = vmatprep.subr.mxu0 0.0
      %5548 = vmatpush1.msra.mxu0 0.0
      %5549 = vmatprep.mubr.f32.mxu0 0.0
      %5550 = vmatmul.mubr.f32.gmra.mrb[0].mxu0 %v5390
      %v5551 = vpop.f32.mrb[0].mxu0
      %v5552 = vadd.f32 0.0, %v5551
      %v5553 = vpop.f32.mrb[0].mxu0
      %5554 = vmatprep.mubr.f32.mxu0 0.0
      %5555 = vmatmul.mubr.f32.gmra.mrb[0].mxu0 %v5393
      %v5556 = vpop.f32.mrb[0].mxu0
      %v5557 = vadd.f32 0.0, %v5556
      %v5558 = vpop.f32.mrb[0].mxu0
      %5559 = vmatprep.mubr.f32.mxu0 0.0
      %5560 = vmatmul.mubr.f32.gmra.mrb[0].mxu0 %v5396
      %v5561 = vpop.f32.mrb[0].mxu0
      %v5562 = vadd.f32 0.0, %v5561
      %v5563 = vpop.f32.mrb[0].mxu0
      %5564 = vmatprep.mubr.f32.mxu0 0.0
      %5565 = vmatmul.mubr.f32.gmra.mrb[0].mxu0 %v5399
      %v5566 = vpop.f32.mrb[0].mxu0
      %v5567 = vadd.f32 0.0, %v5566
      %v5568 = vpop.f32.mrb[0].mxu0
      %5569 = vmatprep.mubr.f32.mxu0 0.0
      %5570 = vmatmul.mubr.f32.gmra.mrb[0].mxu0 %v5402
      %v5571 = vpop.f32.mrb[0].mxu0
      %v5572 = vadd.f32 0.0, %v5571
      %v5573 = vpop.f32.mrb[0].mxu0
      %5574 = vmatprep.mubr.f32.mxu0 0.0
      %5575 = vmatmul.mubr.f32.gmra.mrb[0].mxu0 %v5405
      %v5576 = vpop.f32.mrb[0].mxu0
      %v5577 = vadd.f32 0.0, %v5576
      %v5578 = vpop.f32.mrb[0].mxu0
      %5579 = vmatprep.mubr.f32.mxu0 0.0
      %5580 = vmatmul.mubr.f32.gmra.mrb[0].mxu0 %v5408
      %v5581 = vpop.f32.mrb[0].mxu0
      %v5582 = vadd.f32 0.0, %v5581
      %v5583 = vpop.f32.mrb[0].mxu0
      %5584 = vmatprep.mubr.f32.mxu0 0.0
      %5585 = vmatmul.mubr.f32.gmra.mrb[0].mxu0 %v5411
      %v5586 = vpop.f32.mrb[0].mxu0
      %v5587 = vadd.f32 0.0, %v5586
      %v5588 = vpop.f32.mrb[0].mxu0
      %5589 = vmatprep.mubr.f32.mxu0 0.0
      %5590 = vmatmul.mubr.f32.gmra.mrb[0].mxu0 %v5414
      %v5591 = vpop.f32.mrb[0].mxu0
      %v5592 = vadd.f32 0.0, %v5591
      %v5593 = vpop.f32.mrb[0].mxu0
      %5594 = vmatprep.mubr.f32.mxu0 0.0
      %5595 = vmatmul.mubr.f32.gmra.mrb[0].mxu0 %v5417
      %v5596 = vpop.f32.mrb[0].mxu0
      %v5597 = vadd.f32 0.0, %v5596
      %v5598 = vpop.f32.mrb[0].mxu0
      %5599 = vmatprep.mubr.f32.mxu0 0.0
      %5600 = vmatmul.mubr.f32.gmra.mrb[0].mxu0 %v5420
      %v5601 = vpop.f32.mrb[0].mxu0
      %v5602 = vadd.f32 0.0, %v5601
      %v5603 = vpop.f32.mrb[0].mxu0
      %5604 = vmatprep.mubr.f32.mxu0 0.0
      %5605 = vmatmul.mubr.f32.gmra.mrb[0].mxu0 %v5423
      %v5606 = vpop.f32.mrb[0].mxu0
      %v5607 = vadd.f32 0.0, %v5606
      %v5608 = vpop.f32.mrb[0].mxu0
      %5609 = vmatprep.mubr.f32.mxu0 0.0
      %5610 = vmatmul.mubr.f32.gmra.mrb[0].mxu0 %v5426
      %v5611 = vpop.f32.mrb[0].mxu0
      %v5612 = vadd.f32 0.0, %v5611
      %v5613 = vpop.f32.mrb[0].mxu0
      %5614 = vmatprep.mubr.f32.mxu0 0.0
      %5615 = vmatmul.mubr.f32.gmra.mrb[0].mxu0 %v5429
      %v5616 = vpop.f32.mrb[0].mxu0
      %v5617 = vadd.f32 0.0, %v5616
      %v5618 = vpop.f32.mrb[0].mxu0
      %5619 = vmatprep.mubr.f32.mxu0 0.0
      %5620 = vmatmul.mubr.f32.gmra.mrb[0].mxu0 %v5432
      %v5621 = vpop.f32.mrb[0].mxu0
      %v5622 = vadd.f32 0.0, %v5621
      %v5623 = vpop.f32.mrb[0].mxu0
      %5624 = vmatprep.mubr.f32.mxu0 0.0
      %5625 = vmatmul.mubr.f32.gmra.mrb[0].mxu0 %v5435
      %v5626 = vpop.f32.mrb[0].mxu0
      %v5627 = vadd.f32 0.0, %v5626
      %v5628 = vpop.f32.mrb[0].mxu0
      %5629 = vmatprep.mubr.f32.mxu0 0.0
      %5630 = vmatmul.mubr.f32.gmra.mrb[0].mxu0 %v5438
      %v5631 = vpop.f32.mrb[0].mxu0
      %v5632 = vadd.f32 0.0, %v5631
      %v5633 = vpop.f32.mrb[0].mxu0
      %5634 = vmatprep.mubr.f32.mxu0 0.0
      %5635 = vmatmul.mubr.f32.gmra.mrb[0].mxu0 %v5441
      %v5636 = vpop.f32.mrb[0].mxu0
      %v5637 = vadd.f32 0.0, %v5636
      %v5638 = vpop.f32.mrb[0].mxu0
      %5639 = vmatprep.mubr.f32.mxu0 0.0
      %5640 = vmatmul.mubr.f32.gmra.mrb[0].mxu0 %v5444
      %v5641 = vpop.f32.mrb[0].mxu0
      %v5642 = vadd.f32 0.0, %v5641
      %v5643 = vpop.f32.mrb[0].mxu0
      %5644 = vmatprep.mubr.f32.mxu0 0.0
      %5645 = vmatmul.mubr.f32.gmra.mrb[0].mxu0 %v5447
      %v5646 = vpop.f32.mrb[0].mxu0
      %v5647 = vadd.f32 0.0, %v5646
      %v5648 = vpop.f32.mrb[0].mxu0
      %5649 = vmatprep.mubr.f32.mxu0 0.0
      %5650 = vmatmul.mubr.f32.gmra.mrb[0].mxu0 %v5450
      %v5651 = vpop.f32.mrb[0].mxu0
      %v5652 = vadd.f32 0.0, %v5651
      %v5653 = vpop.f32.mrb[0].mxu0
      %5654 = vmatprep.mubr.f32.mxu0 0.0
      %5655 = vmatmul.mubr.f32.gmra.mrb[0].mxu0 %v5453
      %v5656 = vpop.f32.mrb[0].mxu0
      %v5657 = vadd.f32 0.0, %v5656
      %v5658 = vpop.f32.mrb[0].mxu0
      %5659 = vmatprep.mubr.f32.mxu0 0.0
      %5660 = vmatmul.mubr.f32.gmra.mrb[0].mxu0 %v5456
      %v5661 = vpop.f32.mrb[0].mxu0
      %v5662 = vadd.f32 0.0, %v5661
      %v5663 = vpop.f32.mrb[0].mxu0
      %5664 = vmatprep.mubr.f32.mxu0 0.0
      %5665 = vmatmul.mubr.f32.gmra.mrb[0].mxu0 %v5459
      %v5666 = vpop.f32.mrb[0].mxu0
      %v5667 = vadd.f32 0.0, %v5666
      %v5668 = vpop.f32.mrb[0].mxu0
      %5669 = vmatprep.mubr.f32.mxu0 0.0
      %5670 = vmatmul.mubr.f32.gmra.mrb[0].mxu0 %v5462
      %v5671 = vpop.f32.mrb[0].mxu0
      %v5672 = vadd.f32 0.0, %v5671
      %v5673 = vpop.f32.mrb[0].mxu0
      %5674 = vmatprep.mubr.f32.mxu0 0.0
      %5675 = vmatmul.mubr.f32.gmra.mrb[0].mxu0 %v5465
      %v5676 = vpop.f32.mrb[0].mxu0
      %v5677 = vadd.f32 0.0, %v5676
      %v5678 = vpop.f32.mrb[0].mxu0
      %5679 = vmatprep.mubr.f32.mxu0 0.0
      %5680 = vmatmul.mubr.f32.gmra.mrb[0].mxu0 %v5468
      %v5681 = vpop.f32.mrb[0].mxu0
      %v5682 = vadd.f32 0.0, %v5681
      %v5683 = vpop.f32.mrb[0].mxu0
      %5684 = vmatprep.mubr.f32.mxu0 0.0
      %5685 = vmatmul.mubr.f32.gmra.mrb[0].mxu0 %v5471
      %v5686 = vpop.f32.mrb[0].mxu0
      %v5687 = vadd.f32 0.0, %v5686
      %v5688 = vpop.f32.mrb[0].mxu0
      %5689 = vmatprep.mubr.f32.mxu0 0.0
      %5690 = vmatmul.mubr.f32.gmra.mrb[0].mxu0 %v5474
      %v5691 = vpop.f32.mrb[0].mxu0
      %v5692 = vadd.f32 0.0, %v5691
      %v5693 = vpop.f32.mrb[0].mxu0
      %5694 = vmatprep.mubr.f32.mxu0 0.0
      %5695 = vmatmul.mubr.f32.gmra.mrb[0].mxu0 %v5477
      %v5696 = vpop.f32.mrb[0].mxu0
      %v5697 = vadd.f32 0.0, %v5696
      %v5698 = vpop.f32.mrb[0].mxu0
      %5699 = vmatprep.mubr.f32.mxu0 0.0
      %5700 = vmatmul.mubr.f32.gmra.mrb[0].mxu0 %v5480
      %v5701 = vpop.f32.mrb[0].mxu0
      %v5702 = vadd.f32 0.0, %v5701
      %v5703 = vpop.f32.mrb[0].mxu0
      %5704 = vmatprep.mubr.f32.mxu0 0.0
      %5705 = vmatmul.mubr.f32.gmra.mrb[0].mxu0 %v5483
      %v5706 = vpop.f32.mrb[0].mxu0
      %v5707 = vadd.f32 0.0, %v5706
      %v5708 = vpop.f32.mrb[0].mxu0
      %5709 = vdwg.mxu0
      %v5710 = vadd.f32 %v5323, %v5552
      %v5711 = vadd.f32 %v5324, %v5557
      %v5712 = vadd.f32 %v5325, %v5562
      %v5713 = vadd.f32 %v5326, %v5567
      %v5714 = vadd.f32 %v5327, %v5572
      %v5715 = vadd.f32 %v5328, %v5577
      %v5716 = vadd.f32 %v5329, %v5582
      %v5717 = vadd.f32 %v5330, %v5587
      %v5718 = vadd.f32 %v5331, %v5592
      %v5719 = vadd.f32 %v5332, %v5597
      %v5720 = vadd.f32 %v5333, %v5602
      %v5721 = vadd.f32 %v5334, %v5607
      %v5722 = vadd.f32 %v5335, %v5612
      %v5723 = vadd.f32 %v5336, %v5617
      %v5724 = vadd.f32 %v5337, %v5622
      %v5725 = vadd.f32 %v5338, %v5627
      %v5726 = vadd.f32 %v5339, %v5632
      %v5727 = vadd.f32 %v5340, %v5637
      %v5728 = vadd.f32 %v5341, %v5642
      %v5729 = vadd.f32 %v5342, %v5647
      %v5730 = vadd.f32 %v5343, %v5652
      %v5731 = vadd.f32 %v5344, %v5657
      %v5732 = vadd.f32 %v5345, %v5662
      %v5733 = vadd.f32 %v5346, %v5667
      %v5734 = vadd.f32 %v5347, %v5672
      %v5735 = vadd.f32 %v5348, %v5677
      %v5736 = vadd.f32 %v5349, %v5682
      %v5737 = vadd.f32 %v5350, %v5687
      %v5738 = vadd.f32 %v5351, %v5692
      %v5739 = vadd.f32 %v5352, %v5697
      %v5740 = vadd.f32 %v5353, %v5702
      %v5741 = vadd.f32 %v5354, %v5707
      %v5742 = vld [vmem:[%s4226 + $0x8] sm:$0xff]
      %v5743 = vld [vmem:[%s4226 + $0x10] sm:$0xff]
      %v5744 = vld [vmem:[%s4226 + $0x28] sm:$0xff]
      %v5745 = vld [vmem:[%s4226 + $0x30] sm:$0xff]
      %v5746 = vld [vmem:[%s4226 + $0x48] sm:$0xff]
      %v5747 = vld [vmem:[%s4226 + $0x50] sm:$0xff]
      %v5748 = vld [vmem:[%s4226 + $0x68] sm:$0xff]
      %v5749 = vld [vmem:[%s4226 + $0x70] sm:$0xff]
      %v5750 = vld [vmem:[%s4226 + $0x88] sm:$0xff]
      %v5751 = vld [vmem:[%s4226 + $0x90] sm:$0xff]
      %v5752 = vld [vmem:[%s4226 + $0xa8] sm:$0xff]
      %v5753 = vld [vmem:[%s4226 + $0xb0] sm:$0xff]
      %v5754 = vld [vmem:[%s4226 + $0xc8] sm:$0xff]
      %v5755 = vld [vmem:[%s4226 + $0xd0] sm:$0xff]
      %v5756 = vld [vmem:[%s4226 + $0xe8] sm:$0xff]
      %v5757 = vld [vmem:[%s4226 + $0xf0] sm:$0xff]
      %v5758 = vld [vmem:[%s4226 + $0x108] sm:$0xff]
      %v5759 = vld [vmem:[%s4226 + $0x110] sm:$0xff]
      %v5760 = vld [vmem:[%s4226 + $0x128] sm:$0xff]
      %v5761 = vld [vmem:[%s4226 + $0x130] sm:$0xff]
      %v5762 = vld [vmem:[%s4226 + $0x148] sm:$0xff]
      %v5763 = vld [vmem:[%s4226 + $0x150] sm:$0xff]
      %v5764 = vld [vmem:[%s4226 + $0x168] sm:$0xff]
      %v5765 = vld [vmem:[%s4226 + $0x170] sm:$0xff]
      %v5766 = vld [vmem:[%s4226 + $0x188] sm:$0xff]
      %v5767 = vld [vmem:[%s4226 + $0x190] sm:$0xff]
      %v5768 = vld [vmem:[%s4226 + $0x1a8] sm:$0xff]
      %v5769 = vld [vmem:[%s4226 + $0x1b0] sm:$0xff]
      %v5770 = vld [vmem:[%s4226 + $0x1c8] sm:$0xff]
      %v5771 = vld [vmem:[%s4226 + $0x1d0] sm:$0xff]
      %v5772 = vld [vmem:[%s4226 + $0x1e8] sm:$0xff]
      %v5773 = vld [vmem:[%s4226 + $0x1f0] sm:$0xff]
      %s5774 = scalar_lea.vmem %s3, 32
      %v5775 = vld [vmem:[%s5774] sm:$0xff]
      %v5777 = vsel %vm4153, %v5742, 0
      %v5780 = vsel %vm4153, %v5743, 0
      %v5783 = vsel %vm4153, %v5744, 0
      %v5786 = vsel %vm4153, %v5745, 0
      %v5789 = vsel %vm4153, %v5746, 0
      %v5792 = vsel %vm4153, %v5747, 0
      %v5795 = vsel %vm4153, %v5748, 0
      %v5798 = vsel %vm4153, %v5749, 0
      %v5801 = vsel %vm4153, %v5750, 0
      %v5804 = vsel %vm4153, %v5751, 0
      %v5807 = vsel %vm4153, %v5752, 0
      %v5810 = vsel %vm4153, %v5753, 0
      %v5813 = vsel %vm4153, %v5754, 0
      %v5816 = vsel %vm4153, %v5755, 0
      %v5819 = vsel %vm4153, %v5756, 0
      %v5822 = vsel %vm4153, %v5757, 0
      %v5825 = vsel %vm4153, %v5758, 0
      %v5828 = vsel %vm4153, %v5759, 0
      %v5831 = vsel %vm4153, %v5760, 0
      %v5834 = vsel %vm4153, %v5761, 0
      %v5837 = vsel %vm4153, %v5762, 0
      %v5840 = vsel %vm4153, %v5763, 0
      %v5843 = vsel %vm4153, %v5764, 0
      %v5846 = vsel %vm4153, %v5765, 0
      %v5849 = vsel %vm4153, %v5766, 0
      %v5852 = vsel %vm4153, %v5767, 0
      %v5855 = vsel %vm4153, %v5768, 0
      %v5858 = vsel %vm4153, %v5769, 0
      %v5861 = vsel %vm4153, %v5770, 0
      %v5864 = vsel %vm4153, %v5771, 0
      %v5867 = vsel %vm4153, %v5772, 0
      %v5870 = vsel %vm4153, %v5773, 0
      %5872 = vmatprep.subr.mxu0 0.0
      %5873 = vmatpush1.msra.mxu0 %v5775
      %5874 = vmatprep.subr.mxu0 0.0
      %5875 = vmatpush1.msra.mxu0 0.0
      %5876 = vmatprep.subr.mxu0 0.0
      %5877 = vmatpush1.msra.mxu0 0.0
      %5878 = vmatprep.subr.mxu0 0.0
      %5879 = vmatpush1.msra.mxu0 0.0
      %5880 = vmatprep.subr.mxu0 0.0
      %5881 = vmatpush1.msra.mxu0 0.0
      %5882 = vmatprep.subr.mxu0 0.0
      %5883 = vmatpush1.msra.mxu0 0.0
      %5884 = vmatprep.subr.mxu0 0.0
      %5885 = vmatpush1.msra.mxu0 0.0
      %5886 = vmatprep.subr.mxu0 0.0
      %5887 = vmatpush1.msra.mxu0 0.0
      %5888 = vmatprep.subr.mxu0 0.0
      %5889 = vmatpush1.msra.mxu0 0.0
      %5890 = vmatprep.subr.mxu0 0.0
      %5891 = vmatpush1.msra.mxu0 0.0
      %5892 = vmatprep.subr.mxu0 0.0
      %5893 = vmatpush1.msra.mxu0 0.0
      %5894 = vmatprep.subr.mxu0 0.0
      %5895 = vmatpush1.msra.mxu0 0.0
      %5896 = vmatprep.subr.mxu0 0.0
      %5897 = vmatpush1.msra.mxu0 0.0
      %5898 = vmatprep.subr.mxu0 0.0
      %5899 = vmatpush1.msra.mxu0 0.0
      %5900 = vmatprep.subr.mxu0 0.0
      %5901 = vmatpush1.msra.mxu0 0.0
      %5902 = vmatprep.subr.mxu0 0.0
      %5903 = vmatpush1.msra.mxu0 0.0
      %5904 = vmatprep.subr.mxu0 0.0
      %5905 = vmatpush1.msra.mxu0 0.0
      %5906 = vmatprep.subr.mxu0 0.0
      %5907 = vmatpush1.msra.mxu0 0.0
      %5908 = vmatprep.subr.mxu0 0.0
      %5909 = vmatpush1.msra.mxu0 0.0
      %5910 = vmatprep.subr.mxu0 0.0
      %5911 = vmatpush1.msra.mxu0 0.0
      %5912 = vmatprep.subr.mxu0 0.0
      %5913 = vmatpush1.msra.mxu0 0.0
      %5914 = vmatprep.subr.mxu0 0.0
      %5915 = vmatpush1.msra.mxu0 0.0
      %5916 = vmatprep.subr.mxu0 0.0
      %5917 = vmatpush1.msra.mxu0 0.0
      %5918 = vmatprep.subr.mxu0 0.0
      %5919 = vmatpush1.msra.mxu0 0.0
      %5920 = vmatprep.subr.mxu0 0.0
      %5921 = vmatpush1.msra.mxu0 0.0
      %5922 = vmatprep.subr.mxu0 0.0
      %5923 = vmatpush1.msra.mxu0 0.0
      %5924 = vmatprep.subr.mxu0 0.0
      %5925 = vmatpush1.msra.mxu0 0.0
      %5926 = vmatprep.subr.mxu0 0.0
      %5927 = vmatpush1.msra.mxu0 0.0
      %5928 = vmatprep.subr.mxu0 0.0
      %5929 = vmatpush1.msra.mxu0 0.0
      %5930 = vmatprep.subr.mxu0 0.0
      %5931 = vmatpush1.msra.mxu0 0.0
      %5932 = vmatprep.subr.mxu0 0.0
      %5933 = vmatpush1.msra.mxu0 0.0
      %5934 = vmatprep.subr.mxu0 0.0
      %5935 = vmatpush1.msra.mxu0 0.0
      %5936 = vmatprep.mubr.f32.mxu0 0.0
      %5937 = vmatmul.mubr.f32.gmra.mrb[0].mxu0 %v5777
      %v5938 = vpop.f32.mrb[0].mxu0
      %v5939 = vadd.f32 0.0, %v5938
      %v5940 = vpop.f32.mrb[0].mxu0
      %5941 = vmatprep.mubr.f32.mxu0 0.0
      %5942 = vmatmul.mubr.f32.gmra.mrb[0].mxu0 %v5780
      %v5943 = vpop.f32.mrb[0].mxu0
      %v5944 = vadd.f32 0.0, %v5943
      %v5945 = vpop.f32.mrb[0].mxu0
      %5946 = vmatprep.mubr.f32.mxu0 0.0
      %5947 = vmatmul.mubr.f32.gmra.mrb[0].mxu0 %v5783
      %v5948 = vpop.f32.mrb[0].mxu0
      %v5949 = vadd.f32 0.0, %v5948
      %v5950 = vpop.f32.mrb[0].mxu0
      %5951 = vmatprep.mubr.f32.mxu0 0.0
      %5952 = vmatmul.mubr.f32.gmra.mrb[0].mxu0 %v5786
      %v5953 = vpop.f32.mrb[0].mxu0
      %v5954 = vadd.f32 0.0, %v5953
      %v5955 = vpop.f32.mrb[0].mxu0
      %5956 = vmatprep.mubr.f32.mxu0 0.0
      %5957 = vmatmul.mubr.f32.gmra.mrb[0].mxu0 %v5789
      %v5958 = vpop.f32.mrb[0].mxu0
      %v5959 = vadd.f32 0.0, %v5958
      %v5960 = vpop.f32.mrb[0].mxu0
      %5961 = vmatprep.mubr.f32.mxu0 0.0
      %5962 = vmatmul.mubr.f32.gmra.mrb[0].mxu0 %v5792
      %v5963 = vpop.f32.mrb[0].mxu0
      %v5964 = vadd.f32 0.0, %v5963
      %v5965 = vpop.f32.mrb[0].mxu0
      %5966 = vmatprep.mubr.f32.mxu0 0.0
      %5967 = vmatmul.mubr.f32.gmra.mrb[0].mxu0 %v5795
      %v5968 = vpop.f32.mrb[0].mxu0
      %v5969 = vadd.f32 0.0, %v5968
      %v5970 = vpop.f32.mrb[0].mxu0
      %5971 = vmatprep.mubr.f32.mxu0 0.0
      %5972 = vmatmul.mubr.f32.gmra.mrb[0].mxu0 %v5798
      %v5973 = vpop.f32.mrb[0].mxu0
      %v5974 = vadd.f32 0.0, %v5973
      %v5975 = vpop.f32.mrb[0].mxu0
      %5976 = vmatprep.mubr.f32.mxu0 0.0
      %5977 = vmatmul.mubr.f32.gmra.mrb[0].mxu0 %v5801
      %v5978 = vpop.f32.mrb[0].mxu0
      %v5979 = vadd.f32 0.0, %v5978
      %v5980 = vpop.f32.mrb[0].mxu0
      %5981 = vmatprep.mubr.f32.mxu0 0.0
      %5982 = vmatmul.mubr.f32.gmra.mrb[0].mxu0 %v5804
      %v5983 = vpop.f32.mrb[0].mxu0
      %v5984 = vadd.f32 0.0, %v5983
      %v5985 = vpop.f32.mrb[0].mxu0
      %5986 = vmatprep.mubr.f32.mxu0 0.0
      %5987 = vmatmul.mubr.f32.gmra.mrb[0].mxu0 %v5807
      %v5988 = vpop.f32.mrb[0].mxu0
      %v5989 = vadd.f32 0.0, %v5988
      %v5990 = vpop.f32.mrb[0].mxu0
      %5991 = vmatprep.mubr.f32.mxu0 0.0
      %5992 = vmatmul.mubr.f32.gmra.mrb[0].mxu0 %v5810
      %v5993 = vpop.f32.mrb[0].mxu0
      %v5994 = vadd.f32 0.0, %v5993
      %v5995 = vpop.f32.mrb[0].mxu0
      %5996 = vmatprep.mubr.f32.mxu0 0.0
      %5997 = vmatmul.mubr.f32.gmra.mrb[0].mxu0 %v5813
      %v5998 = vpop.f32.mrb[0].mxu0
      %v5999 = vadd.f32 0.0, %v5998
      %v6000 = vpop.f32.mrb[0].mxu0
      %6001 = vmatprep.mubr.f32.mxu0 0.0
      %6002 = vmatmul.mubr.f32.gmra.mrb[0].mxu0 %v5816
      %v6003 = vpop.f32.mrb[0].mxu0
      %v6004 = vadd.f32 0.0, %v6003
      %v6005 = vpop.f32.mrb[0].mxu0
      %6006 = vmatprep.mubr.f32.mxu0 0.0
      %6007 = vmatmul.mubr.f32.gmra.mrb[0].mxu0 %v5819
      %v6008 = vpop.f32.mrb[0].mxu0
      %v6009 = vadd.f32 0.0, %v6008
      %v6010 = vpop.f32.mrb[0].mxu0
      %6011 = vmatprep.mubr.f32.mxu0 0.0
      %6012 = vmatmul.mubr.f32.gmra.mrb[0].mxu0 %v5822
      %v6013 = vpop.f32.mrb[0].mxu0
      %v6014 = vadd.f32 0.0, %v6013
      %v6015 = vpop.f32.mrb[0].mxu0
      %6016 = vmatprep.mubr.f32.mxu0 0.0
      %6017 = vmatmul.mubr.f32.gmra.mrb[0].mxu0 %v5825
      %v6018 = vpop.f32.mrb[0].mxu0
      %v6019 = vadd.f32 0.0, %v6018
      %v6020 = vpop.f32.mrb[0].mxu0
      %6021 = vmatprep.mubr.f32.mxu0 0.0
      %6022 = vmatmul.mubr.f32.gmra.mrb[0].mxu0 %v5828
      %v6023 = vpop.f32.mrb[0].mxu0
      %v6024 = vadd.f32 0.0, %v6023
      %v6025 = vpop.f32.mrb[0].mxu0
      %6026 = vmatprep.mubr.f32.mxu0 0.0
      %6027 = vmatmul.mubr.f32.gmra.mrb[0].mxu0 %v5831
      %v6028 = vpop.f32.mrb[0].mxu0
      %v6029 = vadd.f32 0.0, %v6028
      %v6030 = vpop.f32.mrb[0].mxu0
      %6031 = vmatprep.mubr.f32.mxu0 0.0
      %6032 = vmatmul.mubr.f32.gmra.mrb[0].mxu0 %v5834
      %v6033 = vpop.f32.mrb[0].mxu0
      %v6034 = vadd.f32 0.0, %v6033
      %v6035 = vpop.f32.mrb[0].mxu0
      %6036 = vmatprep.mubr.f32.mxu0 0.0
      %6037 = vmatmul.mubr.f32.gmra.mrb[0].mxu0 %v5837
      %v6038 = vpop.f32.mrb[0].mxu0
      %v6039 = vadd.f32 0.0, %v6038
      %v6040 = vpop.f32.mrb[0].mxu0
      %6041 = vmatprep.mubr.f32.mxu0 0.0
      %6042 = vmatmul.mubr.f32.gmra.mrb[0].mxu0 %v5840
      %v6043 = vpop.f32.mrb[0].mxu0
      %v6044 = vadd.f32 0.0, %v6043
      %v6045 = vpop.f32.mrb[0].mxu0
      %6046 = vmatprep.mubr.f32.mxu0 0.0
      %6047 = vmatmul.mubr.f32.gmra.mrb[0].mxu0 %v5843
      %v6048 = vpop.f32.mrb[0].mxu0
      %v6049 = vadd.f32 0.0, %v6048
      %v6050 = vpop.f32.mrb[0].mxu0
      %6051 = vmatprep.mubr.f32.mxu0 0.0
      %6052 = vmatmul.mubr.f32.gmra.mrb[0].mxu0 %v5846
      %v6053 = vpop.f32.mrb[0].mxu0
      %v6054 = vadd.f32 0.0, %v6053
      %v6055 = vpop.f32.mrb[0].mxu0
      %6056 = vmatprep.mubr.f32.mxu0 0.0
      %6057 = vmatmul.mubr.f32.gmra.mrb[0].mxu0 %v5849
      %v6058 = vpop.f32.mrb[0].mxu0
      %v6059 = vadd.f32 0.0, %v6058
      %v6060 = vpop.f32.mrb[0].mxu0
      %6061 = vmatprep.mubr.f32.mxu0 0.0
      %6062 = vmatmul.mubr.f32.gmra.mrb[0].mxu0 %v5852
      %v6063 = vpop.f32.mrb[0].mxu0
      %v6064 = vadd.f32 0.0, %v6063
      %v6065 = vpop.f32.mrb[0].mxu0
      %6066 = vmatprep.mubr.f32.mxu0 0.0
      %6067 = vmatmul.mubr.f32.gmra.mrb[0].mxu0 %v5855
      %v6068 = vpop.f32.mrb[0].mxu0
      %v6069 = vadd.f32 0.0, %v6068
      %v6070 = vpop.f32.mrb[0].mxu0
      %6071 = vmatprep.mubr.f32.mxu0 0.0
      %6072 = vmatmul.mubr.f32.gmra.mrb[0].mxu0 %v5858
      %v6073 = vpop.f32.mrb[0].mxu0
      %v6074 = vadd.f32 0.0, %v6073
      %v6075 = vpop.f32.mrb[0].mxu0
      %6076 = vmatprep.mubr.f32.mxu0 0.0
      %6077 = vmatmul.mubr.f32.gmra.mrb[0].mxu0 %v5861
      %v6078 = vpop.f32.mrb[0].mxu0
      %v6079 = vadd.f32 0.0, %v6078
      %v6080 = vpop.f32.mrb[0].mxu0
      %6081 = vmatprep.mubr.f32.mxu0 0.0
      %6082 = vmatmul.mubr.f32.gmra.mrb[0].mxu0 %v5864
      %v6083 = vpop.f32.mrb[0].mxu0
      %v6084 = vadd.f32 0.0, %v6083
      %v6085 = vpop.f32.mrb[0].mxu0
      %6086 = vmatprep.mubr.f32.mxu0 0.0
      %6087 = vmatmul.mubr.f32.gmra.mrb[0].mxu0 %v5867
      %v6088 = vpop.f32.mrb[0].mxu0
      %v6089 = vadd.f32 0.0, %v6088
      %v6090 = vpop.f32.mrb[0].mxu0
      %6091 = vmatprep.mubr.f32.mxu0 0.0
      %6092 = vmatmul.mubr.f32.gmra.mrb[0].mxu0 %v5870
      %v6093 = vpop.f32.mrb[0].mxu0
      %v6094 = vadd.f32 0.0, %v6093
      %v6095 = vpop.f32.mrb[0].mxu0
      %6096 = vdwg.mxu0
      %v6097 = vadd.f32 %v5710, %v5939
      %v6098 = vadd.f32 %v5711, %v5944
      %v6099 = vadd.f32 %v5712, %v5949
      %v6100 = vadd.f32 %v5713, %v5954
      %v6101 = vadd.f32 %v5714, %v5959
      %v6102 = vadd.f32 %v5715, %v5964
      %v6103 = vadd.f32 %v5716, %v5969
      %v6104 = vadd.f32 %v5717, %v5974
      %v6105 = vadd.f32 %v5718, %v5979
      %v6106 = vadd.f32 %v5719, %v5984
      %v6107 = vadd.f32 %v5720, %v5989
      %v6108 = vadd.f32 %v5721, %v5994
      %v6109 = vadd.f32 %v5722, %v5999
      %v6110 = vadd.f32 %v5723, %v6004
      %v6111 = vadd.f32 %v5724, %v6009
      %v6112 = vadd.f32 %v5725, %v6014
      %v6113 = vadd.f32 %v5726, %v6019
      %v6114 = vadd.f32 %v5727, %v6024
      %v6115 = vadd.f32 %v5728, %v6029
      %v6116 = vadd.f32 %v5729, %v6034
      %v6117 = vadd.f32 %v5730, %v6039
      %v6118 = vadd.f32 %v5731, %v6044
      %v6119 = vadd.f32 %v5732, %v6049
      %v6120 = vadd.f32 %v5733, %v6054
      %v6121 = vadd.f32 %v5734, %v6059
      %v6122 = vadd.f32 %v5735, %v6064
      %v6123 = vadd.f32 %v5736, %v6069
      %v6124 = vadd.f32 %v5737, %v6074
      %v6125 = vadd.f32 %v5738, %v6079
      %v6126 = vadd.f32 %v5739, %v6084
      %v6127 = vadd.f32 %v5740, %v6089
      %v6128 = vadd.f32 %v5741, %v6094
      %v6129 = vld [vmem:[%s4226 + $0x9] sm:$0xff]
      %v6130 = vld [vmem:[%s4226 + $0x11] sm:$0xff]
      %v6131 = vld [vmem:[%s4226 + $0x29] sm:$0xff]
      %v6132 = vld [vmem:[%s4226 + $0x31] sm:$0xff]
      %v6133 = vld [vmem:[%s4226 + $0x49] sm:$0xff]
      %v6134 = vld [vmem:[%s4226 + $0x51] sm:$0xff]
      %v6135 = vld [vmem:[%s4226 + $0x69] sm:$0xff]
      %v6136 = vld [vmem:[%s4226 + $0x71] sm:$0xff]
      %v6137 = vld [vmem:[%s4226 + $0x89] sm:$0xff]
      %v6138 = vld [vmem:[%s4226 + $0x91] sm:$0xff]
      %v6139 = vld [vmem:[%s4226 + $0xa9] sm:$0xff]
      %v6140 = vld [vmem:[%s4226 + $0xb1] sm:$0xff]
      %v6141 = vld [vmem:[%s4226 + $0xc9] sm:$0xff]
      %v6142 = vld [vmem:[%s4226 + $0xd1] sm:$0xff]
      %v6143 = vld [vmem:[%s4226 + $0xe9] sm:$0xff]
      %v6144 = vld [vmem:[%s4226 + $0xf1] sm:$0xff]
      %v6145 = vld [vmem:[%s4226 + $0x109] sm:$0xff]
      %v6146 = vld [vmem:[%s4226 + $0x111] sm:$0xff]
      %v6147 = vld [vmem:[%s4226 + $0x129] sm:$0xff]
      %v6148 = vld [vmem:[%s4226 + $0x131] sm:$0xff]
      %v6149 = vld [vmem:[%s4226 + $0x149] sm:$0xff]
      %v6150 = vld [vmem:[%s4226 + $0x151] sm:$0xff]
      %v6151 = vld [vmem:[%s4226 + $0x169] sm:$0xff]
      %v6152 = vld [vmem:[%s4226 + $0x171] sm:$0xff]
      %v6153 = vld [vmem:[%s4226 + $0x189] sm:$0xff]
      %v6154 = vld [vmem:[%s4226 + $0x191] sm:$0xff]
      %v6155 = vld [vmem:[%s4226 + $0x1a9] sm:$0xff]
      %v6156 = vld [vmem:[%s4226 + $0x1b1] sm:$0xff]
      %v6157 = vld [vmem:[%s4226 + $0x1c9] sm:$0xff]
      %v6158 = vld [vmem:[%s4226 + $0x1d1] sm:$0xff]
      %v6159 = vld [vmem:[%s4226 + $0x1e9] sm:$0xff]
      %v6160 = vld [vmem:[%s4226 + $0x1f1] sm:$0xff]
      %s6161 = scalar_lea.vmem %s3, 40
      %v6162 = vld [vmem:[%s6161] sm:$0xff]
      %v6164 = vsel %vm4153, %v6129, 0
      %v6167 = vsel %vm4153, %v6130, 0
      %v6170 = vsel %vm4153, %v6131, 0
      %v6173 = vsel %vm4153, %v6132, 0
      %v6176 = vsel %vm4153, %v6133, 0
      %v6179 = vsel %vm4153, %v6134, 0
      %v6182 = vsel %vm4153, %v6135, 0
      %v6185 = vsel %vm4153, %v6136, 0
      %v6188 = vsel %vm4153, %v6137, 0
      %v6191 = vsel %vm4153, %v6138, 0
      %v6194 = vsel %vm4153, %v6139, 0
      %v6197 = vsel %vm4153, %v6140, 0
      %v6200 = vsel %vm4153, %v6141, 0
      %v6203 = vsel %vm4153, %v6142, 0
      %v6206 = vsel %vm4153, %v6143, 0
      %v6209 = vsel %vm4153, %v6144, 0
      %v6212 = vsel %vm4153, %v6145, 0
      %v6215 = vsel %vm4153, %v6146, 0
      %v6218 = vsel %vm4153, %v6147, 0
      %v6221 = vsel %vm4153, %v6148, 0
      %v6224 = vsel %vm4153, %v6149, 0
      %v6227 = vsel %vm4153, %v6150, 0
      %v6230 = vsel %vm4153, %v6151, 0
      %v6233 = vsel %vm4153, %v6152, 0
      %v6236 = vsel %vm4153, %v6153, 0
      %v6239 = vsel %vm4153, %v6154, 0
      %v6242 = vsel %vm4153, %v6155, 0
      %v6245 = vsel %vm4153, %v6156, 0
      %v6248 = vsel %vm4153, %v6157, 0
      %v6251 = vsel %vm4153, %v6158, 0
      %v6254 = vsel %vm4153, %v6159, 0
      %v6257 = vsel %vm4153, %v6160, 0
      %6259 = vmatprep.subr.mxu0 0.0
      %6260 = vmatpush1.msra.mxu0 %v6162
      %6261 = vmatprep.subr.mxu0 0.0
      %6262 = vmatpush1.msra.mxu0 0.0
      %6263 = vmatprep.subr.mxu0 0.0
      %6264 = vmatpush1.msra.mxu0 0.0
      %6265 = vmatprep.subr.mxu0 0.0
      %6266 = vmatpush1.msra.mxu0 0.0
      %6267 = vmatprep.subr.mxu0 0.0
      %6268 = vmatpush1.msra.mxu0 0.0
      %6269 = vmatprep.subr.mxu0 0.0
      %6270 = vmatpush1.msra.mxu0 0.0
      %6271 = vmatprep.subr.mxu0 0.0
      %6272 = vmatpush1.msra.mxu0 0.0
      %6273 = vmatprep.subr.mxu0 0.0
      %6274 = vmatpush1.msra.mxu0 0.0
      %6275 = vmatprep.subr.mxu0 0.0
      %6276 = vmatpush1.msra.mxu0 0.0
      %6277 = vmatprep.subr.mxu0 0.0
      %6278 = vmatpush1.msra.mxu0 0.0
      %6279 = vmatprep.subr.mxu0 0.0
      %6280 = vmatpush1.msra.mxu0 0.0
      %6281 = vmatprep.subr.mxu0 0.0
      %6282 = vmatpush1.msra.mxu0 0.0
      %6283 = vmatprep.subr.mxu0 0.0
      %6284 = vmatpush1.msra.mxu0 0.0
      %6285 = vmatprep.subr.mxu0 0.0
      %6286 = vmatpush1.msra.mxu0 0.0
      %6287 = vmatprep.subr.mxu0 0.0
      %6288 = vmatpush1.msra.mxu0 0.0
      %6289 = vmatprep.subr.mxu0 0.0
      %6290 = vmatpush1.msra.mxu0 0.0
      %6291 = vmatprep.subr.mxu0 0.0
      %6292 = vmatpush1.msra.mxu0 0.0
      %6293 = vmatprep.subr.mxu0 0.0
      %6294 = vmatpush1.msra.mxu0 0.0
      %6295 = vmatprep.subr.mxu0 0.0
      %6296 = vmatpush1.msra.mxu0 0.0
      %6297 = vmatprep.subr.mxu0 0.0
      %6298 = vmatpush1.msra.mxu0 0.0
      %6299 = vmatprep.subr.mxu0 0.0
      %6300 = vmatpush1.msra.mxu0 0.0
      %6301 = vmatprep.subr.mxu0 0.0
      %6302 = vmatpush1.msra.mxu0 0.0
      %6303 = vmatprep.subr.mxu0 0.0
      %6304 = vmatpush1.msra.mxu0 0.0
      %6305 = vmatprep.subr.mxu0 0.0
      %6306 = vmatpush1.msra.mxu0 0.0
      %6307 = vmatprep.subr.mxu0 0.0
      %6308 = vmatpush1.msra.mxu0 0.0
      %6309 = vmatprep.subr.mxu0 0.0
      %6310 = vmatpush1.msra.mxu0 0.0
      %6311 = vmatprep.subr.mxu0 0.0
      %6312 = vmatpush1.msra.mxu0 0.0
      %6313 = vmatprep.subr.mxu0 0.0
      %6314 = vmatpush1.msra.mxu0 0.0
      %6315 = vmatprep.subr.mxu0 0.0
      %6316 = vmatpush1.msra.mxu0 0.0
      %6317 = vmatprep.subr.mxu0 0.0
      %6318 = vmatpush1.msra.mxu0 0.0
      %6319 = vmatprep.subr.mxu0 0.0
      %6320 = vmatpush1.msra.mxu0 0.0
      %6321 = vmatprep.subr.mxu0 0.0
      %6322 = vmatpush1.msra.mxu0 0.0
      %6323 = vmatprep.mubr.f32.mxu0 0.0
      %6324 = vmatmul.mubr.f32.gmra.mrb[0].mxu0 %v6164
      %v6325 = vpop.f32.mrb[0].mxu0
      %v6326 = vadd.f32 0.0, %v6325
      %v6327 = vpop.f32.mrb[0].mxu0
      %6328 = vmatprep.mubr.f32.mxu0 0.0
      %6329 = vmatmul.mubr.f32.gmra.mrb[0].mxu0 %v6167
      %v6330 = vpop.f32.mrb[0].mxu0
      %v6331 = vadd.f32 0.0, %v6330
      %v6332 = vpop.f32.mrb[0].mxu0
      %6333 = vmatprep.mubr.f32.mxu0 0.0
      %6334 = vmatmul.mubr.f32.gmra.mrb[0].mxu0 %v6170
      %v6335 = vpop.f32.mrb[0].mxu0
      %v6336 = vadd.f32 0.0, %v6335
      %v6337 = vpop.f32.mrb[0].mxu0
      %6338 = vmatprep.mubr.f32.mxu0 0.0
      %6339 = vmatmul.mubr.f32.gmra.mrb[0].mxu0 %v6173
      %v6340 = vpop.f32.mrb[0].mxu0
      %v6341 = vadd.f32 0.0, %v6340
      %v6342 = vpop.f32.mrb[0].mxu0
      %6343 = vmatprep.mubr.f32.mxu0 0.0
      %6344 = vmatmul.mubr.f32.gmra.mrb[0].mxu0 %v6176
      %v6345 = vpop.f32.mrb[0].mxu0
      %v6346 = vadd.f32 0.0, %v6345
      %v6347 = vpop.f32.mrb[0].mxu0
      %6348 = vmatprep.mubr.f32.mxu0 0.0
      %6349 = vmatmul.mubr.f32.gmra.mrb[0].mxu0 %v6179
      %v6350 = vpop.f32.mrb[0].mxu0
      %v6351 = vadd.f32 0.0, %v6350
      %v6352 = vpop.f32.mrb[0].mxu0
      %6353 = vmatprep.mubr.f32.mxu0 0.0
      %6354 = vmatmul.mubr.f32.gmra.mrb[0].mxu0 %v6182
      %v6355 = vpop.f32.mrb[0].mxu0
      %v6356 = vadd.f32 0.0, %v6355
      %v6357 = vpop.f32.mrb[0].mxu0
      %6358 = vmatprep.mubr.f32.mxu0 0.0
      %6359 = vmatmul.mubr.f32.gmra.mrb[0].mxu0 %v6185
      %v6360 = vpop.f32.mrb[0].mxu0
      %v6361 = vadd.f32 0.0, %v6360
      %v6362 = vpop.f32.mrb[0].mxu0
      %6363 = vmatprep.mubr.f32.mxu0 0.0
      %6364 = vmatmul.mubr.f32.gmra.mrb[0].mxu0 %v6188
      %v6365 = vpop.f32.mrb[0].mxu0
      %v6366 = vadd.f32 0.0, %v6365
      %v6367 = vpop.f32.mrb[0].mxu0
      %6368 = vmatprep.mubr.f32.mxu0 0.0
      %6369 = vmatmul.mubr.f32.gmra.mrb[0].mxu0 %v6191
      %v6370 = vpop.f32.mrb[0].mxu0
      %v6371 = vadd.f32 0.0, %v6370
      %v6372 = vpop.f32.mrb[0].mxu0
      %6373 = vmatprep.mubr.f32.mxu0 0.0
      %6374 = vmatmul.mubr.f32.gmra.mrb[0].mxu0 %v6194
      %v6375 = vpop.f32.mrb[0].mxu0
      %v6376 = vadd.f32 0.0, %v6375
      %v6377 = vpop.f32.mrb[0].mxu0
      %6378 = vmatprep.mubr.f32.mxu0 0.0
      %6379 = vmatmul.mubr.f32.gmra.mrb[0].mxu0 %v6197
      %v6380 = vpop.f32.mrb[0].mxu0
      %v6381 = vadd.f32 0.0, %v6380
      %v6382 = vpop.f32.mrb[0].mxu0
      %6383 = vmatprep.mubr.f32.mxu0 0.0
      %6384 = vmatmul.mubr.f32.gmra.mrb[0].mxu0 %v6200
      %v6385 = vpop.f32.mrb[0].mxu0
      %v6386 = vadd.f32 0.0, %v6385
      %v6387 = vpop.f32.mrb[0].mxu0
      %6388 = vmatprep.mubr.f32.mxu0 0.0
      %6389 = vmatmul.mubr.f32.gmra.mrb[0].mxu0 %v6203
      %v6390 = vpop.f32.mrb[0].mxu0
      %v6391 = vadd.f32 0.0, %v6390
      %v6392 = vpop.f32.mrb[0].mxu0
      %6393 = vmatprep.mubr.f32.mxu0 0.0
      %6394 = vmatmul.mubr.f32.gmra.mrb[0].mxu0 %v6206
      %v6395 = vpop.f32.mrb[0].mxu0
      %v6396 = vadd.f32 0.0, %v6395
      %v6397 = vpop.f32.mrb[0].mxu0
      %6398 = vmatprep.mubr.f32.mxu0 0.0
      %6399 = vmatmul.mubr.f32.gmra.mrb[0].mxu0 %v6209
      %v6400 = vpop.f32.mrb[0].mxu0
      %v6401 = vadd.f32 0.0, %v6400
      %v6402 = vpop.f32.mrb[0].mxu0
      %6403 = vmatprep.mubr.f32.mxu0 0.0
      %6404 = vmatmul.mubr.f32.gmra.mrb[0].mxu0 %v6212
      %v6405 = vpop.f32.mrb[0].mxu0
      %v6406 = vadd.f32 0.0, %v6405
      %v6407 = vpop.f32.mrb[0].mxu0
      %6408 = vmatprep.mubr.f32.mxu0 0.0
      %6409 = vmatmul.mubr.f32.gmra.mrb[0].mxu0 %v6215
      %v6410 = vpop.f32.mrb[0].mxu0
      %v6411 = vadd.f32 0.0, %v6410
      %v6412 = vpop.f32.mrb[0].mxu0
      %6413 = vmatprep.mubr.f32.mxu0 0.0
      %6414 = vmatmul.mubr.f32.gmra.mrb[0].mxu0 %v6218
      %v6415 = vpop.f32.mrb[0].mxu0
      %v6416 = vadd.f32 0.0, %v6415
      %v6417 = vpop.f32.mrb[0].mxu0
      %6418 = vmatprep.mubr.f32.mxu0 0.0
      %6419 = vmatmul.mubr.f32.gmra.mrb[0].mxu0 %v6221
      %v6420 = vpop.f32.mrb[0].mxu0
      %v6421 = vadd.f32 0.0, %v6420
      %v6422 = vpop.f32.mrb[0].mxu0
      %6423 = vmatprep.mubr.f32.mxu0 0.0
      %6424 = vmatmul.mubr.f32.gmra.mrb[0].mxu0 %v6224
      %v6425 = vpop.f32.mrb[0].mxu0
      %v6426 = vadd.f32 0.0, %v6425
      %v6427 = vpop.f32.mrb[0].mxu0
      %6428 = vmatprep.mubr.f32.mxu0 0.0
      %6429 = vmatmul.mubr.f32.gmra.mrb[0].mxu0 %v6227
      %v6430 = vpop.f32.mrb[0].mxu0
      %v6431 = vadd.f32 0.0, %v6430
      %v6432 = vpop.f32.mrb[0].mxu0
      %6433 = vmatprep.mubr.f32.mxu0 0.0
      %6434 = vmatmul.mubr.f32.gmra.mrb[0].mxu0 %v6230
      %v6435 = vpop.f32.mrb[0].mxu0
      %v6436 = vadd.f32 0.0, %v6435
      %v6437 = vpop.f32.mrb[0].mxu0
      %6438 = vmatprep.mubr.f32.mxu0 0.0
      %6439 = vmatmul.mubr.f32.gmra.mrb[0].mxu0 %v6233
      %v6440 = vpop.f32.mrb[0].mxu0
      %v6441 = vadd.f32 0.0, %v6440
      %v6442 = vpop.f32.mrb[0].mxu0
      %6443 = vmatprep.mubr.f32.mxu0 0.0
      %6444 = vmatmul.mubr.f32.gmra.mrb[0].mxu0 %v6236
      %v6445 = vpop.f32.mrb[0].mxu0
      %v6446 = vadd.f32 0.0, %v6445
      %v6447 = vpop.f32.mrb[0].mxu0
      %6448 = vmatprep.mubr.f32.mxu0 0.0
      %6449 = vmatmul.mubr.f32.gmra.mrb[0].mxu0 %v6239
      %v6450 = vpop.f32.mrb[0].mxu0
      %v6451 = vadd.f32 0.0, %v6450
      %v6452 = vpop.f32.mrb[0].mxu0
      %6453 = vmatprep.mubr.f32.mxu0 0.0
      %6454 = vmatmul.mubr.f32.gmra.mrb[0].mxu0 %v6242
      %v6455 = vpop.f32.mrb[0].mxu0
      %v6456 = vadd.f32 0.0, %v6455
      %v6457 = vpop.f32.mrb[0].mxu0
      %6458 = vmatprep.mubr.f32.mxu0 0.0
      %6459 = vmatmul.mubr.f32.gmra.mrb[0].mxu0 %v6245
      %v6460 = vpop.f32.mrb[0].mxu0
      %v6461 = vadd.f32 0.0, %v6460
      %v6462 = vpop.f32.mrb[0].mxu0
      %6463 = vmatprep.mubr.f32.mxu0 0.0
      %6464 = vmatmul.mubr.f32.gmra.mrb[0].mxu0 %v6248
      %v6465 = vpop.f32.mrb[0].mxu0
      %v6466 = vadd.f32 0.0, %v6465
      %v6467 = vpop.f32.mrb[0].mxu0
      %6468 = vmatprep.mubr.f32.mxu0 0.0
      %6469 = vmatmul.mubr.f32.gmra.mrb[0].mxu0 %v6251
      %v6470 = vpop.f32.mrb[0].mxu0
      %v6471 = vadd.f32 0.0, %v6470
      %v6472 = vpop.f32.mrb[0].mxu0
      %6473 = vmatprep.mubr.f32.mxu0 0.0
      %6474 = vmatmul.mubr.f32.gmra.mrb[0].mxu0 %v6254
      %v6475 = vpop.f32.mrb[0].mxu0
      %v6476 = vadd.f32 0.0, %v6475
      %v6477 = vpop.f32.mrb[0].mxu0
      %6478 = vmatprep.mubr.f32.mxu0 0.0
      %6479 = vmatmul.mubr.f32.gmra.mrb[0].mxu0 %v6257
      %v6480 = vpop.f32.mrb[0].mxu0
      %v6481 = vadd.f32 0.0, %v6480
      %v6482 = vpop.f32.mrb[0].mxu0
      %6483 = vdwg.mxu0
      %v6484 = vadd.f32 %v6097, %v6326
      %v6485 = vadd.f32 %v6098, %v6331
      %v6486 = vadd.f32 %v6099, %v6336
      %v6487 = vadd.f32 %v6100, %v6341
      %v6488 = vadd.f32 %v6101, %v6346
      %v6489 = vadd.f32 %v6102, %v6351
      %v6490 = vadd.f32 %v6103, %v6356
      %v6491 = vadd.f32 %v6104, %v6361
      %v6492 = vadd.f32 %v6105, %v6366
      %v6493 = vadd.f32 %v6106, %v6371
      %v6494 = vadd.f32 %v6107, %v6376
      %v6495 = vadd.f32 %v6108, %v6381
      %v6496 = vadd.f32 %v6109, %v6386
      %v6497 = vadd.f32 %v6110, %v6391
      %v6498 = vadd.f32 %v6111, %v6396
      %v6499 = vadd.f32 %v6112, %v6401
      %v6500 = vadd.f32 %v6113, %v6406
      %v6501 = vadd.f32 %v6114, %v6411
      %v6502 = vadd.f32 %v6115, %v6416
      %v6503 = vadd.f32 %v6116, %v6421
      %v6504 = vadd.f32 %v6117, %v6426
      %v6505 = vadd.f32 %v6118, %v6431
      %v6506 = vadd.f32 %v6119, %v6436
      %v6507 = vadd.f32 %v6120, %v6441
      %v6508 = vadd.f32 %v6121, %v6446
      %v6509 = vadd.f32 %v6122, %v6451
      %v6510 = vadd.f32 %v6123, %v6456
      %v6511 = vadd.f32 %v6124, %v6461
      %v6512 = vadd.f32 %v6125, %v6466
      %v6513 = vadd.f32 %v6126, %v6471
      %v6514 = vadd.f32 %v6127, %v6476
      %v6515 = vadd.f32 %v6128, %v6481
      %s6516 = scalar_lea.vmem [#allocation3], 64
      %v6517 = vld [vmem:[%s6516 + $0x7] sm:$0xff]
      %v6518 = vld [vmem:[%s6516 + $0xf] sm:$0xff]
      %v6519 = vld [vmem:[%s6516 + $0x27] sm:$0xff]
      %v6520 = vld [vmem:[%s6516 + $0x2f] sm:$0xff]
      %v6521 = vld [vmem:[%s6516 + $0x47] sm:$0xff]
      %v6522 = vld [vmem:[%s6516 + $0x4f] sm:$0xff]
      %v6523 = vld [vmem:[%s6516 + $0x67] sm:$0xff]
      %v6524 = vld [vmem:[%s6516 + $0x6f] sm:$0xff]
      %v6525 = vld [vmem:[%s6516 + $0x87] sm:$0xff]
      %v6526 = vld [vmem:[%s6516 + $0x8f] sm:$0xff]
      %v6527 = vld [vmem:[%s6516 + $0xa7] sm:$0xff]
      %v6528 = vld [vmem:[%s6516 + $0xaf] sm:$0xff]
      %v6529 = vld [vmem:[%s6516 + $0xc7] sm:$0xff]
      %v6530 = vld [vmem:[%s6516 + $0xcf] sm:$0xff]
      %v6531 = vld [vmem:[%s6516 + $0xe7] sm:$0xff]
      %v6532 = vld [vmem:[%s6516 + $0xef] sm:$0xff]
      %v6533 = vld [vmem:[%s6516 + $0x107] sm:$0xff]
      %v6534 = vld [vmem:[%s6516 + $0x10f] sm:$0xff]
      %v6535 = vld [vmem:[%s6516 + $0x127] sm:$0xff]
      %v6536 = vld [vmem:[%s6516 + $0x12f] sm:$0xff]
      %v6537 = vld [vmem:[%s6516 + $0x147] sm:$0xff]
      %v6538 = vld [vmem:[%s6516 + $0x14f] sm:$0xff]
      %v6539 = vld [vmem:[%s6516 + $0x167] sm:$0xff]
      %v6540 = vld [vmem:[%s6516 + $0x16f] sm:$0xff]
      %v6541 = vld [vmem:[%s6516 + $0x187] sm:$0xff]
      %v6542 = vld [vmem:[%s6516 + $0x18f] sm:$0xff]
      %v6543 = vld [vmem:[%s6516 + $0x1a7] sm:$0xff]
      %v6544 = vld [vmem:[%s6516 + $0x1af] sm:$0xff]
      %v6545 = vld [vmem:[%s6516 + $0x1c7] sm:$0xff]
      %v6546 = vld [vmem:[%s6516 + $0x1cf] sm:$0xff]
      %v6547 = vld [vmem:[%s6516 + $0x1e7] sm:$0xff]
      %v6548 = vld [vmem:[%s6516 + $0x1ef] sm:$0xff]
      %s6549 = scalar_lea.vmem %s3, 48
      %v6550 = vld [vmem:[%s6549] sm:$0xff]
      %v6552 = vsel %vm4153, %v6517, 0
      %v6555 = vsel %vm4153, %v6518, 0
      %v6558 = vsel %vm4153, %v6519, 0
      %v6561 = vsel %vm4153, %v6520, 0
      %v6564 = vsel %vm4153, %v6521, 0
      %v6567 = vsel %vm4153, %v6522, 0
      %v6570 = vsel %vm4153, %v6523, 0
      %v6573 = vsel %vm4153, %v6524, 0
      %v6576 = vsel %vm4153, %v6525, 0
      %v6579 = vsel %vm4153, %v6526, 0
      %v6582 = vsel %vm4153, %v6527, 0
      %v6585 = vsel %vm4153, %v6528, 0
      %v6588 = vsel %vm4153, %v6529, 0
      %v6591 = vsel %vm4153, %v6530, 0
      %v6594 = vsel %vm4153, %v6531, 0
      %v6597 = vsel %vm4153, %v6532, 0
      %v6600 = vsel %vm4153, %v6533, 0
      %v6603 = vsel %vm4153, %v6534, 0
      %v6606 = vsel %vm4153, %v6535, 0
      %v6609 = vsel %vm4153, %v6536, 0
      %v6612 = vsel %vm4153, %v6537, 0
      %v6615 = vsel %vm4153, %v6538, 0
      %v6618 = vsel %vm4153, %v6539, 0
      %v6621 = vsel %vm4153, %v6540, 0
      %v6624 = vsel %vm4153, %v6541, 0
      %v6627 = vsel %vm4153, %v6542, 0
      %v6630 = vsel %vm4153, %v6543, 0
      %v6633 = vsel %vm4153, %v6544, 0
      %v6636 = vsel %vm4153, %v6545, 0
      %v6639 = vsel %vm4153, %v6546, 0
      %v6642 = vsel %vm4153, %v6547, 0
      %v6645 = vsel %vm4153, %v6548, 0
      %6647 = vmatprep.subr.mxu0 0.0
      %6648 = vmatpush1.msra.mxu0 %v6550
      %6649 = vmatprep.subr.mxu0 0.0
      %6650 = vmatpush1.msra.mxu0 0.0
      %6651 = vmatprep.subr.mxu0 0.0
      %6652 = vmatpush1.msra.mxu0 0.0
      %6653 = vmatprep.subr.mxu0 0.0
      %6654 = vmatpush1.msra.mxu0 0.0
      %6655 = vmatprep.subr.mxu0 0.0
      %6656 = vmatpush1.msra.mxu0 0.0
      %6657 = vmatprep.subr.mxu0 0.0
      %6658 = vmatpush1.msra.mxu0 0.0
      %6659 = vmatprep.subr.mxu0 0.0
      %6660 = vmatpush1.msra.mxu0 0.0
      %6661 = vmatprep.subr.mxu0 0.0
      %6662 = vmatpush1.msra.mxu0 0.0
      %6663 = vmatprep.subr.mxu0 0.0
      %6664 = vmatpush1.msra.mxu0 0.0
      %6665 = vmatprep.subr.mxu0 0.0
      %6666 = vmatpush1.msra.mxu0 0.0
      %6667 = vmatprep.subr.mxu0 0.0
      %6668 = vmatpush1.msra.mxu0 0.0
      %6669 = vmatprep.subr.mxu0 0.0
      %6670 = vmatpush1.msra.mxu0 0.0
      %6671 = vmatprep.subr.mxu0 0.0
      %6672 = vmatpush1.msra.mxu0 0.0
      %6673 = vmatprep.subr.mxu0 0.0
      %6674 = vmatpush1.msra.mxu0 0.0
      %6675 = vmatprep.subr.mxu0 0.0
      %6676 = vmatpush1.msra.mxu0 0.0
      %6677 = vmatprep.subr.mxu0 0.0
      %6678 = vmatpush1.msra.mxu0 0.0
      %6679 = vmatprep.subr.mxu0 0.0
      %6680 = vmatpush1.msra.mxu0 0.0
      %6681 = vmatprep.subr.mxu0 0.0
      %6682 = vmatpush1.msra.mxu0 0.0
      %6683 = vmatprep.subr.mxu0 0.0
      %6684 = vmatpush1.msra.mxu0 0.0
      %6685 = vmatprep.subr.mxu0 0.0
      %6686 = vmatpush1.msra.mxu0 0.0
      %6687 = vmatprep.subr.mxu0 0.0
      %6688 = vmatpush1.msra.mxu0 0.0
      %6689 = vmatprep.subr.mxu0 0.0
      %6690 = vmatpush1.msra.mxu0 0.0
      %6691 = vmatprep.subr.mxu0 0.0
      %6692 = vmatpush1.msra.mxu0 0.0
      %6693 = vmatprep.subr.mxu0 0.0
      %6694 = vmatpush1.msra.mxu0 0.0
      %6695 = vmatprep.subr.mxu0 0.0
      %6696 = vmatpush1.msra.mxu0 0.0
      %6697 = vmatprep.subr.mxu0 0.0
      %6698 = vmatpush1.msra.mxu0 0.0
      %6699 = vmatprep.subr.mxu0 0.0
      %6700 = vmatpush1.msra.mxu0 0.0
      %6701 = vmatprep.subr.mxu0 0.0
      %6702 = vmatpush1.msra.mxu0 0.0
      %6703 = vmatprep.subr.mxu0 0.0
      %6704 = vmatpush1.msra.mxu0 0.0
      %6705 = vmatprep.subr.mxu0 0.0
      %6706 = vmatpush1.msra.mxu0 0.0
      %6707 = vmatprep.subr.mxu0 0.0
      %6708 = vmatpush1.msra.mxu0 0.0
      %6709 = vmatprep.subr.mxu0 0.0
      %6710 = vmatpush1.msra.mxu0 0.0
      %6711 = vmatprep.mubr.f32.mxu0 0.0
      %6712 = vmatmul.mubr.f32.gmra.mrb[0].mxu0 %v6552
      %v6713 = vpop.f32.mrb[0].mxu0
      %v6714 = vadd.f32 0.0, %v6713
      %v6715 = vpop.f32.mrb[0].mxu0
      %6716 = vmatprep.mubr.f32.mxu0 0.0
      %6717 = vmatmul.mubr.f32.gmra.mrb[0].mxu0 %v6555
      %v6718 = vpop.f32.mrb[0].mxu0
      %v6719 = vadd.f32 0.0, %v6718
      %v6720 = vpop.f32.mrb[0].mxu0
      %6721 = vmatprep.mubr.f32.mxu0 0.0
      %6722 = vmatmul.mubr.f32.gmra.mrb[0].mxu0 %v6558
      %v6723 = vpop.f32.mrb[0].mxu0
      %v6724 = vadd.f32 0.0, %v6723
      %v6725 = vpop.f32.mrb[0].mxu0
      %6726 = vmatprep.mubr.f32.mxu0 0.0
      %6727 = vmatmul.mubr.f32.gmra.mrb[0].mxu0 %v6561
      %v6728 = vpop.f32.mrb[0].mxu0
      %v6729 = vadd.f32 0.0, %v6728
      %v6730 = vpop.f32.mrb[0].mxu0
      %6731 = vmatprep.mubr.f32.mxu0 0.0
      %6732 = vmatmul.mubr.f32.gmra.mrb[0].mxu0 %v6564
      %v6733 = vpop.f32.mrb[0].mxu0
      %v6734 = vadd.f32 0.0, %v6733
      %v6735 = vpop.f32.mrb[0].mxu0
      %6736 = vmatprep.mubr.f32.mxu0 0.0
      %6737 = vmatmul.mubr.f32.gmra.mrb[0].mxu0 %v6567
      %v6738 = vpop.f32.mrb[0].mxu0
      %v6739 = vadd.f32 0.0, %v6738
      %v6740 = vpop.f32.mrb[0].mxu0
      %6741 = vmatprep.mubr.f32.mxu0 0.0
      %6742 = vmatmul.mubr.f32.gmra.mrb[0].mxu0 %v6570
      %v6743 = vpop.f32.mrb[0].mxu0
      %v6744 = vadd.f32 0.0, %v6743
      %v6745 = vpop.f32.mrb[0].mxu0
      %6746 = vmatprep.mubr.f32.mxu0 0.0
      %6747 = vmatmul.mubr.f32.gmra.mrb[0].mxu0 %v6573
      %v6748 = vpop.f32.mrb[0].mxu0
      %v6749 = vadd.f32 0.0, %v6748
      %v6750 = vpop.f32.mrb[0].mxu0
      %6751 = vmatprep.mubr.f32.mxu0 0.0
      %6752 = vmatmul.mubr.f32.gmra.mrb[0].mxu0 %v6576
      %v6753 = vpop.f32.mrb[0].mxu0
      %v6754 = vadd.f32 0.0, %v6753
      %v6755 = vpop.f32.mrb[0].mxu0
      %6756 = vmatprep.mubr.f32.mxu0 0.0
      %6757 = vmatmul.mubr.f32.gmra.mrb[0].mxu0 %v6579
      %v6758 = vpop.f32.mrb[0].mxu0
      %v6759 = vadd.f32 0.0, %v6758
      %v6760 = vpop.f32.mrb[0].mxu0
      %6761 = vmatprep.mubr.f32.mxu0 0.0
      %6762 = vmatmul.mubr.f32.gmra.mrb[0].mxu0 %v6582
      %v6763 = vpop.f32.mrb[0].mxu0
      %v6764 = vadd.f32 0.0, %v6763
      %v6765 = vpop.f32.mrb[0].mxu0
      %6766 = vmatprep.mubr.f32.mxu0 0.0
      %6767 = vmatmul.mubr.f32.gmra.mrb[0].mxu0 %v6585
      %v6768 = vpop.f32.mrb[0].mxu0
      %v6769 = vadd.f32 0.0, %v6768
      %v6770 = vpop.f32.mrb[0].mxu0
      %6771 = vmatprep.mubr.f32.mxu0 0.0
      %6772 = vmatmul.mubr.f32.gmra.mrb[0].mxu0 %v6588
      %v6773 = vpop.f32.mrb[0].mxu0
      %v6774 = vadd.f32 0.0, %v6773
      %v6775 = vpop.f32.mrb[0].mxu0
      %6776 = vmatprep.mubr.f32.mxu0 0.0
      %6777 = vmatmul.mubr.f32.gmra.mrb[0].mxu0 %v6591
      %v6778 = vpop.f32.mrb[0].mxu0
      %v6779 = vadd.f32 0.0, %v6778
      %v6780 = vpop.f32.mrb[0].mxu0
      %6781 = vmatprep.mubr.f32.mxu0 0.0
      %6782 = vmatmul.mubr.f32.gmra.mrb[0].mxu0 %v6594
      %v6783 = vpop.f32.mrb[0].mxu0
      %v6784 = vadd.f32 0.0, %v6783
      %v6785 = vpop.f32.mrb[0].mxu0
      %6786 = vmatprep.mubr.f32.mxu0 0.0
      %6787 = vmatmul.mubr.f32.gmra.mrb[0].mxu0 %v6597
      %v6788 = vpop.f32.mrb[0].mxu0
      %v6789 = vadd.f32 0.0, %v6788
      %v6790 = vpop.f32.mrb[0].mxu0
      %6791 = vmatprep.mubr.f32.mxu0 0.0
      %6792 = vmatmul.mubr.f32.gmra.mrb[0].mxu0 %v6600
      %v6793 = vpop.f32.mrb[0].mxu0
      %v6794 = vadd.f32 0.0, %v6793
      %v6795 = vpop.f32.mrb[0].mxu0
      %6796 = vmatprep.mubr.f32.mxu0 0.0
      %6797 = vmatmul.mubr.f32.gmra.mrb[0].mxu0 %v6603
      %v6798 = vpop.f32.mrb[0].mxu0
      %v6799 = vadd.f32 0.0, %v6798
      %v6800 = vpop.f32.mrb[0].mxu0
      %6801 = vmatprep.mubr.f32.mxu0 0.0
      %6802 = vmatmul.mubr.f32.gmra.mrb[0].mxu0 %v6606
      %v6803 = vpop.f32.mrb[0].mxu0
      %v6804 = vadd.f32 0.0, %v6803
      %v6805 = vpop.f32.mrb[0].mxu0
      %6806 = vmatprep.mubr.f32.mxu0 0.0
      %6807 = vmatmul.mubr.f32.gmra.mrb[0].mxu0 %v6609
      %v6808 = vpop.f32.mrb[0].mxu0
      %v6809 = vadd.f32 0.0, %v6808
      %v6810 = vpop.f32.mrb[0].mxu0
      %6811 = vmatprep.mubr.f32.mxu0 0.0
      %6812 = vmatmul.mubr.f32.gmra.mrb[0].mxu0 %v6612
      %v6813 = vpop.f32.mrb[0].mxu0
      %v6814 = vadd.f32 0.0, %v6813
      %v6815 = vpop.f32.mrb[0].mxu0
      %6816 = vmatprep.mubr.f32.mxu0 0.0
      %6817 = vmatmul.mubr.f32.gmra.mrb[0].mxu0 %v6615
      %v6818 = vpop.f32.mrb[0].mxu0
      %v6819 = vadd.f32 0.0, %v6818
      %v6820 = vpop.f32.mrb[0].mxu0
      %6821 = vmatprep.mubr.f32.mxu0 0.0
      %6822 = vmatmul.mubr.f32.gmra.mrb[0].mxu0 %v6618
      %v6823 = vpop.f32.mrb[0].mxu0
      %v6824 = vadd.f32 0.0, %v6823
      %v6825 = vpop.f32.mrb[0].mxu0
      %6826 = vmatprep.mubr.f32.mxu0 0.0
      %6827 = vmatmul.mubr.f32.gmra.mrb[0].mxu0 %v6621
      %v6828 = vpop.f32.mrb[0].mxu0
      %v6829 = vadd.f32 0.0, %v6828
      %v6830 = vpop.f32.mrb[0].mxu0
      %6831 = vmatprep.mubr.f32.mxu0 0.0
      %6832 = vmatmul.mubr.f32.gmra.mrb[0].mxu0 %v6624
      %v6833 = vpop.f32.mrb[0].mxu0
      %v6834 = vadd.f32 0.0, %v6833
      %v6835 = vpop.f32.mrb[0].mxu0
      %6836 = vmatprep.mubr.f32.mxu0 0.0
      %6837 = vmatmul.mubr.f32.gmra.mrb[0].mxu0 %v6627
      %v6838 = vpop.f32.mrb[0].mxu0
      %v6839 = vadd.f32 0.0, %v6838
      %v6840 = vpop.f32.mrb[0].mxu0
      %6841 = vmatprep.mubr.f32.mxu0 0.0
      %6842 = vmatmul.mubr.f32.gmra.mrb[0].mxu0 %v6630
      %v6843 = vpop.f32.mrb[0].mxu0
      %v6844 = vadd.f32 0.0, %v6843
      %v6845 = vpop.f32.mrb[0].mxu0
      %6846 = vmatprep.mubr.f32.mxu0 0.0
      %6847 = vmatmul.mubr.f32.gmra.mrb[0].mxu0 %v6633
      %v6848 = vpop.f32.mrb[0].mxu0
      %v6849 = vadd.f32 0.0, %v6848
      %v6850 = vpop.f32.mrb[0].mxu0
      %6851 = vmatprep.mubr.f32.mxu0 0.0
      %6852 = vmatmul.mubr.f32.gmra.mrb[0].mxu0 %v6636
      %v6853 = vpop.f32.mrb[0].mxu0
      %v6854 = vadd.f32 0.0, %v6853
      %v6855 = vpop.f32.mrb[0].mxu0
      %6856 = vmatprep.mubr.f32.mxu0 0.0
      %6857 = vmatmul.mubr.f32.gmra.mrb[0].mxu0 %v6639
      %v6858 = vpop.f32.mrb[0].mxu0
      %v6859 = vadd.f32 0.0, %v6858
      %v6860 = vpop.f32.mrb[0].mxu0
      %6861 = vmatprep.mubr.f32.mxu0 0.0
      %6862 = vmatmul.mubr.f32.gmra.mrb[0].mxu0 %v6642
      %v6863 = vpop.f32.mrb[0].mxu0
      %v6864 = vadd.f32 0.0, %v6863
      %v6865 = vpop.f32.mrb[0].mxu0
      %6866 = vmatprep.mubr.f32.mxu0 0.0
      %6867 = vmatmul.mubr.f32.gmra.mrb[0].mxu0 %v6645
      %v6868 = vpop.f32.mrb[0].mxu0
      %v6869 = vadd.f32 0.0, %v6868
      %v6870 = vpop.f32.mrb[0].mxu0
      %6871 = vdwg.mxu0
      %v6872 = vadd.f32 %v6484, %v6714
      %v6873 = vadd.f32 %v6485, %v6719
      %v6874 = vadd.f32 %v6486, %v6724
      %v6875 = vadd.f32 %v6487, %v6729
      %v6876 = vadd.f32 %v6488, %v6734
      %v6877 = vadd.f32 %v6489, %v6739
      %v6878 = vadd.f32 %v6490, %v6744
      %v6879 = vadd.f32 %v6491, %v6749
      %v6880 = vadd.f32 %v6492, %v6754
      %v6881 = vadd.f32 %v6493, %v6759
      %v6882 = vadd.f32 %v6494, %v6764
      %v6883 = vadd.f32 %v6495, %v6769
      %v6884 = vadd.f32 %v6496, %v6774
      %v6885 = vadd.f32 %v6497, %v6779
      %v6886 = vadd.f32 %v6498, %v6784
      %v6887 = vadd.f32 %v6499, %v6789
      %v6888 = vadd.f32 %v6500, %v6794
      %v6889 = vadd.f32 %v6501, %v6799
      %v6890 = vadd.f32 %v6502, %v6804
      %v6891 = vadd.f32 %v6503, %v6809
      %v6892 = vadd.f32 %v6504, %v6814
      %v6893 = vadd.f32 %v6505, %v6819
      %v6894 = vadd.f32 %v6506, %v6824
      %v6895 = vadd.f32 %v6507, %v6829
      %v6896 = vadd.f32 %v6508, %v6834
      %v6897 = vadd.f32 %v6509, %v6839
      %v6898 = vadd.f32 %v6510, %v6844
      %v6899 = vadd.f32 %v6511, %v6849
      %v6900 = vadd.f32 %v6512, %v6854
      %v6901 = vadd.f32 %v6513, %v6859
      %v6902 = vadd.f32 %v6514, %v6864
      %v6903 = vadd.f32 %v6515, %v6869
      %v6904 = vld [vmem:[%s6516 + $0x8] sm:$0xff]
      %v6905 = vld [vmem:[%s6516 + $0x10] sm:$0xff]
      %v6906 = vld [vmem:[%s6516 + $0x28] sm:$0xff]
      %v6907 = vld [vmem:[%s6516 + $0x30] sm:$0xff]
      %v6908 = vld [vmem:[%s6516 + $0x48] sm:$0xff]
      %v6909 = vld [vmem:[%s6516 + $0x50] sm:$0xff]
      %v6910 = vld [vmem:[%s6516 + $0x68] sm:$0xff]
      %v6911 = vld [vmem:[%s6516 + $0x70] sm:$0xff]
      %v6912 = vld [vmem:[%s6516 + $0x88] sm:$0xff]
      %v6913 = vld [vmem:[%s6516 + $0x90] sm:$0xff]
      %v6914 = vld [vmem:[%s6516 + $0xa8] sm:$0xff]
      %v6915 = vld [vmem:[%s6516 + $0xb0] sm:$0xff]
      %v6916 = vld [vmem:[%s6516 + $0xc8] sm:$0xff]
      %v6917 = vld [vmem:[%s6516 + $0xd0] sm:$0xff]
      %v6918 = vld [vmem:[%s6516 + $0xe8] sm:$0xff]
      %v6919 = vld [vmem:[%s6516 + $0xf0] sm:$0xff]
      %v6920 = vld [vmem:[%s6516 + $0x108] sm:$0xff]
      %v6921 = vld [vmem:[%s6516 + $0x110] sm:$0xff]
      %v6922 = vld [vmem:[%s6516 + $0x128] sm:$0xff]
      %v6923 = vld [vmem:[%s6516 + $0x130] sm:$0xff]
      %v6924 = vld [vmem:[%s6516 + $0x148] sm:$0xff]
      %v6925 = vld [vmem:[%s6516 + $0x150] sm:$0xff]
      %v6926 = vld [vmem:[%s6516 + $0x168] sm:$0xff]
      %v6927 = vld [vmem:[%s6516 + $0x170] sm:$0xff]
      %v6928 = vld [vmem:[%s6516 + $0x188] sm:$0xff]
      %v6929 = vld [vmem:[%s6516 + $0x190] sm:$0xff]
      %v6930 = vld [vmem:[%s6516 + $0x1a8] sm:$0xff]
      %v6931 = vld [vmem:[%s6516 + $0x1b0] sm:$0xff]
      %v6932 = vld [vmem:[%s6516 + $0x1c8] sm:$0xff]
      %v6933 = vld [vmem:[%s6516 + $0x1d0] sm:$0xff]
      %v6934 = vld [vmem:[%s6516 + $0x1e8] sm:$0xff]
      %v6935 = vld [vmem:[%s6516 + $0x1f0] sm:$0xff]
      %s6936 = scalar_lea.vmem %s3, 56
      %v6937 = vld [vmem:[%s6936] sm:$0xff]
      %v6939 = vsel %vm4153, %v6904, 0
      %v6942 = vsel %vm4153, %v6905, 0
      %v6945 = vsel %vm4153, %v6906, 0
      %v6948 = vsel %vm4153, %v6907, 0
      %v6951 = vsel %vm4153, %v6908, 0
      %v6954 = vsel %vm4153, %v6909, 0
      %v6957 = vsel %vm4153, %v6910, 0
      %v6960 = vsel %vm4153, %v6911, 0
      %v6963 = vsel %vm4153, %v6912, 0
      %v6966 = vsel %vm4153, %v6913, 0
      %v6969 = vsel %vm4153, %v6914, 0
      %v6972 = vsel %vm4153, %v6915, 0
      %v6975 = vsel %vm4153, %v6916, 0
      %v6978 = vsel %vm4153, %v6917, 0
      %v6981 = vsel %vm4153, %v6918, 0
      %v6984 = vsel %vm4153, %v6919, 0
      %v6987 = vsel %vm4153, %v6920, 0
      %v6990 = vsel %vm4153, %v6921, 0
      %v6993 = vsel %vm4153, %v6922, 0
      %v6996 = vsel %vm4153, %v6923, 0
      %v6999 = vsel %vm4153, %v6924, 0
      %v7002 = vsel %vm4153, %v6925, 0
      %v7005 = vsel %vm4153, %v6926, 0
      %v7008 = vsel %vm4153, %v6927, 0
      %v7011 = vsel %vm4153, %v6928, 0
      %v7014 = vsel %vm4153, %v6929, 0
      %v7017 = vsel %vm4153, %v6930, 0
      %v7020 = vsel %vm4153, %v6931, 0
      %v7023 = vsel %vm4153, %v6932, 0
      %v7026 = vsel %vm4153, %v6933, 0
      %v7029 = vsel %vm4153, %v6934, 0
      %v7032 = vsel %vm4153, %v6935, 0
      %7034 = vmatprep.subr.mxu0 0.0
      %7035 = vmatpush1.msra.mxu0 %v6937
      %7036 = vmatprep.subr.mxu0 0.0
      %7037 = vmatpush1.msra.mxu0 0.0
      %7038 = vmatprep.subr.mxu0 0.0
      %7039 = vmatpush1.msra.mxu0 0.0
      %7040 = vmatprep.subr.mxu0 0.0
      %7041 = vmatpush1.msra.mxu0 0.0
      %7042 = vmatprep.subr.mxu0 0.0
      %7043 = vmatpush1.msra.mxu0 0.0
      %7044 = vmatprep.subr.mxu0 0.0
      %7045 = vmatpush1.msra.mxu0 0.0
      %7046 = vmatprep.subr.mxu0 0.0
      %7047 = vmatpush1.msra.mxu0 0.0
      %7048 = vmatprep.subr.mxu0 0.0
      %7049 = vmatpush1.msra.mxu0 0.0
      %7050 = vmatprep.subr.mxu0 0.0
      %7051 = vmatpush1.msra.mxu0 0.0
      %7052 = vmatprep.subr.mxu0 0.0
      %7053 = vmatpush1.msra.mxu0 0.0
      %7054 = vmatprep.subr.mxu0 0.0
      %7055 = vmatpush1.msra.mxu0 0.0
      %7056 = vmatprep.subr.mxu0 0.0
      %7057 = vmatpush1.msra.mxu0 0.0
      %7058 = vmatprep.subr.mxu0 0.0
      %7059 = vmatpush1.msra.mxu0 0.0
      %7060 = vmatprep.subr.mxu0 0.0
      %7061 = vmatpush1.msra.mxu0 0.0
      %7062 = vmatprep.subr.mxu0 0.0
      %7063 = vmatpush1.msra.mxu0 0.0
      %7064 = vmatprep.subr.mxu0 0.0
      %7065 = vmatpush1.msra.mxu0 0.0
      %7066 = vmatprep.subr.mxu0 0.0
      %7067 = vmatpush1.msra.mxu0 0.0
      %7068 = vmatprep.subr.mxu0 0.0
      %7069 = vmatpush1.msra.mxu0 0.0
      %7070 = vmatprep.subr.mxu0 0.0
      %7071 = vmatpush1.msra.mxu0 0.0
      %7072 = vmatprep.subr.mxu0 0.0
      %7073 = vmatpush1.msra.mxu0 0.0
      %7074 = vmatprep.subr.mxu0 0.0
      %7075 = vmatpush1.msra.mxu0 0.0
      %7076 = vmatprep.subr.mxu0 0.0
      %7077 = vmatpush1.msra.mxu0 0.0
      %7078 = vmatprep.subr.mxu0 0.0
      %7079 = vmatpush1.msra.mxu0 0.0
      %7080 = vmatprep.subr.mxu0 0.0
      %7081 = vmatpush1.msra.mxu0 0.0
      %7082 = vmatprep.subr.mxu0 0.0
      %7083 = vmatpush1.msra.mxu0 0.0
      %7084 = vmatprep.subr.mxu0 0.0
      %7085 = vmatpush1.msra.mxu0 0.0
      %7086 = vmatprep.subr.mxu0 0.0
      %7087 = vmatpush1.msra.mxu0 0.0
      %7088 = vmatprep.subr.mxu0 0.0
      %7089 = vmatpush1.msra.mxu0 0.0
      %7090 = vmatprep.subr.mxu0 0.0
      %7091 = vmatpush1.msra.mxu0 0.0
      %7092 = vmatprep.subr.mxu0 0.0
      %7093 = vmatpush1.msra.mxu0 0.0
      %7094 = vmatprep.subr.mxu0 0.0
      %7095 = vmatpush1.msra.mxu0 0.0
      %7096 = vmatprep.subr.mxu0 0.0
      %7097 = vmatpush1.msra.mxu0 0.0
      %7098 = vmatprep.mubr.f32.mxu0 0.0
      %7099 = vmatmul.mubr.f32.gmra.mrb[0].mxu0 %v6939
      %v7100 = vpop.f32.mrb[0].mxu0
      %v7101 = vadd.f32 0.0, %v7100
      %v7102 = vpop.f32.mrb[0].mxu0
      %7103 = vmatprep.mubr.f32.mxu0 0.0
      %7104 = vmatmul.mubr.f32.gmra.mrb[0].mxu0 %v6942
      %v7105 = vpop.f32.mrb[0].mxu0
      %v7106 = vadd.f32 0.0, %v7105
      %v7107 = vpop.f32.mrb[0].mxu0
      %7108 = vmatprep.mubr.f32.mxu0 0.0
      %7109 = vmatmul.mubr.f32.gmra.mrb[0].mxu0 %v6945
      %v7110 = vpop.f32.mrb[0].mxu0
      %v7111 = vadd.f32 0.0, %v7110
      %v7112 = vpop.f32.mrb[0].mxu0
      %7113 = vmatprep.mubr.f32.mxu0 0.0
      %7114 = vmatmul.mubr.f32.gmra.mrb[0].mxu0 %v6948
      %v7115 = vpop.f32.mrb[0].mxu0
      %v7116 = vadd.f32 0.0, %v7115
      %v7117 = vpop.f32.mrb[0].mxu0
      %7118 = vmatprep.mubr.f32.mxu0 0.0
      %7119 = vmatmul.mubr.f32.gmra.mrb[0].mxu0 %v6951
      %v7120 = vpop.f32.mrb[0].mxu0
      %v7121 = vadd.f32 0.0, %v7120
      %v7122 = vpop.f32.mrb[0].mxu0
      %7123 = vmatprep.mubr.f32.mxu0 0.0
      %7124 = vmatmul.mubr.f32.gmra.mrb[0].mxu0 %v6954
      %v7125 = vpop.f32.mrb[0].mxu0
      %v7126 = vadd.f32 0.0, %v7125
      %v7127 = vpop.f32.mrb[0].mxu0
      %7128 = vmatprep.mubr.f32.mxu0 0.0
      %7129 = vmatmul.mubr.f32.gmra.mrb[0].mxu0 %v6957
      %v7130 = vpop.f32.mrb[0].mxu0
      %v7131 = vadd.f32 0.0, %v7130
      %v7132 = vpop.f32.mrb[0].mxu0
      %7133 = vmatprep.mubr.f32.mxu0 0.0
      %7134 = vmatmul.mubr.f32.gmra.mrb[0].mxu0 %v6960
      %v7135 = vpop.f32.mrb[0].mxu0
      %v7136 = vadd.f32 0.0, %v7135
      %v7137 = vpop.f32.mrb[0].mxu0
      %7138 = vmatprep.mubr.f32.mxu0 0.0
      %7139 = vmatmul.mubr.f32.gmra.mrb[0].mxu0 %v6963
      %v7140 = vpop.f32.mrb[0].mxu0
      %v7141 = vadd.f32 0.0, %v7140
      %v7142 = vpop.f32.mrb[0].mxu0
      %7143 = vmatprep.mubr.f32.mxu0 0.0
      %7144 = vmatmul.mubr.f32.gmra.mrb[0].mxu0 %v6966
      %v7145 = vpop.f32.mrb[0].mxu0
      %v7146 = vadd.f32 0.0, %v7145
      %v7147 = vpop.f32.mrb[0].mxu0
      %7148 = vmatprep.mubr.f32.mxu0 0.0
      %7149 = vmatmul.mubr.f32.gmra.mrb[0].mxu0 %v6969
      %v7150 = vpop.f32.mrb[0].mxu0
      %v7151 = vadd.f32 0.0, %v7150
      %v7152 = vpop.f32.mrb[0].mxu0
      %7153 = vmatprep.mubr.f32.mxu0 0.0
      %7154 = vmatmul.mubr.f32.gmra.mrb[0].mxu0 %v6972
      %v7155 = vpop.f32.mrb[0].mxu0
      %v7156 = vadd.f32 0.0, %v7155
      %v7157 = vpop.f32.mrb[0].mxu0
      %7158 = vmatprep.mubr.f32.mxu0 0.0
      %7159 = vmatmul.mubr.f32.gmra.mrb[0].mxu0 %v6975
      %v7160 = vpop.f32.mrb[0].mxu0
      %v7161 = vadd.f32 0.0, %v7160
      %v7162 = vpop.f32.mrb[0].mxu0
      %7163 = vmatprep.mubr.f32.mxu0 0.0
      %7164 = vmatmul.mubr.f32.gmra.mrb[0].mxu0 %v6978
      %v7165 = vpop.f32.mrb[0].mxu0
      %v7166 = vadd.f32 0.0, %v7165
      %v7167 = vpop.f32.mrb[0].mxu0
      %7168 = vmatprep.mubr.f32.mxu0 0.0
      %7169 = vmatmul.mubr.f32.gmra.mrb[0].mxu0 %v6981
      %v7170 = vpop.f32.mrb[0].mxu0
      %v7171 = vadd.f32 0.0, %v7170
      %v7172 = vpop.f32.mrb[0].mxu0
      %7173 = vmatprep.mubr.f32.mxu0 0.0
      %7174 = vmatmul.mubr.f32.gmra.mrb[0].mxu0 %v6984
      %v7175 = vpop.f32.mrb[0].mxu0
      %v7176 = vadd.f32 0.0, %v7175
      %v7177 = vpop.f32.mrb[0].mxu0
      %7178 = vmatprep.mubr.f32.mxu0 0.0
      %7179 = vmatmul.mubr.f32.gmra.mrb[0].mxu0 %v6987
      %v7180 = vpop.f32.mrb[0].mxu0
      %v7181 = vadd.f32 0.0, %v7180
      %v7182 = vpop.f32.mrb[0].mxu0
      %7183 = vmatprep.mubr.f32.mxu0 0.0
      %7184 = vmatmul.mubr.f32.gmra.mrb[0].mxu0 %v6990
      %v7185 = vpop.f32.mrb[0].mxu0
      %v7186 = vadd.f32 0.0, %v7185
      %v7187 = vpop.f32.mrb[0].mxu0
      %7188 = vmatprep.mubr.f32.mxu0 0.0
      %7189 = vmatmul.mubr.f32.gmra.mrb[0].mxu0 %v6993
      %v7190 = vpop.f32.mrb[0].mxu0
      %v7191 = vadd.f32 0.0, %v7190
      %v7192 = vpop.f32.mrb[0].mxu0
      %7193 = vmatprep.mubr.f32.mxu0 0.0
      %7194 = vmatmul.mubr.f32.gmra.mrb[0].mxu0 %v6996
      %v7195 = vpop.f32.mrb[0].mxu0
      %v7196 = vadd.f32 0.0, %v7195
      %v7197 = vpop.f32.mrb[0].mxu0
      %7198 = vmatprep.mubr.f32.mxu0 0.0
      %7199 = vmatmul.mubr.f32.gmra.mrb[0].mxu0 %v6999
      %v7200 = vpop.f32.mrb[0].mxu0
      %v7201 = vadd.f32 0.0, %v7200
      %v7202 = vpop.f32.mrb[0].mxu0
      %7203 = vmatprep.mubr.f32.mxu0 0.0
      %7204 = vmatmul.mubr.f32.gmra.mrb[0].mxu0 %v7002
      %v7205 = vpop.f32.mrb[0].mxu0
      %v7206 = vadd.f32 0.0, %v7205
      %v7207 = vpop.f32.mrb[0].mxu0
      %7208 = vmatprep.mubr.f32.mxu0 0.0
      %7209 = vmatmul.mubr.f32.gmra.mrb[0].mxu0 %v7005
      %v7210 = vpop.f32.mrb[0].mxu0
      %v7211 = vadd.f32 0.0, %v7210
      %v7212 = vpop.f32.mrb[0].mxu0
      %7213 = vmatprep.mubr.f32.mxu0 0.0
      %7214 = vmatmul.mubr.f32.gmra.mrb[0].mxu0 %v7008
      %v7215 = vpop.f32.mrb[0].mxu0
      %v7216 = vadd.f32 0.0, %v7215
      %v7217 = vpop.f32.mrb[0].mxu0
      %7218 = vmatprep.mubr.f32.mxu0 0.0
      %7219 = vmatmul.mubr.f32.gmra.mrb[0].mxu0 %v7011
      %v7220 = vpop.f32.mrb[0].mxu0
      %v7221 = vadd.f32 0.0, %v7220
      %v7222 = vpop.f32.mrb[0].mxu0
      %7223 = vmatprep.mubr.f32.mxu0 0.0
      %7224 = vmatmul.mubr.f32.gmra.mrb[0].mxu0 %v7014
      %v7225 = vpop.f32.mrb[0].mxu0
      %v7226 = vadd.f32 0.0, %v7225
      %v7227 = vpop.f32.mrb[0].mxu0
      %7228 = vmatprep.mubr.f32.mxu0 0.0
      %7229 = vmatmul.mubr.f32.gmra.mrb[0].mxu0 %v7017
      %v7230 = vpop.f32.mrb[0].mxu0
      %v7231 = vadd.f32 0.0, %v7230
      %v7232 = vpop.f32.mrb[0].mxu0
      %7233 = vmatprep.mubr.f32.mxu0 0.0
      %7234 = vmatmul.mubr.f32.gmra.mrb[0].mxu0 %v7020
      %v7235 = vpop.f32.mrb[0].mxu0
      %v7236 = vadd.f32 0.0, %v7235
      %v7237 = vpop.f32.mrb[0].mxu0
      %7238 = vmatprep.mubr.f32.mxu0 0.0
      %7239 = vmatmul.mubr.f32.gmra.mrb[0].mxu0 %v7023
      %v7240 = vpop.f32.mrb[0].mxu0
      %v7241 = vadd.f32 0.0, %v7240
      %v7242 = vpop.f32.mrb[0].mxu0
      %7243 = vmatprep.mubr.f32.mxu0 0.0
      %7244 = vmatmul.mubr.f32.gmra.mrb[0].mxu0 %v7026
      %v7245 = vpop.f32.mrb[0].mxu0
      %v7246 = vadd.f32 0.0, %v7245
      %v7247 = vpop.f32.mrb[0].mxu0
      %7248 = vmatprep.mubr.f32.mxu0 0.0
      %7249 = vmatmul.mubr.f32.gmra.mrb[0].mxu0 %v7029
      %v7250 = vpop.f32.mrb[0].mxu0
      %v7251 = vadd.f32 0.0, %v7250
      %v7252 = vpop.f32.mrb[0].mxu0
      %7253 = vmatprep.mubr.f32.mxu0 0.0
      %7254 = vmatmul.mubr.f32.gmra.mrb[0].mxu0 %v7032
      %v7255 = vpop.f32.mrb[0].mxu0
      %v7256 = vadd.f32 0.0, %v7255
      %v7257 = vpop.f32.mrb[0].mxu0
      %7258 = vdwg.mxu0
      %v7259 = vadd.f32 %v6872, %v7101
      %v7260 = vadd.f32 %v6873, %v7106
      %v7261 = vadd.f32 %v6874, %v7111
      %v7262 = vadd.f32 %v6875, %v7116
      %v7263 = vadd.f32 %v6876, %v7121
      %v7264 = vadd.f32 %v6877, %v7126
      %v7265 = vadd.f32 %v6878, %v7131
      %v7266 = vadd.f32 %v6879, %v7136
      %v7267 = vadd.f32 %v6880, %v7141
      %v7268 = vadd.f32 %v6881, %v7146
      %v7269 = vadd.f32 %v6882, %v7151
      %v7270 = vadd.f32 %v6883, %v7156
      %v7271 = vadd.f32 %v6884, %v7161
      %v7272 = vadd.f32 %v6885, %v7166
      %v7273 = vadd.f32 %v6886, %v7171
      %v7274 = vadd.f32 %v6887, %v7176
      %v7275 = vadd.f32 %v6888, %v7181
      %v7276 = vadd.f32 %v6889, %v7186
      %v7277 = vadd.f32 %v6890, %v7191
      %v7278 = vadd.f32 %v6891, %v7196
      %v7279 = vadd.f32 %v6892, %v7201
      %v7280 = vadd.f32 %v6893, %v7206
      %v7281 = vadd.f32 %v6894, %v7211
      %v7282 = vadd.f32 %v6895, %v7216
      %v7283 = vadd.f32 %v6896, %v7221
      %v7284 = vadd.f32 %v6897, %v7226
      %v7285 = vadd.f32 %v6898, %v7231
      %v7286 = vadd.f32 %v6899, %v7236
      %v7287 = vadd.f32 %v6900, %v7241
      %v7288 = vadd.f32 %v6901, %v7246
      %v7289 = vadd.f32 %v6902, %v7251
      %v7290 = vadd.f32 %v6903, %v7256
      %v7291 = vld [vmem:[%s6516 + $0x9] sm:$0xff]
      %v7292 = vld [vmem:[%s6516 + $0x11] sm:$0xff]
      %v7293 = vld [vmem:[%s6516 + $0x29] sm:$0xff]
      %v7294 = vld [vmem:[%s6516 + $0x31] sm:$0xff]
      %v7295 = vld [vmem:[%s6516 + $0x49] sm:$0xff]
      %v7296 = vld [vmem:[%s6516 + $0x51] sm:$0xff]
      %v7297 = vld [vmem:[%s6516 + $0x69] sm:$0xff]
      %v7298 = vld [vmem:[%s6516 + $0x71] sm:$0xff]
      %v7299 = vld [vmem:[%s6516 + $0x89] sm:$0xff]
      %v7300 = vld [vmem:[%s6516 + $0x91] sm:$0xff]
      %v7301 = vld [vmem:[%s6516 + $0xa9] sm:$0xff]
      %v7302 = vld [vmem:[%s6516 + $0xb1] sm:$0xff]
      %v7303 = vld [vmem:[%s6516 + $0xc9] sm:$0xff]
      %v7304 = vld [vmem:[%s6516 + $0xd1] sm:$0xff]
      %v7305 = vld [vmem:[%s6516 + $0xe9] sm:$0xff]
      %v7306 = vld [vmem:[%s6516 + $0xf1] sm:$0xff]
      %v7307 = vld [vmem:[%s6516 + $0x109] sm:$0xff]
      %v7308 = vld [vmem:[%s6516 + $0x111] sm:$0xff]
      %v7309 = vld [vmem:[%s6516 + $0x129] sm:$0xff]
      %v7310 = vld [vmem:[%s6516 + $0x131] sm:$0xff]
      %v7311 = vld [vmem:[%s6516 + $0x149] sm:$0xff]
      %v7312 = vld [vmem:[%s6516 + $0x151] sm:$0xff]
      %v7313 = vld [vmem:[%s6516 + $0x169] sm:$0xff]
      %v7314 = vld [vmem:[%s6516 + $0x171] sm:$0xff]
      %v7315 = vld [vmem:[%s6516 + $0x189] sm:$0xff]
      %v7316 = vld [vmem:[%s6516 + $0x191] sm:$0xff]
      %v7317 = vld [vmem:[%s6516 + $0x1a9] sm:$0xff]
      %v7318 = vld [vmem:[%s6516 + $0x1b1] sm:$0xff]
      %v7319 = vld [vmem:[%s6516 + $0x1c9] sm:$0xff]
      %v7320 = vld [vmem:[%s6516 + $0x1d1] sm:$0xff]
      %v7321 = vld [vmem:[%s6516 + $0x1e9] sm:$0xff]
      %v7322 = vld [vmem:[%s6516 + $0x1f1] sm:$0xff]
      %s7323 = scalar_lea.vmem %s3, 64
      %v7324 = vld [vmem:[%s7323] sm:$0xff]
      %v7326 = vsel %vm4153, %v7291, 0
      %v7329 = vsel %vm4153, %v7292, 0
      %v7332 = vsel %vm4153, %v7293, 0
      %v7335 = vsel %vm4153, %v7294, 0
      %v7338 = vsel %vm4153, %v7295, 0
      %v7341 = vsel %vm4153, %v7296, 0
      %v7344 = vsel %vm4153, %v7297, 0
      %v7347 = vsel %vm4153, %v7298, 0
      %v7350 = vsel %vm4153, %v7299, 0
      %v7353 = vsel %vm4153, %v7300, 0
      %v7356 = vsel %vm4153, %v7301, 0
      %v7359 = vsel %vm4153, %v7302, 0
      %v7362 = vsel %vm4153, %v7303, 0
      %v7365 = vsel %vm4153, %v7304, 0
      %v7368 = vsel %vm4153, %v7305, 0
      %v7371 = vsel %vm4153, %v7306, 0
      %v7374 = vsel %vm4153, %v7307, 0
      %v7377 = vsel %vm4153, %v7308, 0
      %v7380 = vsel %vm4153, %v7309, 0
      %v7383 = vsel %vm4153, %v7310, 0
      %v7386 = vsel %vm4153, %v7311, 0
      %v7389 = vsel %vm4153, %v7312, 0
      %v7392 = vsel %vm4153, %v7313, 0
      %v7395 = vsel %vm4153, %v7314, 0
      %v7398 = vsel %vm4153, %v7315, 0
      %v7401 = vsel %vm4153, %v7316, 0
      %v7404 = vsel %vm4153, %v7317, 0
      %v7407 = vsel %vm4153, %v7318, 0
      %v7410 = vsel %vm4153, %v7319, 0
      %v7413 = vsel %vm4153, %v7320, 0
      %v7416 = vsel %vm4153, %v7321, 0
      %v7419 = vsel %vm4153, %v7322, 0
      %7421 = vmatprep.subr.mxu0 0.0
      %7422 = vmatpush1.msra.mxu0 %v7324
      %7423 = vmatprep.subr.mxu0 0.0
      %7424 = vmatpush1.msra.mxu0 0.0
      %7425 = vmatprep.subr.mxu0 0.0
      %7426 = vmatpush1.msra.mxu0 0.0
      %7427 = vmatprep.subr.mxu0 0.0
      %7428 = vmatpush1.msra.mxu0 0.0
      %7429 = vmatprep.subr.mxu0 0.0
      %7430 = vmatpush1.msra.mxu0 0.0
      %7431 = vmatprep.subr.mxu0 0.0
      %7432 = vmatpush1.msra.mxu0 0.0
      %7433 = vmatprep.subr.mxu0 0.0
      %7434 = vmatpush1.msra.mxu0 0.0
      %7435 = vmatprep.subr.mxu0 0.0
      %7436 = vmatpush1.msra.mxu0 0.0
      %7437 = vmatprep.subr.mxu0 0.0
      %7438 = vmatpush1.msra.mxu0 0.0
      %7439 = vmatprep.subr.mxu0 0.0
      %7440 = vmatpush1.msra.mxu0 0.0
      %7441 = vmatprep.subr.mxu0 0.0
      %7442 = vmatpush1.msra.mxu0 0.0
      %7443 = vmatprep.subr.mxu0 0.0
      %7444 = vmatpush1.msra.mxu0 0.0
      %7445 = vmatprep.subr.mxu0 0.0
      %7446 = vmatpush1.msra.mxu0 0.0
      %7447 = vmatprep.subr.mxu0 0.0
      %7448 = vmatpush1.msra.mxu0 0.0
      %7449 = vmatprep.subr.mxu0 0.0
      %7450 = vmatpush1.msra.mxu0 0.0
      %7451 = vmatprep.subr.mxu0 0.0
      %7452 = vmatpush1.msra.mxu0 0.0
      %7453 = vmatprep.subr.mxu0 0.0
      %7454 = vmatpush1.msra.mxu0 0.0
      %7455 = vmatprep.subr.mxu0 0.0
      %7456 = vmatpush1.msra.mxu0 0.0
      %7457 = vmatprep.subr.mxu0 0.0
      %7458 = vmatpush1.msra.mxu0 0.0
      %7459 = vmatprep.subr.mxu0 0.0
      %7460 = vmatpush1.msra.mxu0 0.0
      %7461 = vmatprep.subr.mxu0 0.0
      %7462 = vmatpush1.msra.mxu0 0.0
      %7463 = vmatprep.subr.mxu0 0.0
      %7464 = vmatpush1.msra.mxu0 0.0
      %7465 = vmatprep.subr.mxu0 0.0
      %7466 = vmatpush1.msra.mxu0 0.0
      %7467 = vmatprep.subr.mxu0 0.0
      %7468 = vmatpush1.msra.mxu0 0.0
      %7469 = vmatprep.subr.mxu0 0.0
      %7470 = vmatpush1.msra.mxu0 0.0
      %7471 = vmatprep.subr.mxu0 0.0
      %7472 = vmatpush1.msra.mxu0 0.0
      %7473 = vmatprep.subr.mxu0 0.0
      %7474 = vmatpush1.msra.mxu0 0.0
      %7475 = vmatprep.subr.mxu0 0.0
      %7476 = vmatpush1.msra.mxu0 0.0
      %7477 = vmatprep.subr.mxu0 0.0
      %7478 = vmatpush1.msra.mxu0 0.0
      %7479 = vmatprep.subr.mxu0 0.0
      %7480 = vmatpush1.msra.mxu0 0.0
      %7481 = vmatprep.subr.mxu0 0.0
      %7482 = vmatpush1.msra.mxu0 0.0
      %7483 = vmatprep.subr.mxu0 0.0
      %7484 = vmatpush1.msra.mxu0 0.0
      %7485 = vmatprep.mubr.f32.mxu0 0.0
      %7486 = vmatmul.mubr.f32.gmra.mrb[0].mxu0 %v7326
      %v7487 = vpop.f32.mrb[0].mxu0
      %v7488 = vadd.f32 0.0, %v7487
      %v7489 = vpop.f32.mrb[0].mxu0
      %7490 = vmatprep.mubr.f32.mxu0 0.0
      %7491 = vmatmul.mubr.f32.gmra.mrb[0].mxu0 %v7329
      %v7492 = vpop.f32.mrb[0].mxu0
      %v7493 = vadd.f32 0.0, %v7492
      %v7494 = vpop.f32.mrb[0].mxu0
      %7495 = vmatprep.mubr.f32.mxu0 0.0
      %7496 = vmatmul.mubr.f32.gmra.mrb[0].mxu0 %v7332
      %v7497 = vpop.f32.mrb[0].mxu0
      %v7498 = vadd.f32 0.0, %v7497
      %v7499 = vpop.f32.mrb[0].mxu0
      %7500 = vmatprep.mubr.f32.mxu0 0.0
      %7501 = vmatmul.mubr.f32.gmra.mrb[0].mxu0 %v7335
      %v7502 = vpop.f32.mrb[0].mxu0
      %v7503 = vadd.f32 0.0, %v7502
      %v7504 = vpop.f32.mrb[0].mxu0
      %7505 = vmatprep.mubr.f32.mxu0 0.0
      %7506 = vmatmul.mubr.f32.gmra.mrb[0].mxu0 %v7338
      %v7507 = vpop.f32.mrb[0].mxu0
      %v7508 = vadd.f32 0.0, %v7507
      %v7509 = vpop.f32.mrb[0].mxu0
      %7510 = vmatprep.mubr.f32.mxu0 0.0
      %7511 = vmatmul.mubr.f32.gmra.mrb[0].mxu0 %v7341
      %v7512 = vpop.f32.mrb[0].mxu0
      %v7513 = vadd.f32 0.0, %v7512
      %v7514 = vpop.f32.mrb[0].mxu0
      %7515 = vmatprep.mubr.f32.mxu0 0.0
      %7516 = vmatmul.mubr.f32.gmra.mrb[0].mxu0 %v7344
      %v7517 = vpop.f32.mrb[0].mxu0
      %v7518 = vadd.f32 0.0, %v7517
      %v7519 = vpop.f32.mrb[0].mxu0
      %7520 = vmatprep.mubr.f32.mxu0 0.0
      %7521 = vmatmul.mubr.f32.gmra.mrb[0].mxu0 %v7347
      %v7522 = vpop.f32.mrb[0].mxu0
      %v7523 = vadd.f32 0.0, %v7522
      %v7524 = vpop.f32.mrb[0].mxu0
      %7525 = vmatprep.mubr.f32.mxu0 0.0
      %7526 = vmatmul.mubr.f32.gmra.mrb[0].mxu0 %v7350
      %v7527 = vpop.f32.mrb[0].mxu0
      %v7528 = vadd.f32 0.0, %v7527
      %v7529 = vpop.f32.mrb[0].mxu0
      %7530 = vmatprep.mubr.f32.mxu0 0.0
      %7531 = vmatmul.mubr.f32.gmra.mrb[0].mxu0 %v7353
      %v7532 = vpop.f32.mrb[0].mxu0
      %v7533 = vadd.f32 0.0, %v7532
      %v7534 = vpop.f32.mrb[0].mxu0
      %7535 = vmatprep.mubr.f32.mxu0 0.0
      %7536 = vmatmul.mubr.f32.gmra.mrb[0].mxu0 %v7356
      %v7537 = vpop.f32.mrb[0].mxu0
      %v7538 = vadd.f32 0.0, %v7537
      %v7539 = vpop.f32.mrb[0].mxu0
      %7540 = vmatprep.mubr.f32.mxu0 0.0
      %7541 = vmatmul.mubr.f32.gmra.mrb[0].mxu0 %v7359
      %v7542 = vpop.f32.mrb[0].mxu0
      %v7543 = vadd.f32 0.0, %v7542
      %v7544 = vpop.f32.mrb[0].mxu0
      %7545 = vmatprep.mubr.f32.mxu0 0.0
      %7546 = vmatmul.mubr.f32.gmra.mrb[0].mxu0 %v7362
      %v7547 = vpop.f32.mrb[0].mxu0
      %v7548 = vadd.f32 0.0, %v7547
      %v7549 = vpop.f32.mrb[0].mxu0
      %7550 = vmatprep.mubr.f32.mxu0 0.0
      %7551 = vmatmul.mubr.f32.gmra.mrb[0].mxu0 %v7365
      %v7552 = vpop.f32.mrb[0].mxu0
      %v7553 = vadd.f32 0.0, %v7552
      %v7554 = vpop.f32.mrb[0].mxu0
      %7555 = vmatprep.mubr.f32.mxu0 0.0
      %7556 = vmatmul.mubr.f32.gmra.mrb[0].mxu0 %v7368
      %v7557 = vpop.f32.mrb[0].mxu0
      %v7558 = vadd.f32 0.0, %v7557
      %v7559 = vpop.f32.mrb[0].mxu0
      %7560 = vmatprep.mubr.f32.mxu0 0.0
      %7561 = vmatmul.mubr.f32.gmra.mrb[0].mxu0 %v7371
      %v7562 = vpop.f32.mrb[0].mxu0
      %v7563 = vadd.f32 0.0, %v7562
      %v7564 = vpop.f32.mrb[0].mxu0
      %7565 = vmatprep.mubr.f32.mxu0 0.0
      %7566 = vmatmul.mubr.f32.gmra.mrb[0].mxu0 %v7374
      %v7567 = vpop.f32.mrb[0].mxu0
      %v7568 = vadd.f32 0.0, %v7567
      %v7569 = vpop.f32.mrb[0].mxu0
      %7570 = vmatprep.mubr.f32.mxu0 0.0
      %7571 = vmatmul.mubr.f32.gmra.mrb[0].mxu0 %v7377
      %v7572 = vpop.f32.mrb[0].mxu0
      %v7573 = vadd.f32 0.0, %v7572
      %v7574 = vpop.f32.mrb[0].mxu0
      %7575 = vmatprep.mubr.f32.mxu0 0.0
      %7576 = vmatmul.mubr.f32.gmra.mrb[0].mxu0 %v7380
      %v7577 = vpop.f32.mrb[0].mxu0
      %v7578 = vadd.f32 0.0, %v7577
      %v7579 = vpop.f32.mrb[0].mxu0
      %7580 = vmatprep.mubr.f32.mxu0 0.0
      %7581 = vmatmul.mubr.f32.gmra.mrb[0].mxu0 %v7383
      %v7582 = vpop.f32.mrb[0].mxu0
      %v7583 = vadd.f32 0.0, %v7582
      %v7584 = vpop.f32.mrb[0].mxu0
      %7585 = vmatprep.mubr.f32.mxu0 0.0
      %7586 = vmatmul.mubr.f32.gmra.mrb[0].mxu0 %v7386
      %v7587 = vpop.f32.mrb[0].mxu0
      %v7588 = vadd.f32 0.0, %v7587
      %v7589 = vpop.f32.mrb[0].mxu0
      %7590 = vmatprep.mubr.f32.mxu0 0.0
      %7591 = vmatmul.mubr.f32.gmra.mrb[0].mxu0 %v7389
      %v7592 = vpop.f32.mrb[0].mxu0
      %v7593 = vadd.f32 0.0, %v7592
      %v7594 = vpop.f32.mrb[0].mxu0
      %7595 = vmatprep.mubr.f32.mxu0 0.0
      %7596 = vmatmul.mubr.f32.gmra.mrb[0].mxu0 %v7392
      %v7597 = vpop.f32.mrb[0].mxu0
      %v7598 = vadd.f32 0.0, %v7597
      %v7599 = vpop.f32.mrb[0].mxu0
      %7600 = vmatprep.mubr.f32.mxu0 0.0
      %7601 = vmatmul.mubr.f32.gmra.mrb[0].mxu0 %v7395
      %v7602 = vpop.f32.mrb[0].mxu0
      %v7603 = vadd.f32 0.0, %v7602
      %v7604 = vpop.f32.mrb[0].mxu0
      %7605 = vmatprep.mubr.f32.mxu0 0.0
      %7606 = vmatmul.mubr.f32.gmra.mrb[0].mxu0 %v7398
      %v7607 = vpop.f32.mrb[0].mxu0
      %v7608 = vadd.f32 0.0, %v7607
      %v7609 = vpop.f32.mrb[0].mxu0
      %7610 = vmatprep.mubr.f32.mxu0 0.0
      %7611 = vmatmul.mubr.f32.gmra.mrb[0].mxu0 %v7401
      %v7612 = vpop.f32.mrb[0].mxu0
      %v7613 = vadd.f32 0.0, %v7612
      %v7614 = vpop.f32.mrb[0].mxu0
      %7615 = vmatprep.mubr.f32.mxu0 0.0
      %7616 = vmatmul.mubr.f32.gmra.mrb[0].mxu0 %v7404
      %v7617 = vpop.f32.mrb[0].mxu0
      %v7618 = vadd.f32 0.0, %v7617
      %v7619 = vpop.f32.mrb[0].mxu0
      %7620 = vmatprep.mubr.f32.mxu0 0.0
      %7621 = vmatmul.mubr.f32.gmra.mrb[0].mxu0 %v7407
      %v7622 = vpop.f32.mrb[0].mxu0
      %v7623 = vadd.f32 0.0, %v7622
      %v7624 = vpop.f32.mrb[0].mxu0
      %7625 = vmatprep.mubr.f32.mxu0 0.0
      %7626 = vmatmul.mubr.f32.gmra.mrb[0].mxu0 %v7410
      %v7627 = vpop.f32.mrb[0].mxu0
      %v7628 = vadd.f32 0.0, %v7627
      %v7629 = vpop.f32.mrb[0].mxu0
      %7630 = vmatprep.mubr.f32.mxu0 0.0
      %7631 = vmatmul.mubr.f32.gmra.mrb[0].mxu0 %v7413
      %v7632 = vpop.f32.mrb[0].mxu0
      %v7633 = vadd.f32 0.0, %v7632
      %v7634 = vpop.f32.mrb[0].mxu0
      %7635 = vmatprep.mubr.f32.mxu0 0.0
      %7636 = vmatmul.mubr.f32.gmra.mrb[0].mxu0 %v7416
      %v7637 = vpop.f32.mrb[0].mxu0
      %v7638 = vadd.f32 0.0, %v7637
      %v7639 = vpop.f32.mrb[0].mxu0
      %7640 = vmatprep.mubr.f32.mxu0 0.0
      %7641 = vmatmul.mubr.f32.gmra.mrb[0].mxu0 %v7419
      %v7642 = vpop.f32.mrb[0].mxu0
      %v7643 = vadd.f32 0.0, %v7642
      %v7644 = vpop.f32.mrb[0].mxu0
      %7645 = vdwg.mxu0
      %v7646 = vadd.f32 %v7259, %v7488
      %v7647 = vadd.f32 %v7260, %v7493
      %v7648 = vadd.f32 %v7261, %v7498
      %v7649 = vadd.f32 %v7262, %v7503
      %v7650 = vadd.f32 %v7263, %v7508
      %v7651 = vadd.f32 %v7264, %v7513
      %v7652 = vadd.f32 %v7265, %v7518
      %v7653 = vadd.f32 %v7266, %v7523
      %v7654 = vadd.f32 %v7267, %v7528
      %v7655 = vadd.f32 %v7268, %v7533
      %v7656 = vadd.f32 %v7269, %v7538
      %v7657 = vadd.f32 %v7270, %v7543
      %v7658 = vadd.f32 %v7271, %v7548
      %v7659 = vadd.f32 %v7272, %v7553
      %v7660 = vadd.f32 %v7273, %v7558
      %v7661 = vadd.f32 %v7274, %v7563
      %v7662 = vadd.f32 %v7275, %v7568
      %v7663 = vadd.f32 %v7276, %v7573
      %v7664 = vadd.f32 %v7277, %v7578
      %v7665 = vadd.f32 %v7278, %v7583
      %v7666 = vadd.f32 %v7279, %v7588
      %v7667 = vadd.f32 %v7280, %v7593
      %v7668 = vadd.f32 %v7281, %v7598
      %v7669 = vadd.f32 %v7282, %v7603
      %v7670 = vadd.f32 %v7283, %v7608
      %v7671 = vadd.f32 %v7284, %v7613
      %v7672 = vadd.f32 %v7285, %v7618
      %v7673 = vadd.f32 %v7286, %v7623
      %v7674 = vadd.f32 %v7287, %v7628
      %v7675 = vadd.f32 %v7288, %v7633
      %v7676 = vadd.f32 %v7289, %v7638
      %v7677 = vadd.f32 %v7290, %v7643
      %v7678 = vld [vmem:[%s6] sm:$0x1]
      %v7680 = vlaneseq
      %v7681 = vshrl.u32 %v7680, 7
      %v7682 = vsub.s32 0, %v7681
      %v7683 = vrot.slane %v7678, %v7682
      %v7685 = vmul.f32 %v7646, %v7683
      %v7686 = vmul.f32 %v7647, %v7683
      %v7687 = vmul.f32 %v7648, %v7683
      %v7688 = vmul.f32 %v7649, %v7683
      %v7689 = vmul.f32 %v7650, %v7683
      %v7690 = vmul.f32 %v7651, %v7683
      %v7691 = vmul.f32 %v7652, %v7683
      %v7692 = vmul.f32 %v7653, %v7683
      %v7693 = vmul.f32 %v7654, %v7683
      %v7694 = vmul.f32 %v7655, %v7683
      %v7695 = vmul.f32 %v7656, %v7683
      %v7696 = vmul.f32 %v7657, %v7683
      %v7697 = vmul.f32 %v7658, %v7683
      %v7698 = vmul.f32 %v7659, %v7683
      %v7699 = vmul.f32 %v7660, %v7683
      %v7700 = vmul.f32 %v7661, %v7683
      %v7701 = vmul.f32 %v7662, %v7683
      %v7702 = vmul.f32 %v7663, %v7683
      %v7703 = vmul.f32 %v7664, %v7683
      %v7704 = vmul.f32 %v7665, %v7683
      %v7705 = vmul.f32 %v7666, %v7683
      %v7706 = vmul.f32 %v7667, %v7683
      %v7707 = vmul.f32 %v7668, %v7683
      %v7708 = vmul.f32 %v7669, %v7683
      %v7709 = vmul.f32 %v7670, %v7683
      %v7710 = vmul.f32 %v7671, %v7683
      %v7711 = vmul.f32 %v7672, %v7683
      %v7712 = vmul.f32 %v7673, %v7683
      %v7713 = vmul.f32 %v7674, %v7683
      %v7714 = vmul.f32 %v7675, %v7683
      %v7715 = vmul.f32 %v7676, %v7683
      %v7716 = vmul.f32 %v7677, %v7683
      %v7717 = vld [vmem:[%s7] sm:$0x1]
      %v7719 = vlaneseq
      %v7720 = vshrl.u32 %v7719, 7
      %v7721 = vsub.s32 0, %v7720
      %v7722 = vrot.slane %v7717, %v7721
      %v7724 = vadd.f32 %v7685, %v7722
      %v7725 = vadd.f32 %v7686, %v7722
      %v7726 = vadd.f32 %v7687, %v7722
      %v7727 = vadd.f32 %v7688, %v7722
      %v7728 = vadd.f32 %v7689, %v7722
      %v7729 = vadd.f32 %v7690, %v7722
      %v7730 = vadd.f32 %v7691, %v7722
      %v7731 = vadd.f32 %v7692, %v7722
      %v7732 = vadd.f32 %v7693, %v7722
      %v7733 = vadd.f32 %v7694, %v7722
      %v7734 = vadd.f32 %v7695, %v7722
      %v7735 = vadd.f32 %v7696, %v7722
      %v7736 = vadd.f32 %v7697, %v7722
      %v7737 = vadd.f32 %v7698, %v7722
      %v7738 = vadd.f32 %v7699, %v7722
      %v7739 = vadd.f32 %v7700, %v7722
      %v7740 = vadd.f32 %v7701, %v7722
      %v7741 = vadd.f32 %v7702, %v7722
      %v7742 = vadd.f32 %v7703, %v7722
      %v7743 = vadd.f32 %v7704, %v7722
      %v7744 = vadd.f32 %v7705, %v7722
      %v7745 = vadd.f32 %v7706, %v7722
      %v7746 = vadd.f32 %v7707, %v7722
      %v7747 = vadd.f32 %v7708, %v7722
      %v7748 = vadd.f32 %v7709, %v7722
      %v7749 = vadd.f32 %v7710, %v7722
      %v7750 = vadd.f32 %v7711, %v7722
      %v7751 = vadd.f32 %v7712, %v7722
      %v7752 = vadd.f32 %v7713, %v7722
      %v7753 = vadd.f32 %v7714, %v7722
      %v7754 = vadd.f32 %v7715, %v7722
      %v7755 = vadd.f32 %v7716, %v7722
      %v7756 = vld [vmem:[%s8] sm:$0xf]
      %v7758 = vsel %vm497, %v387, 0
      %v7761 = vsel %vm497, %v388, 0
      %v7764 = vsel %vm497, %v389, 0
      %v7767 = vsel %vm497, %v390, 0
      %v7770 = vsel %vm497, %v391, 0
      %v7773 = vsel %vm497, %v392, 0
      %v7776 = vsel %vm497, %v393, 0
      %v7779 = vsel %vm497, %v394, 0
      %v7782 = vsel %vm497, %v395, 0
      %v7785 = vsel %vm497, %v396, 0
      %v7788 = vsel %vm497, %v397, 0
      %v7791 = vsel %vm497, %v398, 0
      %v7794 = vsel %vm497, %v399, 0
      %v7797 = vsel %vm497, %v400, 0
      %v7800 = vsel %vm497, %v401, 0
      %v7803 = vsel %vm497, %v402, 0
      %v7806 = vsel %vm497, %v403, 0
      %v7809 = vsel %vm497, %v404, 0
      %v7812 = vsel %vm497, %v405, 0
      %v7815 = vsel %vm497, %v406, 0
      %v7818 = vsel %vm497, %v407, 0
      %v7821 = vsel %vm497, %v408, 0
      %v7824 = vsel %vm497, %v409, 0
      %v7827 = vsel %vm497, %v410, 0
      %v7830 = vsel %vm497, %v411, 0
      %v7833 = vsel %vm497, %v412, 0
      %v7836 = vsel %vm497, %v413, 0
      %v7839 = vsel %vm497, %v414, 0
      %v7842 = vsel %vm497, %v415, 0
      %v7845 = vsel %vm497, %v416, 0
      %v7848 = vsel %vm497, %v417, 0
      %v7851 = vsel %vm497, %v418, 0
      %v7854 = vsel %vm766, %v7756, 0
      %7856 = vmatprep.subr.mxu0 0.0
      %7857 = vmatpush1.msra.mxu0 %v7854
      %7858 = vmatprep.subr.mxu0 0.0
      %7859 = vmatpush1.msra.mxu0 0.0
      %7860 = vmatprep.subr.mxu0 0.0
      %7861 = vmatpush1.msra.mxu0 0.0
      %7862 = vmatprep.subr.mxu0 0.0
      %7863 = vmatpush1.msra.mxu0 0.0
      %7864 = vmatprep.subr.mxu0 0.0
      %7865 = vmatpush1.msra.mxu0 0.0
      %7866 = vmatprep.subr.mxu0 0.0
      %7867 = vmatpush1.msra.mxu0 0.0
      %7868 = vmatprep.subr.mxu0 0.0
      %7869 = vmatpush1.msra.mxu0 0.0
      %7870 = vmatprep.subr.mxu0 0.0
      %7871 = vmatpush1.msra.mxu0 0.0
      %7872 = vmatprep.subr.mxu0 0.0
      %7873 = vmatpush1.msra.mxu0 0.0
      %7874 = vmatprep.subr.mxu0 0.0
      %7875 = vmatpush1.msra.mxu0 0.0
      %7876 = vmatprep.subr.mxu0 0.0
      %7877 = vmatpush1.msra.mxu0 0.0
      %7878 = vmatprep.subr.mxu0 0.0
      %7879 = vmatpush1.msra.mxu0 0.0
      %7880 = vmatprep.subr.mxu0 0.0
      %7881 = vmatpush1.msra.mxu0 0.0
      %7882 = vmatprep.subr.mxu0 0.0
      %7883 = vmatpush1.msra.mxu0 0.0
      %7884 = vmatprep.subr.mxu0 0.0
      %7885 = vmatpush1.msra.mxu0 0.0
      %7886 = vmatprep.subr.mxu0 0.0
      %7887 = vmatpush1.msra.mxu0 0.0
      %7888 = vmatprep.subr.mxu0 0.0
      %7889 = vmatpush1.msra.mxu0 0.0
      %7890 = vmatprep.subr.mxu0 0.0
      %7891 = vmatpush1.msra.mxu0 0.0
      %7892 = vmatprep.subr.mxu0 0.0
      %7893 = vmatpush1.msra.mxu0 0.0
      %7894 = vmatprep.subr.mxu0 0.0
      %7895 = vmatpush1.msra.mxu0 0.0
      %7896 = vmatprep.subr.mxu0 0.0
      %7897 = vmatpush1.msra.mxu0 0.0
      %7898 = vmatprep.subr.mxu0 0.0
      %7899 = vmatpush1.msra.mxu0 0.0
      %7900 = vmatprep.subr.mxu0 0.0
      %7901 = vmatpush1.msra.mxu0 0.0
      %7902 = vmatprep.subr.mxu0 0.0
      %7903 = vmatpush1.msra.mxu0 0.0
      %7904 = vmatprep.subr.mxu0 0.0
      %7905 = vmatpush1.msra.mxu0 0.0
      %7906 = vmatprep.subr.mxu0 0.0
      %7907 = vmatpush1.msra.mxu0 0.0
      %7908 = vmatprep.subr.mxu0 0.0
      %7909 = vmatpush1.msra.mxu0 0.0
      %7910 = vmatprep.subr.mxu0 0.0
      %7911 = vmatpush1.msra.mxu0 0.0
      %7912 = vmatprep.subr.mxu0 0.0
      %7913 = vmatpush1.msra.mxu0 0.0
      %7914 = vmatprep.subr.mxu0 0.0
      %7915 = vmatpush1.msra.mxu0 0.0
      %7916 = vmatprep.subr.mxu0 0.0
      %7917 = vmatpush1.msra.mxu0 0.0
      %7918 = vmatprep.subr.mxu0 0.0
      %7919 = vmatpush1.msra.mxu0 0.0
      %7920 = vmatprep.mubr.f32.mxu0 0.0
      %7921 = vmatmul.mubr.f32.gmra.mrb[0].mxu0 %v7758
      %v7922 = vpop.f32.mrb[0].mxu0
      %v7923 = vadd.f32 0.0, %v7922
      %v7924 = vpop.f32.mrb[0].mxu0
      %7925 = vmatprep.mubr.f32.mxu0 0.0
      %7926 = vmatmul.mubr.f32.gmra.mrb[0].mxu0 %v7761
      %v7927 = vpop.f32.mrb[0].mxu0
      %v7928 = vadd.f32 0.0, %v7927
      %v7929 = vpop.f32.mrb[0].mxu0
      %7930 = vmatprep.mubr.f32.mxu0 0.0
      %7931 = vmatmul.mubr.f32.gmra.mrb[0].mxu0 %v7764
      %v7932 = vpop.f32.mrb[0].mxu0
      %v7933 = vadd.f32 0.0, %v7932
      %v7934 = vpop.f32.mrb[0].mxu0
      %7935 = vmatprep.mubr.f32.mxu0 0.0
      %7936 = vmatmul.mubr.f32.gmra.mrb[0].mxu0 %v7767
      %v7937 = vpop.f32.mrb[0].mxu0
      %v7938 = vadd.f32 0.0, %v7937
      %v7939 = vpop.f32.mrb[0].mxu0
      %7940 = vmatprep.mubr.f32.mxu0 0.0
      %7941 = vmatmul.mubr.f32.gmra.mrb[0].mxu0 %v7770
      %v7942 = vpop.f32.mrb[0].mxu0
      %v7943 = vadd.f32 0.0, %v7942
      %v7944 = vpop.f32.mrb[0].mxu0
      %7945 = vmatprep.mubr.f32.mxu0 0.0
      %7946 = vmatmul.mubr.f32.gmra.mrb[0].mxu0 %v7773
      %v7947 = vpop.f32.mrb[0].mxu0
      %v7948 = vadd.f32 0.0, %v7947
      %v7949 = vpop.f32.mrb[0].mxu0
      %7950 = vmatprep.mubr.f32.mxu0 0.0
      %7951 = vmatmul.mubr.f32.gmra.mrb[0].mxu0 %v7776
      %v7952 = vpop.f32.mrb[0].mxu0
      %v7953 = vadd.f32 0.0, %v7952
      %v7954 = vpop.f32.mrb[0].mxu0
      %7955 = vmatprep.mubr.f32.mxu0 0.0
      %7956 = vmatmul.mubr.f32.gmra.mrb[0].mxu0 %v7779
      %v7957 = vpop.f32.mrb[0].mxu0
      %v7958 = vadd.f32 0.0, %v7957
      %v7959 = vpop.f32.mrb[0].mxu0
      %7960 = vmatprep.mubr.f32.mxu0 0.0
      %7961 = vmatmul.mubr.f32.gmra.mrb[0].mxu0 %v7782
      %v7962 = vpop.f32.mrb[0].mxu0
      %v7963 = vadd.f32 0.0, %v7962
      %v7964 = vpop.f32.mrb[0].mxu0
      %7965 = vmatprep.mubr.f32.mxu0 0.0
      %7966 = vmatmul.mubr.f32.gmra.mrb[0].mxu0 %v7785
      %v7967 = vpop.f32.mrb[0].mxu0
      %v7968 = vadd.f32 0.0, %v7967
      %v7969 = vpop.f32.mrb[0].mxu0
      %7970 = vmatprep.mubr.f32.mxu0 0.0
      %7971 = vmatmul.mubr.f32.gmra.mrb[0].mxu0 %v7788
      %v7972 = vpop.f32.mrb[0].mxu0
      %v7973 = vadd.f32 0.0, %v7972
      %v7974 = vpop.f32.mrb[0].mxu0
      %7975 = vmatprep.mubr.f32.mxu0 0.0
      %7976 = vmatmul.mubr.f32.gmra.mrb[0].mxu0 %v7791
      %v7977 = vpop.f32.mrb[0].mxu0
      %v7978 = vadd.f32 0.0, %v7977
      %v7979 = vpop.f32.mrb[0].mxu0
      %7980 = vmatprep.mubr.f32.mxu0 0.0
      %7981 = vmatmul.mubr.f32.gmra.mrb[0].mxu0 %v7794
      %v7982 = vpop.f32.mrb[0].mxu0
      %v7983 = vadd.f32 0.0, %v7982
      %v7984 = vpop.f32.mrb[0].mxu0
      %7985 = vmatprep.mubr.f32.mxu0 0.0
      %7986 = vmatmul.mubr.f32.gmra.mrb[0].mxu0 %v7797
      %v7987 = vpop.f32.mrb[0].mxu0
      %v7988 = vadd.f32 0.0, %v7987
      %v7989 = vpop.f32.mrb[0].mxu0
      %7990 = vmatprep.mubr.f32.mxu0 0.0
      %7991 = vmatmul.mubr.f32.gmra.mrb[0].mxu0 %v7800
      %v7992 = vpop.f32.mrb[0].mxu0
      %v7993 = vadd.f32 0.0, %v7992
      %v7994 = vpop.f32.mrb[0].mxu0
      %7995 = vmatprep.mubr.f32.mxu0 0.0
      %7996 = vmatmul.mubr.f32.gmra.mrb[0].mxu0 %v7803
      %v7997 = vpop.f32.mrb[0].mxu0
      %v7998 = vadd.f32 0.0, %v7997
      %v7999 = vpop.f32.mrb[0].mxu0
      %8000 = vmatprep.mubr.f32.mxu0 0.0
      %8001 = vmatmul.mubr.f32.gmra.mrb[0].mxu0 %v7806
      %v8002 = vpop.f32.mrb[0].mxu0
      %v8003 = vadd.f32 0.0, %v8002
      %v8004 = vpop.f32.mrb[0].mxu0
      %8005 = vmatprep.mubr.f32.mxu0 0.0
      %8006 = vmatmul.mubr.f32.gmra.mrb[0].mxu0 %v7809
      %v8007 = vpop.f32.mrb[0].mxu0
      %v8008 = vadd.f32 0.0, %v8007
      %v8009 = vpop.f32.mrb[0].mxu0
      %8010 = vmatprep.mubr.f32.mxu0 0.0
      %8011 = vmatmul.mubr.f32.gmra.mrb[0].mxu0 %v7812
      %v8012 = vpop.f32.mrb[0].mxu0
      %v8013 = vadd.f32 0.0, %v8012
      %v8014 = vpop.f32.mrb[0].mxu0
      %8015 = vmatprep.mubr.f32.mxu0 0.0
      %8016 = vmatmul.mubr.f32.gmra.mrb[0].mxu0 %v7815
      %v8017 = vpop.f32.mrb[0].mxu0
      %v8018 = vadd.f32 0.0, %v8017
      %v8019 = vpop.f32.mrb[0].mxu0
      %8020 = vmatprep.mubr.f32.mxu0 0.0
      %8021 = vmatmul.mubr.f32.gmra.mrb[0].mxu0 %v7818
      %v8022 = vpop.f32.mrb[0].mxu0
      %v8023 = vadd.f32 0.0, %v8022
      %v8024 = vpop.f32.mrb[0].mxu0
      %8025 = vmatprep.mubr.f32.mxu0 0.0
      %8026 = vmatmul.mubr.f32.gmra.mrb[0].mxu0 %v7821
      %v8027 = vpop.f32.mrb[0].mxu0
      %v8028 = vadd.f32 0.0, %v8027
      %v8029 = vpop.f32.mrb[0].mxu0
      %8030 = vmatprep.mubr.f32.mxu0 0.0
      %8031 = vmatmul.mubr.f32.gmra.mrb[0].mxu0 %v7824
      %v8032 = vpop.f32.mrb[0].mxu0
      %v8033 = vadd.f32 0.0, %v8032
      %v8034 = vpop.f32.mrb[0].mxu0
      %8035 = vmatprep.mubr.f32.mxu0 0.0
      %8036 = vmatmul.mubr.f32.gmra.mrb[0].mxu0 %v7827
      %v8037 = vpop.f32.mrb[0].mxu0
      %v8038 = vadd.f32 0.0, %v8037
      %v8039 = vpop.f32.mrb[0].mxu0
      %8040 = vmatprep.mubr.f32.mxu0 0.0
      %8041 = vmatmul.mubr.f32.gmra.mrb[0].mxu0 %v7830
      %v8042 = vpop.f32.mrb[0].mxu0
      %v8043 = vadd.f32 0.0, %v8042
      %v8044 = vpop.f32.mrb[0].mxu0
      %8045 = vmatprep.mubr.f32.mxu0 0.0
      %8046 = vmatmul.mubr.f32.gmra.mrb[0].mxu0 %v7833
      %v8047 = vpop.f32.mrb[0].mxu0
      %v8048 = vadd.f32 0.0, %v8047
      %v8049 = vpop.f32.mrb[0].mxu0
      %8050 = vmatprep.mubr.f32.mxu0 0.0
      %8051 = vmatmul.mubr.f32.gmra.mrb[0].mxu0 %v7836
      %v8052 = vpop.f32.mrb[0].mxu0
      %v8053 = vadd.f32 0.0, %v8052
      %v8054 = vpop.f32.mrb[0].mxu0
      %8055 = vmatprep.mubr.f32.mxu0 0.0
      %8056 = vmatmul.mubr.f32.gmra.mrb[0].mxu0 %v7839
      %v8057 = vpop.f32.mrb[0].mxu0
      %v8058 = vadd.f32 0.0, %v8057
      %v8059 = vpop.f32.mrb[0].mxu0
      %8060 = vmatprep.mubr.f32.mxu0 0.0
      %8061 = vmatmul.mubr.f32.gmra.mrb[0].mxu0 %v7842
      %v8062 = vpop.f32.mrb[0].mxu0
      %v8063 = vadd.f32 0.0, %v8062
      %v8064 = vpop.f32.mrb[0].mxu0
      %8065 = vmatprep.mubr.f32.mxu0 0.0
      %8066 = vmatmul.mubr.f32.gmra.mrb[0].mxu0 %v7845
      %v8067 = vpop.f32.mrb[0].mxu0
      %v8068 = vadd.f32 0.0, %v8067
      %v8069 = vpop.f32.mrb[0].mxu0
      %8070 = vmatprep.mubr.f32.mxu0 0.0
      %8071 = vmatmul.mubr.f32.gmra.mrb[0].mxu0 %v7848
      %v8072 = vpop.f32.mrb[0].mxu0
      %v8073 = vadd.f32 0.0, %v8072
      %v8074 = vpop.f32.mrb[0].mxu0
      %8075 = vmatprep.mubr.f32.mxu0 0.0
      %8076 = vmatmul.mubr.f32.gmra.mrb[0].mxu0 %v7851
      %v8077 = vpop.f32.mrb[0].mxu0
      %v8078 = vadd.f32 0.0, %v8077
      %v8079 = vpop.f32.mrb[0].mxu0
      %8080 = vdwg.mxu0
      %v8081 = vld [vmem:[%s9] sm:$0x1]
      %v8083 = vlaneseq
      %v8084 = vshrl.u32 %v8083, 7
      %v8085 = vsub.s32 0, %v8084
      %v8086 = vrot.slane %v8081, %v8085
      %v8088 = vmul.f32 %v7923, %v8086
      %v8089 = vmul.f32 %v7928, %v8086
      %v8090 = vmul.f32 %v7933, %v8086
      %v8091 = vmul.f32 %v7938, %v8086
      %v8092 = vmul.f32 %v7943, %v8086
      %v8093 = vmul.f32 %v7948, %v8086
      %v8094 = vmul.f32 %v7953, %v8086
      %v8095 = vmul.f32 %v7958, %v8086
      %v8096 = vmul.f32 %v7963, %v8086
      %v8097 = vmul.f32 %v7968, %v8086
      %v8098 = vmul.f32 %v7973, %v8086
      %v8099 = vmul.f32 %v7978, %v8086
      %v8100 = vmul.f32 %v7983, %v8086
      %v8101 = vmul.f32 %v7988, %v8086
      %v8102 = vmul.f32 %v7993, %v8086
      %v8103 = vmul.f32 %v7998, %v8086
      %v8104 = vmul.f32 %v8003, %v8086
      %v8105 = vmul.f32 %v8008, %v8086
      %v8106 = vmul.f32 %v8013, %v8086
      %v8107 = vmul.f32 %v8018, %v8086
      %v8108 = vmul.f32 %v8023, %v8086
      %v8109 = vmul.f32 %v8028, %v8086
      %v8110 = vmul.f32 %v8033, %v8086
      %v8111 = vmul.f32 %v8038, %v8086
      %v8112 = vmul.f32 %v8043, %v8086
      %v8113 = vmul.f32 %v8048, %v8086
      %v8114 = vmul.f32 %v8053, %v8086
      %v8115 = vmul.f32 %v8058, %v8086
      %v8116 = vmul.f32 %v8063, %v8086
      %v8117 = vmul.f32 %v8068, %v8086
      %v8118 = vmul.f32 %v8073, %v8086
      %v8119 = vmul.f32 %v8078, %v8086
      %v8120 = vld [vmem:[%s10] sm:$0x1]
      %v8122 = vlaneseq
      %v8123 = vshrl.u32 %v8122, 7
      %v8124 = vsub.s32 0, %v8123
      %v8125 = vrot.slane %v8120, %v8124
      %v8127 = vadd.f32 %v8088, %v8125
      %v8128 = vadd.f32 %v8089, %v8125
      %v8129 = vadd.f32 %v8090, %v8125
      %v8130 = vadd.f32 %v8091, %v8125
      %v8131 = vadd.f32 %v8092, %v8125
      %v8132 = vadd.f32 %v8093, %v8125
      %v8133 = vadd.f32 %v8094, %v8125
      %v8134 = vadd.f32 %v8095, %v8125
      %v8135 = vadd.f32 %v8096, %v8125
      %v8136 = vadd.f32 %v8097, %v8125
      %v8137 = vadd.f32 %v8098, %v8125
      %v8138 = vadd.f32 %v8099, %v8125
      %v8139 = vadd.f32 %v8100, %v8125
      %v8140 = vadd.f32 %v8101, %v8125
      %v8141 = vadd.f32 %v8102, %v8125
      %v8142 = vadd.f32 %v8103, %v8125
      %v8143 = vadd.f32 %v8104, %v8125
      %v8144 = vadd.f32 %v8105, %v8125
      %v8145 = vadd.f32 %v8106, %v8125
      %v8146 = vadd.f32 %v8107, %v8125
      %v8147 = vadd.f32 %v8108, %v8125
      %v8148 = vadd.f32 %v8109, %v8125
      %v8149 = vadd.f32 %v8110, %v8125
      %v8150 = vadd.f32 %v8111, %v8125
      %v8151 = vadd.f32 %v8112, %v8125
      %v8152 = vadd.f32 %v8113, %v8125
      %v8153 = vadd.f32 %v8114, %v8125
      %v8154 = vadd.f32 %v8115, %v8125
      %v8155 = vadd.f32 %v8116, %v8125
      %v8156 = vadd.f32 %v8117, %v8125
      %v8157 = vadd.f32 %v8118, %v8125
      %v8158 = vadd.f32 %v8119, %v8125
      %v8159 = vadd.f32 %v7724, %v8127
      %v8160 = vadd.f32 %v7725, %v8128
      %v8161 = vadd.f32 %v7726, %v8129
      %v8162 = vadd.f32 %v7727, %v8130
      %v8163 = vadd.f32 %v7728, %v8131
      %v8164 = vadd.f32 %v7729, %v8132
      %v8165 = vadd.f32 %v7730, %v8133
      %v8166 = vadd.f32 %v7731, %v8134
      %v8167 = vadd.f32 %v7732, %v8135
      %v8168 = vadd.f32 %v7733, %v8136
      %v8169 = vadd.f32 %v7734, %v8137
      %v8170 = vadd.f32 %v7735, %v8138
      %v8171 = vadd.f32 %v7736, %v8139
      %v8172 = vadd.f32 %v7737, %v8140
      %v8173 = vadd.f32 %v7738, %v8141
      %v8174 = vadd.f32 %v7739, %v8142
      %v8175 = vadd.f32 %v7740, %v8143
      %v8176 = vadd.f32 %v7741, %v8144
      %v8177 = vadd.f32 %v7742, %v8145
      %v8178 = vadd.f32 %v7743, %v8146
      %v8179 = vadd.f32 %v7744, %v8147
      %v8180 = vadd.f32 %v7745, %v8148
      %v8181 = vadd.f32 %v7746, %v8149
      %v8182 = vadd.f32 %v7747, %v8150
      %v8183 = vadd.f32 %v7748, %v8151
      %v8184 = vadd.f32 %v7749, %v8152
      %v8185 = vadd.f32 %v7750, %v8153
      %v8186 = vadd.f32 %v7751, %v8154
      %v8187 = vadd.f32 %v7752, %v8155
      %v8188 = vadd.f32 %v7753, %v8156
      %v8189 = vadd.f32 %v7754, %v8157
      %v8190 = vadd.f32 %v7755, %v8158
      %8191 = vst.msk [vmem:[%s386] sm:$0xff] %vm4153, %v8159
      %8192 = vst.msk [vmem:[%s386 + $0x8] sm:$0xff] %vm4153, %v8160
      %8193 = vst.msk [vmem:[%s386 + $0x10] sm:$0xff] %vm4153, %v8161
      %8194 = vst.msk [vmem:[%s386 + $0x18] sm:$0xff] %vm4153, %v8162
      %8195 = vst.msk [vmem:[%s386 + $0x20] sm:$0xff] %vm4153, %v8163
      %8196 = vst.msk [vmem:[%s386 + $0x28] sm:$0xff] %vm4153, %v8164
      %8197 = vst.msk [vmem:[%s386 + $0x30] sm:$0xff] %vm4153, %v8165
      %8198 = vst.msk [vmem:[%s386 + $0x38] sm:$0xff] %vm4153, %v8166
      %8199 = vst.msk [vmem:[%s386 + $0x40] sm:$0xff] %vm4153, %v8167
      %8200 = vst.msk [vmem:[%s386 + $0x48] sm:$0xff] %vm4153, %v8168
      %8201 = vst.msk [vmem:[%s386 + $0x50] sm:$0xff] %vm4153, %v8169
      %8202 = vst.msk [vmem:[%s386 + $0x58] sm:$0xff] %vm4153, %v8170
      %8203 = vst.msk [vmem:[%s386 + $0x60] sm:$0xff] %vm4153, %v8171
      %8204 = vst.msk [vmem:[%s386 + $0x68] sm:$0xff] %vm4153, %v8172
      %8205 = vst.msk [vmem:[%s386 + $0x70] sm:$0xff] %vm4153, %v8173
      %8206 = vst.msk [vmem:[%s386 + $0x78] sm:$0xff] %vm4153, %v8174
      %8207 = vst.msk [vmem:[%s386 + $0x80] sm:$0xff] %vm4153, %v8175
      %8208 = vst.msk [vmem:[%s386 + $0x88] sm:$0xff] %vm4153, %v8176
      %8209 = vst.msk [vmem:[%s386 + $0x90] sm:$0xff] %vm4153, %v8177
      %8210 = vst.msk [vmem:[%s386 + $0x98] sm:$0xff] %vm4153, %v8178
      %8211 = vst.msk [vmem:[%s386 + $0xa0] sm:$0xff] %vm4153, %v8179
      %8212 = vst.msk [vmem:[%s386 + $0xa8] sm:$0xff] %vm4153, %v8180
      %8213 = vst.msk [vmem:[%s386 + $0xb0] sm:$0xff] %vm4153, %v8181
      %8214 = vst.msk [vmem:[%s386 + $0xb8] sm:$0xff] %vm4153, %v8182
      %8215 = vst.msk [vmem:[%s386 + $0xc0] sm:$0xff] %vm4153, %v8183
      %8216 = vst.msk [vmem:[%s386 + $0xc8] sm:$0xff] %vm4153, %v8184
      %8217 = vst.msk [vmem:[%s386 + $0xd0] sm:$0xff] %vm4153, %v8185
      %8218 = vst.msk [vmem:[%s386 + $0xd8] sm:$0xff] %vm4153, %v8186
      %8219 = vst.msk [vmem:[%s386 + $0xe0] sm:$0xff] %vm4153, %v8187
      %8220 = vst.msk [vmem:[%s386 + $0xe8] sm:$0xff] %vm4153, %v8188
      %8221 = vst.msk [vmem:[%s386 + $0xf0] sm:$0xff] %vm4153, %v8189
      %8222 = vst.msk [vmem:[%s386 + $0xf8] sm:$0xff] %vm4153, %v8190
      %p8223 = scmp.lt.s32.totalorder %s22, 1
      %s8224 = scalar_select %p8223, %s22, 1
      %s8225 = smul.addr %s8224, 32
      %s8226 = smul.addr %s8225, 8
      %s8227 = scalar_lea.vmem %s11, %s8226
      // Predicated region
      $region65: #{bottleneck_ir_forward.1} parent=63 // pred_check
        %p8228 = pneg %p276
      $region66: #{bottleneck_ir_forward.1} parent=63 // pred_check_branch
        %8230 = sbr.rel (%p8228) target = $region68
      $region67: #{bottleneck_ir_forward.1} parent=63 // pred_region
        _
      $region68: #{bottleneck_ir_forward.1} parent=63 // pred_fallthru
        _
    $region64: #{bottleneck_ir_forward.1} parent=5 // pred_fallthru
      _
    %p8231 = scmp.le.s32.totalorder 2, %s17
    // Predicated region
    $region69: #{bottleneck_ir_forward.1} parent=5 // pred_check
      %p8232 = pneg %p8231
    $region70: #{bottleneck_ir_forward.1} parent=5 // pred_check_branch
      %8234 = sbr.rel (%p8232) target = $region72
    $region71: #{bottleneck_ir_forward.1} parent=5 // pred_region
      %s8235 = ssub.s32 %s17, 2
      // Predicated region
      $region73: #{bottleneck_ir_forward.1} parent=71 // pred_check
        %p8236 = pneg %p282
      $region74: #{bottleneck_ir_forward.1} parent=71 // pred_check_branch
        %8238 = sbr.rel (%p8236) target = $region76
      $region75: #{bottleneck_ir_forward.1} parent=71 // pred_region
        %p8239 = scmp.lt.s32.totalorder %s23, 1
        %s8240 = scalar_select %p8239, %s23, 1
        %s8241 = smul.addr %s8240, 32
        %s8242 = smul.addr %s8241, 8
        %s8243 = scalar_lea.vmem %s11, %s8242
      $region76: #{bottleneck_ir_forward.1} parent=71 // pred_fallthru
        _
    $region72: #{bottleneck_ir_forward.1} parent=5 // pred_fallthru
      _
  $region6: #{bottleneck_ir_forward.1} parent=0 // loop_footer
    %s21 = sadd.s32 1, %s17
  $region7: #{bottleneck_ir_forward.1} parent=0 // loop_footer_branch
    %16 = sbr.rel target = $region3
  $region8: #{bottleneck_ir_forward.1} parent=0 // loop_exit
    _

</llo_original>
